<compile_context>
chip_gen: v7x
topology: tpu7x:2x2x1
jax: 0.10.0
libtpu: 0.0.40
codegen_flags: <defaults>
</compile_context>

<pallas_src>
import functools

import jax
import jax.numpy as jnp
import numpy as np
from jax import lax
from jax.experimental import pallas as pl
from jax.experimental.pallas import tpu as pltpu


def _gd_kernel(step_ref, y_ref, A_ref, W_ref, b_ref, *rest, has_xinit):
    """One gradient-descent iteration per grid step; x_ref is resident across the grid."""
    if has_xinit:
        xinit_ref, x_ref = rest
    else:
        (x_ref,) = rest

    t = pl.program_id(0)

    # --- init: x = x_init if provided else physics.A_adjoint(y) = y @ A ---
    @pl.when(t == 0)
    def _init():
        if has_xinit:
            x_ref[...] = xinit_ref[...]
        else:
            x_ref[...] = lax.dot_general(
                y_ref[...].astype(jnp.bfloat16), A_ref[...],
                (((1,), (0,)), ((), ())),
                preferred_element_type=jnp.float32)

    x = x_ref[...]                       # f32 carry
    x_lo = x.astype(jnp.bfloat16)        # bf16 copy for the MXU streams

    # backbone block: block(x) = x @ W[t].T + b[t]   (NT contraction, W fed untransposed)
    blk = lax.dot_general(
        x_lo, W_ref[0], (((1,), (1,)), ((), ())),
        preferred_element_type=jnp.float32) + b_ref[0]

    # measurement_consistency_grad: A_adjoint(y - A(x)) = (y - x @ A.T) @ A
    Ax = lax.dot_general(
        x_lo, A_ref[...], (((1,), (1,)), ((), ())),
        preferred_element_type=jnp.float32)
    resid = (y_ref[...] - Ax).astype(jnp.bfloat16)
    grad = lax.dot_general(
        resid, A_ref[...], (((1,), (0,)), ((), ())),
        preferred_element_type=jnp.float32)

    # x <- block(x) + x + step_size[t] * grad
    x_ref[...] = blk + x + step_ref[t] * grad


def _vmem_limit_bytes(Bp, M, N, n_blocks, has_xinit):
    """Generation-aware VMEM request derived from the actual working set."""
    bf16, f32 = 2, 4
    w_bufs = 1 if n_blocks == 1 else 2          # W/b double-buffered only when streamed
    working = (
        M * N * bf16                            # A (bf16, single-buffered)
        + w_bufs * N * N * bf16                 # W block(s)
        + w_bufs * N * f32                      # b block(s)
        + Bp * M * f32                          # y (single-buffered)
        + (Bp * N * f32 if has_xinit else 0)    # x_init
        + 2 * Bp * N * f32                      # resident output x (safety factor)
    )
    try:
        phys = int(pltpu.get_tpu_info().vmem_capacity_bytes)
    except Exception:
        phys = 64 * 1024 * 1024                 # v7x per-TensorCore (smallest generation)
    return int(min(phys, max(32 * 1024 * 1024, 2 * working + 8 * 1024 * 1024)))


@jax.jit
def _gradient_descent_impl(y, A, W, b, step_size, x_init):
    iterations = int(step_size.shape[0])
    n_blocks = int(W.shape[0])
    if n_blocks > 1:
        assert n_blocks == iterations, "'# blocks' does not equal to 'iterations'"
    M, N = A.shape
    B = y.shape[0]
    has_xinit = x_init is not None

    # Pad batch rows to a multiple of 8 sublanes (padded rows are discarded at the end).
    Bp = ((B + 7) // 8) * 8
    pad = Bp - B
    yp = y.astype(jnp.float32)
    if pad:
        yp = jnp.pad(yp, ((0, pad), (0, 0)))

    # Stream the big operands as bf16; all dots accumulate in f32.
    A_lo = A.astype(jnp.bfloat16)
    W_lo = W.astype(jnp.bfloat16)
    b3 = b.astype(jnp.float32).reshape(n_blocks, 1, N)

    # PyTorch resets the loop variable to 0 when n_blocks == 1, so step_size[0]
    # is reused on every iteration in that case.
    if n_blocks == 1:
        step_eff = jnp.full((iterations,), step_size[0], dtype=jnp.float32)
    else:
        step_eff = step_size.astype(jnp.float32)

    const2 = lambda t, step: (0, 0)
    if n_blocks == 1:
        w_idx = lambda t, step: (0, 0, 0)
        wb_mode = pl.Buffered(1)                 # W/b are also grid-invariant
    else:
        w_idx = lambda t, step: (t, 0, 0)
        wb_mode = None                           # default double-buffering for the W stream

    in_specs = [
        pl.BlockSpec((Bp, M), const2, pipeline_mode=pl.Buffered(1)),   # y   (invariant)
        pl.BlockSpec((M, N), const2, pipeline_mode=pl.Buffered(1)),    # A   (bf16, invariant)
        pl.BlockSpec((1, N, N), w_idx, pipeline_mode=wb_mode),         # W[t] (bf16)
        pl.BlockSpec((1, 1, N), w_idx, pipeline_mode=wb_mode),         # b[t]
    ]
    args = [step_eff, yp, A_lo, W_lo, b3]
    if has_xinit:
        x0p = x_init.astype(jnp.float32)
        if pad:
            x0p = jnp.pad(x0p, ((0, pad), (0, 0)))
        in_specs.append(pl.BlockSpec((Bp, N), const2, pipeline_mode=pl.Buffered(1)))
        args.append(x0p)

    out = pl.pallas_call(
        functools.partial(_gd_kernel, has_xinit=has_xinit),
        out_shape=jax.ShapeDtypeStruct((Bp, N), jnp.float32),
        grid_spec=pltpu.PrefetchScalarGridSpec(
            num_scalar_prefetch=1,               # step_size -> SMEM
            grid=(iterations,),
            in_specs=in_specs,
            out_specs=pl.BlockSpec((Bp, N), const2),   # x resident across the grid
        ),
        compiler_params=pltpu.CompilerParams(
            dimension_semantics=("arbitrary",),  # iterations are a sequential carry
            vmem_limit_bytes=_vmem_limit_bytes(Bp, M, N, n_blocks, has_xinit),
        ),
    )(*args)
    return out[:B]


def gradient_descent(y, A, W, b, step_size, x_init=None):
    """Pallas implementation of GradientDescent.forward.

    y:         (B, M) measurements
    A:         (M, N) physics forward operator
    W, b:      (n_blocks, N, N) / (n_blocks, N) linear backbone blocks
    step_size: (iterations,) learnable step sizes
    x_init:    optional (B, N)
    """
    return _gradient_descent_impl(y, A, W, b, step_size, x_init)


def gradient_descent_ref(y, A, W, b, step_size, x_init=None):
    """Pure-JAX reference matching the PyTorch forward (same bf16/f32 mixed precision)."""
    iterations = int(step_size.shape[0])
    n_blocks = int(W.shape[0])
    A_lo = A.astype(jnp.bfloat16)
    W_lo = W.astype(jnp.bfloat16)
    if x_init is not None:
        x = x_init.astype(jnp.float32)
    else:
        x = lax.dot_general(y.astype(jnp.bfloat16), A_lo, (((1,), (0,)), ((), ())),
                            preferred_element_type=jnp.float32)
    for t in range(iterations):
        ti = 0 if n_blocks == 1 else t          # PyTorch resets t when n_blocks == 1
        x_lo = x.astype(jnp.bfloat16)
        blk = lax.dot_general(x_lo, W_lo[ti], (((1,), (1,)), ((), ())),
                              preferred_element_type=jnp.float32) + b[ti]
        Ax = lax.dot_general(x_lo, A_lo, (((1,), (1,)), ((), ())),
                             preferred_element_type=jnp.float32)
        resid = (y - Ax).astype(jnp.bfloat16)
        grad = lax.dot_general(resid, A_lo, (((1,), (0,)), ((), ())),
                               preferred_element_type=jnp.float32)
        x = blk + x + step_size[ti] * grad
    return x


if __name__ == "__main__":
    # small shapes: image (B=2, C=4, H=16, W=16) -> N=1024 ; measurements M=512
    B, C, H, Wd = 2, 4, 16, 16
    N = C * H * Wd
    M = N // 2
    iterations = 2          # n_blocks == iterations branch of NeuralIteration.init

    key = jax.random.PRNGKey(0)
    k_y, k_A, k_W, k_b, k_x0 = jax.random.split(key, 5)
    y = jax.random.normal(k_y, (B, M), dtype=jnp.float32)
    A = jax.random.normal(k_A, (M, N), dtype=jnp.float32) / jnp.sqrt(N)
    # deterministic "backbone block" parameters (module __init__ takes arbitrary blocks)
    W = jax.random.normal(k_W, (iterations, N, N), dtype=jnp.float32) * 0.01
    b = jax.random.normal(k_b, (iterations, N), dtype=jnp.float32) * 0.01
    # step_size parameter: step_size * torch.ones(iterations) with step_size=1.0
    step_size = jnp.ones((iterations,), dtype=jnp.float32)

    # case 1: x_init = None  (x starts at A_adjoint(y), computed inside the kernel)
    out = jax.block_until_ready(gradient_descent(y, A, W, b, step_size))
    ref = gradient_descent_ref(y, A, W, b, step_size)
    assert np.allclose(np.asarray(out), np.asarray(ref), rtol=1e-2, atol=1e-2), \
        "mismatch (x_init=None)"

    # case 2: explicit x_init (flattened NCHW image)
    x0 = jax.random.normal(k_x0, (B, C, H, Wd), dtype=jnp.float32).reshape(B, N)
    out2 = jax.block_until_ready(gradient_descent(y, A, W, b, step_size, x_init=x0))
    ref2 = gradient_descent_ref(y, A, W, b, step_size, x_init=x0)
    assert np.allclose(np.asarray(out2), np.asarray(ref2), rtol=1e-2, atol=1e-2), \
        "mismatch (x_init)"

    # case 3: single shared block (n_blocks == 1): step_size[0] is reused every iteration
    W1, b1 = W[:1], b[:1]
    step3 = jnp.array([0.5, 0.25, 0.125], dtype=jnp.float32)
    out3 = jax.block_until_ready(gradient_descent(y, A, W1, b1, step3, x_init=x0))
    ref3 = gradient_descent_ref(y, A, W1, b1, step3, x_init=x0)
    assert np.allclose(np.asarray(out3), np.asarray(ref3), rtol=1e-2, atol=1e-2), \
        "mismatch (n_blocks=1)"

    print("KERNEL_OK")
</pallas_src>

<mosaic_0001>
module attributes {stable_mosaic.version = 11 : i64} {
  func.func @_gd_kernel(%arg0: i32, %arg1: memref<2xf32, #tpu.memory_space<smem>>, %arg2: memref<8x512xf32, #tpu.memory_space<vmem>>, %arg3: memref<512x1024xbf16, #tpu.memory_space<vmem>>, %arg4: memref<1x1024x1024xbf16, #tpu.memory_space<vmem>>, %arg5: memref<1x1x1024xf32, #tpu.memory_space<vmem>>, %arg6: memref<8x1024xf32, #tpu.memory_space<vmem>>) attributes {dimension_semantics = [#tpu.dimension_semantics<arbitrary>], iteration_bounds = array<i64: 2>, scalar_prefetch = 1 : i64, scratch_operands = 0 : i64, tpu.core_type = #tpu.core_type<tc>, window_params = [{pipeline_mode = #tpu.pipeline_mode<synchronous>, transform_indices = @transform_0, window_bounds = array<i64: 8, 512>}, {pipeline_mode = #tpu.pipeline_mode<synchronous>, transform_indices = @transform_1, window_bounds = array<i64: 512, 1024>}, {transform_indices = @transform_2, window_bounds = array<i64: 1, 1024, 1024>}, {transform_indices = @transform_3, window_bounds = array<i64: 1, 1, 1024>}, {pipeline_mode = #tpu.pipeline_mode<synchronous>, transform_indices = @transform_4, window_bounds = array<i64: 8, 1024>}]} {
    %c0_i32 = arith.constant 0 : i32
    %0 = arith.cmpi eq, %arg0, %c0_i32 : i32
    %1 = arith.extui %0 : i1 to i32
    %c0_i32_0 = arith.constant 0 : i32
    %2 = arith.cmpi ne, %1, %c0_i32_0 : i32
    scf.if %2 {
      %c0_18 = arith.constant 0 : index
      %c0_19 = arith.constant 0 : index
      %26 = vector.load %arg2[%c0_18, %c0_19] : memref<8x512xf32, #tpu.memory_space<vmem>>, vector<8x512xf32>
      %27 = arith.truncf %26 : vector<8x512xf32> to vector<8x512xbf16>
      %c0_20 = arith.constant 0 : index
      %c0_21 = arith.constant 0 : index
      %28 = vector.load %arg3[%c0_20, %c0_21] : memref<512x1024xbf16, #tpu.memory_space<vmem>>, vector<512x1024xbf16>
      %cst_22 = arith.constant dense<0.000000e+00> : vector<8x1024xf32>
      %29 = tpu.matmul %27, %28, %cst_22 {dimension_numbers = #tpu.dot_dimension_numbers<[1], [0], [0], [1], [0, 0, 1, 1], [], []>} : vector<8x512xbf16>, vector<512x1024xbf16>, vector<8x1024xf32> -> vector<8x1024xf32>
      %c0_23 = arith.constant 0 : index
      %c0_24 = arith.constant 0 : index
      %30 = vector.load %arg6[%c0_23, %c0_24] : memref<8x1024xf32, #tpu.memory_space<vmem>>, vector<8x1024xf32>
      tpu.vector_store %arg6[%c0_23, %c0_24], %29 {strides = array<i32>} : memref<8x1024xf32, #tpu.memory_space<vmem>>, vector<8x1024xf32>,
    } else {
    }
    %c0 = arith.constant 0 : index
    %c0_1 = arith.constant 0 : index
    %3 = vector.load %arg6[%c0, %c0_1] : memref<8x1024xf32, #tpu.memory_space<vmem>>, vector<8x1024xf32>
    %4 = arith.truncf %3 : vector<8x1024xf32> to vector<8x1024xbf16>
    %c0_2 = arith.constant 0 : index
    %c0_3 = arith.constant 0 : index
    %c0_4 = arith.constant 0 : index
    %5 = vector.load %arg4[%c0_2, %c0_3, %c0_4] : memref<1x1024x1024xbf16, #tpu.memory_space<vmem>>, vector<1x1024x1024xbf16>
    %6 = vector.shape_cast %5 : vector<1x1024x1024xbf16> to vector<1024x1024xbf16>
    %cst = arith.constant dense<0.000000e+00> : vector<8x1024xf32>
    %7 = tpu.matmul %4, %6, %cst {dimension_numbers = #tpu.dot_dimension_numbers<[1], [1], [0], [0], [0, 0, 1, 0], [], []>} : vector<8x1024xbf16>, vector<1024x1024xbf16>, vector<8x1024xf32> -> vector<8x1024xf32>
    %c0_5 = arith.constant 0 : index
    %c0_6 = arith.constant 0 : index
    %c0_7 = arith.constant 0 : index
    %8 = vector.load %arg5[%c0_5, %c0_6, %c0_7] : memref<1x1x1024xf32, #tpu.memory_space<vmem>>, vector<1x1x1024xf32>
    %9 = vector.shape_cast %8 : vector<1x1x1024xf32> to vector<1x1024xf32>
    %10 = vector.broadcast %9 : vector<1x1024xf32> to vector<8x1024xf32>
    %11 = arith.addf %7, %10 : vector<8x1024xf32>
    %c0_8 = arith.constant 0 : index
    %c0_9 = arith.constant 0 : index
    %12 = vector.load %arg3[%c0_8, %c0_9] : memref<512x1024xbf16, #tpu.memory_space<vmem>>, vector<512x1024xbf16>
    %cst_10 = arith.constant dense<0.000000e+00> : vector<8x512xf32>
    %13 = tpu.matmul %4, %12, %cst_10 {dimension_numbers = #tpu.dot_dimension_numbers<[1], [1], [0], [0], [0, 0, 1, 0], [], []>} : vector<8x1024xbf16>, vector<512x1024xbf16>, vector<8x512xf32> -> vector<8x512xf32>
    %c0_11 = arith.constant 0 : index
    %c0_12 = arith.constant 0 : index
    %14 = vector.load %arg2[%c0_11, %c0_12] : memref<8x512xf32, #tpu.memory_space<vmem>>, vector<8x512xf32>
    %15 = arith.subf %14, %13 : vector<8x512xf32>
    %16 = arith.truncf %15 : vector<8x512xf32> to vector<8x512xbf16>
    %c0_13 = arith.constant 0 : index
    %c0_14 = arith.constant 0 : index
    %17 = vector.load %arg3[%c0_13, %c0_14] : memref<512x1024xbf16, #tpu.memory_space<vmem>>, vector<512x1024xbf16>
    %cst_15 = arith.constant dense<0.000000e+00> : vector<8x1024xf32>
    %18 = tpu.matmul %16, %17, %cst_15 {dimension_numbers = #tpu.dot_dimension_numbers<[1], [0], [0], [1], [0, 0, 1, 1], [], []>} : vector<8x512xbf16>, vector<512x1024xbf16>, vector<8x1024xf32> -> vector<8x1024xf32>
    %19 = arith.addf %11, %3 : vector<8x1024xf32>
    %20 = arith.index_cast %arg0 : i32 to index
    %21 = memref.load %arg1[%20] : memref<2xf32, #tpu.memory_space<smem>>
    %22 = vector.broadcast %21 : f32 to vector<8x1024xf32>
    %23 = arith.mulf %22, %18 : vector<8x1024xf32>
    %24 = arith.addf %19, %23 : vector<8x1024xf32>
    %c0_16 = arith.constant 0 : index
    %c0_17 = arith.constant 0 : index
    %25 = vector.load %arg6[%c0_16, %c0_17] : memref<8x1024xf32, #tpu.memory_space<vmem>>, vector<8x1024xf32>
    tpu.vector_store %arg6[%c0_16, %c0_17], %24 {strides = array<i32>} : memref<8x1024xf32, #tpu.memory_space<vmem>>, vector<8x1024xf32>,
    return
  }
  func.func @transform_0(%arg0: i32, %arg1: memref<2xf32, #tpu.memory_space<smem>>) -> (i32, i32) {
    %c0_i32 = arith.constant 0 : i32
    %c0_i32_0 = arith.constant 0 : i32
    %c0_i32_1 = arith.constant 0 : i32
    return %c0_i32, %c0_i32_0 : i32, i32
  }
  func.func @transform_1(%arg0: i32, %arg1: memref<2xf32, #tpu.memory_space<smem>>) -> (i32, i32) {
    %c0_i32 = arith.constant 0 : i32
    %c0_i32_0 = arith.constant 0 : i32
    %c0_i32_1 = arith.constant 0 : i32
    return %c0_i32, %c0_i32_0 : i32, i32
  }
  func.func @transform_2(%arg0: i32, %arg1: memref<2xf32, #tpu.memory_space<smem>>) -> (i32, i32, i32) {
    %c0_i32 = arith.constant 0 : i32
    %c0_i32_0 = arith.constant 0 : i32
    %c0_i32_1 = arith.constant 0 : i32
    return %arg0, %c0_i32, %c0_i32_0 : i32, i32, i32
  }
  func.func @transform_3(%arg0: i32, %arg1: memref<2xf32, #tpu.memory_space<smem>>) -> (i32, i32, i32) {
    %c0_i32 = arith.constant 0 : i32
    %c0_i32_0 = arith.constant 0 : i32
    %c0_i32_1 = arith.constant 0 : i32
    return %arg0, %c0_i32, %c0_i32_0 : i32, i32, i32
  }
  func.func @transform_4(%arg0: i32, %arg1: memref<2xf32, #tpu.memory_space<smem>>) -> (i32, i32) {
    %c0_i32 = arith.constant 0 : i32
    %c0_i32_0 = arith.constant 0 : i32
    %c0_i32_1 = arith.constant 0 : i32
    return %c0_i32, %c0_i32_0 : i32, i32
  }
}

</mosaic_0001>

<llo_original>
// kernel: _gradient_descent_impl.1
$region0: #{_gradient_descent_impl.1}
  #allocation0 [shape = 'u32[]', space=smem, size = 0x4, offset = 0x4, fixed_abs, tag = 'smem constant byte address 0x4 - core index']
  #allocation1 [shape = 'u32[144,128]{1,0:T(1,128)}', space=vmem, size = 0x12000, scoped, tag = 'internal scratch']
  #allocation2 [shape = 's32[1]{0}', space=sflag, size = 0x4, scoped, tag = 'scoped memory for _gradient_descent_impl.1']
  #allocation3 [shape = 'u8[512]{0}', space=smem, size = 0x200, scoped, tag = 'prefetched SMEM operand 0']
  %s0 = inlined_call_operand.vmem [shape: f32[2], index: 0, kind: input, shape index: {}]
  %s1 = inlined_call_operand.vmem [shape: f32[8,512], index: 1, kind: input, shape index: {}]
  %s2 = inlined_call_operand.vmem [shape: bf16[512,1024], index: 2, kind: input, shape index: {}]
  %s3 = inlined_call_operand.vmem [shape: bf16[2,1024,1024], index: 3, kind: input, shape index: {}]
  %s4 = inlined_call_operand.vmem [shape: f32[2,1,1024], index: 4, kind: input, shape index: {}]
  %s5 = inlined_call_operand.vmem [shape: f32[8,1024], index: 5, kind: output, shape index: {}]
  %s6 = sld [smem:[#allocation0]]
  $region53: #{_gradient_descent_impl.1} parent=0
    _
  %s8 = ssub.s32 1, %s6
  %s9 = scalar_select 0, %s8, %s6
  %s10 = sshll.u32 %s0, 4
  %s11 = int_to_ptr.vmem [resolvable:$true] %s10
  %13 = dma.vmem_to_smem %s11, 16, [#allocation3], [#allocation2]
  %14 = dma.done [#allocation2], 16
  %15 = sfence
  loop: start=0, step=1, limit=4
  $region2: #{_gradient_descent_impl.1} parent=0 // loop_pre_header
    _
  $region3: #{_gradient_descent_impl.1} parent=0 // loop_header
    %s17 = sphi 0, %s21
    %p18 = scmp.ge.s32.totalorder %s17, 4
    %s25 = sphi 0, %s25
    %s27 = sphi 0, %s25
    %s28 = sphi 0, %s27
    %s42 = sphi 0, %s28
    %s46 = sphi 0, %s46
    %s48 = sphi 0, %s46
    %s49 = sphi 0, %s48
    %s63 = sphi 0, %s49
    %s69 = sphi 0, %s71
    %s72 = sphi 0, %s69
    %s73 = sphi 0, %s72
    %s89 = sphi 0, %s73
    %s95 = sphi 0, %s97
    %s98 = sphi 0, %s95
    %s99 = sphi 0, %s98
    %s115 = sphi 0, %s99
    %s119 = sphi 0, %s119
    %s121 = sphi 0, %s119
    %s122 = sphi 0, %s121
    %s136 = sphi 0, %s122
  $region4: #{_gradient_descent_impl.1} parent=0 // loop_header_branch
    %20 = sbr.rel (%p18) target = $region8
  $region5: #{_gradient_descent_impl.1} parent=0 // loop_body
    %s22 = ssub.s32 %s17, 1
    %s23 = ssub.s32 %s17, 2
    %s24 = sadd.s32 %s17, 1
    %s26 = sadd.s32 %s25, 1
    %p29 = scmp.eq.s32.totalorder %s17, 1
    %p30 = scmp.ne.s32.totalorder %s25, %s27
    %p31 = scmp.eq.s32.totalorder %s17, 0
    %p32 = por %p30, %p31
    %p33 = scmp.ne.s32.totalorder %s25, %s27
    %p34 = scmp.eq.s32.totalorder %s22, 1
    %p35 = por %p33, %p34
    %p36 = scmp.ne.s32.totalorder %s27, %s28
    %p37 = scmp.eq.s32.totalorder %s22, 0
    %p38 = por %p36, %p37
    %p39 = scmp.ne.s32.totalorder %s27, %s28
    %p40 = scmp.eq.s32.totalorder %s23, 1
    %p41 = por %p39, %p40
    %p43 = scmp.ne.s32.totalorder %s28, %s42
    %p44 = scmp.eq.s32.totalorder %s23, 0
    %p45 = por %p43, %p44
    %s47 = sadd.s32 %s46, 1
    %p50 = scmp.eq.s32.totalorder %s17, 1
    %p51 = scmp.ne.s32.totalorder %s46, %s48
    %p52 = scmp.eq.s32.totalorder %s17, 0
    %p53 = por %p51, %p52
    %p54 = scmp.ne.s32.totalorder %s46, %s48
    %p55 = scmp.eq.s32.totalorder %s22, 1
    %p56 = por %p54, %p55
    %p57 = scmp.ne.s32.totalorder %s48, %s49
    %p58 = scmp.eq.s32.totalorder %s22, 0
    %p59 = por %p57, %p58
    %p60 = scmp.ne.s32.totalorder %s48, %s49
    %p61 = scmp.eq.s32.totalorder %s23, 1
    %p62 = por %p60, %p61
    %p64 = scmp.ne.s32.totalorder %s49, %s63
    %p65 = scmp.eq.s32.totalorder %s23, 0
    %p66 = por %p64, %p65
    %s67 = ssub.s32 %s17, %s24
    %p68 = scmp.eq.s32.totalorder %s67, 0
    %s70 = sadd.s32 %s69, 1
    %s71 = scalar_select %p68, %s69, %s70
    %p74 = pneg %p68
    %p75 = scmp.eq.s32.totalorder %s17, 1
    %p76 = por %p74, %p75
    %p77 = scmp.ne.s32.totalorder %s69, %s72
    %p78 = scmp.eq.s32.totalorder %s17, 0
    %p79 = por %p77, %p78
    %p80 = scmp.ne.s32.totalorder %s69, %s72
    %p81 = scmp.eq.s32.totalorder %s22, 1
    %p82 = por %p80, %p81
    %p83 = scmp.ne.s32.totalorder %s72, %s73
    %p84 = scmp.eq.s32.totalorder %s22, 0
    %p85 = por %p83, %p84
    %p86 = scmp.ne.s32.totalorder %s72, %s73
    %p87 = scmp.eq.s32.totalorder %s23, 1
    %p88 = por %p86, %p87
    %p90 = scmp.ne.s32.totalorder %s73, %s89
    %p91 = scmp.eq.s32.totalorder %s23, 0
    %p92 = por %p90, %p91
    %s93 = ssub.s32 %s17, %s24
    %p94 = scmp.eq.s32.totalorder %s93, 0
    %s96 = sadd.s32 %s95, 1
    %s97 = scalar_select %p94, %s95, %s96
    %p100 = pneg %p94
    %p101 = scmp.eq.s32.totalorder %s17, 1
    %p102 = por %p100, %p101
    %p103 = scmp.ne.s32.totalorder %s95, %s98
    %p104 = scmp.eq.s32.totalorder %s17, 0
    %p105 = por %p103, %p104
    %p106 = scmp.ne.s32.totalorder %s95, %s98
    %p107 = scmp.eq.s32.totalorder %s22, 1
    %p108 = por %p106, %p107
    %p109 = scmp.ne.s32.totalorder %s98, %s99
    %p110 = scmp.eq.s32.totalorder %s22, 0
    %p111 = por %p109, %p110
    %p112 = scmp.ne.s32.totalorder %s98, %s99
    %p113 = scmp.eq.s32.totalorder %s23, 1
    %p114 = por %p112, %p113
    %p116 = scmp.ne.s32.totalorder %s99, %s115
    %p117 = scmp.eq.s32.totalorder %s23, 0
    %p118 = por %p116, %p117
    %s120 = sadd.s32 %s119, 1
    %p123 = scmp.eq.s32.totalorder %s17, 1
    %p124 = scmp.ne.s32.totalorder %s119, %s121
    %p125 = scmp.eq.s32.totalorder %s17, 0
    %p126 = por %p124, %p125
    %p127 = scmp.ne.s32.totalorder %s119, %s121
    %p128 = scmp.eq.s32.totalorder %s22, 1
    %p129 = por %p127, %p128
    %p130 = scmp.ne.s32.totalorder %s121, %s122
    %p131 = scmp.eq.s32.totalorder %s22, 0
    %p132 = por %p130, %p131
    %p133 = scmp.ne.s32.totalorder %s121, %s122
    %p134 = scmp.eq.s32.totalorder %s23, 1
    %p135 = por %p133, %p134
    %p137 = scmp.ne.s32.totalorder %s122, %s136
    %p138 = scmp.eq.s32.totalorder %s23, 0
    %p139 = por %p137, %p138
    %p140 = scmp.le.s32.totalorder 1, %s17
    %p141 = scmp.lt.s32.totalorder %s17, 3
    %p142 = pnand %p140, %p141
    %p143 = pneg %p142
    // Predicated region
    $region9: #{_gradient_descent_impl.1} parent=5 // pred_check
      _
    $region10: #{_gradient_descent_impl.1} parent=5 // pred_check_branch
      %145 = sbr.rel (%p142) target = $region12
    $region11: #{_gradient_descent_impl.1} parent=5 // pred_region
      %s146 = ssub.s32 %s17, 1
      // Predicated region
      $region13: #{_gradient_descent_impl.1} parent=11 // pred_check
        %p147 = pneg %p38
      $region14: #{_gradient_descent_impl.1} parent=11 // pred_check_branch
        %149 = sbr.rel (%p147) target = $region16
      $region15: #{_gradient_descent_impl.1} parent=11 // pred_region
        _
      $region16: #{_gradient_descent_impl.1} parent=11 // pred_fallthru
        _
      // Predicated region
      $region17: #{_gradient_descent_impl.1} parent=11 // pred_check
        %p150 = pneg %p59
      $region18: #{_gradient_descent_impl.1} parent=11 // pred_check_branch
        %152 = sbr.rel (%p150) target = $region20
      $region19: #{_gradient_descent_impl.1} parent=11 // pred_region
        _
      $region20: #{_gradient_descent_impl.1} parent=11 // pred_fallthru
        _
    $region12: #{_gradient_descent_impl.1} parent=5 // pred_fallthru
      _
    %p153 = scmp.lt.s32.totalorder %s17, 2
    // Predicated region
    $region21: #{_gradient_descent_impl.1} parent=5 // pred_check
      %p154 = pneg %p153
    $region22: #{_gradient_descent_impl.1} parent=5 // pred_check_branch
      %156 = sbr.rel (%p154) target = $region24
    $region23: #{_gradient_descent_impl.1} parent=5 // pred_region
      // Predicated region
      $region25: #{_gradient_descent_impl.1} parent=23 // pred_check
        %p157 = pneg %p79
      $region26: #{_gradient_descent_impl.1} parent=23 // pred_check_branch
        %159 = sbr.rel (%p157) target = $region28
      $region27: #{_gradient_descent_impl.1} parent=23 // pred_region
        %p160 = scmp.lt.s32.totalorder %s17, 1
        %s161 = scalar_select %p160, %s17, 1
        %s162 = smul.addr %s161, 1024
        %s163 = smul.addr %s162, 4
        %s164 = scalar_lea.vmem %s3, %s163
      $region28: #{_gradient_descent_impl.1} parent=23 // pred_fallthru
        _
      // Predicated region
      $region29: #{_gradient_descent_impl.1} parent=23 // pred_check
        %p165 = pneg %p105
      $region30: #{_gradient_descent_impl.1} parent=23 // pred_check_branch
        %167 = sbr.rel (%p165) target = $region32
      $region31: #{_gradient_descent_impl.1} parent=23 // pred_region
        %p168 = scmp.lt.s32.totalorder %s17, 1
        %s169 = scalar_select %p168, %s17, 1
        %s170 = smul.addr %s169, 8
        %s171 = scalar_lea.vmem %s4, %s170
      $region32: #{_gradient_descent_impl.1} parent=23 // pred_fallthru
        _
    $region24: #{_gradient_descent_impl.1} parent=5 // pred_fallthru
      _
    %p172 = scmp.le.s32.totalorder 1, %s17
    %p173 = scmp.lt.s32.totalorder %s17, 3
    %p174 = pnand %p172, %p173
    %p175 = pneg %p174
    // Predicated region
    $region33: #{_gradient_descent_impl.1} parent=5 // pred_check
      _
    $region34: #{_gradient_descent_impl.1} parent=5 // pred_check_branch
      %177 = sbr.rel (%p174) target = $region36
    $region35: #{_gradient_descent_impl.1} parent=5 // pred_region
      %s178 = ssub.s32 %s17, 1
      %p179 = pneg %p38
      %p180 = pneg %p35
      %p181 = pneg %p59
      %p182 = pneg %p56
      %p183 = scmp.lt.s32.totalorder %s22, 1
      %s184 = scalar_select %p183, %s22, 1
      %s185 = smul.addr %s184, 1024
      %s186 = smul.addr %s185, 4
      %s187 = scalar_lea.vmem %s3, %s186
      %p188 = pneg %p85
      %p189 = pneg %p82
      %p190 = scmp.lt.s32.totalorder %s22, 1
      %s191 = scalar_select %p190, %s22, 1
      %s192 = smul.addr %s191, 8
      %s193 = scalar_lea.vmem %s4, %s192
      %p194 = pneg %p111
      %p195 = pneg %p108
      %p196 = pneg %p132
      %p197 = pneg %p129
      %p198 = scmp.lt.s32.totalorder %s22, 1
      %s199 = scalar_select %p198, %s22, 1
      %s200 = smul.addr %s199, 1024
      %s201 = smul.addr %s200, 4
      %s202 = scalar_lea.vmem %s3, %s201
      %p203 = scmp.lt.s32.totalorder %s22, 1
      %s204 = scalar_select %p203, %s22, 1
      %s205 = smul.addr %s204, 8
      %s206 = scalar_lea.vmem %s4, %s205
      %p207 = scmp.eq.s32.totalorder %s22, 0
      // Predicated region
      $region37: #{_gradient_descent_impl.1} parent=35 // pred_check
        %p208 = pneg %p207
      $region38: #{_gradient_descent_impl.1} parent=35 // pred_check_branch
        %210 = sbr.rel (%p208) target = $region40
      $region39: #{_gradient_descent_impl.1} parent=35 // pred_region
        %v211 = vld [vmem:[%s1] sm:$0xff]
        %v212 = vld [vmem:[%s1 + $0x8] sm:$0xff]
        %v213 = vld [vmem:[%s1 + $0x10] sm:$0xff]
        %v214 = vld [vmem:[%s1 + $0x18] sm:$0xff]
        %v215 = vpack.c.bf16 %v211, %v211
        %v216 = vpack.c.bf16 %v212, %v212
        %v217 = vpack.c.bf16 %v213, %v213
        %v218 = vpack.c.bf16 %v214, %v214
        %v219 = vld [vmem:[%s2] sm:$0xff]
        %v220 = vld [vmem:[%s2 + $0x8] sm:$0xff]
        %v221 = vld [vmem:[%s2 + $0x10] sm:$0xff]
        %v222 = vld [vmem:[%s2 + $0x18] sm:$0xff]
        %v223 = vld [vmem:[%s2 + $0x20] sm:$0xff]
        %v224 = vld [vmem:[%s2 + $0x28] sm:$0xff]
        %v225 = vld [vmem:[%s2 + $0x30] sm:$0xff]
        %v226 = vld [vmem:[%s2 + $0x38] sm:$0xff]
        %v227 = vld [vmem:[%s2 + $0x40] sm:$0xff]
        %v228 = vld [vmem:[%s2 + $0x48] sm:$0xff]
        %v229 = vld [vmem:[%s2 + $0x50] sm:$0xff]
        %v230 = vld [vmem:[%s2 + $0x58] sm:$0xff]
        %v231 = vld [vmem:[%s2 + $0x60] sm:$0xff]
        %v232 = vld [vmem:[%s2 + $0x68] sm:$0xff]
        %v233 = vld [vmem:[%s2 + $0x70] sm:$0xff]
        %v234 = vld [vmem:[%s2 + $0x78] sm:$0xff]
        %v235 = vld [vmem:[%s2 + $0x80] sm:$0xff]
        %v236 = vld [vmem:[%s2 + $0x88] sm:$0xff]
        %v237 = vld [vmem:[%s2 + $0x90] sm:$0xff]
        %v238 = vld [vmem:[%s2 + $0x98] sm:$0xff]
        %v239 = vld [vmem:[%s2 + $0xa0] sm:$0xff]
        %v240 = vld [vmem:[%s2 + $0xa8] sm:$0xff]
        %v241 = vld [vmem:[%s2 + $0xb0] sm:$0xff]
        %v242 = vld [vmem:[%s2 + $0xb8] sm:$0xff]
        %v243 = vld [vmem:[%s2 + $0xc0] sm:$0xff]
        %v244 = vld [vmem:[%s2 + $0xc8] sm:$0xff]
        %v245 = vld [vmem:[%s2 + $0xd0] sm:$0xff]
        %v246 = vld [vmem:[%s2 + $0xd8] sm:$0xff]
        %v247 = vld [vmem:[%s2 + $0xe0] sm:$0xff]
        %v248 = vld [vmem:[%s2 + $0xe8] sm:$0xff]
        %v249 = vld [vmem:[%s2 + $0xf0] sm:$0xff]
        %v250 = vld [vmem:[%s2 + $0xf8] sm:$0xff]
        %v251 = vld [vmem:[%s2 + $0x100] sm:$0xff]
        %v252 = vld [vmem:[%s2 + $0x108] sm:$0xff]
        %v253 = vld [vmem:[%s2 + $0x110] sm:$0xff]
        %v254 = vld [vmem:[%s2 + $0x118] sm:$0xff]
        %v255 = vld [vmem:[%s2 + $0x120] sm:$0xff]
        %v256 = vld [vmem:[%s2 + $0x128] sm:$0xff]
        %v257 = vld [vmem:[%s2 + $0x130] sm:$0xff]
        %v258 = vld [vmem:[%s2 + $0x138] sm:$0xff]
        %v259 = vld [vmem:[%s2 + $0x140] sm:$0xff]
        %v260 = vld [vmem:[%s2 + $0x148] sm:$0xff]
        %v261 = vld [vmem:[%s2 + $0x150] sm:$0xff]
        %v262 = vld [vmem:[%s2 + $0x158] sm:$0xff]
        %v263 = vld [vmem:[%s2 + $0x160] sm:$0xff]
        %v264 = vld [vmem:[%s2 + $0x168] sm:$0xff]
        %v265 = vld [vmem:[%s2 + $0x170] sm:$0xff]
        %v266 = vld [vmem:[%s2 + $0x178] sm:$0xff]
        %v267 = vld [vmem:[%s2 + $0x180] sm:$0xff]
        %v268 = vld [vmem:[%s2 + $0x188] sm:$0xff]
        %v269 = vld [vmem:[%s2 + $0x190] sm:$0xff]
        %v270 = vld [vmem:[%s2 + $0x198] sm:$0xff]
        %v271 = vld [vmem:[%s2 + $0x1a0] sm:$0xff]
        %v272 = vld [vmem:[%s2 + $0x1a8] sm:$0xff]
        %v273 = vld [vmem:[%s2 + $0x1b0] sm:$0xff]
        %v274 = vld [vmem:[%s2 + $0x1b8] sm:$0xff]
        %v275 = vld [vmem:[%s2 + $0x1c0] sm:$0xff]
        %v276 = vld [vmem:[%s2 + $0x1c8] sm:$0xff]
        %v277 = vld [vmem:[%s2 + $0x1d0] sm:$0xff]
        %v278 = vld [vmem:[%s2 + $0x1d8] sm:$0xff]
        %v279 = vld [vmem:[%s2 + $0x1e0] sm:$0xff]
        %v280 = vld [vmem:[%s2 + $0x1e8] sm:$0xff]
        %v281 = vld [vmem:[%s2 + $0x1f0] sm:$0xff]
        %v282 = vld [vmem:[%s2 + $0x1f8] sm:$0xff]
        %v283 = vld [vmem:[%s2 + $0x200] sm:$0xff]
        %v284 = vld [vmem:[%s2 + $0x208] sm:$0xff]
        %v285 = vld [vmem:[%s2 + $0x210] sm:$0xff]
        %v286 = vld [vmem:[%s2 + $0x218] sm:$0xff]
        %v287 = vld [vmem:[%s2 + $0x220] sm:$0xff]
        %v288 = vld [vmem:[%s2 + $0x228] sm:$0xff]
        %v289 = vld [vmem:[%s2 + $0x230] sm:$0xff]
        %v290 = vld [vmem:[%s2 + $0x238] sm:$0xff]
        %v291 = vld [vmem:[%s2 + $0x240] sm:$0xff]
        %v292 = vld [vmem:[%s2 + $0x248] sm:$0xff]
        %v293 = vld [vmem:[%s2 + $0x250] sm:$0xff]
        %v294 = vld [vmem:[%s2 + $0x258] sm:$0xff]
        %v295 = vld [vmem:[%s2 + $0x260] sm:$0xff]
        %v296 = vld [vmem:[%s2 + $0x268] sm:$0xff]
        %v297 = vld [vmem:[%s2 + $0x270] sm:$0xff]
        %v298 = vld [vmem:[%s2 + $0x278] sm:$0xff]
        %v299 = vld [vmem:[%s2 + $0x280] sm:$0xff]
        %v300 = vld [vmem:[%s2 + $0x288] sm:$0xff]
        %v301 = vld [vmem:[%s2 + $0x290] sm:$0xff]
        %v302 = vld [vmem:[%s2 + $0x298] sm:$0xff]
        %v303 = vld [vmem:[%s2 + $0x2a0] sm:$0xff]
        %v304 = vld [vmem:[%s2 + $0x2a8] sm:$0xff]
        %v305 = vld [vmem:[%s2 + $0x2b0] sm:$0xff]
        %v306 = vld [vmem:[%s2 + $0x2b8] sm:$0xff]
        %v307 = vld [vmem:[%s2 + $0x2c0] sm:$0xff]
        %v308 = vld [vmem:[%s2 + $0x2c8] sm:$0xff]
        %v309 = vld [vmem:[%s2 + $0x2d0] sm:$0xff]
        %v310 = vld [vmem:[%s2 + $0x2d8] sm:$0xff]
        %v311 = vld [vmem:[%s2 + $0x2e0] sm:$0xff]
        %v312 = vld [vmem:[%s2 + $0x2e8] sm:$0xff]
        %v313 = vld [vmem:[%s2 + $0x2f0] sm:$0xff]
        %v314 = vld [vmem:[%s2 + $0x2f8] sm:$0xff]
        %v315 = vld [vmem:[%s2 + $0x300] sm:$0xff]
        %v316 = vld [vmem:[%s2 + $0x308] sm:$0xff]
        %v317 = vld [vmem:[%s2 + $0x310] sm:$0xff]
        %v318 = vld [vmem:[%s2 + $0x318] sm:$0xff]
        %v319 = vld [vmem:[%s2 + $0x320] sm:$0xff]
        %v320 = vld [vmem:[%s2 + $0x328] sm:$0xff]
        %v321 = vld [vmem:[%s2 + $0x330] sm:$0xff]
        %v322 = vld [vmem:[%s2 + $0x338] sm:$0xff]
        %v323 = vld [vmem:[%s2 + $0x340] sm:$0xff]
        %v324 = vld [vmem:[%s2 + $0x348] sm:$0xff]
        %v325 = vld [vmem:[%s2 + $0x350] sm:$0xff]
        %v326 = vld [vmem:[%s2 + $0x358] sm:$0xff]
        %v327 = vld [vmem:[%s2 + $0x360] sm:$0xff]
        %v328 = vld [vmem:[%s2 + $0x368] sm:$0xff]
        %v329 = vld [vmem:[%s2 + $0x370] sm:$0xff]
        %v330 = vld [vmem:[%s2 + $0x378] sm:$0xff]
        %v331 = vld [vmem:[%s2 + $0x380] sm:$0xff]
        %v332 = vld [vmem:[%s2 + $0x388] sm:$0xff]
        %v333 = vld [vmem:[%s2 + $0x390] sm:$0xff]
        %v334 = vld [vmem:[%s2 + $0x398] sm:$0xff]
        %v335 = vld [vmem:[%s2 + $0x3a0] sm:$0xff]
        %v336 = vld [vmem:[%s2 + $0x3a8] sm:$0xff]
        %v337 = vld [vmem:[%s2 + $0x3b0] sm:$0xff]
        %v338 = vld [vmem:[%s2 + $0x3b8] sm:$0xff]
        %v339 = vld [vmem:[%s2 + $0x3c0] sm:$0xff]
        %v340 = vld [vmem:[%s2 + $0x3c8] sm:$0xff]
        %v341 = vld [vmem:[%s2 + $0x3d0] sm:$0xff]
        %v342 = vld [vmem:[%s2 + $0x3d8] sm:$0xff]
        %v343 = vld [vmem:[%s2 + $0x3e0] sm:$0xff]
        %v344 = vld [vmem:[%s2 + $0x3e8] sm:$0xff]
        %v345 = vld [vmem:[%s2 + $0x3f0] sm:$0xff]
        %v346 = vld [vmem:[%s2 + $0x3f8] sm:$0xff]
        %v347 = vld [vmem:[%s2 + $0x400] sm:$0xff]
        %v348 = vld [vmem:[%s2 + $0x408] sm:$0xff]
        %v349 = vld [vmem:[%s2 + $0x410] sm:$0xff]
        %v350 = vld [vmem:[%s2 + $0x418] sm:$0xff]
        %v351 = vld [vmem:[%s2 + $0x420] sm:$0xff]
        %v352 = vld [vmem:[%s2 + $0x428] sm:$0xff]
        %v353 = vld [vmem:[%s2 + $0x430] sm:$0xff]
        %v354 = vld [vmem:[%s2 + $0x438] sm:$0xff]
        %v355 = vld [vmem:[%s2 + $0x440] sm:$0xff]
        %v356 = vld [vmem:[%s2 + $0x448] sm:$0xff]
        %v357 = vld [vmem:[%s2 + $0x450] sm:$0xff]
        %v358 = vld [vmem:[%s2 + $0x458] sm:$0xff]
        %v359 = vld [vmem:[%s2 + $0x460] sm:$0xff]
        %v360 = vld [vmem:[%s2 + $0x468] sm:$0xff]
        %v361 = vld [vmem:[%s2 + $0x470] sm:$0xff]
        %v362 = vld [vmem:[%s2 + $0x478] sm:$0xff]
        %v363 = vld [vmem:[%s2 + $0x480] sm:$0xff]
        %v364 = vld [vmem:[%s2 + $0x488] sm:$0xff]
        %v365 = vld [vmem:[%s2 + $0x490] sm:$0xff]
        %v366 = vld [vmem:[%s2 + $0x498] sm:$0xff]
        %v367 = vld [vmem:[%s2 + $0x4a0] sm:$0xff]
        %v368 = vld [vmem:[%s2 + $0x4a8] sm:$0xff]
        %v369 = vld [vmem:[%s2 + $0x4b0] sm:$0xff]
        %v370 = vld [vmem:[%s2 + $0x4b8] sm:$0xff]
        %v371 = vld [vmem:[%s2 + $0x4c0] sm:$0xff]
        %v372 = vld [vmem:[%s2 + $0x4c8] sm:$0xff]
        %v373 = vld [vmem:[%s2 + $0x4d0] sm:$0xff]
        %v374 = vld [vmem:[%s2 + $0x4d8] sm:$0xff]
        %v375 = vld [vmem:[%s2 + $0x4e0] sm:$0xff]
        %v376 = vld [vmem:[%s2 + $0x4e8] sm:$0xff]
        %v377 = vld [vmem:[%s2 + $0x4f0] sm:$0xff]
        %v378 = vld [vmem:[%s2 + $0x4f8] sm:$0xff]
        %v379 = vld [vmem:[%s2 + $0x500] sm:$0xff]
        %v380 = vld [vmem:[%s2 + $0x508] sm:$0xff]
        %v381 = vld [vmem:[%s2 + $0x510] sm:$0xff]
        %v382 = vld [vmem:[%s2 + $0x518] sm:$0xff]
        %v383 = vld [vmem:[%s2 + $0x520] sm:$0xff]
        %v384 = vld [vmem:[%s2 + $0x528] sm:$0xff]
        %v385 = vld [vmem:[%s2 + $0x530] sm:$0xff]
        %v386 = vld [vmem:[%s2 + $0x538] sm:$0xff]
        %v387 = vld [vmem:[%s2 + $0x540] sm:$0xff]
        %v388 = vld [vmem:[%s2 + $0x548] sm:$0xff]
        %v389 = vld [vmem:[%s2 + $0x550] sm:$0xff]
        %v390 = vld [vmem:[%s2 + $0x558] sm:$0xff]
        %v391 = vld [vmem:[%s2 + $0x560] sm:$0xff]
        %v392 = vld [vmem:[%s2 + $0x568] sm:$0xff]
        %v393 = vld [vmem:[%s2 + $0x570] sm:$0xff]
        %v394 = vld [vmem:[%s2 + $0x578] sm:$0xff]
        %v395 = vld [vmem:[%s2 + $0x580] sm:$0xff]
        %v396 = vld [vmem:[%s2 + $0x588] sm:$0xff]
        %v397 = vld [vmem:[%s2 + $0x590] sm:$0xff]
        %v398 = vld [vmem:[%s2 + $0x598] sm:$0xff]
        %v399 = vld [vmem:[%s2 + $0x5a0] sm:$0xff]
        %v400 = vld [vmem:[%s2 + $0x5a8] sm:$0xff]
        %v401 = vld [vmem:[%s2 + $0x5b0] sm:$0xff]
        %v402 = vld [vmem:[%s2 + $0x5b8] sm:$0xff]
        %v403 = vld [vmem:[%s2 + $0x5c0] sm:$0xff]
        %v404 = vld [vmem:[%s2 + $0x5c8] sm:$0xff]
        %v405 = vld [vmem:[%s2 + $0x5d0] sm:$0xff]
        %v406 = vld [vmem:[%s2 + $0x5d8] sm:$0xff]
        %v407 = vld [vmem:[%s2 + $0x5e0] sm:$0xff]
        %v408 = vld [vmem:[%s2 + $0x5e8] sm:$0xff]
        %v409 = vld [vmem:[%s2 + $0x5f0] sm:$0xff]
        %v410 = vld [vmem:[%s2 + $0x5f8] sm:$0xff]
        %v411 = vld [vmem:[%s2 + $0x600] sm:$0xff]
        %v412 = vld [vmem:[%s2 + $0x608] sm:$0xff]
        %v413 = vld [vmem:[%s2 + $0x610] sm:$0xff]
        %v414 = vld [vmem:[%s2 + $0x618] sm:$0xff]
        %v415 = vld [vmem:[%s2 + $0x620] sm:$0xff]
        %v416 = vld [vmem:[%s2 + $0x628] sm:$0xff]
        %v417 = vld [vmem:[%s2 + $0x630] sm:$0xff]
        %v418 = vld [vmem:[%s2 + $0x638] sm:$0xff]
        %v419 = vld [vmem:[%s2 + $0x640] sm:$0xff]
        %v420 = vld [vmem:[%s2 + $0x648] sm:$0xff]
        %v421 = vld [vmem:[%s2 + $0x650] sm:$0xff]
        %v422 = vld [vmem:[%s2 + $0x658] sm:$0xff]
        %v423 = vld [vmem:[%s2 + $0x660] sm:$0xff]
        %v424 = vld [vmem:[%s2 + $0x668] sm:$0xff]
        %v425 = vld [vmem:[%s2 + $0x670] sm:$0xff]
        %v426 = vld [vmem:[%s2 + $0x678] sm:$0xff]
        %v427 = vld [vmem:[%s2 + $0x680] sm:$0xff]
        %v428 = vld [vmem:[%s2 + $0x688] sm:$0xff]
        %v429 = vld [vmem:[%s2 + $0x690] sm:$0xff]
        %v430 = vld [vmem:[%s2 + $0x698] sm:$0xff]
        %v431 = vld [vmem:[%s2 + $0x6a0] sm:$0xff]
        %v432 = vld [vmem:[%s2 + $0x6a8] sm:$0xff]
        %v433 = vld [vmem:[%s2 + $0x6b0] sm:$0xff]
        %v434 = vld [vmem:[%s2 + $0x6b8] sm:$0xff]
        %v435 = vld [vmem:[%s2 + $0x6c0] sm:$0xff]
        %v436 = vld [vmem:[%s2 + $0x6c8] sm:$0xff]
        %v437 = vld [vmem:[%s2 + $0x6d0] sm:$0xff]
        %v438 = vld [vmem:[%s2 + $0x6d8] sm:$0xff]
        %v439 = vld [vmem:[%s2 + $0x6e0] sm:$0xff]
        %v440 = vld [vmem:[%s2 + $0x6e8] sm:$0xff]
        %v441 = vld [vmem:[%s2 + $0x6f0] sm:$0xff]
        %v442 = vld [vmem:[%s2 + $0x6f8] sm:$0xff]
        %v443 = vld [vmem:[%s2 + $0x700] sm:$0xff]
        %v444 = vld [vmem:[%s2 + $0x708] sm:$0xff]
        %v445 = vld [vmem:[%s2 + $0x710] sm:$0xff]
        %v446 = vld [vmem:[%s2 + $0x718] sm:$0xff]
        %v447 = vld [vmem:[%s2 + $0x720] sm:$0xff]
        %v448 = vld [vmem:[%s2 + $0x728] sm:$0xff]
        %v449 = vld [vmem:[%s2 + $0x730] sm:$0xff]
        %v450 = vld [vmem:[%s2 + $0x738] sm:$0xff]
        %v451 = vld [vmem:[%s2 + $0x740] sm:$0xff]
        %v452 = vld [vmem:[%s2 + $0x748] sm:$0xff]
        %v453 = vld [vmem:[%s2 + $0x750] sm:$0xff]
        %v454 = vld [vmem:[%s2 + $0x758] sm:$0xff]
        %v455 = vld [vmem:[%s2 + $0x760] sm:$0xff]
        %v456 = vld [vmem:[%s2 + $0x768] sm:$0xff]
        %v457 = vld [vmem:[%s2 + $0x770] sm:$0xff]
        %v458 = vld [vmem:[%s2 + $0x778] sm:$0xff]
        %v459 = vld [vmem:[%s2 + $0x780] sm:$0xff]
        %v460 = vld [vmem:[%s2 + $0x788] sm:$0xff]
        %v461 = vld [vmem:[%s2 + $0x790] sm:$0xff]
        %v462 = vld [vmem:[%s2 + $0x798] sm:$0xff]
        %v463 = vld [vmem:[%s2 + $0x7a0] sm:$0xff]
        %v464 = vld [vmem:[%s2 + $0x7a8] sm:$0xff]
        %v465 = vld [vmem:[%s2 + $0x7b0] sm:$0xff]
        %v466 = vld [vmem:[%s2 + $0x7b8] sm:$0xff]
        %v467 = vld [vmem:[%s2 + $0x7c0] sm:$0xff]
        %v468 = vld [vmem:[%s2 + $0x7c8] sm:$0xff]
        %v469 = vld [vmem:[%s2 + $0x7d0] sm:$0xff]
        %v470 = vld [vmem:[%s2 + $0x7d8] sm:$0xff]
        %v471 = vld [vmem:[%s2 + $0x7e0] sm:$0xff]
        %v472 = vld [vmem:[%s2 + $0x7e8] sm:$0xff]
        %v473 = vld [vmem:[%s2 + $0x7f0] sm:$0xff]
        %v474 = vld [vmem:[%s2 + $0x7f8] sm:$0xff]
        %v731 = vunpack.c.l.b16 %v219
        %v732 = vunpack.c.h.b16 %v219
        %v733 = vunpack.c.l.b16 %v220
        %v734 = vunpack.c.h.b16 %v220
        %v735 = vunpack.c.l.b16 %v221
        %v736 = vunpack.c.h.b16 %v221
        %v737 = vunpack.c.l.b16 %v222
        %v738 = vunpack.c.h.b16 %v222
        %v739 = vunpack.c.l.b16 %v223
        %v740 = vunpack.c.h.b16 %v223
        %v741 = vunpack.c.l.b16 %v224
        %v742 = vunpack.c.h.b16 %v224
        %v743 = vunpack.c.l.b16 %v225
        %v744 = vunpack.c.h.b16 %v225
        %v745 = vunpack.c.l.b16 %v226
        %v746 = vunpack.c.h.b16 %v226
        %v747 = vunpack.c.l.b16 %v227
        %v748 = vunpack.c.h.b16 %v227
        %v749 = vunpack.c.l.b16 %v228
        %v750 = vunpack.c.h.b16 %v228
        %v751 = vunpack.c.l.b16 %v229
        %v752 = vunpack.c.h.b16 %v229
        %v753 = vunpack.c.l.b16 %v230
        %v754 = vunpack.c.h.b16 %v230
        %v755 = vunpack.c.l.b16 %v231
        %v756 = vunpack.c.h.b16 %v231
        %v757 = vunpack.c.l.b16 %v232
        %v758 = vunpack.c.h.b16 %v232
        %v759 = vunpack.c.l.b16 %v233
        %v760 = vunpack.c.h.b16 %v233
        %v761 = vunpack.c.l.b16 %v234
        %v762 = vunpack.c.h.b16 %v234
        %v763 = vunpack.c.l.b16 %v235
        %v764 = vunpack.c.h.b16 %v235
        %v765 = vunpack.c.l.b16 %v236
        %v766 = vunpack.c.h.b16 %v236
        %v767 = vunpack.c.l.b16 %v237
        %v768 = vunpack.c.h.b16 %v237
        %v769 = vunpack.c.l.b16 %v238
        %v770 = vunpack.c.h.b16 %v238
        %v771 = vunpack.c.l.b16 %v239
        %v772 = vunpack.c.h.b16 %v239
        %v773 = vunpack.c.l.b16 %v240
        %v774 = vunpack.c.h.b16 %v240
        %v775 = vunpack.c.l.b16 %v241
        %v776 = vunpack.c.h.b16 %v241
        %v777 = vunpack.c.l.b16 %v242
        %v778 = vunpack.c.h.b16 %v242
        %v779 = vunpack.c.l.b16 %v243
        %v780 = vunpack.c.h.b16 %v243
        %v781 = vunpack.c.l.b16 %v244
        %v782 = vunpack.c.h.b16 %v244
        %v783 = vunpack.c.l.b16 %v245
        %v784 = vunpack.c.h.b16 %v245
        %v785 = vunpack.c.l.b16 %v246
        %v786 = vunpack.c.h.b16 %v246
        %v787 = vunpack.c.l.b16 %v247
        %v788 = vunpack.c.h.b16 %v247
        %v789 = vunpack.c.l.b16 %v248
        %v790 = vunpack.c.h.b16 %v248
        %v791 = vunpack.c.l.b16 %v249
        %v792 = vunpack.c.h.b16 %v249
        %v793 = vunpack.c.l.b16 %v250
        %v794 = vunpack.c.h.b16 %v250
        %v795 = vunpack.c.l.b16 %v251
        %v796 = vunpack.c.h.b16 %v251
        %v797 = vunpack.c.l.b16 %v252
        %v798 = vunpack.c.h.b16 %v252
        %v799 = vunpack.c.l.b16 %v253
        %v800 = vunpack.c.h.b16 %v253
        %v801 = vunpack.c.l.b16 %v254
        %v802 = vunpack.c.h.b16 %v254
        %v803 = vunpack.c.l.b16 %v255
        %v804 = vunpack.c.h.b16 %v255
        %v805 = vunpack.c.l.b16 %v256
        %v806 = vunpack.c.h.b16 %v256
        %v807 = vunpack.c.l.b16 %v257
        %v808 = vunpack.c.h.b16 %v257
        %v809 = vunpack.c.l.b16 %v258
        %v810 = vunpack.c.h.b16 %v258
        %v811 = vunpack.c.l.b16 %v259
        %v812 = vunpack.c.h.b16 %v259
        %v813 = vunpack.c.l.b16 %v260
        %v814 = vunpack.c.h.b16 %v260
        %v815 = vunpack.c.l.b16 %v261
        %v816 = vunpack.c.h.b16 %v261
        %v817 = vunpack.c.l.b16 %v262
        %v818 = vunpack.c.h.b16 %v262
        %v819 = vunpack.c.l.b16 %v263
        %v820 = vunpack.c.h.b16 %v263
        %v821 = vunpack.c.l.b16 %v264
        %v822 = vunpack.c.h.b16 %v264
        %v823 = vunpack.c.l.b16 %v265
        %v824 = vunpack.c.h.b16 %v265
        %v825 = vunpack.c.l.b16 %v266
        %v826 = vunpack.c.h.b16 %v266
        %v827 = vunpack.c.l.b16 %v267
        %v828 = vunpack.c.h.b16 %v267
        %v829 = vunpack.c.l.b16 %v268
        %v830 = vunpack.c.h.b16 %v268
        %v831 = vunpack.c.l.b16 %v269
        %v832 = vunpack.c.h.b16 %v269
        %v833 = vunpack.c.l.b16 %v270
        %v834 = vunpack.c.h.b16 %v270
        %v835 = vunpack.c.l.b16 %v271
        %v836 = vunpack.c.h.b16 %v271
        %v837 = vunpack.c.l.b16 %v272
        %v838 = vunpack.c.h.b16 %v272
        %v839 = vunpack.c.l.b16 %v273
        %v840 = vunpack.c.h.b16 %v273
        %v841 = vunpack.c.l.b16 %v274
        %v842 = vunpack.c.h.b16 %v274
        %v843 = vunpack.c.l.b16 %v275
        %v844 = vunpack.c.h.b16 %v275
        %v845 = vunpack.c.l.b16 %v276
        %v846 = vunpack.c.h.b16 %v276
        %v847 = vunpack.c.l.b16 %v277
        %v848 = vunpack.c.h.b16 %v277
        %v849 = vunpack.c.l.b16 %v278
        %v850 = vunpack.c.h.b16 %v278
        %v851 = vunpack.c.l.b16 %v279
        %v852 = vunpack.c.h.b16 %v279
        %v853 = vunpack.c.l.b16 %v280
        %v854 = vunpack.c.h.b16 %v280
        %v855 = vunpack.c.l.b16 %v281
        %v856 = vunpack.c.h.b16 %v281
        %v857 = vunpack.c.l.b16 %v282
        %v858 = vunpack.c.h.b16 %v282
        %v859 = vunpack.c.l.b16 %v283
        %v860 = vunpack.c.h.b16 %v283
        %v861 = vunpack.c.l.b16 %v284
        %v862 = vunpack.c.h.b16 %v284
        %v863 = vunpack.c.l.b16 %v285
        %v864 = vunpack.c.h.b16 %v285
        %v865 = vunpack.c.l.b16 %v286
        %v866 = vunpack.c.h.b16 %v286
        %v867 = vunpack.c.l.b16 %v287
        %v868 = vunpack.c.h.b16 %v287
        %v869 = vunpack.c.l.b16 %v288
        %v870 = vunpack.c.h.b16 %v288
        %v871 = vunpack.c.l.b16 %v289
        %v872 = vunpack.c.h.b16 %v289
        %v873 = vunpack.c.l.b16 %v290
        %v874 = vunpack.c.h.b16 %v290
        %v875 = vunpack.c.l.b16 %v291
        %v876 = vunpack.c.h.b16 %v291
        %v877 = vunpack.c.l.b16 %v292
        %v878 = vunpack.c.h.b16 %v292
        %v879 = vunpack.c.l.b16 %v293
        %v880 = vunpack.c.h.b16 %v293
        %v881 = vunpack.c.l.b16 %v294
        %v882 = vunpack.c.h.b16 %v294
        %v883 = vunpack.c.l.b16 %v295
        %v884 = vunpack.c.h.b16 %v295
        %v885 = vunpack.c.l.b16 %v296
        %v886 = vunpack.c.h.b16 %v296
        %v887 = vunpack.c.l.b16 %v297
        %v888 = vunpack.c.h.b16 %v297
        %v889 = vunpack.c.l.b16 %v298
        %v890 = vunpack.c.h.b16 %v298
        %v891 = vunpack.c.l.b16 %v299
        %v892 = vunpack.c.h.b16 %v299
        %v893 = vunpack.c.l.b16 %v300
        %v894 = vunpack.c.h.b16 %v300
        %v895 = vunpack.c.l.b16 %v301
        %v896 = vunpack.c.h.b16 %v301
        %v897 = vunpack.c.l.b16 %v302
        %v898 = vunpack.c.h.b16 %v302
        %v899 = vunpack.c.l.b16 %v303
        %v900 = vunpack.c.h.b16 %v303
        %v901 = vunpack.c.l.b16 %v304
        %v902 = vunpack.c.h.b16 %v304
        %v903 = vunpack.c.l.b16 %v305
        %v904 = vunpack.c.h.b16 %v305
        %v905 = vunpack.c.l.b16 %v306
        %v906 = vunpack.c.h.b16 %v306
        %v907 = vunpack.c.l.b16 %v307
        %v908 = vunpack.c.h.b16 %v307
        %v909 = vunpack.c.l.b16 %v308
        %v910 = vunpack.c.h.b16 %v308
        %v911 = vunpack.c.l.b16 %v309
        %v912 = vunpack.c.h.b16 %v309
        %v913 = vunpack.c.l.b16 %v310
        %v914 = vunpack.c.h.b16 %v310
        %v915 = vunpack.c.l.b16 %v311
        %v916 = vunpack.c.h.b16 %v311
        %v917 = vunpack.c.l.b16 %v312
        %v918 = vunpack.c.h.b16 %v312
        %v919 = vunpack.c.l.b16 %v313
        %v920 = vunpack.c.h.b16 %v313
        %v921 = vunpack.c.l.b16 %v314
        %v922 = vunpack.c.h.b16 %v314
        %v923 = vunpack.c.l.b16 %v315
        %v924 = vunpack.c.h.b16 %v315
        %v925 = vunpack.c.l.b16 %v316
        %v926 = vunpack.c.h.b16 %v316
        %v927 = vunpack.c.l.b16 %v317
        %v928 = vunpack.c.h.b16 %v317
        %v929 = vunpack.c.l.b16 %v318
        %v930 = vunpack.c.h.b16 %v318
        %v931 = vunpack.c.l.b16 %v319
        %v932 = vunpack.c.h.b16 %v319
        %v933 = vunpack.c.l.b16 %v320
        %v934 = vunpack.c.h.b16 %v320
        %v935 = vunpack.c.l.b16 %v321
        %v936 = vunpack.c.h.b16 %v321
        %v937 = vunpack.c.l.b16 %v322
        %v938 = vunpack.c.h.b16 %v322
        %v939 = vunpack.c.l.b16 %v323
        %v940 = vunpack.c.h.b16 %v323
        %v941 = vunpack.c.l.b16 %v324
        %v942 = vunpack.c.h.b16 %v324
        %v943 = vunpack.c.l.b16 %v325
        %v944 = vunpack.c.h.b16 %v325
        %v945 = vunpack.c.l.b16 %v326
        %v946 = vunpack.c.h.b16 %v326
        %v947 = vunpack.c.l.b16 %v327
        %v948 = vunpack.c.h.b16 %v327
        %v949 = vunpack.c.l.b16 %v328
        %v950 = vunpack.c.h.b16 %v328
        %v951 = vunpack.c.l.b16 %v329
        %v952 = vunpack.c.h.b16 %v329
        %v953 = vunpack.c.l.b16 %v330
        %v954 = vunpack.c.h.b16 %v330
        %v955 = vunpack.c.l.b16 %v331
        %v956 = vunpack.c.h.b16 %v331
        %v957 = vunpack.c.l.b16 %v332
        %v958 = vunpack.c.h.b16 %v332
        %v959 = vunpack.c.l.b16 %v333
        %v960 = vunpack.c.h.b16 %v333
        %v961 = vunpack.c.l.b16 %v334
        %v962 = vunpack.c.h.b16 %v334
        %v963 = vunpack.c.l.b16 %v335
        %v964 = vunpack.c.h.b16 %v335
        %v965 = vunpack.c.l.b16 %v336
        %v966 = vunpack.c.h.b16 %v336
        %v967 = vunpack.c.l.b16 %v337
        %v968 = vunpack.c.h.b16 %v337
        %v969 = vunpack.c.l.b16 %v338
        %v970 = vunpack.c.h.b16 %v338
        %v971 = vunpack.c.l.b16 %v339
        %v972 = vunpack.c.h.b16 %v339
        %v973 = vunpack.c.l.b16 %v340
        %v974 = vunpack.c.h.b16 %v340
        %v975 = vunpack.c.l.b16 %v341
        %v976 = vunpack.c.h.b16 %v341
        %v977 = vunpack.c.l.b16 %v342
        %v978 = vunpack.c.h.b16 %v342
        %v979 = vunpack.c.l.b16 %v343
        %v980 = vunpack.c.h.b16 %v343
        %v981 = vunpack.c.l.b16 %v344
        %v982 = vunpack.c.h.b16 %v344
        %v983 = vunpack.c.l.b16 %v345
        %v984 = vunpack.c.h.b16 %v345
        %v985 = vunpack.c.l.b16 %v346
        %v986 = vunpack.c.h.b16 %v346
        %v987 = vunpack.c.l.b16 %v347
        %v988 = vunpack.c.h.b16 %v347
        %v989 = vunpack.c.l.b16 %v348
        %v990 = vunpack.c.h.b16 %v348
        %v991 = vunpack.c.l.b16 %v349
        %v992 = vunpack.c.h.b16 %v349
        %v993 = vunpack.c.l.b16 %v350
        %v994 = vunpack.c.h.b16 %v350
        %v995 = vunpack.c.l.b16 %v351
        %v996 = vunpack.c.h.b16 %v351
        %v997 = vunpack.c.l.b16 %v352
        %v998 = vunpack.c.h.b16 %v352
        %v999 = vunpack.c.l.b16 %v353
        %v1000 = vunpack.c.h.b16 %v353
        %v1001 = vunpack.c.l.b16 %v354
        %v1002 = vunpack.c.h.b16 %v354
        %v1003 = vunpack.c.l.b16 %v355
        %v1004 = vunpack.c.h.b16 %v355
        %v1005 = vunpack.c.l.b16 %v356
        %v1006 = vunpack.c.h.b16 %v356
        %v1007 = vunpack.c.l.b16 %v357
        %v1008 = vunpack.c.h.b16 %v357
        %v1009 = vunpack.c.l.b16 %v358
        %v1010 = vunpack.c.h.b16 %v358
        %v1011 = vunpack.c.l.b16 %v359
        %v1012 = vunpack.c.h.b16 %v359
        %v1013 = vunpack.c.l.b16 %v360
        %v1014 = vunpack.c.h.b16 %v360
        %v1015 = vunpack.c.l.b16 %v361
        %v1016 = vunpack.c.h.b16 %v361
        %v1017 = vunpack.c.l.b16 %v362
        %v1018 = vunpack.c.h.b16 %v362
        %v1019 = vunpack.c.l.b16 %v363
        %v1020 = vunpack.c.h.b16 %v363
        %v1021 = vunpack.c.l.b16 %v364
        %v1022 = vunpack.c.h.b16 %v364
        %v1023 = vunpack.c.l.b16 %v365
        %v1024 = vunpack.c.h.b16 %v365
        %v1025 = vunpack.c.l.b16 %v366
        %v1026 = vunpack.c.h.b16 %v366
        %v1027 = vunpack.c.l.b16 %v367
        %v1028 = vunpack.c.h.b16 %v367
        %v1029 = vunpack.c.l.b16 %v368
        %v1030 = vunpack.c.h.b16 %v368
        %v1031 = vunpack.c.l.b16 %v369
        %v1032 = vunpack.c.h.b16 %v369
        %v1033 = vunpack.c.l.b16 %v370
        %v1034 = vunpack.c.h.b16 %v370
        %v1035 = vunpack.c.l.b16 %v371
        %v1036 = vunpack.c.h.b16 %v371
        %v1037 = vunpack.c.l.b16 %v372
        %v1038 = vunpack.c.h.b16 %v372
        %v1039 = vunpack.c.l.b16 %v373
        %v1040 = vunpack.c.h.b16 %v373
        %v1041 = vunpack.c.l.b16 %v374
        %v1042 = vunpack.c.h.b16 %v374
        %v1043 = vunpack.c.l.b16 %v375
        %v1044 = vunpack.c.h.b16 %v375
        %v1045 = vunpack.c.l.b16 %v376
        %v1046 = vunpack.c.h.b16 %v376
        %v1047 = vunpack.c.l.b16 %v377
        %v1048 = vunpack.c.h.b16 %v377
        %v1049 = vunpack.c.l.b16 %v378
        %v1050 = vunpack.c.h.b16 %v378
        %v1051 = vunpack.c.l.b16 %v379
        %v1052 = vunpack.c.h.b16 %v379
        %v1053 = vunpack.c.l.b16 %v380
        %v1054 = vunpack.c.h.b16 %v380
        %v1055 = vunpack.c.l.b16 %v381
        %v1056 = vunpack.c.h.b16 %v381
        %v1057 = vunpack.c.l.b16 %v382
        %v1058 = vunpack.c.h.b16 %v382
        %v1059 = vunpack.c.l.b16 %v383
        %v1060 = vunpack.c.h.b16 %v383
        %v1061 = vunpack.c.l.b16 %v384
        %v1062 = vunpack.c.h.b16 %v384
        %v1063 = vunpack.c.l.b16 %v385
        %v1064 = vunpack.c.h.b16 %v385
        %v1065 = vunpack.c.l.b16 %v386
        %v1066 = vunpack.c.h.b16 %v386
        %v1067 = vunpack.c.l.b16 %v387
        %v1068 = vunpack.c.h.b16 %v387
        %v1069 = vunpack.c.l.b16 %v388
        %v1070 = vunpack.c.h.b16 %v388
        %v1071 = vunpack.c.l.b16 %v389
        %v1072 = vunpack.c.h.b16 %v389
        %v1073 = vunpack.c.l.b16 %v390
        %v1074 = vunpack.c.h.b16 %v390
        %v1075 = vunpack.c.l.b16 %v391
        %v1076 = vunpack.c.h.b16 %v391
        %v1077 = vunpack.c.l.b16 %v392
        %v1078 = vunpack.c.h.b16 %v392
        %v1079 = vunpack.c.l.b16 %v393
        %v1080 = vunpack.c.h.b16 %v393
        %v1081 = vunpack.c.l.b16 %v394
        %v1082 = vunpack.c.h.b16 %v394
        %v1083 = vunpack.c.l.b16 %v395
        %v1084 = vunpack.c.h.b16 %v395
        %v1085 = vunpack.c.l.b16 %v396
        %v1086 = vunpack.c.h.b16 %v396
        %v1087 = vunpack.c.l.b16 %v397
        %v1088 = vunpack.c.h.b16 %v397
        %v1089 = vunpack.c.l.b16 %v398
        %v1090 = vunpack.c.h.b16 %v398
        %v1091 = vunpack.c.l.b16 %v399
        %v1092 = vunpack.c.h.b16 %v399
        %v1093 = vunpack.c.l.b16 %v400
        %v1094 = vunpack.c.h.b16 %v400
        %v1095 = vunpack.c.l.b16 %v401
        %v1096 = vunpack.c.h.b16 %v401
        %v1097 = vunpack.c.l.b16 %v402
        %v1098 = vunpack.c.h.b16 %v402
        %v1099 = vunpack.c.l.b16 %v403
        %v1100 = vunpack.c.h.b16 %v403
        %v1101 = vunpack.c.l.b16 %v404
        %v1102 = vunpack.c.h.b16 %v404
        %v1103 = vunpack.c.l.b16 %v405
        %v1104 = vunpack.c.h.b16 %v405
        %v1105 = vunpack.c.l.b16 %v406
        %v1106 = vunpack.c.h.b16 %v406
        %v1107 = vunpack.c.l.b16 %v407
        %v1108 = vunpack.c.h.b16 %v407
        %v1109 = vunpack.c.l.b16 %v408
        %v1110 = vunpack.c.h.b16 %v408
        %v1111 = vunpack.c.l.b16 %v409
        %v1112 = vunpack.c.h.b16 %v409
        %v1113 = vunpack.c.l.b16 %v410
        %v1114 = vunpack.c.h.b16 %v410
        %v1115 = vunpack.c.l.b16 %v411
        %v1116 = vunpack.c.h.b16 %v411
        %v1117 = vunpack.c.l.b16 %v412
        %v1118 = vunpack.c.h.b16 %v412
        %v1119 = vunpack.c.l.b16 %v413
        %v1120 = vunpack.c.h.b16 %v413
        %v1121 = vunpack.c.l.b16 %v414
        %v1122 = vunpack.c.h.b16 %v414
        %v1123 = vunpack.c.l.b16 %v415
        %v1124 = vunpack.c.h.b16 %v415
        %v1125 = vunpack.c.l.b16 %v416
        %v1126 = vunpack.c.h.b16 %v416
        %v1127 = vunpack.c.l.b16 %v417
        %v1128 = vunpack.c.h.b16 %v417
        %v1129 = vunpack.c.l.b16 %v418
        %v1130 = vunpack.c.h.b16 %v418
        %v1131 = vunpack.c.l.b16 %v419
        %v1132 = vunpack.c.h.b16 %v419
        %v1133 = vunpack.c.l.b16 %v420
        %v1134 = vunpack.c.h.b16 %v420
        %v1135 = vunpack.c.l.b16 %v421
        %v1136 = vunpack.c.h.b16 %v421
        %v1137 = vunpack.c.l.b16 %v422
        %v1138 = vunpack.c.h.b16 %v422
        %v1139 = vunpack.c.l.b16 %v423
        %v1140 = vunpack.c.h.b16 %v423
        %v1141 = vunpack.c.l.b16 %v424
        %v1142 = vunpack.c.h.b16 %v424
        %v1143 = vunpack.c.l.b16 %v425
        %v1144 = vunpack.c.h.b16 %v425
        %v1145 = vunpack.c.l.b16 %v426
        %v1146 = vunpack.c.h.b16 %v426
        %v1147 = vunpack.c.l.b16 %v427
        %v1148 = vunpack.c.h.b16 %v427
        %v1149 = vunpack.c.l.b16 %v428
        %v1150 = vunpack.c.h.b16 %v428
        %v1151 = vunpack.c.l.b16 %v429
        %v1152 = vunpack.c.h.b16 %v429
        %v1153 = vunpack.c.l.b16 %v430
        %v1154 = vunpack.c.h.b16 %v430
        %v1155 = vunpack.c.l.b16 %v431
        %v1156 = vunpack.c.h.b16 %v431
        %v1157 = vunpack.c.l.b16 %v432
        %v1158 = vunpack.c.h.b16 %v432
        %v1159 = vunpack.c.l.b16 %v433
        %v1160 = vunpack.c.h.b16 %v433
        %v1161 = vunpack.c.l.b16 %v434
        %v1162 = vunpack.c.h.b16 %v434
        %v1163 = vunpack.c.l.b16 %v435
        %v1164 = vunpack.c.h.b16 %v435
        %v1165 = vunpack.c.l.b16 %v436
        %v1166 = vunpack.c.h.b16 %v436
        %v1167 = vunpack.c.l.b16 %v437
        %v1168 = vunpack.c.h.b16 %v437
        %v1169 = vunpack.c.l.b16 %v438
        %v1170 = vunpack.c.h.b16 %v438
        %v1171 = vunpack.c.l.b16 %v439
        %v1172 = vunpack.c.h.b16 %v439
        %v1173 = vunpack.c.l.b16 %v440
        %v1174 = vunpack.c.h.b16 %v440
        %v1175 = vunpack.c.l.b16 %v441
        %v1176 = vunpack.c.h.b16 %v441
        %v1177 = vunpack.c.l.b16 %v442
        %v1178 = vunpack.c.h.b16 %v442
        %v1179 = vunpack.c.l.b16 %v443
        %v1180 = vunpack.c.h.b16 %v443
        %v1181 = vunpack.c.l.b16 %v444
        %v1182 = vunpack.c.h.b16 %v444
        %v1183 = vunpack.c.l.b16 %v445
        %v1184 = vunpack.c.h.b16 %v445
        %v1185 = vunpack.c.l.b16 %v446
        %v1186 = vunpack.c.h.b16 %v446
        %v1187 = vunpack.c.l.b16 %v447
        %v1188 = vunpack.c.h.b16 %v447
        %v1189 = vunpack.c.l.b16 %v448
        %v1190 = vunpack.c.h.b16 %v448
        %v1191 = vunpack.c.l.b16 %v449
        %v1192 = vunpack.c.h.b16 %v449
        %v1193 = vunpack.c.l.b16 %v450
        %v1194 = vunpack.c.h.b16 %v450
        %v1195 = vunpack.c.l.b16 %v451
        %v1196 = vunpack.c.h.b16 %v451
        %v1197 = vunpack.c.l.b16 %v452
        %v1198 = vunpack.c.h.b16 %v452
        %v1199 = vunpack.c.l.b16 %v453
        %v1200 = vunpack.c.h.b16 %v453
        %v1201 = vunpack.c.l.b16 %v454
        %v1202 = vunpack.c.h.b16 %v454
        %v1203 = vunpack.c.l.b16 %v455
        %v1204 = vunpack.c.h.b16 %v455
        %v1205 = vunpack.c.l.b16 %v456
        %v1206 = vunpack.c.h.b16 %v456
        %v1207 = vunpack.c.l.b16 %v457
        %v1208 = vunpack.c.h.b16 %v457
        %v1209 = vunpack.c.l.b16 %v458
        %v1210 = vunpack.c.h.b16 %v458
        %v1211 = vunpack.c.l.b16 %v459
        %v1212 = vunpack.c.h.b16 %v459
        %v1213 = vunpack.c.l.b16 %v460
        %v1214 = vunpack.c.h.b16 %v460
        %v1215 = vunpack.c.l.b16 %v461
        %v1216 = vunpack.c.h.b16 %v461
        %v1217 = vunpack.c.l.b16 %v462
        %v1218 = vunpack.c.h.b16 %v462
        %v1219 = vunpack.c.l.b16 %v463
        %v1220 = vunpack.c.h.b16 %v463
        %v1221 = vunpack.c.l.b16 %v464
        %v1222 = vunpack.c.h.b16 %v464
        %v1223 = vunpack.c.l.b16 %v465
        %v1224 = vunpack.c.h.b16 %v465
        %v1225 = vunpack.c.l.b16 %v466
        %v1226 = vunpack.c.h.b16 %v466
        %v1227 = vunpack.c.l.b16 %v467
        %v1228 = vunpack.c.h.b16 %v467
        %v1229 = vunpack.c.l.b16 %v468
        %v1230 = vunpack.c.h.b16 %v468
        %v1231 = vunpack.c.l.b16 %v469
        %v1232 = vunpack.c.h.b16 %v469
        %v1233 = vunpack.c.l.b16 %v470
        %v1234 = vunpack.c.h.b16 %v470
        %v1235 = vunpack.c.l.b16 %v471
        %v1236 = vunpack.c.h.b16 %v471
        %v1237 = vunpack.c.l.b16 %v472
        %v1238 = vunpack.c.h.b16 %v472
        %v1239 = vunpack.c.l.b16 %v473
        %v1240 = vunpack.c.h.b16 %v473
        %v1241 = vunpack.c.l.b16 %v474
        %v1242 = vunpack.c.h.b16 %v474
        %v1243 = vpack.c.b16 %v739, %v731
        %v1244 = vpack.c.b16 %v740, %v732
        %v1245 = vpack.c.b16 %v741, %v733
        %v1246 = vpack.c.b16 %v742, %v734
        %v1247 = vpack.c.b16 %v743, %v735
        %v1248 = vpack.c.b16 %v744, %v736
        %v1249 = vpack.c.b16 %v745, %v737
        %v1250 = vpack.c.b16 %v746, %v738
        %v1251 = vpack.c.b16 %v755, %v747
        %v1252 = vpack.c.b16 %v756, %v748
        %v1253 = vpack.c.b16 %v757, %v749
        %v1254 = vpack.c.b16 %v758, %v750
        %v1255 = vpack.c.b16 %v759, %v751
        %v1256 = vpack.c.b16 %v760, %v752
        %v1257 = vpack.c.b16 %v761, %v753
        %v1258 = vpack.c.b16 %v762, %v754
        %v1259 = vpack.c.b16 %v771, %v763
        %v1260 = vpack.c.b16 %v772, %v764
        %v1261 = vpack.c.b16 %v773, %v765
        %v1262 = vpack.c.b16 %v774, %v766
        %v1263 = vpack.c.b16 %v775, %v767
        %v1264 = vpack.c.b16 %v776, %v768
        %v1265 = vpack.c.b16 %v777, %v769
        %v1266 = vpack.c.b16 %v778, %v770
        %v1267 = vpack.c.b16 %v787, %v779
        %v1268 = vpack.c.b16 %v788, %v780
        %v1269 = vpack.c.b16 %v789, %v781
        %v1270 = vpack.c.b16 %v790, %v782
        %v1271 = vpack.c.b16 %v791, %v783
        %v1272 = vpack.c.b16 %v792, %v784
        %v1273 = vpack.c.b16 %v793, %v785
        %v1274 = vpack.c.b16 %v794, %v786
        %v1275 = vpack.c.b16 %v803, %v795
        %v1276 = vpack.c.b16 %v804, %v796
        %v1277 = vpack.c.b16 %v805, %v797
        %v1278 = vpack.c.b16 %v806, %v798
        %v1279 = vpack.c.b16 %v807, %v799
        %v1280 = vpack.c.b16 %v808, %v800
        %v1281 = vpack.c.b16 %v809, %v801
        %v1282 = vpack.c.b16 %v810, %v802
        %v1283 = vpack.c.b16 %v819, %v811
        %v1284 = vpack.c.b16 %v820, %v812
        %v1285 = vpack.c.b16 %v821, %v813
        %v1286 = vpack.c.b16 %v822, %v814
        %v1287 = vpack.c.b16 %v823, %v815
        %v1288 = vpack.c.b16 %v824, %v816
        %v1289 = vpack.c.b16 %v825, %v817
        %v1290 = vpack.c.b16 %v826, %v818
        %v1291 = vpack.c.b16 %v835, %v827
        %v1292 = vpack.c.b16 %v836, %v828
        %v1293 = vpack.c.b16 %v837, %v829
        %v1294 = vpack.c.b16 %v838, %v830
        %v1295 = vpack.c.b16 %v839, %v831
        %v1296 = vpack.c.b16 %v840, %v832
        %v1297 = vpack.c.b16 %v841, %v833
        %v1298 = vpack.c.b16 %v842, %v834
        %v1299 = vpack.c.b16 %v851, %v843
        %v1300 = vpack.c.b16 %v852, %v844
        %v1301 = vpack.c.b16 %v853, %v845
        %v1302 = vpack.c.b16 %v854, %v846
        %v1303 = vpack.c.b16 %v855, %v847
        %v1304 = vpack.c.b16 %v856, %v848
        %v1305 = vpack.c.b16 %v857, %v849
        %v1306 = vpack.c.b16 %v858, %v850
        %v1307 = vpack.c.b16 %v867, %v859
        %v1308 = vpack.c.b16 %v868, %v860
        %v1309 = vpack.c.b16 %v869, %v861
        %v1310 = vpack.c.b16 %v870, %v862
        %v1311 = vpack.c.b16 %v871, %v863
        %v1312 = vpack.c.b16 %v872, %v864
        %v1313 = vpack.c.b16 %v873, %v865
        %v1314 = vpack.c.b16 %v874, %v866
        %v1315 = vpack.c.b16 %v883, %v875
        %v1316 = vpack.c.b16 %v884, %v876
        %v1317 = vpack.c.b16 %v885, %v877
        %v1318 = vpack.c.b16 %v886, %v878
        %v1319 = vpack.c.b16 %v887, %v879
        %v1320 = vpack.c.b16 %v888, %v880
        %v1321 = vpack.c.b16 %v889, %v881
        %v1322 = vpack.c.b16 %v890, %v882
        %v1323 = vpack.c.b16 %v899, %v891
        %v1324 = vpack.c.b16 %v900, %v892
        %v1325 = vpack.c.b16 %v901, %v893
        %v1326 = vpack.c.b16 %v902, %v894
        %v1327 = vpack.c.b16 %v903, %v895
        %v1328 = vpack.c.b16 %v904, %v896
        %v1329 = vpack.c.b16 %v905, %v897
        %v1330 = vpack.c.b16 %v906, %v898
        %v1331 = vpack.c.b16 %v915, %v907
        %v1332 = vpack.c.b16 %v916, %v908
        %v1333 = vpack.c.b16 %v917, %v909
        %v1334 = vpack.c.b16 %v918, %v910
        %v1335 = vpack.c.b16 %v919, %v911
        %v1336 = vpack.c.b16 %v920, %v912
        %v1337 = vpack.c.b16 %v921, %v913
        %v1338 = vpack.c.b16 %v922, %v914
        %v1339 = vpack.c.b16 %v931, %v923
        %v1340 = vpack.c.b16 %v932, %v924
        %v1341 = vpack.c.b16 %v933, %v925
        %v1342 = vpack.c.b16 %v934, %v926
        %v1343 = vpack.c.b16 %v935, %v927
        %v1344 = vpack.c.b16 %v936, %v928
        %v1345 = vpack.c.b16 %v937, %v929
        %v1346 = vpack.c.b16 %v938, %v930
        %v1347 = vpack.c.b16 %v947, %v939
        %v1348 = vpack.c.b16 %v948, %v940
        %v1349 = vpack.c.b16 %v949, %v941
        %v1350 = vpack.c.b16 %v950, %v942
        %v1351 = vpack.c.b16 %v951, %v943
        %v1352 = vpack.c.b16 %v952, %v944
        %v1353 = vpack.c.b16 %v953, %v945
        %v1354 = vpack.c.b16 %v954, %v946
        %v1355 = vpack.c.b16 %v963, %v955
        %v1356 = vpack.c.b16 %v964, %v956
        %v1357 = vpack.c.b16 %v965, %v957
        %v1358 = vpack.c.b16 %v966, %v958
        %v1359 = vpack.c.b16 %v967, %v959
        %v1360 = vpack.c.b16 %v968, %v960
        %v1361 = vpack.c.b16 %v969, %v961
        %v1362 = vpack.c.b16 %v970, %v962
        %v1363 = vpack.c.b16 %v979, %v971
        %v1364 = vpack.c.b16 %v980, %v972
        %v1365 = vpack.c.b16 %v981, %v973
        %v1366 = vpack.c.b16 %v982, %v974
        %v1367 = vpack.c.b16 %v983, %v975
        %v1368 = vpack.c.b16 %v984, %v976
        %v1369 = vpack.c.b16 %v985, %v977
        %v1370 = vpack.c.b16 %v986, %v978
        %v1371 = vpack.c.b16 %v995, %v987
        %v1372 = vpack.c.b16 %v996, %v988
        %v1373 = vpack.c.b16 %v997, %v989
        %v1374 = vpack.c.b16 %v998, %v990
        %v1375 = vpack.c.b16 %v999, %v991
        %v1376 = vpack.c.b16 %v1000, %v992
        %v1377 = vpack.c.b16 %v1001, %v993
        %v1378 = vpack.c.b16 %v1002, %v994
        %v1379 = vpack.c.b16 %v1011, %v1003
        %v1380 = vpack.c.b16 %v1012, %v1004
        %v1381 = vpack.c.b16 %v1013, %v1005
        %v1382 = vpack.c.b16 %v1014, %v1006
        %v1383 = vpack.c.b16 %v1015, %v1007
        %v1384 = vpack.c.b16 %v1016, %v1008
        %v1385 = vpack.c.b16 %v1017, %v1009
        %v1386 = vpack.c.b16 %v1018, %v1010
        %v1387 = vpack.c.b16 %v1027, %v1019
        %v1388 = vpack.c.b16 %v1028, %v1020
        %v1389 = vpack.c.b16 %v1029, %v1021
        %v1390 = vpack.c.b16 %v1030, %v1022
        %v1391 = vpack.c.b16 %v1031, %v1023
        %v1392 = vpack.c.b16 %v1032, %v1024
        %v1393 = vpack.c.b16 %v1033, %v1025
        %v1394 = vpack.c.b16 %v1034, %v1026
        %v1395 = vpack.c.b16 %v1043, %v1035
        %v1396 = vpack.c.b16 %v1044, %v1036
        %v1397 = vpack.c.b16 %v1045, %v1037
        %v1398 = vpack.c.b16 %v1046, %v1038
        %v1399 = vpack.c.b16 %v1047, %v1039
        %v1400 = vpack.c.b16 %v1048, %v1040
        %v1401 = vpack.c.b16 %v1049, %v1041
        %v1402 = vpack.c.b16 %v1050, %v1042
        %v1403 = vpack.c.b16 %v1059, %v1051
        %v1404 = vpack.c.b16 %v1060, %v1052
        %v1405 = vpack.c.b16 %v1061, %v1053
        %v1406 = vpack.c.b16 %v1062, %v1054
        %v1407 = vpack.c.b16 %v1063, %v1055
        %v1408 = vpack.c.b16 %v1064, %v1056
        %v1409 = vpack.c.b16 %v1065, %v1057
        %v1410 = vpack.c.b16 %v1066, %v1058
        %v1411 = vpack.c.b16 %v1075, %v1067
        %v1412 = vpack.c.b16 %v1076, %v1068
        %v1413 = vpack.c.b16 %v1077, %v1069
        %v1414 = vpack.c.b16 %v1078, %v1070
        %v1415 = vpack.c.b16 %v1079, %v1071
        %v1416 = vpack.c.b16 %v1080, %v1072
        %v1417 = vpack.c.b16 %v1081, %v1073
        %v1418 = vpack.c.b16 %v1082, %v1074
        %v1419 = vpack.c.b16 %v1091, %v1083
        %v1420 = vpack.c.b16 %v1092, %v1084
        %v1421 = vpack.c.b16 %v1093, %v1085
        %v1422 = vpack.c.b16 %v1094, %v1086
        %v1423 = vpack.c.b16 %v1095, %v1087
        %v1424 = vpack.c.b16 %v1096, %v1088
        %v1425 = vpack.c.b16 %v1097, %v1089
        %v1426 = vpack.c.b16 %v1098, %v1090
        %v1427 = vpack.c.b16 %v1107, %v1099
        %v1428 = vpack.c.b16 %v1108, %v1100
        %v1429 = vpack.c.b16 %v1109, %v1101
        %v1430 = vpack.c.b16 %v1110, %v1102
        %v1431 = vpack.c.b16 %v1111, %v1103
        %v1432 = vpack.c.b16 %v1112, %v1104
        %v1433 = vpack.c.b16 %v1113, %v1105
        %v1434 = vpack.c.b16 %v1114, %v1106
        %v1435 = vpack.c.b16 %v1123, %v1115
        %v1436 = vpack.c.b16 %v1124, %v1116
        %v1437 = vpack.c.b16 %v1125, %v1117
        %v1438 = vpack.c.b16 %v1126, %v1118
        %v1439 = vpack.c.b16 %v1127, %v1119
        %v1440 = vpack.c.b16 %v1128, %v1120
        %v1441 = vpack.c.b16 %v1129, %v1121
        %v1442 = vpack.c.b16 %v1130, %v1122
        %v1443 = vpack.c.b16 %v1139, %v1131
        %v1444 = vpack.c.b16 %v1140, %v1132
        %v1445 = vpack.c.b16 %v1141, %v1133
        %v1446 = vpack.c.b16 %v1142, %v1134
        %v1447 = vpack.c.b16 %v1143, %v1135
        %v1448 = vpack.c.b16 %v1144, %v1136
        %v1449 = vpack.c.b16 %v1145, %v1137
        %v1450 = vpack.c.b16 %v1146, %v1138
        %v1451 = vpack.c.b16 %v1155, %v1147
        %v1452 = vpack.c.b16 %v1156, %v1148
        %v1453 = vpack.c.b16 %v1157, %v1149
        %v1454 = vpack.c.b16 %v1158, %v1150
        %v1455 = vpack.c.b16 %v1159, %v1151
        %v1456 = vpack.c.b16 %v1160, %v1152
        %v1457 = vpack.c.b16 %v1161, %v1153
        %v1458 = vpack.c.b16 %v1162, %v1154
        %v1459 = vpack.c.b16 %v1171, %v1163
        %v1460 = vpack.c.b16 %v1172, %v1164
        %v1461 = vpack.c.b16 %v1173, %v1165
        %v1462 = vpack.c.b16 %v1174, %v1166
        %v1463 = vpack.c.b16 %v1175, %v1167
        %v1464 = vpack.c.b16 %v1176, %v1168
        %v1465 = vpack.c.b16 %v1177, %v1169
        %v1466 = vpack.c.b16 %v1178, %v1170
        %v1467 = vpack.c.b16 %v1187, %v1179
        %v1468 = vpack.c.b16 %v1188, %v1180
        %v1469 = vpack.c.b16 %v1189, %v1181
        %v1470 = vpack.c.b16 %v1190, %v1182
        %v1471 = vpack.c.b16 %v1191, %v1183
        %v1472 = vpack.c.b16 %v1192, %v1184
        %v1473 = vpack.c.b16 %v1193, %v1185
        %v1474 = vpack.c.b16 %v1194, %v1186
        %v1475 = vpack.c.b16 %v1203, %v1195
        %v1476 = vpack.c.b16 %v1204, %v1196
        %v1477 = vpack.c.b16 %v1205, %v1197
        %v1478 = vpack.c.b16 %v1206, %v1198
        %v1479 = vpack.c.b16 %v1207, %v1199
        %v1480 = vpack.c.b16 %v1208, %v1200
        %v1481 = vpack.c.b16 %v1209, %v1201
        %v1482 = vpack.c.b16 %v1210, %v1202
        %v1483 = vpack.c.b16 %v1219, %v1211
        %v1484 = vpack.c.b16 %v1220, %v1212
        %v1485 = vpack.c.b16 %v1221, %v1213
        %v1486 = vpack.c.b16 %v1222, %v1214
        %v1487 = vpack.c.b16 %v1223, %v1215
        %v1488 = vpack.c.b16 %v1224, %v1216
        %v1489 = vpack.c.b16 %v1225, %v1217
        %v1490 = vpack.c.b16 %v1226, %v1218
        %v1491 = vpack.c.b16 %v1235, %v1227
        %v1492 = vpack.c.b16 %v1236, %v1228
        %v1493 = vpack.c.b16 %v1237, %v1229
        %v1494 = vpack.c.b16 %v1238, %v1230
        %v1495 = vpack.c.b16 %v1239, %v1231
        %v1496 = vpack.c.b16 %v1240, %v1232
        %v1497 = vpack.c.b16 %v1241, %v1233
        %v1498 = vpack.c.b16 %v1242, %v1234
        %1755 = vmatprep.subr.bf16.mxu0 %v1244
        %1756 = vmatpush1.bf16.msra.mxu0 %v1243
        %1757 = vmatprep.subr.bf16.mxu0 %v1252
        %1758 = vmatpush1.bf16.msra.mxu0 %v1251
        %1759 = vmatprep.subr.bf16.mxu0 %v1260
        %1760 = vmatpush1.bf16.msra.mxu0 %v1259
        %1761 = vmatprep.subr.bf16.mxu0 %v1268
        %1762 = vmatpush1.bf16.msra.mxu0 %v1267
        %1763 = vmatprep.subr.bf16.mxu0 %v1276
        %1764 = vmatpush1.bf16.msra.mxu0 %v1275
        %1765 = vmatprep.subr.bf16.mxu0 %v1284
        %1766 = vmatpush1.bf16.msra.mxu0 %v1283
        %1767 = vmatprep.subr.bf16.mxu0 %v1292
        %1768 = vmatpush1.bf16.msra.mxu0 %v1291
        %1769 = vmatprep.subr.bf16.mxu0 %v1300
        %1770 = vmatpush1.bf16.msra.mxu0 %v1299
        %1771 = vmatprep.subr.bf16.mxu0 %v1308
        %1772 = vmatpush1.bf16.msra.mxu0 %v1307
        %1773 = vmatprep.subr.bf16.mxu0 %v1316
        %1774 = vmatpush1.bf16.msra.mxu0 %v1315
        %1775 = vmatprep.subr.bf16.mxu0 %v1324
        %1776 = vmatpush1.bf16.msra.mxu0 %v1323
        %1777 = vmatprep.subr.bf16.mxu0 %v1332
        %1778 = vmatpush1.bf16.msra.mxu0 %v1331
        %1779 = vmatprep.subr.bf16.mxu0 %v1340
        %1780 = vmatpush1.bf16.msra.mxu0 %v1339
        %1781 = vmatprep.subr.bf16.mxu0 %v1348
        %1782 = vmatpush1.bf16.msra.mxu0 %v1347
        %1783 = vmatprep.subr.bf16.mxu0 %v1356
        %1784 = vmatpush1.bf16.msra.mxu0 %v1355
        %1785 = vmatprep.subr.bf16.mxu0 %v1364
        %1786 = vmatpush1.bf16.msra.mxu0 %v1363
        %1787 = vmatprep.mubr.bf16.mxu0 %v216
        %1788 = vmatmul.mubr.bf16.gmra.mrb[0].mxu0 %v215
        %v1789 = vpop.f32.mrb[0].mxu0
        %v1790 = vadd.f32 0.0, %v1789
        %v1791 = vpop.f32.mrb[0].mxu0
        %v1792 = vadd.f32 0.0, %v1791
        %v1793 = vpop.f32.mrb[0].mxu0
        %v1794 = vpop.f32.mrb[0].mxu0
        %1795 = vdwg.mxu0
        %1796 = vmatprep.subr.bf16.mxu0 %v1372
        %1797 = vmatpush1.bf16.msra.mxu0 %v1371
        %1798 = vmatprep.subr.bf16.mxu0 %v1380
        %1799 = vmatpush1.bf16.msra.mxu0 %v1379
        %1800 = vmatprep.subr.bf16.mxu0 %v1388
        %1801 = vmatpush1.bf16.msra.mxu0 %v1387
        %1802 = vmatprep.subr.bf16.mxu0 %v1396
        %1803 = vmatpush1.bf16.msra.mxu0 %v1395
        %1804 = vmatprep.subr.bf16.mxu0 %v1404
        %1805 = vmatpush1.bf16.msra.mxu0 %v1403
        %1806 = vmatprep.subr.bf16.mxu0 %v1412
        %1807 = vmatpush1.bf16.msra.mxu0 %v1411
        %1808 = vmatprep.subr.bf16.mxu0 %v1420
        %1809 = vmatpush1.bf16.msra.mxu0 %v1419
        %1810 = vmatprep.subr.bf16.mxu0 %v1428
        %1811 = vmatpush1.bf16.msra.mxu0 %v1427
        %1812 = vmatprep.subr.bf16.mxu0 %v1436
        %1813 = vmatpush1.bf16.msra.mxu0 %v1435
        %1814 = vmatprep.subr.bf16.mxu0 %v1444
        %1815 = vmatpush1.bf16.msra.mxu0 %v1443
        %1816 = vmatprep.subr.bf16.mxu0 %v1452
        %1817 = vmatpush1.bf16.msra.mxu0 %v1451
        %1818 = vmatprep.subr.bf16.mxu0 %v1460
        %1819 = vmatpush1.bf16.msra.mxu0 %v1459
        %1820 = vmatprep.subr.bf16.mxu0 %v1468
        %1821 = vmatpush1.bf16.msra.mxu0 %v1467
        %1822 = vmatprep.subr.bf16.mxu0 %v1476
        %1823 = vmatpush1.bf16.msra.mxu0 %v1475
        %1824 = vmatprep.subr.bf16.mxu0 %v1484
        %1825 = vmatpush1.bf16.msra.mxu0 %v1483
        %1826 = vmatprep.subr.bf16.mxu0 %v1492
        %1827 = vmatpush1.bf16.msra.mxu0 %v1491
        %1828 = vmatprep.mubr.bf16.mxu0 %v218
        %1829 = vmatmul.mubr.bf16.gmra.mrb[0].mxu0 %v217
        %v1830 = vpop.f32.mrb[0].mxu0
        %v1831 = vadd.f32 %v1790, %v1830
        %v1832 = vpop.f32.mrb[0].mxu0
        %v1833 = vadd.f32 %v1792, %v1832
        %v1834 = vpop.f32.mrb[0].mxu0
        %v1835 = vpop.f32.mrb[0].mxu0
        %1836 = vdwg.mxu0
        %1837 = vmatprep.subr.bf16.mxu0 %v1246
        %1838 = vmatpush1.bf16.msra.mxu0 %v1245
        %1839 = vmatprep.subr.bf16.mxu0 %v1254
        %1840 = vmatpush1.bf16.msra.mxu0 %v1253
        %1841 = vmatprep.subr.bf16.mxu0 %v1262
        %1842 = vmatpush1.bf16.msra.mxu0 %v1261
        %1843 = vmatprep.subr.bf16.mxu0 %v1270
        %1844 = vmatpush1.bf16.msra.mxu0 %v1269
        %1845 = vmatprep.subr.bf16.mxu0 %v1278
        %1846 = vmatpush1.bf16.msra.mxu0 %v1277
        %1847 = vmatprep.subr.bf16.mxu0 %v1286
        %1848 = vmatpush1.bf16.msra.mxu0 %v1285
        %1849 = vmatprep.subr.bf16.mxu0 %v1294
        %1850 = vmatpush1.bf16.msra.mxu0 %v1293
        %1851 = vmatprep.subr.bf16.mxu0 %v1302
        %1852 = vmatpush1.bf16.msra.mxu0 %v1301
        %1853 = vmatprep.subr.bf16.mxu0 %v1310
        %1854 = vmatpush1.bf16.msra.mxu0 %v1309
        %1855 = vmatprep.subr.bf16.mxu0 %v1318
        %1856 = vmatpush1.bf16.msra.mxu0 %v1317
        %1857 = vmatprep.subr.bf16.mxu0 %v1326
        %1858 = vmatpush1.bf16.msra.mxu0 %v1325
        %1859 = vmatprep.subr.bf16.mxu0 %v1334
        %1860 = vmatpush1.bf16.msra.mxu0 %v1333
        %1861 = vmatprep.subr.bf16.mxu0 %v1342
        %1862 = vmatpush1.bf16.msra.mxu0 %v1341
        %1863 = vmatprep.subr.bf16.mxu0 %v1350
        %1864 = vmatpush1.bf16.msra.mxu0 %v1349
        %1865 = vmatprep.subr.bf16.mxu0 %v1358
        %1866 = vmatpush1.bf16.msra.mxu0 %v1357
        %1867 = vmatprep.subr.bf16.mxu0 %v1366
        %1868 = vmatpush1.bf16.msra.mxu0 %v1365
        %1869 = vmatprep.mubr.bf16.mxu0 %v216
        %1870 = vmatmul.mubr.bf16.gmra.mrb[0].mxu0 %v215
        %v1871 = vpop.f32.mrb[0].mxu0
        %v1872 = vadd.f32 0.0, %v1871
        %v1873 = vpop.f32.mrb[0].mxu0
        %v1874 = vadd.f32 0.0, %v1873
        %v1875 = vpop.f32.mrb[0].mxu0
        %v1876 = vpop.f32.mrb[0].mxu0
        %1877 = vdwg.mxu0
        %1878 = vmatprep.subr.bf16.mxu0 %v1374
        %1879 = vmatpush1.bf16.msra.mxu0 %v1373
        %1880 = vmatprep.subr.bf16.mxu0 %v1382
        %1881 = vmatpush1.bf16.msra.mxu0 %v1381
        %1882 = vmatprep.subr.bf16.mxu0 %v1390
        %1883 = vmatpush1.bf16.msra.mxu0 %v1389
        %1884 = vmatprep.subr.bf16.mxu0 %v1398
        %1885 = vmatpush1.bf16.msra.mxu0 %v1397
        %1886 = vmatprep.subr.bf16.mxu0 %v1406
        %1887 = vmatpush1.bf16.msra.mxu0 %v1405
        %1888 = vmatprep.subr.bf16.mxu0 %v1414
        %1889 = vmatpush1.bf16.msra.mxu0 %v1413
        %1890 = vmatprep.subr.bf16.mxu0 %v1422
        %1891 = vmatpush1.bf16.msra.mxu0 %v1421
        %1892 = vmatprep.subr.bf16.mxu0 %v1430
        %1893 = vmatpush1.bf16.msra.mxu0 %v1429
        %1894 = vmatprep.subr.bf16.mxu0 %v1438
        %1895 = vmatpush1.bf16.msra.mxu0 %v1437
        %1896 = vmatprep.subr.bf16.mxu0 %v1446
        %1897 = vmatpush1.bf16.msra.mxu0 %v1445
        %1898 = vmatprep.subr.bf16.mxu0 %v1454
        %1899 = vmatpush1.bf16.msra.mxu0 %v1453
        %1900 = vmatprep.subr.bf16.mxu0 %v1462
        %1901 = vmatpush1.bf16.msra.mxu0 %v1461
        %1902 = vmatprep.subr.bf16.mxu0 %v1470
        %1903 = vmatpush1.bf16.msra.mxu0 %v1469
        %1904 = vmatprep.subr.bf16.mxu0 %v1478
        %1905 = vmatpush1.bf16.msra.mxu0 %v1477
        %1906 = vmatprep.subr.bf16.mxu0 %v1486
        %1907 = vmatpush1.bf16.msra.mxu0 %v1485
        %1908 = vmatprep.subr.bf16.mxu0 %v1494
        %1909 = vmatpush1.bf16.msra.mxu0 %v1493
        %1910 = vmatprep.mubr.bf16.mxu0 %v218
        %1911 = vmatmul.mubr.bf16.gmra.mrb[0].mxu0 %v217
        %v1912 = vpop.f32.mrb[0].mxu0
        %v1913 = vadd.f32 %v1872, %v1912
        %v1914 = vpop.f32.mrb[0].mxu0
        %v1915 = vadd.f32 %v1874, %v1914
        %v1916 = vpop.f32.mrb[0].mxu0
        %v1917 = vpop.f32.mrb[0].mxu0
        %1918 = vdwg.mxu0
        %1919 = vmatprep.subr.bf16.mxu0 %v1248
        %1920 = vmatpush1.bf16.msra.mxu0 %v1247
        %1921 = vmatprep.subr.bf16.mxu0 %v1256
        %1922 = vmatpush1.bf16.msra.mxu0 %v1255
        %1923 = vmatprep.subr.bf16.mxu0 %v1264
        %1924 = vmatpush1.bf16.msra.mxu0 %v1263
        %1925 = vmatprep.subr.bf16.mxu0 %v1272
        %1926 = vmatpush1.bf16.msra.mxu0 %v1271
        %1927 = vmatprep.subr.bf16.mxu0 %v1280
        %1928 = vmatpush1.bf16.msra.mxu0 %v1279
        %1929 = vmatprep.subr.bf16.mxu0 %v1288
        %1930 = vmatpush1.bf16.msra.mxu0 %v1287
        %1931 = vmatprep.subr.bf16.mxu0 %v1296
        %1932 = vmatpush1.bf16.msra.mxu0 %v1295
        %1933 = vmatprep.subr.bf16.mxu0 %v1304
        %1934 = vmatpush1.bf16.msra.mxu0 %v1303
        %1935 = vmatprep.subr.bf16.mxu0 %v1312
        %1936 = vmatpush1.bf16.msra.mxu0 %v1311
        %1937 = vmatprep.subr.bf16.mxu0 %v1320
        %1938 = vmatpush1.bf16.msra.mxu0 %v1319
        %1939 = vmatprep.subr.bf16.mxu0 %v1328
        %1940 = vmatpush1.bf16.msra.mxu0 %v1327
        %1941 = vmatprep.subr.bf16.mxu0 %v1336
        %1942 = vmatpush1.bf16.msra.mxu0 %v1335
        %1943 = vmatprep.subr.bf16.mxu0 %v1344
        %1944 = vmatpush1.bf16.msra.mxu0 %v1343
        %1945 = vmatprep.subr.bf16.mxu0 %v1352
        %1946 = vmatpush1.bf16.msra.mxu0 %v1351
        %1947 = vmatprep.subr.bf16.mxu0 %v1360
        %1948 = vmatpush1.bf16.msra.mxu0 %v1359
        %1949 = vmatprep.subr.bf16.mxu0 %v1368
        %1950 = vmatpush1.bf16.msra.mxu0 %v1367
        %1951 = vmatprep.mubr.bf16.mxu0 %v216
        %1952 = vmatmul.mubr.bf16.gmra.mrb[0].mxu0 %v215
        %v1953 = vpop.f32.mrb[0].mxu0
        %v1954 = vadd.f32 0.0, %v1953
        %v1955 = vpop.f32.mrb[0].mxu0
        %v1956 = vadd.f32 0.0, %v1955
        %v1957 = vpop.f32.mrb[0].mxu0
        %v1958 = vpop.f32.mrb[0].mxu0
        %1959 = vdwg.mxu0
        %1960 = vmatprep.subr.bf16.mxu0 %v1376
        %1961 = vmatpush1.bf16.msra.mxu0 %v1375
        %1962 = vmatprep.subr.bf16.mxu0 %v1384
        %1963 = vmatpush1.bf16.msra.mxu0 %v1383
        %1964 = vmatprep.subr.bf16.mxu0 %v1392
        %1965 = vmatpush1.bf16.msra.mxu0 %v1391
        %1966 = vmatprep.subr.bf16.mxu0 %v1400
        %1967 = vmatpush1.bf16.msra.mxu0 %v1399
        %1968 = vmatprep.subr.bf16.mxu0 %v1408
        %1969 = vmatpush1.bf16.msra.mxu0 %v1407
        %1970 = vmatprep.subr.bf16.mxu0 %v1416
        %1971 = vmatpush1.bf16.msra.mxu0 %v1415
        %1972 = vmatprep.subr.bf16.mxu0 %v1424
        %1973 = vmatpush1.bf16.msra.mxu0 %v1423
        %1974 = vmatprep.subr.bf16.mxu0 %v1432
        %1975 = vmatpush1.bf16.msra.mxu0 %v1431
        %1976 = vmatprep.subr.bf16.mxu0 %v1440
        %1977 = vmatpush1.bf16.msra.mxu0 %v1439
        %1978 = vmatprep.subr.bf16.mxu0 %v1448
        %1979 = vmatpush1.bf16.msra.mxu0 %v1447
        %1980 = vmatprep.subr.bf16.mxu0 %v1456
        %1981 = vmatpush1.bf16.msra.mxu0 %v1455
        %1982 = vmatprep.subr.bf16.mxu0 %v1464
        %1983 = vmatpush1.bf16.msra.mxu0 %v1463
        %1984 = vmatprep.subr.bf16.mxu0 %v1472
        %1985 = vmatpush1.bf16.msra.mxu0 %v1471
        %1986 = vmatprep.subr.bf16.mxu0 %v1480
        %1987 = vmatpush1.bf16.msra.mxu0 %v1479
        %1988 = vmatprep.subr.bf16.mxu0 %v1488
        %1989 = vmatpush1.bf16.msra.mxu0 %v1487
        %1990 = vmatprep.subr.bf16.mxu0 %v1496
        %1991 = vmatpush1.bf16.msra.mxu0 %v1495
        %1992 = vmatprep.mubr.bf16.mxu0 %v218
        %1993 = vmatmul.mubr.bf16.gmra.mrb[0].mxu0 %v217
        %v1994 = vpop.f32.mrb[0].mxu0
        %v1995 = vadd.f32 %v1954, %v1994
        %v1996 = vpop.f32.mrb[0].mxu0
        %v1997 = vadd.f32 %v1956, %v1996
        %v1998 = vpop.f32.mrb[0].mxu0
        %v1999 = vpop.f32.mrb[0].mxu0
        %2000 = vdwg.mxu0
        %2001 = vmatprep.subr.bf16.mxu0 %v1250
        %2002 = vmatpush1.bf16.msra.mxu0 %v1249
        %2003 = vmatprep.subr.bf16.mxu0 %v1258
        %2004 = vmatpush1.bf16.msra.mxu0 %v1257
        %2005 = vmatprep.subr.bf16.mxu0 %v1266
        %2006 = vmatpush1.bf16.msra.mxu0 %v1265
        %2007 = vmatprep.subr.bf16.mxu0 %v1274
        %2008 = vmatpush1.bf16.msra.mxu0 %v1273
        %2009 = vmatprep.subr.bf16.mxu0 %v1282
        %2010 = vmatpush1.bf16.msra.mxu0 %v1281
        %2011 = vmatprep.subr.bf16.mxu0 %v1290
        %2012 = vmatpush1.bf16.msra.mxu0 %v1289
        %2013 = vmatprep.subr.bf16.mxu0 %v1298
        %2014 = vmatpush1.bf16.msra.mxu0 %v1297
        %2015 = vmatprep.subr.bf16.mxu0 %v1306
        %2016 = vmatpush1.bf16.msra.mxu0 %v1305
        %2017 = vmatprep.subr.bf16.mxu0 %v1314
        %2018 = vmatpush1.bf16.msra.mxu0 %v1313
        %2019 = vmatprep.subr.bf16.mxu0 %v1322
        %2020 = vmatpush1.bf16.msra.mxu0 %v1321
        %2021 = vmatprep.subr.bf16.mxu0 %v1330
        %2022 = vmatpush1.bf16.msra.mxu0 %v1329
        %2023 = vmatprep.subr.bf16.mxu0 %v1338
        %2024 = vmatpush1.bf16.msra.mxu0 %v1337
        %2025 = vmatprep.subr.bf16.mxu0 %v1346
        %2026 = vmatpush1.bf16.msra.mxu0 %v1345
        %2027 = vmatprep.subr.bf16.mxu0 %v1354
        %2028 = vmatpush1.bf16.msra.mxu0 %v1353
        %2029 = vmatprep.subr.bf16.mxu0 %v1362
        %2030 = vmatpush1.bf16.msra.mxu0 %v1361
        %2031 = vmatprep.subr.bf16.mxu0 %v1370
        %2032 = vmatpush1.bf16.msra.mxu0 %v1369
        %2033 = vmatprep.mubr.bf16.mxu0 %v216
        %2034 = vmatmul.mubr.bf16.gmra.mrb[0].mxu0 %v215
        %v2035 = vpop.f32.mrb[0].mxu0
        %v2036 = vadd.f32 0.0, %v2035
        %v2037 = vpop.f32.mrb[0].mxu0
        %v2038 = vadd.f32 0.0, %v2037
        %v2039 = vpop.f32.mrb[0].mxu0
        %v2040 = vpop.f32.mrb[0].mxu0
        %2041 = vdwg.mxu0
        %2042 = vmatprep.subr.bf16.mxu0 %v1378
        %2043 = vmatpush1.bf16.msra.mxu0 %v1377
        %2044 = vmatprep.subr.bf16.mxu0 %v1386
        %2045 = vmatpush1.bf16.msra.mxu0 %v1385
        %2046 = vmatprep.subr.bf16.mxu0 %v1394
        %2047 = vmatpush1.bf16.msra.mxu0 %v1393
        %2048 = vmatprep.subr.bf16.mxu0 %v1402
        %2049 = vmatpush1.bf16.msra.mxu0 %v1401
        %2050 = vmatprep.subr.bf16.mxu0 %v1410
        %2051 = vmatpush1.bf16.msra.mxu0 %v1409
        %2052 = vmatprep.subr.bf16.mxu0 %v1418
        %2053 = vmatpush1.bf16.msra.mxu0 %v1417
        %2054 = vmatprep.subr.bf16.mxu0 %v1426
        %2055 = vmatpush1.bf16.msra.mxu0 %v1425
        %2056 = vmatprep.subr.bf16.mxu0 %v1434
        %2057 = vmatpush1.bf16.msra.mxu0 %v1433
        %2058 = vmatprep.subr.bf16.mxu0 %v1442
        %2059 = vmatpush1.bf16.msra.mxu0 %v1441
        %2060 = vmatprep.subr.bf16.mxu0 %v1450
        %2061 = vmatpush1.bf16.msra.mxu0 %v1449
        %2062 = vmatprep.subr.bf16.mxu0 %v1458
        %2063 = vmatpush1.bf16.msra.mxu0 %v1457
        %2064 = vmatprep.subr.bf16.mxu0 %v1466
        %2065 = vmatpush1.bf16.msra.mxu0 %v1465
        %2066 = vmatprep.subr.bf16.mxu0 %v1474
        %2067 = vmatpush1.bf16.msra.mxu0 %v1473
        %2068 = vmatprep.subr.bf16.mxu0 %v1482
        %2069 = vmatpush1.bf16.msra.mxu0 %v1481
        %2070 = vmatprep.subr.bf16.mxu0 %v1490
        %2071 = vmatpush1.bf16.msra.mxu0 %v1489
        %2072 = vmatprep.subr.bf16.mxu0 %v1498
        %2073 = vmatpush1.bf16.msra.mxu0 %v1497
        %2074 = vmatprep.mubr.bf16.mxu0 %v218
        %2075 = vmatmul.mubr.bf16.gmra.mrb[0].mxu0 %v217
        %v2076 = vpop.f32.mrb[0].mxu0
        %v2077 = vadd.f32 %v2036, %v2076
        %v2078 = vpop.f32.mrb[0].mxu0
        %v2079 = vadd.f32 %v2038, %v2078
        %v2080 = vpop.f32.mrb[0].mxu0
        %v2081 = vpop.f32.mrb[0].mxu0
        %2082 = vdwg.mxu0
        %2083 = vst [vmem:[%s5] sm:$0xff] %v1831
        %2084 = vst [vmem:[%s5 + $0x8] sm:$0xff] %v1833
        %2085 = vst [vmem:[%s5 + $0x10] sm:$0xff] %v1913
        %2086 = vst [vmem:[%s5 + $0x18] sm:$0xff] %v1915
        %2087 = vst [vmem:[%s5 + $0x20] sm:$0xff] %v1995
        %2088 = vst [vmem:[%s5 + $0x28] sm:$0xff] %v1997
        %2089 = vst [vmem:[%s5 + $0x30] sm:$0xff] %v2077
        %2090 = vst [vmem:[%s5 + $0x38] sm:$0xff] %v2079
      $region40: #{_gradient_descent_impl.1} parent=35 // pred_fallthru
        _
      %v2091 = vld [vmem:[%s5] sm:$0xff]
      %v2092 = vld [vmem:[%s5 + $0x8] sm:$0xff]
      %v2093 = vld [vmem:[%s5 + $0x10] sm:$0xff]
      %v2094 = vld [vmem:[%s5 + $0x18] sm:$0xff]
      %v2095 = vld [vmem:[%s5 + $0x20] sm:$0xff]
      %v2096 = vld [vmem:[%s5 + $0x28] sm:$0xff]
      %v2097 = vld [vmem:[%s5 + $0x30] sm:$0xff]
      %v2098 = vld [vmem:[%s5 + $0x38] sm:$0xff]
      %v2099 = vpack.c.bf16 %v2091, %v2091
      %v2100 = vpack.c.bf16 %v2092, %v2092
      %v2101 = vpack.c.bf16 %v2093, %v2093
      %v2102 = vpack.c.bf16 %v2094, %v2094
      %v2103 = vpack.c.bf16 %v2095, %v2095
      %v2104 = vpack.c.bf16 %v2096, %v2096
      %v2105 = vpack.c.bf16 %v2097, %v2097
      %v2106 = vpack.c.bf16 %v2098, %v2098
      %v2107 = vld [vmem:[%s202] sm:$0xff]
      %v2108 = vld [vmem:[%s202 + $0x8] sm:$0xff]
      %v2109 = vld [vmem:[%s202 + $0x10] sm:$0xff]
      %v2110 = vld [vmem:[%s202 + $0x18] sm:$0xff]
      %v2111 = vld [vmem:[%s202 + $0x20] sm:$0xff]
      %v2112 = vld [vmem:[%s202 + $0x28] sm:$0xff]
      %v2113 = vld [vmem:[%s202 + $0x30] sm:$0xff]
      %v2114 = vld [vmem:[%s202 + $0x38] sm:$0xff]
      %v2115 = vld [vmem:[%s202 + $0x40] sm:$0xff]
      %v2116 = vld [vmem:[%s202 + $0x48] sm:$0xff]
      %v2117 = vld [vmem:[%s202 + $0x50] sm:$0xff]
      %v2118 = vld [vmem:[%s202 + $0x58] sm:$0xff]
      %v2119 = vld [vmem:[%s202 + $0x60] sm:$0xff]
      %v2120 = vld [vmem:[%s202 + $0x68] sm:$0xff]
      %v2121 = vld [vmem:[%s202 + $0x70] sm:$0xff]
      %v2122 = vld [vmem:[%s202 + $0x78] sm:$0xff]
      %v2123 = vld [vmem:[%s202 + $0x80] sm:$0xff]
      %v2124 = vld [vmem:[%s202 + $0x88] sm:$0xff]
      %v2125 = vld [vmem:[%s202 + $0x90] sm:$0xff]
      %v2126 = vld [vmem:[%s202 + $0x98] sm:$0xff]
      %v2127 = vld [vmem:[%s202 + $0xa0] sm:$0xff]
      %v2128 = vld [vmem:[%s202 + $0xa8] sm:$0xff]
      %v2129 = vld [vmem:[%s202 + $0xb0] sm:$0xff]
      %v2130 = vld [vmem:[%s202 + $0xb8] sm:$0xff]
      %v2131 = vld [vmem:[%s202 + $0xc0] sm:$0xff]
      %v2132 = vld [vmem:[%s202 + $0xc8] sm:$0xff]
      %v2133 = vld [vmem:[%s202 + $0xd0] sm:$0xff]
      %v2134 = vld [vmem:[%s202 + $0xd8] sm:$0xff]
      %v2135 = vld [vmem:[%s202 + $0xe0] sm:$0xff]
      %v2136 = vld [vmem:[%s202 + $0xe8] sm:$0xff]
      %v2137 = vld [vmem:[%s202 + $0xf0] sm:$0xff]
      %v2138 = vld [vmem:[%s202 + $0xf8] sm:$0xff]
      %v2139 = vld [vmem:[%s202 + $0x100] sm:$0xff]
      %v2140 = vld [vmem:[%s202 + $0x108] sm:$0xff]
      %v2141 = vld [vmem:[%s202 + $0x110] sm:$0xff]
      %v2142 = vld [vmem:[%s202 + $0x118] sm:$0xff]
      %v2143 = vld [vmem:[%s202 + $0x120] sm:$0xff]
      %v2144 = vld [vmem:[%s202 + $0x128] sm:$0xff]
      %v2145 = vld [vmem:[%s202 + $0x130] sm:$0xff]
      %v2146 = vld [vmem:[%s202 + $0x138] sm:$0xff]
      %v2147 = vld [vmem:[%s202 + $0x140] sm:$0xff]
      %v2148 = vld [vmem:[%s202 + $0x148] sm:$0xff]
      %v2149 = vld [vmem:[%s202 + $0x150] sm:$0xff]
      %v2150 = vld [vmem:[%s202 + $0x158] sm:$0xff]
      %v2151 = vld [vmem:[%s202 + $0x160] sm:$0xff]
      %v2152 = vld [vmem:[%s202 + $0x168] sm:$0xff]
      %v2153 = vld [vmem:[%s202 + $0x170] sm:$0xff]
      %v2154 = vld [vmem:[%s202 + $0x178] sm:$0xff]
      %v2155 = vld [vmem:[%s202 + $0x180] sm:$0xff]
      %v2156 = vld [vmem:[%s202 + $0x188] sm:$0xff]
      %v2157 = vld [vmem:[%s202 + $0x190] sm:$0xff]
      %v2158 = vld [vmem:[%s202 + $0x198] sm:$0xff]
      %v2159 = vld [vmem:[%s202 + $0x1a0] sm:$0xff]
      %v2160 = vld [vmem:[%s202 + $0x1a8] sm:$0xff]
      %v2161 = vld [vmem:[%s202 + $0x1b0] sm:$0xff]
      %v2162 = vld [vmem:[%s202 + $0x1b8] sm:$0xff]
      %v2163 = vld [vmem:[%s202 + $0x1c0] sm:$0xff]
      %v2164 = vld [vmem:[%s202 + $0x1c8] sm:$0xff]
      %v2165 = vld [vmem:[%s202 + $0x1d0] sm:$0xff]
      %v2166 = vld [vmem:[%s202 + $0x1d8] sm:$0xff]
      %v2167 = vld [vmem:[%s202 + $0x1e0] sm:$0xff]
      %v2168 = vld [vmem:[%s202 + $0x1e8] sm:$0xff]
      %v2169 = vld [vmem:[%s202 + $0x1f0] sm:$0xff]
      %v2170 = vld [vmem:[%s202 + $0x1f8] sm:$0xff]
      %v2171 = vld [vmem:[%s202 + $0x200] sm:$0xff]
      %v2172 = vld [vmem:[%s202 + $0x208] sm:$0xff]
      %v2173 = vld [vmem:[%s202 + $0x210] sm:$0xff]
      %v2174 = vld [vmem:[%s202 + $0x218] sm:$0xff]
      %v2175 = vld [vmem:[%s202 + $0x220] sm:$0xff]
      %v2176 = vld [vmem:[%s202 + $0x228] sm:$0xff]
      %v2177 = vld [vmem:[%s202 + $0x230] sm:$0xff]
      %v2178 = vld [vmem:[%s202 + $0x238] sm:$0xff]
      %v2179 = vld [vmem:[%s202 + $0x240] sm:$0xff]
      %v2180 = vld [vmem:[%s202 + $0x248] sm:$0xff]
      %v2181 = vld [vmem:[%s202 + $0x250] sm:$0xff]
      %v2182 = vld [vmem:[%s202 + $0x258] sm:$0xff]
      %v2183 = vld [vmem:[%s202 + $0x260] sm:$0xff]
      %v2184 = vld [vmem:[%s202 + $0x268] sm:$0xff]
      %v2185 = vld [vmem:[%s202 + $0x270] sm:$0xff]
      %v2186 = vld [vmem:[%s202 + $0x278] sm:$0xff]
      %v2187 = vld [vmem:[%s202 + $0x280] sm:$0xff]
      %v2188 = vld [vmem:[%s202 + $0x288] sm:$0xff]
      %v2189 = vld [vmem:[%s202 + $0x290] sm:$0xff]
      %v2190 = vld [vmem:[%s202 + $0x298] sm:$0xff]
      %v2191 = vld [vmem:[%s202 + $0x2a0] sm:$0xff]
      %v2192 = vld [vmem:[%s202 + $0x2a8] sm:$0xff]
      %v2193 = vld [vmem:[%s202 + $0x2b0] sm:$0xff]
      %v2194 = vld [vmem:[%s202 + $0x2b8] sm:$0xff]
      %v2195 = vld [vmem:[%s202 + $0x2c0] sm:$0xff]
      %v2196 = vld [vmem:[%s202 + $0x2c8] sm:$0xff]
      %v2197 = vld [vmem:[%s202 + $0x2d0] sm:$0xff]
      %v2198 = vld [vmem:[%s202 + $0x2d8] sm:$0xff]
      %v2199 = vld [vmem:[%s202 + $0x2e0] sm:$0xff]
      %v2200 = vld [vmem:[%s202 + $0x2e8] sm:$0xff]
      %v2201 = vld [vmem:[%s202 + $0x2f0] sm:$0xff]
      %v2202 = vld [vmem:[%s202 + $0x2f8] sm:$0xff]
      %v2203 = vld [vmem:[%s202 + $0x300] sm:$0xff]
      %v2204 = vld [vmem:[%s202 + $0x308] sm:$0xff]
      %v2205 = vld [vmem:[%s202 + $0x310] sm:$0xff]
      %v2206 = vld [vmem:[%s202 + $0x318] sm:$0xff]
      %v2207 = vld [vmem:[%s202 + $0x320] sm:$0xff]
      %v2208 = vld [vmem:[%s202 + $0x328] sm:$0xff]
      %v2209 = vld [vmem:[%s202 + $0x330] sm:$0xff]
      %v2210 = vld [vmem:[%s202 + $0x338] sm:$0xff]
      %v2211 = vld [vmem:[%s202 + $0x340] sm:$0xff]
      %v2212 = vld [vmem:[%s202 + $0x348] sm:$0xff]
      %v2213 = vld [vmem:[%s202 + $0x350] sm:$0xff]
      %v2214 = vld [vmem:[%s202 + $0x358] sm:$0xff]
      %v2215 = vld [vmem:[%s202 + $0x360] sm:$0xff]
      %v2216 = vld [vmem:[%s202 + $0x368] sm:$0xff]
      %v2217 = vld [vmem:[%s202 + $0x370] sm:$0xff]
      %v2218 = vld [vmem:[%s202 + $0x378] sm:$0xff]
      %v2219 = vld [vmem:[%s202 + $0x380] sm:$0xff]
      %v2220 = vld [vmem:[%s202 + $0x388] sm:$0xff]
      %v2221 = vld [vmem:[%s202 + $0x390] sm:$0xff]
      %v2222 = vld [vmem:[%s202 + $0x398] sm:$0xff]
      %v2223 = vld [vmem:[%s202 + $0x3a0] sm:$0xff]
      %v2224 = vld [vmem:[%s202 + $0x3a8] sm:$0xff]
      %v2225 = vld [vmem:[%s202 + $0x3b0] sm:$0xff]
      %v2226 = vld [vmem:[%s202 + $0x3b8] sm:$0xff]
      %v2227 = vld [vmem:[%s202 + $0x3c0] sm:$0xff]
      %v2228 = vld [vmem:[%s202 + $0x3c8] sm:$0xff]
      %v2229 = vld [vmem:[%s202 + $0x3d0] sm:$0xff]
      %v2230 = vld [vmem:[%s202 + $0x3d8] sm:$0xff]
      %v2231 = vld [vmem:[%s202 + $0x3e0] sm:$0xff]
      %v2232 = vld [vmem:[%s202 + $0x3e8] sm:$0xff]
      %v2233 = vld [vmem:[%s202 + $0x3f0] sm:$0xff]
      %v2234 = vld [vmem:[%s202 + $0x3f8] sm:$0xff]
      %v2235 = vld [vmem:[%s202 + $0x400] sm:$0xff]
      %v2236 = vld [vmem:[%s202 + $0x408] sm:$0xff]
      %v2237 = vld [vmem:[%s202 + $0x410] sm:$0xff]
      %v2238 = vld [vmem:[%s202 + $0x418] sm:$0xff]
      %v2239 = vld [vmem:[%s202 + $0x420] sm:$0xff]
      %v2240 = vld [vmem:[%s202 + $0x428] sm:$0xff]
      %v2241 = vld [vmem:[%s202 + $0x430] sm:$0xff]
      %v2242 = vld [vmem:[%s202 + $0x438] sm:$0xff]
      %v2243 = vld [vmem:[%s202 + $0x440] sm:$0xff]
      %v2244 = vld [vmem:[%s202 + $0x448] sm:$0xff]
      %v2245 = vld [vmem:[%s202 + $0x450] sm:$0xff]
      %v2246 = vld [vmem:[%s202 + $0x458] sm:$0xff]
      %v2247 = vld [vmem:[%s202 + $0x460] sm:$0xff]
      %v2248 = vld [vmem:[%s202 + $0x468] sm:$0xff]
      %v2249 = vld [vmem:[%s202 + $0x470] sm:$0xff]
      %v2250 = vld [vmem:[%s202 + $0x478] sm:$0xff]
      %v2251 = vld [vmem:[%s202 + $0x480] sm:$0xff]
      %v2252 = vld [vmem:[%s202 + $0x488] sm:$0xff]
      %v2253 = vld [vmem:[%s202 + $0x490] sm:$0xff]
      %v2254 = vld [vmem:[%s202 + $0x498] sm:$0xff]
      %v2255 = vld [vmem:[%s202 + $0x4a0] sm:$0xff]
      %v2256 = vld [vmem:[%s202 + $0x4a8] sm:$0xff]
      %v2257 = vld [vmem:[%s202 + $0x4b0] sm:$0xff]
      %v2258 = vld [vmem:[%s202 + $0x4b8] sm:$0xff]
      %v2259 = vld [vmem:[%s202 + $0x4c0] sm:$0xff]
      %v2260 = vld [vmem:[%s202 + $0x4c8] sm:$0xff]
      %v2261 = vld [vmem:[%s202 + $0x4d0] sm:$0xff]
      %v2262 = vld [vmem:[%s202 + $0x4d8] sm:$0xff]
      %v2263 = vld [vmem:[%s202 + $0x4e0] sm:$0xff]
      %v2264 = vld [vmem:[%s202 + $0x4e8] sm:$0xff]
      %v2265 = vld [vmem:[%s202 + $0x4f0] sm:$0xff]
      %v2266 = vld [vmem:[%s202 + $0x4f8] sm:$0xff]
      %v2267 = vld [vmem:[%s202 + $0x500] sm:$0xff]
      %v2268 = vld [vmem:[%s202 + $0x508] sm:$0xff]
      %v2269 = vld [vmem:[%s202 + $0x510] sm:$0xff]
      %v2270 = vld [vmem:[%s202 + $0x518] sm:$0xff]
      %v2271 = vld [vmem:[%s202 + $0x520] sm:$0xff]
      %v2272 = vld [vmem:[%s202 + $0x528] sm:$0xff]
      %v2273 = vld [vmem:[%s202 + $0x530] sm:$0xff]
      %v2274 = vld [vmem:[%s202 + $0x538] sm:$0xff]
      %v2275 = vld [vmem:[%s202 + $0x540] sm:$0xff]
      %v2276 = vld [vmem:[%s202 + $0x548] sm:$0xff]
      %v2277 = vld [vmem:[%s202 + $0x550] sm:$0xff]
      %v2278 = vld [vmem:[%s202 + $0x558] sm:$0xff]
      %v2279 = vld [vmem:[%s202 + $0x560] sm:$0xff]
      %v2280 = vld [vmem:[%s202 + $0x568] sm:$0xff]
      %v2281 = vld [vmem:[%s202 + $0x570] sm:$0xff]
      %v2282 = vld [vmem:[%s202 + $0x578] sm:$0xff]
      %v2283 = vld [vmem:[%s202 + $0x580] sm:$0xff]
      %v2284 = vld [vmem:[%s202 + $0x588] sm:$0xff]
      %v2285 = vld [vmem:[%s202 + $0x590] sm:$0xff]
      %v2286 = vld [vmem:[%s202 + $0x598] sm:$0xff]
      %v2287 = vld [vmem:[%s202 + $0x5a0] sm:$0xff]
      %v2288 = vld [vmem:[%s202 + $0x5a8] sm:$0xff]
      %v2289 = vld [vmem:[%s202 + $0x5b0] sm:$0xff]
      %v2290 = vld [vmem:[%s202 + $0x5b8] sm:$0xff]
      %v2291 = vld [vmem:[%s202 + $0x5c0] sm:$0xff]
      %v2292 = vld [vmem:[%s202 + $0x5c8] sm:$0xff]
      %v2293 = vld [vmem:[%s202 + $0x5d0] sm:$0xff]
      %v2294 = vld [vmem:[%s202 + $0x5d8] sm:$0xff]
      %v2295 = vld [vmem:[%s202 + $0x5e0] sm:$0xff]
      %v2296 = vld [vmem:[%s202 + $0x5e8] sm:$0xff]
      %v2297 = vld [vmem:[%s202 + $0x5f0] sm:$0xff]
      %v2298 = vld [vmem:[%s202 + $0x5f8] sm:$0xff]
      %v2299 = vld [vmem:[%s202 + $0x600] sm:$0xff]
      %v2300 = vld [vmem:[%s202 + $0x608] sm:$0xff]
      %v2301 = vld [vmem:[%s202 + $0x610] sm:$0xff]
      %v2302 = vld [vmem:[%s202 + $0x618] sm:$0xff]
      %v2303 = vld [vmem:[%s202 + $0x620] sm:$0xff]
      %v2304 = vld [vmem:[%s202 + $0x628] sm:$0xff]
      %v2305 = vld [vmem:[%s202 + $0x630] sm:$0xff]
      %v2306 = vld [vmem:[%s202 + $0x638] sm:$0xff]
      %v2307 = vld [vmem:[%s202 + $0x640] sm:$0xff]
      %v2308 = vld [vmem:[%s202 + $0x648] sm:$0xff]
      %v2309 = vld [vmem:[%s202 + $0x650] sm:$0xff]
      %v2310 = vld [vmem:[%s202 + $0x658] sm:$0xff]
      %v2311 = vld [vmem:[%s202 + $0x660] sm:$0xff]
      %v2312 = vld [vmem:[%s202 + $0x668] sm:$0xff]
      %v2313 = vld [vmem:[%s202 + $0x670] sm:$0xff]
      %v2314 = vld [vmem:[%s202 + $0x678] sm:$0xff]
      %v2315 = vld [vmem:[%s202 + $0x680] sm:$0xff]
      %v2316 = vld [vmem:[%s202 + $0x688] sm:$0xff]
      %v2317 = vld [vmem:[%s202 + $0x690] sm:$0xff]
      %v2318 = vld [vmem:[%s202 + $0x698] sm:$0xff]
      %v2319 = vld [vmem:[%s202 + $0x6a0] sm:$0xff]
      %v2320 = vld [vmem:[%s202 + $0x6a8] sm:$0xff]
      %v2321 = vld [vmem:[%s202 + $0x6b0] sm:$0xff]
      %v2322 = vld [vmem:[%s202 + $0x6b8] sm:$0xff]
      %v2323 = vld [vmem:[%s202 + $0x6c0] sm:$0xff]
      %v2324 = vld [vmem:[%s202 + $0x6c8] sm:$0xff]
      %v2325 = vld [vmem:[%s202 + $0x6d0] sm:$0xff]
      %v2326 = vld [vmem:[%s202 + $0x6d8] sm:$0xff]
      %v2327 = vld [vmem:[%s202 + $0x6e0] sm:$0xff]
      %v2328 = vld [vmem:[%s202 + $0x6e8] sm:$0xff]
      %v2329 = vld [vmem:[%s202 + $0x6f0] sm:$0xff]
      %v2330 = vld [vmem:[%s202 + $0x6f8] sm:$0xff]
      %v2331 = vld [vmem:[%s202 + $0x700] sm:$0xff]
      %v2332 = vld [vmem:[%s202 + $0x708] sm:$0xff]
      %v2333 = vld [vmem:[%s202 + $0x710] sm:$0xff]
      %v2334 = vld [vmem:[%s202 + $0x718] sm:$0xff]
      %v2335 = vld [vmem:[%s202 + $0x720] sm:$0xff]
      %v2336 = vld [vmem:[%s202 + $0x728] sm:$0xff]
      %v2337 = vld [vmem:[%s202 + $0x730] sm:$0xff]
      %v2338 = vld [vmem:[%s202 + $0x738] sm:$0xff]
      %v2339 = vld [vmem:[%s202 + $0x740] sm:$0xff]
      %v2340 = vld [vmem:[%s202 + $0x748] sm:$0xff]
      %v2341 = vld [vmem:[%s202 + $0x750] sm:$0xff]
      %v2342 = vld [vmem:[%s202 + $0x758] sm:$0xff]
      %v2343 = vld [vmem:[%s202 + $0x760] sm:$0xff]
      %v2344 = vld [vmem:[%s202 + $0x768] sm:$0xff]
      %v2345 = vld [vmem:[%s202 + $0x770] sm:$0xff]
      %v2346 = vld [vmem:[%s202 + $0x778] sm:$0xff]
      %v2347 = vld [vmem:[%s202 + $0x780] sm:$0xff]
      %v2348 = vld [vmem:[%s202 + $0x788] sm:$0xff]
      %v2349 = vld [vmem:[%s202 + $0x790] sm:$0xff]
      %v2350 = vld [vmem:[%s202 + $0x798] sm:$0xff]
      %v2351 = vld [vmem:[%s202 + $0x7a0] sm:$0xff]
      %v2352 = vld [vmem:[%s202 + $0x7a8] sm:$0xff]
      %v2353 = vld [vmem:[%s202 + $0x7b0] sm:$0xff]
      %v2354 = vld [vmem:[%s202 + $0x7b8] sm:$0xff]
      %v2355 = vld [vmem:[%s202 + $0x7c0] sm:$0xff]
      %v2356 = vld [vmem:[%s202 + $0x7c8] sm:$0xff]
      %v2357 = vld [vmem:[%s202 + $0x7d0] sm:$0xff]
      %v2358 = vld [vmem:[%s202 + $0x7d8] sm:$0xff]
      %v2359 = vld [vmem:[%s202 + $0x7e0] sm:$0xff]
      %v2360 = vld [vmem:[%s202 + $0x7e8] sm:$0xff]
      %v2361 = vld [vmem:[%s202 + $0x7f0] sm:$0xff]
      %v2362 = vld [vmem:[%s202 + $0x7f8] sm:$0xff]
      %v2363 = vld [vmem:[%s202 + $0x800] sm:$0xff]
      %v2364 = vld [vmem:[%s202 + $0x808] sm:$0xff]
      %v2365 = vld [vmem:[%s202 + $0x810] sm:$0xff]
      %v2366 = vld [vmem:[%s202 + $0x818] sm:$0xff]
      %v2367 = vld [vmem:[%s202 + $0x820] sm:$0xff]
      %v2368 = vld [vmem:[%s202 + $0x828] sm:$0xff]
      %v2369 = vld [vmem:[%s202 + $0x830] sm:$0xff]
      %v2370 = vld [vmem:[%s202 + $0x838] sm:$0xff]
      %v2371 = vld [vmem:[%s202 + $0x840] sm:$0xff]
      %v2372 = vld [vmem:[%s202 + $0x848] sm:$0xff]
      %v2373 = vld [vmem:[%s202 + $0x850] sm:$0xff]
      %v2374 = vld [vmem:[%s202 + $0x858] sm:$0xff]
      %v2375 = vld [vmem:[%s202 + $0x860] sm:$0xff]
      %v2376 = vld [vmem:[%s202 + $0x868] sm:$0xff]
      %v2377 = vld [vmem:[%s202 + $0x870] sm:$0xff]
      %v2378 = vld [vmem:[%s202 + $0x878] sm:$0xff]
      %v2379 = vld [vmem:[%s202 + $0x880] sm:$0xff]
      %v2380 = vld [vmem:[%s202 + $0x888] sm:$0xff]
      %v2381 = vld [vmem:[%s202 + $0x890] sm:$0xff]
      %v2382 = vld [vmem:[%s202 + $0x898] sm:$0xff]
      %v2383 = vld [vmem:[%s202 + $0x8a0] sm:$0xff]
      %v2384 = vld [vmem:[%s202 + $0x8a8] sm:$0xff]
      %v2385 = vld [vmem:[%s202 + $0x8b0] sm:$0xff]
      %v2386 = vld [vmem:[%s202 + $0x8b8] sm:$0xff]
      %v2387 = vld [vmem:[%s202 + $0x8c0] sm:$0xff]
      %v2388 = vld [vmem:[%s202 + $0x8c8] sm:$0xff]
      %v2389 = vld [vmem:[%s202 + $0x8d0] sm:$0xff]
      %v2390 = vld [vmem:[%s202 + $0x8d8] sm:$0xff]
      %v2391 = vld [vmem:[%s202 + $0x8e0] sm:$0xff]
      %v2392 = vld [vmem:[%s202 + $0x8e8] sm:$0xff]
      %v2393 = vld [vmem:[%s202 + $0x8f0] sm:$0xff]
      %v2394 = vld [vmem:[%s202 + $0x8f8] sm:$0xff]
      %v2395 = vld [vmem:[%s202 + $0x900] sm:$0xff]
      %v2396 = vld [vmem:[%s202 + $0x908] sm:$0xff]
      %v2397 = vld [vmem:[%s202 + $0x910] sm:$0xff]
      %v2398 = vld [vmem:[%s202 + $0x918] sm:$0xff]
      %v2399 = vld [vmem:[%s202 + $0x920] sm:$0xff]
      %v2400 = vld [vmem:[%s202 + $0x928] sm:$0xff]
      %v2401 = vld [vmem:[%s202 + $0x930] sm:$0xff]
      %v2402 = vld [vmem:[%s202 + $0x938] sm:$0xff]
      %v2403 = vld [vmem:[%s202 + $0x940] sm:$0xff]
      %v2404 = vld [vmem:[%s202 + $0x948] sm:$0xff]
      %v2405 = vld [vmem:[%s202 + $0x950] sm:$0xff]
      %v2406 = vld [vmem:[%s202 + $0x958] sm:$0xff]
      %v2407 = vld [vmem:[%s202 + $0x960] sm:$0xff]
      %v2408 = vld [vmem:[%s202 + $0x968] sm:$0xff]
      %v2409 = vld [vmem:[%s202 + $0x970] sm:$0xff]
      %v2410 = vld [vmem:[%s202 + $0x978] sm:$0xff]
      %v2411 = vld [vmem:[%s202 + $0x980] sm:$0xff]
      %v2412 = vld [vmem:[%s202 + $0x988] sm:$0xff]
      %v2413 = vld [vmem:[%s202 + $0x990] sm:$0xff]
      %v2414 = vld [vmem:[%s202 + $0x998] sm:$0xff]
      %v2415 = vld [vmem:[%s202 + $0x9a0] sm:$0xff]
      %v2416 = vld [vmem:[%s202 + $0x9a8] sm:$0xff]
      %v2417 = vld [vmem:[%s202 + $0x9b0] sm:$0xff]
      %v2418 = vld [vmem:[%s202 + $0x9b8] sm:$0xff]
      %v2419 = vld [vmem:[%s202 + $0x9c0] sm:$0xff]
      %v2420 = vld [vmem:[%s202 + $0x9c8] sm:$0xff]
      %v2421 = vld [vmem:[%s202 + $0x9d0] sm:$0xff]
      %v2422 = vld [vmem:[%s202 + $0x9d8] sm:$0xff]
      %v2423 = vld [vmem:[%s202 + $0x9e0] sm:$0xff]
      %v2424 = vld [vmem:[%s202 + $0x9e8] sm:$0xff]
      %v2425 = vld [vmem:[%s202 + $0x9f0] sm:$0xff]
      %v2426 = vld [vmem:[%s202 + $0x9f8] sm:$0xff]
      %v2427 = vld [vmem:[%s202 + $0xa00] sm:$0xff]
      %v2428 = vld [vmem:[%s202 + $0xa08] sm:$0xff]
      %v2429 = vld [vmem:[%s202 + $0xa10] sm:$0xff]
      %v2430 = vld [vmem:[%s202 + $0xa18] sm:$0xff]
      %v2431 = vld [vmem:[%s202 + $0xa20] sm:$0xff]
      %v2432 = vld [vmem:[%s202 + $0xa28] sm:$0xff]
      %v2433 = vld [vmem:[%s202 + $0xa30] sm:$0xff]
      %v2434 = vld [vmem:[%s202 + $0xa38] sm:$0xff]
      %v2435 = vld [vmem:[%s202 + $0xa40] sm:$0xff]
      %v2436 = vld [vmem:[%s202 + $0xa48] sm:$0xff]
      %v2437 = vld [vmem:[%s202 + $0xa50] sm:$0xff]
      %v2438 = vld [vmem:[%s202 + $0xa58] sm:$0xff]
      %v2439 = vld [vmem:[%s202 + $0xa60] sm:$0xff]
      %v2440 = vld [vmem:[%s202 + $0xa68] sm:$0xff]
      %v2441 = vld [vmem:[%s202 + $0xa70] sm:$0xff]
      %v2442 = vld [vmem:[%s202 + $0xa78] sm:$0xff]
      %v2443 = vld [vmem:[%s202 + $0xa80] sm:$0xff]
      %v2444 = vld [vmem:[%s202 + $0xa88] sm:$0xff]
      %v2445 = vld [vmem:[%s202 + $0xa90] sm:$0xff]
      %v2446 = vld [vmem:[%s202 + $0xa98] sm:$0xff]
      %v2447 = vld [vmem:[%s202 + $0xaa0] sm:$0xff]
      %v2448 = vld [vmem:[%s202 + $0xaa8] sm:$0xff]
      %v2449 = vld [vmem:[%s202 + $0xab0] sm:$0xff]
      %v2450 = vld [vmem:[%s202 + $0xab8] sm:$0xff]
      %v2451 = vld [vmem:[%s202 + $0xac0] sm:$0xff]
      %v2452 = vld [vmem:[%s202 + $0xac8] sm:$0xff]
      %v2453 = vld [vmem:[%s202 + $0xad0] sm:$0xff]
      %v2454 = vld [vmem:[%s202 + $0xad8] sm:$0xff]
      %v2455 = vld [vmem:[%s202 + $0xae0] sm:$0xff]
      %v2456 = vld [vmem:[%s202 + $0xae8] sm:$0xff]
      %v2457 = vld [vmem:[%s202 + $0xaf0] sm:$0xff]
      %v2458 = vld [vmem:[%s202 + $0xaf8] sm:$0xff]
      %v2459 = vld [vmem:[%s202 + $0xb00] sm:$0xff]
      %v2460 = vld [vmem:[%s202 + $0xb08] sm:$0xff]
      %v2461 = vld [vmem:[%s202 + $0xb10] sm:$0xff]
      %v2462 = vld [vmem:[%s202 + $0xb18] sm:$0xff]
      %v2463 = vld [vmem:[%s202 + $0xb20] sm:$0xff]
      %v2464 = vld [vmem:[%s202 + $0xb28] sm:$0xff]
      %v2465 = vld [vmem:[%s202 + $0xb30] sm:$0xff]
      %v2466 = vld [vmem:[%s202 + $0xb38] sm:$0xff]
      %v2467 = vld [vmem:[%s202 + $0xb40] sm:$0xff]
      %v2468 = vld [vmem:[%s202 + $0xb48] sm:$0xff]
      %v2469 = vld [vmem:[%s202 + $0xb50] sm:$0xff]
      %v2470 = vld [vmem:[%s202 + $0xb58] sm:$0xff]
      %v2471 = vld [vmem:[%s202 + $0xb60] sm:$0xff]
      %v2472 = vld [vmem:[%s202 + $0xb68] sm:$0xff]
      %v2473 = vld [vmem:[%s202 + $0xb70] sm:$0xff]
      %v2474 = vld [vmem:[%s202 + $0xb78] sm:$0xff]
      %v2475 = vld [vmem:[%s202 + $0xb80] sm:$0xff]
      %v2476 = vld [vmem:[%s202 + $0xb88] sm:$0xff]
      %v2477 = vld [vmem:[%s202 + $0xb90] sm:$0xff]
      %v2478 = vld [vmem:[%s202 + $0xb98] sm:$0xff]
      %v2479 = vld [vmem:[%s202 + $0xba0] sm:$0xff]
      %v2480 = vld [vmem:[%s202 + $0xba8] sm:$0xff]
      %v2481 = vld [vmem:[%s202 + $0xbb0] sm:$0xff]
      %v2482 = vld [vmem:[%s202 + $0xbb8] sm:$0xff]
      %v2483 = vld [vmem:[%s202 + $0xbc0] sm:$0xff]
      %v2484 = vld [vmem:[%s202 + $0xbc8] sm:$0xff]
      %v2485 = vld [vmem:[%s202 + $0xbd0] sm:$0xff]
      %v2486 = vld [vmem:[%s202 + $0xbd8] sm:$0xff]
      %v2487 = vld [vmem:[%s202 + $0xbe0] sm:$0xff]
      %v2488 = vld [vmem:[%s202 + $0xbe8] sm:$0xff]
      %v2489 = vld [vmem:[%s202 + $0xbf0] sm:$0xff]
      %v2490 = vld [vmem:[%s202 + $0xbf8] sm:$0xff]
      %v2491 = vld [vmem:[%s202 + $0xc00] sm:$0xff]
      %v2492 = vld [vmem:[%s202 + $0xc08] sm:$0xff]
      %v2493 = vld [vmem:[%s202 + $0xc10] sm:$0xff]
      %v2494 = vld [vmem:[%s202 + $0xc18] sm:$0xff]
      %v2495 = vld [vmem:[%s202 + $0xc20] sm:$0xff]
      %v2496 = vld [vmem:[%s202 + $0xc28] sm:$0xff]
      %v2497 = vld [vmem:[%s202 + $0xc30] sm:$0xff]
      %v2498 = vld [vmem:[%s202 + $0xc38] sm:$0xff]
      %v2499 = vld [vmem:[%s202 + $0xc40] sm:$0xff]
      %v2500 = vld [vmem:[%s202 + $0xc48] sm:$0xff]
      %v2501 = vld [vmem:[%s202 + $0xc50] sm:$0xff]
      %v2502 = vld [vmem:[%s202 + $0xc58] sm:$0xff]
      %v2503 = vld [vmem:[%s202 + $0xc60] sm:$0xff]
      %v2504 = vld [vmem:[%s202 + $0xc68] sm:$0xff]
      %v2505 = vld [vmem:[%s202 + $0xc70] sm:$0xff]
      %v2506 = vld [vmem:[%s202 + $0xc78] sm:$0xff]
      %v2507 = vld [vmem:[%s202 + $0xc80] sm:$0xff]
      %v2508 = vld [vmem:[%s202 + $0xc88] sm:$0xff]
      %v2509 = vld [vmem:[%s202 + $0xc90] sm:$0xff]
      %v2510 = vld [vmem:[%s202 + $0xc98] sm:$0xff]
      %v2511 = vld [vmem:[%s202 + $0xca0] sm:$0xff]
      %v2512 = vld [vmem:[%s202 + $0xca8] sm:$0xff]
      %v2513 = vld [vmem:[%s202 + $0xcb0] sm:$0xff]
      %v2514 = vld [vmem:[%s202 + $0xcb8] sm:$0xff]
      %v2515 = vld [vmem:[%s202 + $0xcc0] sm:$0xff]
      %v2516 = vld [vmem:[%s202 + $0xcc8] sm:$0xff]
      %v2517 = vld [vmem:[%s202 + $0xcd0] sm:$0xff]
      %v2518 = vld [vmem:[%s202 + $0xcd8] sm:$0xff]
      %v2519 = vld [vmem:[%s202 + $0xce0] sm:$0xff]
      %v2520 = vld [vmem:[%s202 + $0xce8] sm:$0xff]
      %v2521 = vld [vmem:[%s202 + $0xcf0] sm:$0xff]
      %v2522 = vld [vmem:[%s202 + $0xcf8] sm:$0xff]
      %v2523 = vld [vmem:[%s202 + $0xd00] sm:$0xff]
      %v2524 = vld [vmem:[%s202 + $0xd08] sm:$0xff]
      %v2525 = vld [vmem:[%s202 + $0xd10] sm:$0xff]
      %v2526 = vld [vmem:[%s202 + $0xd18] sm:$0xff]
      %v2527 = vld [vmem:[%s202 + $0xd20] sm:$0xff]
      %v2528 = vld [vmem:[%s202 + $0xd28] sm:$0xff]
      %v2529 = vld [vmem:[%s202 + $0xd30] sm:$0xff]
      %v2530 = vld [vmem:[%s202 + $0xd38] sm:$0xff]
      %v2531 = vld [vmem:[%s202 + $0xd40] sm:$0xff]
      %v2532 = vld [vmem:[%s202 + $0xd48] sm:$0xff]
      %v2533 = vld [vmem:[%s202 + $0xd50] sm:$0xff]
      %v2534 = vld [vmem:[%s202 + $0xd58] sm:$0xff]
      %v2535 = vld [vmem:[%s202 + $0xd60] sm:$0xff]
      %v2536 = vld [vmem:[%s202 + $0xd68] sm:$0xff]
      %v2537 = vld [vmem:[%s202 + $0xd70] sm:$0xff]
      %v2538 = vld [vmem:[%s202 + $0xd78] sm:$0xff]
      %v2539 = vld [vmem:[%s202 + $0xd80] sm:$0xff]
      %v2540 = vld [vmem:[%s202 + $0xd88] sm:$0xff]
      %v2541 = vld [vmem:[%s202 + $0xd90] sm:$0xff]
      %v2542 = vld [vmem:[%s202 + $0xd98] sm:$0xff]
      %v2543 = vld [vmem:[%s202 + $0xda0] sm:$0xff]
      %v2544 = vld [vmem:[%s202 + $0xda8] sm:$0xff]
      %v2545 = vld [vmem:[%s202 + $0xdb0] sm:$0xff]
      %v2546 = vld [vmem:[%s202 + $0xdb8] sm:$0xff]
      %v2547 = vld [vmem:[%s202 + $0xdc0] sm:$0xff]
      %v2548 = vld [vmem:[%s202 + $0xdc8] sm:$0xff]
      %v2549 = vld [vmem:[%s202 + $0xdd0] sm:$0xff]
      %v2550 = vld [vmem:[%s202 + $0xdd8] sm:$0xff]
      %v2551 = vld [vmem:[%s202 + $0xde0] sm:$0xff]
      %v2552 = vld [vmem:[%s202 + $0xde8] sm:$0xff]
      %v2553 = vld [vmem:[%s202 + $0xdf0] sm:$0xff]
      %v2554 = vld [vmem:[%s202 + $0xdf8] sm:$0xff]
      %v2555 = vld [vmem:[%s202 + $0xe00] sm:$0xff]
      %v2556 = vld [vmem:[%s202 + $0xe08] sm:$0xff]
      %v2557 = vld [vmem:[%s202 + $0xe10] sm:$0xff]
      %v2558 = vld [vmem:[%s202 + $0xe18] sm:$0xff]
      %v2559 = vld [vmem:[%s202 + $0xe20] sm:$0xff]
      %v2560 = vld [vmem:[%s202 + $0xe28] sm:$0xff]
      %v2561 = vld [vmem:[%s202 + $0xe30] sm:$0xff]
      %v2562 = vld [vmem:[%s202 + $0xe38] sm:$0xff]
      %v2563 = vld [vmem:[%s202 + $0xe40] sm:$0xff]
      %v2564 = vld [vmem:[%s202 + $0xe48] sm:$0xff]
      %v2565 = vld [vmem:[%s202 + $0xe50] sm:$0xff]
      %v2566 = vld [vmem:[%s202 + $0xe58] sm:$0xff]
      %v2567 = vld [vmem:[%s202 + $0xe60] sm:$0xff]
      %v2568 = vld [vmem:[%s202 + $0xe68] sm:$0xff]
      %v2569 = vld [vmem:[%s202 + $0xe70] sm:$0xff]
      %v2570 = vld [vmem:[%s202 + $0xe78] sm:$0xff]
      %v2571 = vld [vmem:[%s202 + $0xe80] sm:$0xff]
      %v2572 = vld [vmem:[%s202 + $0xe88] sm:$0xff]
      %v2573 = vld [vmem:[%s202 + $0xe90] sm:$0xff]
      %v2574 = vld [vmem:[%s202 + $0xe98] sm:$0xff]
      %v2575 = vld [vmem:[%s202 + $0xea0] sm:$0xff]
      %v2576 = vld [vmem:[%s202 + $0xea8] sm:$0xff]
      %v2577 = vld [vmem:[%s202 + $0xeb0] sm:$0xff]
      %v2578 = vld [vmem:[%s202 + $0xeb8] sm:$0xff]
      %v2579 = vld [vmem:[%s202 + $0xec0] sm:$0xff]
      %v2580 = vld [vmem:[%s202 + $0xec8] sm:$0xff]
      %v2581 = vld [vmem:[%s202 + $0xed0] sm:$0xff]
      %v2582 = vld [vmem:[%s202 + $0xed8] sm:$0xff]
      %v2583 = vld [vmem:[%s202 + $0xee0] sm:$0xff]
      %v2584 = vld [vmem:[%s202 + $0xee8] sm:$0xff]
      %v2585 = vld [vmem:[%s202 + $0xef0] sm:$0xff]
      %v2586 = vld [vmem:[%s202 + $0xef8] sm:$0xff]
      %v2587 = vld [vmem:[%s202 + $0xf00] sm:$0xff]
      %v2588 = vld [vmem:[%s202 + $0xf08] sm:$0xff]
      %v2589 = vld [vmem:[%s202 + $0xf10] sm:$0xff]
      %v2590 = vld [vmem:[%s202 + $0xf18] sm:$0xff]
      %v2591 = vld [vmem:[%s202 + $0xf20] sm:$0xff]
      %v2592 = vld [vmem:[%s202 + $0xf28] sm:$0xff]
      %v2593 = vld [vmem:[%s202 + $0xf30] sm:$0xff]
      %v2594 = vld [vmem:[%s202 + $0xf38] sm:$0xff]
      %v2595 = vld [vmem:[%s202 + $0xf40] sm:$0xff]
      %v2596 = vld [vmem:[%s202 + $0xf48] sm:$0xff]
      %v2597 = vld [vmem:[%s202 + $0xf50] sm:$0xff]
      %v2598 = vld [vmem:[%s202 + $0xf58] sm:$0xff]
      %v2599 = vld [vmem:[%s202 + $0xf60] sm:$0xff]
      %v2600 = vld [vmem:[%s202 + $0xf68] sm:$0xff]
      %v2601 = vld [vmem:[%s202 + $0xf70] sm:$0xff]
      %v2602 = vld [vmem:[%s202 + $0xf78] sm:$0xff]
      %v2603 = vld [vmem:[%s202 + $0xf80] sm:$0xff]
      %v2604 = vld [vmem:[%s202 + $0xf88] sm:$0xff]
      %v2605 = vld [vmem:[%s202 + $0xf90] sm:$0xff]
      %v2606 = vld [vmem:[%s202 + $0xf98] sm:$0xff]
      %v2607 = vld [vmem:[%s202 + $0xfa0] sm:$0xff]
      %v2608 = vld [vmem:[%s202 + $0xfa8] sm:$0xff]
      %v2609 = vld [vmem:[%s202 + $0xfb0] sm:$0xff]
      %v2610 = vld [vmem:[%s202 + $0xfb8] sm:$0xff]
      %v2611 = vld [vmem:[%s202 + $0xfc0] sm:$0xff]
      %v2612 = vld [vmem:[%s202 + $0xfc8] sm:$0xff]
      %v2613 = vld [vmem:[%s202 + $0xfd0] sm:$0xff]
      %v2614 = vld [vmem:[%s202 + $0xfd8] sm:$0xff]
      %v2615 = vld [vmem:[%s202 + $0xfe0] sm:$0xff]
      %v2616 = vld [vmem:[%s202 + $0xfe8] sm:$0xff]
      %v2617 = vld [vmem:[%s202 + $0xff0] sm:$0xff]
      %v2618 = vld [vmem:[%s202 + $0xff8] sm:$0xff]
      %v2619 = vld [vmem:[%s206] sm:$0xff]
      %v2621 = vlaneseq
      %v2622 = vshrl.u32 %v2621, 7
      %v2623 = vsub.s32 0, %v2622
      %v2624 = vrot.slane %v2619, %v2623
      %v2625 = vlaneseq
      %v2626 = vshrl.u32 %v2625, 7
      %v2627 = vsub.s32 1, %v2626
      %v2628 = vrot.slane %v2619, %v2627
      %v2629 = vlaneseq
      %v2630 = vshrl.u32 %v2629, 7
      %v2631 = vsub.s32 2, %v2630
      %v2632 = vrot.slane %v2619, %v2631
      %v2633 = vlaneseq
      %v2634 = vshrl.u32 %v2633, 7
      %v2635 = vsub.s32 3, %v2634
      %v2636 = vrot.slane %v2619, %v2635
      %v2637 = vlaneseq
      %v2638 = vshrl.u32 %v2637, 7
      %v2639 = vsub.s32 4, %v2638
      %v2640 = vrot.slane %v2619, %v2639
      %v2641 = vlaneseq
      %v2642 = vshrl.u32 %v2641, 7
      %v2643 = vsub.s32 5, %v2642
      %v2644 = vrot.slane %v2619, %v2643
      %v2645 = vlaneseq
      %v2646 = vshrl.u32 %v2645, 7
      %v2647 = vsub.s32 6, %v2646
      %v2648 = vrot.slane %v2619, %v2647
      %v2649 = vlaneseq
      %v2650 = vshrl.u32 %v2649, 7
      %v2651 = vsub.s32 7, %v2650
      %v2652 = vrot.slane %v2619, %v2651
      %v3173 = vunpack.c.l.b16 %v2107
      %v3174 = vunpack.c.h.b16 %v2107
      %v3175 = vunpack.c.l.b16 %v2108
      %v3176 = vunpack.c.h.b16 %v2108
      %v3177 = vunpack.c.l.b16 %v2109
      %v3178 = vunpack.c.h.b16 %v2109
      %v3179 = vunpack.c.l.b16 %v2110
      %v3180 = vunpack.c.h.b16 %v2110
      %v3181 = vunpack.c.l.b16 %v2111
      %v3182 = vunpack.c.h.b16 %v2111
      %v3183 = vunpack.c.l.b16 %v2112
      %v3184 = vunpack.c.h.b16 %v2112
      %v3185 = vunpack.c.l.b16 %v2113
      %v3186 = vunpack.c.h.b16 %v2113
      %v3187 = vunpack.c.l.b16 %v2114
      %v3188 = vunpack.c.h.b16 %v2114
      %v3189 = vunpack.c.l.b16 %v2115
      %v3190 = vunpack.c.h.b16 %v2115
      %v3191 = vunpack.c.l.b16 %v2116
      %v3192 = vunpack.c.h.b16 %v2116
      %v3193 = vunpack.c.l.b16 %v2117
      %v3194 = vunpack.c.h.b16 %v2117
      %v3195 = vunpack.c.l.b16 %v2118
      %v3196 = vunpack.c.h.b16 %v2118
      %v3197 = vunpack.c.l.b16 %v2119
      %v3198 = vunpack.c.h.b16 %v2119
      %v3199 = vunpack.c.l.b16 %v2120
      %v3200 = vunpack.c.h.b16 %v2120
      %v3201 = vunpack.c.l.b16 %v2121
      %v3202 = vunpack.c.h.b16 %v2121
      %v3203 = vunpack.c.l.b16 %v2122
      %v3204 = vunpack.c.h.b16 %v2122
      %v3205 = vunpack.c.l.b16 %v2123
      %v3206 = vunpack.c.h.b16 %v2123
      %v3207 = vunpack.c.l.b16 %v2124
      %v3208 = vunpack.c.h.b16 %v2124
      %v3209 = vunpack.c.l.b16 %v2125
      %v3210 = vunpack.c.h.b16 %v2125
      %v3211 = vunpack.c.l.b16 %v2126
      %v3212 = vunpack.c.h.b16 %v2126
      %v3213 = vunpack.c.l.b16 %v2127
      %v3214 = vunpack.c.h.b16 %v2127
      %v3215 = vunpack.c.l.b16 %v2128
      %v3216 = vunpack.c.h.b16 %v2128
      %v3217 = vunpack.c.l.b16 %v2129
      %v3218 = vunpack.c.h.b16 %v2129
      %v3219 = vunpack.c.l.b16 %v2130
      %v3220 = vunpack.c.h.b16 %v2130
      %v3221 = vunpack.c.l.b16 %v2131
      %v3222 = vunpack.c.h.b16 %v2131
      %v3223 = vunpack.c.l.b16 %v2132
      %v3224 = vunpack.c.h.b16 %v2132
      %v3225 = vunpack.c.l.b16 %v2133
      %v3226 = vunpack.c.h.b16 %v2133
      %v3227 = vunpack.c.l.b16 %v2134
      %v3228 = vunpack.c.h.b16 %v2134
      %v3229 = vunpack.c.l.b16 %v2135
      %v3230 = vunpack.c.h.b16 %v2135
      %v3231 = vunpack.c.l.b16 %v2136
      %v3232 = vunpack.c.h.b16 %v2136
      %v3233 = vunpack.c.l.b16 %v2137
      %v3234 = vunpack.c.h.b16 %v2137
      %v3235 = vunpack.c.l.b16 %v2138
      %v3236 = vunpack.c.h.b16 %v2138
      %v3237 = vunpack.c.l.b16 %v2139
      %v3238 = vunpack.c.h.b16 %v2139
      %v3239 = vunpack.c.l.b16 %v2140
      %v3240 = vunpack.c.h.b16 %v2140
      %v3241 = vunpack.c.l.b16 %v2141
      %v3242 = vunpack.c.h.b16 %v2141
      %v3243 = vunpack.c.l.b16 %v2142
      %v3244 = vunpack.c.h.b16 %v2142
      %v3245 = vunpack.c.l.b16 %v2143
      %v3246 = vunpack.c.h.b16 %v2143
      %v3247 = vunpack.c.l.b16 %v2144
      %v3248 = vunpack.c.h.b16 %v2144
      %v3249 = vunpack.c.l.b16 %v2145
      %v3250 = vunpack.c.h.b16 %v2145
      %v3251 = vunpack.c.l.b16 %v2146
      %v3252 = vunpack.c.h.b16 %v2146
      %v3253 = vunpack.c.l.b16 %v2147
      %v3254 = vunpack.c.h.b16 %v2147
      %v3255 = vunpack.c.l.b16 %v2148
      %v3256 = vunpack.c.h.b16 %v2148
      %v3257 = vunpack.c.l.b16 %v2149
      %v3258 = vunpack.c.h.b16 %v2149
      %v3259 = vunpack.c.l.b16 %v2150
      %v3260 = vunpack.c.h.b16 %v2150
      %v3261 = vunpack.c.l.b16 %v2151
      %v3262 = vunpack.c.h.b16 %v2151
      %v3263 = vunpack.c.l.b16 %v2152
      %v3264 = vunpack.c.h.b16 %v2152
      %v3265 = vunpack.c.l.b16 %v2153
      %v3266 = vunpack.c.h.b16 %v2153
      %v3267 = vunpack.c.l.b16 %v2154
      %v3268 = vunpack.c.h.b16 %v2154
      %v3269 = vunpack.c.l.b16 %v2155
      %v3270 = vunpack.c.h.b16 %v2155
      %v3271 = vunpack.c.l.b16 %v2156
      %v3272 = vunpack.c.h.b16 %v2156
      %v3273 = vunpack.c.l.b16 %v2157
      %v3274 = vunpack.c.h.b16 %v2157
      %v3275 = vunpack.c.l.b16 %v2158
      %v3276 = vunpack.c.h.b16 %v2158
      %v3277 = vunpack.c.l.b16 %v2159
      %v3278 = vunpack.c.h.b16 %v2159
      %v3279 = vunpack.c.l.b16 %v2160
      %v3280 = vunpack.c.h.b16 %v2160
      %v3281 = vunpack.c.l.b16 %v2161
      %v3282 = vunpack.c.h.b16 %v2161
      %v3283 = vunpack.c.l.b16 %v2162
      %v3284 = vunpack.c.h.b16 %v2162
      %v3285 = vunpack.c.l.b16 %v2163
      %v3286 = vunpack.c.h.b16 %v2163
      %v3287 = vunpack.c.l.b16 %v2164
      %v3288 = vunpack.c.h.b16 %v2164
      %v3289 = vunpack.c.l.b16 %v2165
      %v3290 = vunpack.c.h.b16 %v2165
      %v3291 = vunpack.c.l.b16 %v2166
      %v3292 = vunpack.c.h.b16 %v2166
      %v3293 = vunpack.c.l.b16 %v2167
      %v3294 = vunpack.c.h.b16 %v2167
      %v3295 = vunpack.c.l.b16 %v2168
      %v3296 = vunpack.c.h.b16 %v2168
      %v3297 = vunpack.c.l.b16 %v2169
      %v3298 = vunpack.c.h.b16 %v2169
      %v3299 = vunpack.c.l.b16 %v2170
      %v3300 = vunpack.c.h.b16 %v2170
      %v3301 = vunpack.c.l.b16 %v2171
      %v3302 = vunpack.c.h.b16 %v2171
      %v3303 = vunpack.c.l.b16 %v2172
      %v3304 = vunpack.c.h.b16 %v2172
      %v3305 = vunpack.c.l.b16 %v2173
      %v3306 = vunpack.c.h.b16 %v2173
      %v3307 = vunpack.c.l.b16 %v2174
      %v3308 = vunpack.c.h.b16 %v2174
      %v3309 = vunpack.c.l.b16 %v2175
      %v3310 = vunpack.c.h.b16 %v2175
      %v3311 = vunpack.c.l.b16 %v2176
      %v3312 = vunpack.c.h.b16 %v2176
      %v3313 = vunpack.c.l.b16 %v2177
      %v3314 = vunpack.c.h.b16 %v2177
      %v3315 = vunpack.c.l.b16 %v2178
      %v3316 = vunpack.c.h.b16 %v2178
      %v3317 = vunpack.c.l.b16 %v2179
      %v3318 = vunpack.c.h.b16 %v2179
      %v3319 = vunpack.c.l.b16 %v2180
      %v3320 = vunpack.c.h.b16 %v2180
      %v3321 = vunpack.c.l.b16 %v2181
      %v3322 = vunpack.c.h.b16 %v2181
      %v3323 = vunpack.c.l.b16 %v2182
      %v3324 = vunpack.c.h.b16 %v2182
      %v3325 = vunpack.c.l.b16 %v2183
      %v3326 = vunpack.c.h.b16 %v2183
      %v3327 = vunpack.c.l.b16 %v2184
      %v3328 = vunpack.c.h.b16 %v2184
      %v3329 = vunpack.c.l.b16 %v2185
      %v3330 = vunpack.c.h.b16 %v2185
      %v3331 = vunpack.c.l.b16 %v2186
      %v3332 = vunpack.c.h.b16 %v2186
      %v3333 = vunpack.c.l.b16 %v2187
      %v3334 = vunpack.c.h.b16 %v2187
      %v3335 = vunpack.c.l.b16 %v2188
      %v3336 = vunpack.c.h.b16 %v2188
      %v3337 = vunpack.c.l.b16 %v2189
      %v3338 = vunpack.c.h.b16 %v2189
      %v3339 = vunpack.c.l.b16 %v2190
      %v3340 = vunpack.c.h.b16 %v2190
      %v3341 = vunpack.c.l.b16 %v2191
      %v3342 = vunpack.c.h.b16 %v2191
      %v3343 = vunpack.c.l.b16 %v2192
      %v3344 = vunpack.c.h.b16 %v2192
      %v3345 = vunpack.c.l.b16 %v2193
      %v3346 = vunpack.c.h.b16 %v2193
      %v3347 = vunpack.c.l.b16 %v2194
      %v3348 = vunpack.c.h.b16 %v2194
      %v3349 = vunpack.c.l.b16 %v2195
      %v3350 = vunpack.c.h.b16 %v2195
      %v3351 = vunpack.c.l.b16 %v2196
      %v3352 = vunpack.c.h.b16 %v2196
      %v3353 = vunpack.c.l.b16 %v2197
      %v3354 = vunpack.c.h.b16 %v2197
      %v3355 = vunpack.c.l.b16 %v2198
      %v3356 = vunpack.c.h.b16 %v2198
      %v3357 = vunpack.c.l.b16 %v2199
      %v3358 = vunpack.c.h.b16 %v2199
      %v3359 = vunpack.c.l.b16 %v2200
      %v3360 = vunpack.c.h.b16 %v2200
      %v3361 = vunpack.c.l.b16 %v2201
      %v3362 = vunpack.c.h.b16 %v2201
      %v3363 = vunpack.c.l.b16 %v2202
      %v3364 = vunpack.c.h.b16 %v2202
      %v3365 = vunpack.c.l.b16 %v2203
      %v3366 = vunpack.c.h.b16 %v2203
      %v3367 = vunpack.c.l.b16 %v2204
      %v3368 = vunpack.c.h.b16 %v2204
      %v3369 = vunpack.c.l.b16 %v2205
      %v3370 = vunpack.c.h.b16 %v2205
      %v3371 = vunpack.c.l.b16 %v2206
      %v3372 = vunpack.c.h.b16 %v2206
      %v3373 = vunpack.c.l.b16 %v2207
      %v3374 = vunpack.c.h.b16 %v2207
      %v3375 = vunpack.c.l.b16 %v2208
      %v3376 = vunpack.c.h.b16 %v2208
      %v3377 = vunpack.c.l.b16 %v2209
      %v3378 = vunpack.c.h.b16 %v2209
      %v3379 = vunpack.c.l.b16 %v2210
      %v3380 = vunpack.c.h.b16 %v2210
      %v3381 = vunpack.c.l.b16 %v2211
      %v3382 = vunpack.c.h.b16 %v2211
      %v3383 = vunpack.c.l.b16 %v2212
      %v3384 = vunpack.c.h.b16 %v2212
      %v3385 = vunpack.c.l.b16 %v2213
      %v3386 = vunpack.c.h.b16 %v2213
      %v3387 = vunpack.c.l.b16 %v2214
      %v3388 = vunpack.c.h.b16 %v2214
      %v3389 = vunpack.c.l.b16 %v2215
      %v3390 = vunpack.c.h.b16 %v2215
      %v3391 = vunpack.c.l.b16 %v2216
      %v3392 = vunpack.c.h.b16 %v2216
      %v3393 = vunpack.c.l.b16 %v2217
      %v3394 = vunpack.c.h.b16 %v2217
      %v3395 = vunpack.c.l.b16 %v2218
      %v3396 = vunpack.c.h.b16 %v2218
      %v3397 = vunpack.c.l.b16 %v2219
      %v3398 = vunpack.c.h.b16 %v2219
      %v3399 = vunpack.c.l.b16 %v2220
      %v3400 = vunpack.c.h.b16 %v2220
      %v3401 = vunpack.c.l.b16 %v2221
      %v3402 = vunpack.c.h.b16 %v2221
      %v3403 = vunpack.c.l.b16 %v2222
      %v3404 = vunpack.c.h.b16 %v2222
      %v3405 = vunpack.c.l.b16 %v2223
      %v3406 = vunpack.c.h.b16 %v2223
      %v3407 = vunpack.c.l.b16 %v2224
      %v3408 = vunpack.c.h.b16 %v2224
      %v3409 = vunpack.c.l.b16 %v2225
      %v3410 = vunpack.c.h.b16 %v2225
      %v3411 = vunpack.c.l.b16 %v2226
      %v3412 = vunpack.c.h.b16 %v2226
      %v3413 = vunpack.c.l.b16 %v2227
      %v3414 = vunpack.c.h.b16 %v2227
      %v3415 = vunpack.c.l.b16 %v2228
      %v3416 = vunpack.c.h.b16 %v2228
      %v3417 = vunpack.c.l.b16 %v2229
      %v3418 = vunpack.c.h.b16 %v2229
      %v3419 = vunpack.c.l.b16 %v2230
      %v3420 = vunpack.c.h.b16 %v2230
      %v3421 = vunpack.c.l.b16 %v2231
      %v3422 = vunpack.c.h.b16 %v2231
      %v3423 = vunpack.c.l.b16 %v2232
      %v3424 = vunpack.c.h.b16 %v2232
      %v3425 = vunpack.c.l.b16 %v2233
      %v3426 = vunpack.c.h.b16 %v2233
      %v3427 = vunpack.c.l.b16 %v2234
      %v3428 = vunpack.c.h.b16 %v2234
      %v3429 = vunpack.c.l.b16 %v2235
      %v3430 = vunpack.c.h.b16 %v2235
      %v3431 = vunpack.c.l.b16 %v2236
      %v3432 = vunpack.c.h.b16 %v2236
      %v3433 = vunpack.c.l.b16 %v2237
      %v3434 = vunpack.c.h.b16 %v2237
      %v3435 = vunpack.c.l.b16 %v2238
      %v3436 = vunpack.c.h.b16 %v2238
      %v3437 = vunpack.c.l.b16 %v2239
      %v3438 = vunpack.c.h.b16 %v2239
      %v3439 = vunpack.c.l.b16 %v2240
      %v3440 = vunpack.c.h.b16 %v2240
      %v3441 = vunpack.c.l.b16 %v2241
      %v3442 = vunpack.c.h.b16 %v2241
      %v3443 = vunpack.c.l.b16 %v2242
      %v3444 = vunpack.c.h.b16 %v2242
      %v3445 = vunpack.c.l.b16 %v2243
      %v3446 = vunpack.c.h.b16 %v2243
      %v3447 = vunpack.c.l.b16 %v2244
      %v3448 = vunpack.c.h.b16 %v2244
      %v3449 = vunpack.c.l.b16 %v2245
      %v3450 = vunpack.c.h.b16 %v2245
      %v3451 = vunpack.c.l.b16 %v2246
      %v3452 = vunpack.c.h.b16 %v2246
      %v3453 = vunpack.c.l.b16 %v2247
      %v3454 = vunpack.c.h.b16 %v2247
      %v3455 = vunpack.c.l.b16 %v2248
      %v3456 = vunpack.c.h.b16 %v2248
      %v3457 = vunpack.c.l.b16 %v2249
      %v3458 = vunpack.c.h.b16 %v2249
      %v3459 = vunpack.c.l.b16 %v2250
      %v3460 = vunpack.c.h.b16 %v2250
      %v3461 = vunpack.c.l.b16 %v2251
      %v3462 = vunpack.c.h.b16 %v2251
      %v3463 = vunpack.c.l.b16 %v2252
      %v3464 = vunpack.c.h.b16 %v2252
      %v3465 = vunpack.c.l.b16 %v2253
      %v3466 = vunpack.c.h.b16 %v2253
      %v3467 = vunpack.c.l.b16 %v2254
      %v3468 = vunpack.c.h.b16 %v2254
      %v3469 = vunpack.c.l.b16 %v2255
      %v3470 = vunpack.c.h.b16 %v2255
      %v3471 = vunpack.c.l.b16 %v2256
      %v3472 = vunpack.c.h.b16 %v2256
      %v3473 = vunpack.c.l.b16 %v2257
      %v3474 = vunpack.c.h.b16 %v2257
      %v3475 = vunpack.c.l.b16 %v2258
      %v3476 = vunpack.c.h.b16 %v2258
      %v3477 = vunpack.c.l.b16 %v2259
      %v3478 = vunpack.c.h.b16 %v2259
      %v3479 = vunpack.c.l.b16 %v2260
      %v3480 = vunpack.c.h.b16 %v2260
      %v3481 = vunpack.c.l.b16 %v2261
      %v3482 = vunpack.c.h.b16 %v2261
      %v3483 = vunpack.c.l.b16 %v2262
      %v3484 = vunpack.c.h.b16 %v2262
      %v3485 = vunpack.c.l.b16 %v2263
      %v3486 = vunpack.c.h.b16 %v2263
      %v3487 = vunpack.c.l.b16 %v2264
      %v3488 = vunpack.c.h.b16 %v2264
      %v3489 = vunpack.c.l.b16 %v2265
      %v3490 = vunpack.c.h.b16 %v2265
      %v3491 = vunpack.c.l.b16 %v2266
      %v3492 = vunpack.c.h.b16 %v2266
      %v3493 = vunpack.c.l.b16 %v2267
      %v3494 = vunpack.c.h.b16 %v2267
      %v3495 = vunpack.c.l.b16 %v2268
      %v3496 = vunpack.c.h.b16 %v2268
      %v3497 = vunpack.c.l.b16 %v2269
      %v3498 = vunpack.c.h.b16 %v2269
      %v3499 = vunpack.c.l.b16 %v2270
      %v3500 = vunpack.c.h.b16 %v2270
      %v3501 = vunpack.c.l.b16 %v2271
      %v3502 = vunpack.c.h.b16 %v2271
      %v3503 = vunpack.c.l.b16 %v2272
      %v3504 = vunpack.c.h.b16 %v2272
      %v3505 = vunpack.c.l.b16 %v2273
      %v3506 = vunpack.c.h.b16 %v2273
      %v3507 = vunpack.c.l.b16 %v2274
      %v3508 = vunpack.c.h.b16 %v2274
      %v3509 = vunpack.c.l.b16 %v2275
      %v3510 = vunpack.c.h.b16 %v2275
      %v3511 = vunpack.c.l.b16 %v2276
      %v3512 = vunpack.c.h.b16 %v2276
      %v3513 = vunpack.c.l.b16 %v2277
      %v3514 = vunpack.c.h.b16 %v2277
      %v3515 = vunpack.c.l.b16 %v2278
      %v3516 = vunpack.c.h.b16 %v2278
      %v3517 = vunpack.c.l.b16 %v2279
      %v3518 = vunpack.c.h.b16 %v2279
      %v3519 = vunpack.c.l.b16 %v2280
      %v3520 = vunpack.c.h.b16 %v2280
      %v3521 = vunpack.c.l.b16 %v2281
      %v3522 = vunpack.c.h.b16 %v2281
      %v3523 = vunpack.c.l.b16 %v2282
      %v3524 = vunpack.c.h.b16 %v2282
      %v3525 = vunpack.c.l.b16 %v2283
      %v3526 = vunpack.c.h.b16 %v2283
      %v3527 = vunpack.c.l.b16 %v2284
      %v3528 = vunpack.c.h.b16 %v2284
      %v3529 = vunpack.c.l.b16 %v2285
      %v3530 = vunpack.c.h.b16 %v2285
      %v3531 = vunpack.c.l.b16 %v2286
      %v3532 = vunpack.c.h.b16 %v2286
      %v3533 = vunpack.c.l.b16 %v2287
      %v3534 = vunpack.c.h.b16 %v2287
      %v3535 = vunpack.c.l.b16 %v2288
      %v3536 = vunpack.c.h.b16 %v2288
      %v3537 = vunpack.c.l.b16 %v2289
      %v3538 = vunpack.c.h.b16 %v2289
      %v3539 = vunpack.c.l.b16 %v2290
      %v3540 = vunpack.c.h.b16 %v2290
      %v3541 = vunpack.c.l.b16 %v2291
      %v3542 = vunpack.c.h.b16 %v2291
      %v3543 = vunpack.c.l.b16 %v2292
      %v3544 = vunpack.c.h.b16 %v2292
      %v3545 = vunpack.c.l.b16 %v2293
      %v3546 = vunpack.c.h.b16 %v2293
      %v3547 = vunpack.c.l.b16 %v2294
      %v3548 = vunpack.c.h.b16 %v2294
      %v3549 = vunpack.c.l.b16 %v2295
      %v3550 = vunpack.c.h.b16 %v2295
      %v3551 = vunpack.c.l.b16 %v2296
      %v3552 = vunpack.c.h.b16 %v2296
      %v3553 = vunpack.c.l.b16 %v2297
      %v3554 = vunpack.c.h.b16 %v2297
      %v3555 = vunpack.c.l.b16 %v2298
      %v3556 = vunpack.c.h.b16 %v2298
      %v3557 = vunpack.c.l.b16 %v2299
      %v3558 = vunpack.c.h.b16 %v2299
      %v3559 = vunpack.c.l.b16 %v2300
      %v3560 = vunpack.c.h.b16 %v2300
      %v3561 = vunpack.c.l.b16 %v2301
      %v3562 = vunpack.c.h.b16 %v2301
      %v3563 = vunpack.c.l.b16 %v2302
      %v3564 = vunpack.c.h.b16 %v2302
      %v3565 = vunpack.c.l.b16 %v2303
      %v3566 = vunpack.c.h.b16 %v2303
      %v3567 = vunpack.c.l.b16 %v2304
      %v3568 = vunpack.c.h.b16 %v2304
      %v3569 = vunpack.c.l.b16 %v2305
      %v3570 = vunpack.c.h.b16 %v2305
      %v3571 = vunpack.c.l.b16 %v2306
      %v3572 = vunpack.c.h.b16 %v2306
      %v3573 = vunpack.c.l.b16 %v2307
      %v3574 = vunpack.c.h.b16 %v2307
      %v3575 = vunpack.c.l.b16 %v2308
      %v3576 = vunpack.c.h.b16 %v2308
      %v3577 = vunpack.c.l.b16 %v2309
      %v3578 = vunpack.c.h.b16 %v2309
      %v3579 = vunpack.c.l.b16 %v2310
      %v3580 = vunpack.c.h.b16 %v2310
      %v3581 = vunpack.c.l.b16 %v2311
      %v3582 = vunpack.c.h.b16 %v2311
      %v3583 = vunpack.c.l.b16 %v2312
      %v3584 = vunpack.c.h.b16 %v2312
      %v3585 = vunpack.c.l.b16 %v2313
      %v3586 = vunpack.c.h.b16 %v2313
      %v3587 = vunpack.c.l.b16 %v2314
      %v3588 = vunpack.c.h.b16 %v2314
      %v3589 = vunpack.c.l.b16 %v2315
      %v3590 = vunpack.c.h.b16 %v2315
      %v3591 = vunpack.c.l.b16 %v2316
      %v3592 = vunpack.c.h.b16 %v2316
      %v3593 = vunpack.c.l.b16 %v2317
      %v3594 = vunpack.c.h.b16 %v2317
      %v3595 = vunpack.c.l.b16 %v2318
      %v3596 = vunpack.c.h.b16 %v2318
      %v3597 = vunpack.c.l.b16 %v2319
      %v3598 = vunpack.c.h.b16 %v2319
      %v3599 = vunpack.c.l.b16 %v2320
      %v3600 = vunpack.c.h.b16 %v2320
      %v3601 = vunpack.c.l.b16 %v2321
      %v3602 = vunpack.c.h.b16 %v2321
      %v3603 = vunpack.c.l.b16 %v2322
      %v3604 = vunpack.c.h.b16 %v2322
      %v3605 = vunpack.c.l.b16 %v2323
      %v3606 = vunpack.c.h.b16 %v2323
      %v3607 = vunpack.c.l.b16 %v2324
      %v3608 = vunpack.c.h.b16 %v2324
      %v3609 = vunpack.c.l.b16 %v2325
      %v3610 = vunpack.c.h.b16 %v2325
      %v3611 = vunpack.c.l.b16 %v2326
      %v3612 = vunpack.c.h.b16 %v2326
      %v3613 = vunpack.c.l.b16 %v2327
      %v3614 = vunpack.c.h.b16 %v2327
      %v3615 = vunpack.c.l.b16 %v2328
      %v3616 = vunpack.c.h.b16 %v2328
      %v3617 = vunpack.c.l.b16 %v2329
      %v3618 = vunpack.c.h.b16 %v2329
      %v3619 = vunpack.c.l.b16 %v2330
      %v3620 = vunpack.c.h.b16 %v2330
      %v3621 = vunpack.c.l.b16 %v2331
      %v3622 = vunpack.c.h.b16 %v2331
      %v3623 = vunpack.c.l.b16 %v2332
      %v3624 = vunpack.c.h.b16 %v2332
      %v3625 = vunpack.c.l.b16 %v2333
      %v3626 = vunpack.c.h.b16 %v2333
      %v3627 = vunpack.c.l.b16 %v2334
      %v3628 = vunpack.c.h.b16 %v2334
      %v3629 = vunpack.c.l.b16 %v2335
      %v3630 = vunpack.c.h.b16 %v2335
      %v3631 = vunpack.c.l.b16 %v2336
      %v3632 = vunpack.c.h.b16 %v2336
      %v3633 = vunpack.c.l.b16 %v2337
      %v3634 = vunpack.c.h.b16 %v2337
      %v3635 = vunpack.c.l.b16 %v2338
      %v3636 = vunpack.c.h.b16 %v2338
      %v3637 = vunpack.c.l.b16 %v2339
      %v3638 = vunpack.c.h.b16 %v2339
      %v3639 = vunpack.c.l.b16 %v2340
      %v3640 = vunpack.c.h.b16 %v2340
      %v3641 = vunpack.c.l.b16 %v2341
      %v3642 = vunpack.c.h.b16 %v2341
      %v3643 = vunpack.c.l.b16 %v2342
      %v3644 = vunpack.c.h.b16 %v2342
      %v3645 = vunpack.c.l.b16 %v2343
      %v3646 = vunpack.c.h.b16 %v2343
      %v3647 = vunpack.c.l.b16 %v2344
      %v3648 = vunpack.c.h.b16 %v2344
      %v3649 = vunpack.c.l.b16 %v2345
      %v3650 = vunpack.c.h.b16 %v2345
      %v3651 = vunpack.c.l.b16 %v2346
      %v3652 = vunpack.c.h.b16 %v2346
      %v3653 = vunpack.c.l.b16 %v2347
      %v3654 = vunpack.c.h.b16 %v2347
      %v3655 = vunpack.c.l.b16 %v2348
      %v3656 = vunpack.c.h.b16 %v2348
      %v3657 = vunpack.c.l.b16 %v2349
      %v3658 = vunpack.c.h.b16 %v2349
      %v3659 = vunpack.c.l.b16 %v2350
      %v3660 = vunpack.c.h.b16 %v2350
      %v3661 = vunpack.c.l.b16 %v2351
      %v3662 = vunpack.c.h.b16 %v2351
      %v3663 = vunpack.c.l.b16 %v2352
      %v3664 = vunpack.c.h.b16 %v2352
      %v3665 = vunpack.c.l.b16 %v2353
      %v3666 = vunpack.c.h.b16 %v2353
      %v3667 = vunpack.c.l.b16 %v2354
      %v3668 = vunpack.c.h.b16 %v2354
      %v3669 = vunpack.c.l.b16 %v2355
      %v3670 = vunpack.c.h.b16 %v2355
      %v3671 = vunpack.c.l.b16 %v2356
      %v3672 = vunpack.c.h.b16 %v2356
      %v3673 = vunpack.c.l.b16 %v2357
      %v3674 = vunpack.c.h.b16 %v2357
      %v3675 = vunpack.c.l.b16 %v2358
      %v3676 = vunpack.c.h.b16 %v2358
      %v3677 = vunpack.c.l.b16 %v2359
      %v3678 = vunpack.c.h.b16 %v2359
      %v3679 = vunpack.c.l.b16 %v2360
      %v3680 = vunpack.c.h.b16 %v2360
      %v3681 = vunpack.c.l.b16 %v2361
      %v3682 = vunpack.c.h.b16 %v2361
      %v3683 = vunpack.c.l.b16 %v2362
      %v3684 = vunpack.c.h.b16 %v2362
      %v3685 = vunpack.c.l.b16 %v2363
      %v3686 = vunpack.c.h.b16 %v2363
      %v3687 = vunpack.c.l.b16 %v2364
      %v3688 = vunpack.c.h.b16 %v2364
      %v3689 = vunpack.c.l.b16 %v2365
      %v3690 = vunpack.c.h.b16 %v2365
      %v3691 = vunpack.c.l.b16 %v2366
      %v3692 = vunpack.c.h.b16 %v2366
      %v3693 = vunpack.c.l.b16 %v2367
      %v3694 = vunpack.c.h.b16 %v2367
      %v3695 = vunpack.c.l.b16 %v2368
      %v3696 = vunpack.c.h.b16 %v2368
      %v3697 = vunpack.c.l.b16 %v2369
      %v3698 = vunpack.c.h.b16 %v2369
      %v3699 = vunpack.c.l.b16 %v2370
      %v3700 = vunpack.c.h.b16 %v2370
      %v3701 = vunpack.c.l.b16 %v2371
      %v3702 = vunpack.c.h.b16 %v2371
      %v3703 = vunpack.c.l.b16 %v2372
      %v3704 = vunpack.c.h.b16 %v2372
      %v3705 = vunpack.c.l.b16 %v2373
      %v3706 = vunpack.c.h.b16 %v2373
      %v3707 = vunpack.c.l.b16 %v2374
      %v3708 = vunpack.c.h.b16 %v2374
      %v3709 = vunpack.c.l.b16 %v2375
      %v3710 = vunpack.c.h.b16 %v2375
      %v3711 = vunpack.c.l.b16 %v2376
      %v3712 = vunpack.c.h.b16 %v2376
      %v3713 = vunpack.c.l.b16 %v2377
      %v3714 = vunpack.c.h.b16 %v2377
      %v3715 = vunpack.c.l.b16 %v2378
      %v3716 = vunpack.c.h.b16 %v2378
      %v3717 = vunpack.c.l.b16 %v2379
      %v3718 = vunpack.c.h.b16 %v2379
      %v3719 = vunpack.c.l.b16 %v2380
      %v3720 = vunpack.c.h.b16 %v2380
      %v3721 = vunpack.c.l.b16 %v2381
      %v3722 = vunpack.c.h.b16 %v2381
      %v3723 = vunpack.c.l.b16 %v2382
      %v3724 = vunpack.c.h.b16 %v2382
      %v3725 = vunpack.c.l.b16 %v2383
      %v3726 = vunpack.c.h.b16 %v2383
      %v3727 = vunpack.c.l.b16 %v2384
      %v3728 = vunpack.c.h.b16 %v2384
      %v3729 = vunpack.c.l.b16 %v2385
      %v3730 = vunpack.c.h.b16 %v2385
      %v3731 = vunpack.c.l.b16 %v2386
      %v3732 = vunpack.c.h.b16 %v2386
      %v3733 = vunpack.c.l.b16 %v2387
      %v3734 = vunpack.c.h.b16 %v2387
      %v3735 = vunpack.c.l.b16 %v2388
      %v3736 = vunpack.c.h.b16 %v2388
      %v3737 = vunpack.c.l.b16 %v2389
      %v3738 = vunpack.c.h.b16 %v2389
      %v3739 = vunpack.c.l.b16 %v2390
      %v3740 = vunpack.c.h.b16 %v2390
      %v3741 = vunpack.c.l.b16 %v2391
      %v3742 = vunpack.c.h.b16 %v2391
      %v3743 = vunpack.c.l.b16 %v2392
      %v3744 = vunpack.c.h.b16 %v2392
      %v3745 = vunpack.c.l.b16 %v2393
      %v3746 = vunpack.c.h.b16 %v2393
      %v3747 = vunpack.c.l.b16 %v2394
      %v3748 = vunpack.c.h.b16 %v2394
      %v3749 = vunpack.c.l.b16 %v2395
      %v3750 = vunpack.c.h.b16 %v2395
      %v3751 = vunpack.c.l.b16 %v2396
      %v3752 = vunpack.c.h.b16 %v2396
      %v3753 = vunpack.c.l.b16 %v2397
      %v3754 = vunpack.c.h.b16 %v2397
      %v3755 = vunpack.c.l.b16 %v2398
      %v3756 = vunpack.c.h.b16 %v2398
      %v3757 = vunpack.c.l.b16 %v2399
      %v3758 = vunpack.c.h.b16 %v2399
      %v3759 = vunpack.c.l.b16 %v2400
      %v3760 = vunpack.c.h.b16 %v2400
      %v3761 = vunpack.c.l.b16 %v2401
      %v3762 = vunpack.c.h.b16 %v2401
      %v3763 = vunpack.c.l.b16 %v2402
      %v3764 = vunpack.c.h.b16 %v2402
      %v3765 = vunpack.c.l.b16 %v2403
      %v3766 = vunpack.c.h.b16 %v2403
      %v3767 = vunpack.c.l.b16 %v2404
      %v3768 = vunpack.c.h.b16 %v2404
      %v3769 = vunpack.c.l.b16 %v2405
      %v3770 = vunpack.c.h.b16 %v2405
      %v3771 = vunpack.c.l.b16 %v2406
      %v3772 = vunpack.c.h.b16 %v2406
      %v3773 = vunpack.c.l.b16 %v2407
      %v3774 = vunpack.c.h.b16 %v2407
      %v3775 = vunpack.c.l.b16 %v2408
      %v3776 = vunpack.c.h.b16 %v2408
      %v3777 = vunpack.c.l.b16 %v2409
      %v3778 = vunpack.c.h.b16 %v2409
      %v3779 = vunpack.c.l.b16 %v2410
      %v3780 = vunpack.c.h.b16 %v2410
      %v3781 = vunpack.c.l.b16 %v2411
      %v3782 = vunpack.c.h.b16 %v2411
      %v3783 = vunpack.c.l.b16 %v2412
      %v3784 = vunpack.c.h.b16 %v2412
      %v3785 = vunpack.c.l.b16 %v2413
      %v3786 = vunpack.c.h.b16 %v2413
      %v3787 = vunpack.c.l.b16 %v2414
      %v3788 = vunpack.c.h.b16 %v2414
      %v3789 = vunpack.c.l.b16 %v2415
      %v3790 = vunpack.c.h.b16 %v2415
      %v3791 = vunpack.c.l.b16 %v2416
      %v3792 = vunpack.c.h.b16 %v2416
      %v3793 = vunpack.c.l.b16 %v2417
      %v3794 = vunpack.c.h.b16 %v2417
      %v3795 = vunpack.c.l.b16 %v2418
      %v3796 = vunpack.c.h.b16 %v2418
      %v3797 = vunpack.c.l.b16 %v2419
      %v3798 = vunpack.c.h.b16 %v2419
      %v3799 = vunpack.c.l.b16 %v2420
      %v3800 = vunpack.c.h.b16 %v2420
      %v3801 = vunpack.c.l.b16 %v2421
      %v3802 = vunpack.c.h.b16 %v2421
      %v3803 = vunpack.c.l.b16 %v2422
      %v3804 = vunpack.c.h.b16 %v2422
      %v3805 = vunpack.c.l.b16 %v2423
      %v3806 = vunpack.c.h.b16 %v2423
      %v3807 = vunpack.c.l.b16 %v2424
      %v3808 = vunpack.c.h.b16 %v2424
      %v3809 = vunpack.c.l.b16 %v2425
      %v3810 = vunpack.c.h.b16 %v2425
      %v3811 = vunpack.c.l.b16 %v2426
      %v3812 = vunpack.c.h.b16 %v2426
      %v3813 = vunpack.c.l.b16 %v2427
      %v3814 = vunpack.c.h.b16 %v2427
      %v3815 = vunpack.c.l.b16 %v2428
      %v3816 = vunpack.c.h.b16 %v2428
      %v3817 = vunpack.c.l.b16 %v2429
      %v3818 = vunpack.c.h.b16 %v2429
      %v3819 = vunpack.c.l.b16 %v2430
      %v3820 = vunpack.c.h.b16 %v2430
      %v3821 = vunpack.c.l.b16 %v2431
      %v3822 = vunpack.c.h.b16 %v2431
      %v3823 = vunpack.c.l.b16 %v2432
      %v3824 = vunpack.c.h.b16 %v2432
      %v3825 = vunpack.c.l.b16 %v2433
      %v3826 = vunpack.c.h.b16 %v2433
      %v3827 = vunpack.c.l.b16 %v2434
      %v3828 = vunpack.c.h.b16 %v2434
      %v3829 = vunpack.c.l.b16 %v2435
      %v3830 = vunpack.c.h.b16 %v2435
      %v3831 = vunpack.c.l.b16 %v2436
      %v3832 = vunpack.c.h.b16 %v2436
      %v3833 = vunpack.c.l.b16 %v2437
      %v3834 = vunpack.c.h.b16 %v2437
      %v3835 = vunpack.c.l.b16 %v2438
      %v3836 = vunpack.c.h.b16 %v2438
      %v3837 = vunpack.c.l.b16 %v2439
      %v3838 = vunpack.c.h.b16 %v2439
      %v3839 = vunpack.c.l.b16 %v2440
      %v3840 = vunpack.c.h.b16 %v2440
      %v3841 = vunpack.c.l.b16 %v2441
      %v3842 = vunpack.c.h.b16 %v2441
      %v3843 = vunpack.c.l.b16 %v2442
      %v3844 = vunpack.c.h.b16 %v2442
      %v3845 = vunpack.c.l.b16 %v2443
      %v3846 = vunpack.c.h.b16 %v2443
      %v3847 = vunpack.c.l.b16 %v2444
      %v3848 = vunpack.c.h.b16 %v2444
      %v3849 = vunpack.c.l.b16 %v2445
      %v3850 = vunpack.c.h.b16 %v2445
      %v3851 = vunpack.c.l.b16 %v2446
      %v3852 = vunpack.c.h.b16 %v2446
      %v3853 = vunpack.c.l.b16 %v2447
      %v3854 = vunpack.c.h.b16 %v2447
      %v3855 = vunpack.c.l.b16 %v2448
      %v3856 = vunpack.c.h.b16 %v2448
      %v3857 = vunpack.c.l.b16 %v2449
      %v3858 = vunpack.c.h.b16 %v2449
      %v3859 = vunpack.c.l.b16 %v2450
      %v3860 = vunpack.c.h.b16 %v2450
      %v3861 = vunpack.c.l.b16 %v2451
      %v3862 = vunpack.c.h.b16 %v2451
      %v3863 = vunpack.c.l.b16 %v2452
      %v3864 = vunpack.c.h.b16 %v2452
      %v3865 = vunpack.c.l.b16 %v2453
      %v3866 = vunpack.c.h.b16 %v2453
      %v3867 = vunpack.c.l.b16 %v2454
      %v3868 = vunpack.c.h.b16 %v2454
      %v3869 = vunpack.c.l.b16 %v2455
      %v3870 = vunpack.c.h.b16 %v2455
      %v3871 = vunpack.c.l.b16 %v2456
      %v3872 = vunpack.c.h.b16 %v2456
      %v3873 = vunpack.c.l.b16 %v2457
      %v3874 = vunpack.c.h.b16 %v2457
      %v3875 = vunpack.c.l.b16 %v2458
      %v3876 = vunpack.c.h.b16 %v2458
      %v3877 = vunpack.c.l.b16 %v2459
      %v3878 = vunpack.c.h.b16 %v2459
      %v3879 = vunpack.c.l.b16 %v2460
      %v3880 = vunpack.c.h.b16 %v2460
      %v3881 = vunpack.c.l.b16 %v2461
      %v3882 = vunpack.c.h.b16 %v2461
      %v3883 = vunpack.c.l.b16 %v2462
      %v3884 = vunpack.c.h.b16 %v2462
      %v3885 = vunpack.c.l.b16 %v2463
      %v3886 = vunpack.c.h.b16 %v2463
      %v3887 = vunpack.c.l.b16 %v2464
      %v3888 = vunpack.c.h.b16 %v2464
      %v3889 = vunpack.c.l.b16 %v2465
      %v3890 = vunpack.c.h.b16 %v2465
      %v3891 = vunpack.c.l.b16 %v2466
      %v3892 = vunpack.c.h.b16 %v2466
      %v3893 = vunpack.c.l.b16 %v2467
      %v3894 = vunpack.c.h.b16 %v2467
      %v3895 = vunpack.c.l.b16 %v2468
      %v3896 = vunpack.c.h.b16 %v2468
      %v3897 = vunpack.c.l.b16 %v2469
      %v3898 = vunpack.c.h.b16 %v2469
      %v3899 = vunpack.c.l.b16 %v2470
      %v3900 = vunpack.c.h.b16 %v2470
      %v3901 = vunpack.c.l.b16 %v2471
      %v3902 = vunpack.c.h.b16 %v2471
      %v3903 = vunpack.c.l.b16 %v2472
      %v3904 = vunpack.c.h.b16 %v2472
      %v3905 = vunpack.c.l.b16 %v2473
      %v3906 = vunpack.c.h.b16 %v2473
      %v3907 = vunpack.c.l.b16 %v2474
      %v3908 = vunpack.c.h.b16 %v2474
      %v3909 = vunpack.c.l.b16 %v2475
      %v3910 = vunpack.c.h.b16 %v2475
      %v3911 = vunpack.c.l.b16 %v2476
      %v3912 = vunpack.c.h.b16 %v2476
      %v3913 = vunpack.c.l.b16 %v2477
      %v3914 = vunpack.c.h.b16 %v2477
      %v3915 = vunpack.c.l.b16 %v2478
      %v3916 = vunpack.c.h.b16 %v2478
      %v3917 = vunpack.c.l.b16 %v2479
      %v3918 = vunpack.c.h.b16 %v2479
      %v3919 = vunpack.c.l.b16 %v2480
      %v3920 = vunpack.c.h.b16 %v2480
      %v3921 = vunpack.c.l.b16 %v2481
      %v3922 = vunpack.c.h.b16 %v2481
      %v3923 = vunpack.c.l.b16 %v2482
      %v3924 = vunpack.c.h.b16 %v2482
      %v3925 = vunpack.c.l.b16 %v2483
      %v3926 = vunpack.c.h.b16 %v2483
      %v3927 = vunpack.c.l.b16 %v2484
      %v3928 = vunpack.c.h.b16 %v2484
      %v3929 = vunpack.c.l.b16 %v2485
      %v3930 = vunpack.c.h.b16 %v2485
      %v3931 = vunpack.c.l.b16 %v2486
      %v3932 = vunpack.c.h.b16 %v2486
      %v3933 = vunpack.c.l.b16 %v2487
      %v3934 = vunpack.c.h.b16 %v2487
      %v3935 = vunpack.c.l.b16 %v2488
      %v3936 = vunpack.c.h.b16 %v2488
      %v3937 = vunpack.c.l.b16 %v2489
      %v3938 = vunpack.c.h.b16 %v2489
      %v3939 = vunpack.c.l.b16 %v2490
      %v3940 = vunpack.c.h.b16 %v2490
      %v3941 = vunpack.c.l.b16 %v2491
      %v3942 = vunpack.c.h.b16 %v2491
      %v3943 = vunpack.c.l.b16 %v2492
      %v3944 = vunpack.c.h.b16 %v2492
      %v3945 = vunpack.c.l.b16 %v2493
      %v3946 = vunpack.c.h.b16 %v2493
      %v3947 = vunpack.c.l.b16 %v2494
      %v3948 = vunpack.c.h.b16 %v2494
      %v3949 = vunpack.c.l.b16 %v2495
      %v3950 = vunpack.c.h.b16 %v2495
      %v3951 = vunpack.c.l.b16 %v2496
      %v3952 = vunpack.c.h.b16 %v2496
      %v3953 = vunpack.c.l.b16 %v2497
      %v3954 = vunpack.c.h.b16 %v2497
      %v3955 = vunpack.c.l.b16 %v2498
      %v3956 = vunpack.c.h.b16 %v2498
      %v3957 = vunpack.c.l.b16 %v2499
      %v3958 = vunpack.c.h.b16 %v2499
      %v3959 = vunpack.c.l.b16 %v2500
      %v3960 = vunpack.c.h.b16 %v2500
      %v3961 = vunpack.c.l.b16 %v2501
      %v3962 = vunpack.c.h.b16 %v2501
      %v3963 = vunpack.c.l.b16 %v2502
      %v3964 = vunpack.c.h.b16 %v2502
      %v3965 = vunpack.c.l.b16 %v2503
      %v3966 = vunpack.c.h.b16 %v2503
      %v3967 = vunpack.c.l.b16 %v2504
      %v3968 = vunpack.c.h.b16 %v2504
      %v3969 = vunpack.c.l.b16 %v2505
      %v3970 = vunpack.c.h.b16 %v2505
      %v3971 = vunpack.c.l.b16 %v2506
      %v3972 = vunpack.c.h.b16 %v2506
      %v3973 = vunpack.c.l.b16 %v2507
      %v3974 = vunpack.c.h.b16 %v2507
      %v3975 = vunpack.c.l.b16 %v2508
      %v3976 = vunpack.c.h.b16 %v2508
      %v3977 = vunpack.c.l.b16 %v2509
      %v3978 = vunpack.c.h.b16 %v2509
      %v3979 = vunpack.c.l.b16 %v2510
      %v3980 = vunpack.c.h.b16 %v2510
      %v3981 = vunpack.c.l.b16 %v2511
      %v3982 = vunpack.c.h.b16 %v2511
      %v3983 = vunpack.c.l.b16 %v2512
      %v3984 = vunpack.c.h.b16 %v2512
      %v3985 = vunpack.c.l.b16 %v2513
      %v3986 = vunpack.c.h.b16 %v2513
      %v3987 = vunpack.c.l.b16 %v2514
      %v3988 = vunpack.c.h.b16 %v2514
      %v3989 = vunpack.c.l.b16 %v2515
      %v3990 = vunpack.c.h.b16 %v2515
      %v3991 = vunpack.c.l.b16 %v2516
      %v3992 = vunpack.c.h.b16 %v2516
      %v3993 = vunpack.c.l.b16 %v2517
      %v3994 = vunpack.c.h.b16 %v2517
      %v3995 = vunpack.c.l.b16 %v2518
      %v3996 = vunpack.c.h.b16 %v2518
      %v3997 = vunpack.c.l.b16 %v2519
      %v3998 = vunpack.c.h.b16 %v2519
      %v3999 = vunpack.c.l.b16 %v2520
      %v4000 = vunpack.c.h.b16 %v2520
      %v4001 = vunpack.c.l.b16 %v2521
      %v4002 = vunpack.c.h.b16 %v2521
      %v4003 = vunpack.c.l.b16 %v2522
      %v4004 = vunpack.c.h.b16 %v2522
      %v4005 = vunpack.c.l.b16 %v2523
      %v4006 = vunpack.c.h.b16 %v2523
      %v4007 = vunpack.c.l.b16 %v2524
      %v4008 = vunpack.c.h.b16 %v2524
      %v4009 = vunpack.c.l.b16 %v2525
      %v4010 = vunpack.c.h.b16 %v2525
      %v4011 = vunpack.c.l.b16 %v2526
      %v4012 = vunpack.c.h.b16 %v2526
      %v4013 = vunpack.c.l.b16 %v2527
      %v4014 = vunpack.c.h.b16 %v2527
      %v4015 = vunpack.c.l.b16 %v2528
      %v4016 = vunpack.c.h.b16 %v2528
      %v4017 = vunpack.c.l.b16 %v2529
      %v4018 = vunpack.c.h.b16 %v2529
      %v4019 = vunpack.c.l.b16 %v2530
      %v4020 = vunpack.c.h.b16 %v2530
      %v4021 = vunpack.c.l.b16 %v2531
      %v4022 = vunpack.c.h.b16 %v2531
      %v4023 = vunpack.c.l.b16 %v2532
      %v4024 = vunpack.c.h.b16 %v2532
      %v4025 = vunpack.c.l.b16 %v2533
      %v4026 = vunpack.c.h.b16 %v2533
      %v4027 = vunpack.c.l.b16 %v2534
      %v4028 = vunpack.c.h.b16 %v2534
      %v4029 = vunpack.c.l.b16 %v2535
      %v4030 = vunpack.c.h.b16 %v2535
      %v4031 = vunpack.c.l.b16 %v2536
      %v4032 = vunpack.c.h.b16 %v2536
      %v4033 = vunpack.c.l.b16 %v2537
      %v4034 = vunpack.c.h.b16 %v2537
      %v4035 = vunpack.c.l.b16 %v2538
      %v4036 = vunpack.c.h.b16 %v2538
      %v4037 = vunpack.c.l.b16 %v2539
      %v4038 = vunpack.c.h.b16 %v2539
      %v4039 = vunpack.c.l.b16 %v2540
      %v4040 = vunpack.c.h.b16 %v2540
      %v4041 = vunpack.c.l.b16 %v2541
      %v4042 = vunpack.c.h.b16 %v2541
      %v4043 = vunpack.c.l.b16 %v2542
      %v4044 = vunpack.c.h.b16 %v2542
      %v4045 = vunpack.c.l.b16 %v2543
      %v4046 = vunpack.c.h.b16 %v2543
      %v4047 = vunpack.c.l.b16 %v2544
      %v4048 = vunpack.c.h.b16 %v2544
      %v4049 = vunpack.c.l.b16 %v2545
      %v4050 = vunpack.c.h.b16 %v2545
      %v4051 = vunpack.c.l.b16 %v2546
      %v4052 = vunpack.c.h.b16 %v2546
      %v4053 = vunpack.c.l.b16 %v2547
      %v4054 = vunpack.c.h.b16 %v2547
      %v4055 = vunpack.c.l.b16 %v2548
      %v4056 = vunpack.c.h.b16 %v2548
      %v4057 = vunpack.c.l.b16 %v2549
      %v4058 = vunpack.c.h.b16 %v2549
      %v4059 = vunpack.c.l.b16 %v2550
      %v4060 = vunpack.c.h.b16 %v2550
      %v4061 = vunpack.c.l.b16 %v2551
      %v4062 = vunpack.c.h.b16 %v2551
      %v4063 = vunpack.c.l.b16 %v2552
      %v4064 = vunpack.c.h.b16 %v2552
      %v4065 = vunpack.c.l.b16 %v2553
      %v4066 = vunpack.c.h.b16 %v2553
      %v4067 = vunpack.c.l.b16 %v2554
      %v4068 = vunpack.c.h.b16 %v2554
      %v4069 = vunpack.c.l.b16 %v2555
      %v4070 = vunpack.c.h.b16 %v2555
      %v4071 = vunpack.c.l.b16 %v2556
      %v4072 = vunpack.c.h.b16 %v2556
      %v4073 = vunpack.c.l.b16 %v2557
      %v4074 = vunpack.c.h.b16 %v2557
      %v4075 = vunpack.c.l.b16 %v2558
      %v4076 = vunpack.c.h.b16 %v2558
      %v4077 = vunpack.c.l.b16 %v2559
      %v4078 = vunpack.c.h.b16 %v2559
      %v4079 = vunpack.c.l.b16 %v2560
      %v4080 = vunpack.c.h.b16 %v2560
      %v4081 = vunpack.c.l.b16 %v2561
      %v4082 = vunpack.c.h.b16 %v2561
      %v4083 = vunpack.c.l.b16 %v2562
      %v4084 = vunpack.c.h.b16 %v2562
      %v4085 = vunpack.c.l.b16 %v2563
      %v4086 = vunpack.c.h.b16 %v2563
      %v4087 = vunpack.c.l.b16 %v2564
      %v4088 = vunpack.c.h.b16 %v2564
      %v4089 = vunpack.c.l.b16 %v2565
      %v4090 = vunpack.c.h.b16 %v2565
      %v4091 = vunpack.c.l.b16 %v2566
      %v4092 = vunpack.c.h.b16 %v2566
      %v4093 = vunpack.c.l.b16 %v2567
      %v4094 = vunpack.c.h.b16 %v2567
      %v4095 = vunpack.c.l.b16 %v2568
      %v4096 = vunpack.c.h.b16 %v2568
      %v4097 = vunpack.c.l.b16 %v2569
      %v4098 = vunpack.c.h.b16 %v2569
      %v4099 = vunpack.c.l.b16 %v2570
      %v4100 = vunpack.c.h.b16 %v2570
      %v4101 = vunpack.c.l.b16 %v2571
      %v4102 = vunpack.c.h.b16 %v2571
      %v4103 = vunpack.c.l.b16 %v2572
      %v4104 = vunpack.c.h.b16 %v2572
      %v4105 = vunpack.c.l.b16 %v2573
      %v4106 = vunpack.c.h.b16 %v2573
      %v4107 = vunpack.c.l.b16 %v2574
      %v4108 = vunpack.c.h.b16 %v2574
      %v4109 = vunpack.c.l.b16 %v2575
      %v4110 = vunpack.c.h.b16 %v2575
      %v4111 = vunpack.c.l.b16 %v2576
      %v4112 = vunpack.c.h.b16 %v2576
      %v4113 = vunpack.c.l.b16 %v2577
      %v4114 = vunpack.c.h.b16 %v2577
      %v4115 = vunpack.c.l.b16 %v2578
      %v4116 = vunpack.c.h.b16 %v2578
      %v4117 = vunpack.c.l.b16 %v2579
      %v4118 = vunpack.c.h.b16 %v2579
      %v4119 = vunpack.c.l.b16 %v2580
      %v4120 = vunpack.c.h.b16 %v2580
      %v4121 = vunpack.c.l.b16 %v2581
      %v4122 = vunpack.c.h.b16 %v2581
      %v4123 = vunpack.c.l.b16 %v2582
      %v4124 = vunpack.c.h.b16 %v2582
      %v4125 = vunpack.c.l.b16 %v2583
      %v4126 = vunpack.c.h.b16 %v2583
      %v4127 = vunpack.c.l.b16 %v2584
      %v4128 = vunpack.c.h.b16 %v2584
      %v4129 = vunpack.c.l.b16 %v2585
      %v4130 = vunpack.c.h.b16 %v2585
      %v4131 = vunpack.c.l.b16 %v2586
      %v4132 = vunpack.c.h.b16 %v2586
      %v4133 = vunpack.c.l.b16 %v2587
      %v4134 = vunpack.c.h.b16 %v2587
      %v4135 = vunpack.c.l.b16 %v2588
      %v4136 = vunpack.c.h.b16 %v2588
      %v4137 = vunpack.c.l.b16 %v2589
      %v4138 = vunpack.c.h.b16 %v2589
      %v4139 = vunpack.c.l.b16 %v2590
      %v4140 = vunpack.c.h.b16 %v2590
      %v4141 = vunpack.c.l.b16 %v2591
      %v4142 = vunpack.c.h.b16 %v2591
      %v4143 = vunpack.c.l.b16 %v2592
      %v4144 = vunpack.c.h.b16 %v2592
      %v4145 = vunpack.c.l.b16 %v2593
      %v4146 = vunpack.c.h.b16 %v2593
      %v4147 = vunpack.c.l.b16 %v2594
      %v4148 = vunpack.c.h.b16 %v2594
      %v4149 = vunpack.c.l.b16 %v2595
      %v4150 = vunpack.c.h.b16 %v2595
      %v4151 = vunpack.c.l.b16 %v2596
      %v4152 = vunpack.c.h.b16 %v2596
      %v4153 = vunpack.c.l.b16 %v2597
      %v4154 = vunpack.c.h.b16 %v2597
      %v4155 = vunpack.c.l.b16 %v2598
      %v4156 = vunpack.c.h.b16 %v2598
      %v4157 = vunpack.c.l.b16 %v2599
      %v4158 = vunpack.c.h.b16 %v2599
      %v4159 = vunpack.c.l.b16 %v2600
      %v4160 = vunpack.c.h.b16 %v2600
      %v4161 = vunpack.c.l.b16 %v2601
      %v4162 = vunpack.c.h.b16 %v2601
      %v4163 = vunpack.c.l.b16 %v2602
      %v4164 = vunpack.c.h.b16 %v2602
      %v4165 = vunpack.c.l.b16 %v2603
      %v4166 = vunpack.c.h.b16 %v2603
      %v4167 = vunpack.c.l.b16 %v2604
      %v4168 = vunpack.c.h.b16 %v2604
      %v4169 = vunpack.c.l.b16 %v2605
      %v4170 = vunpack.c.h.b16 %v2605
      %v4171 = vunpack.c.l.b16 %v2606
      %v4172 = vunpack.c.h.b16 %v2606
      %v4173 = vunpack.c.l.b16 %v2607
      %v4174 = vunpack.c.h.b16 %v2607
      %v4175 = vunpack.c.l.b16 %v2608
      %v4176 = vunpack.c.h.b16 %v2608
      %v4177 = vunpack.c.l.b16 %v2609
      %v4178 = vunpack.c.h.b16 %v2609
      %v4179 = vunpack.c.l.b16 %v2610
      %v4180 = vunpack.c.h.b16 %v2610
      %v4181 = vunpack.c.l.b16 %v2611
      %v4182 = vunpack.c.h.b16 %v2611
      %v4183 = vunpack.c.l.b16 %v2612
      %v4184 = vunpack.c.h.b16 %v2612
      %v4185 = vunpack.c.l.b16 %v2613
      %v4186 = vunpack.c.h.b16 %v2613
      %v4187 = vunpack.c.l.b16 %v2614
      %v4188 = vunpack.c.h.b16 %v2614
      %v4189 = vunpack.c.l.b16 %v2615
      %v4190 = vunpack.c.h.b16 %v2615
      %v4191 = vunpack.c.l.b16 %v2616
      %v4192 = vunpack.c.h.b16 %v2616
      %v4193 = vunpack.c.l.b16 %v2617
      %v4194 = vunpack.c.h.b16 %v2617
      %v4195 = vunpack.c.l.b16 %v2618
      %v4196 = vunpack.c.h.b16 %v2618
      %v4197 = vpack.c.b16 %v3181, %v3173
      %v4198 = vpack.c.b16 %v3182, %v3174
      %v4199 = vpack.c.b16 %v3183, %v3175
      %v4200 = vpack.c.b16 %v3184, %v3176
      %v4201 = vpack.c.b16 %v3185, %v3177
      %v4202 = vpack.c.b16 %v3186, %v3178
      %v4203 = vpack.c.b16 %v3187, %v3179
      %v4204 = vpack.c.b16 %v3188, %v3180
      %v4205 = vpack.c.b16 %v3197, %v3189
      %v4206 = vpack.c.b16 %v3198, %v3190
      %v4207 = vpack.c.b16 %v3199, %v3191
      %v4208 = vpack.c.b16 %v3200, %v3192
      %v4209 = vpack.c.b16 %v3201, %v3193
      %v4210 = vpack.c.b16 %v3202, %v3194
      %v4211 = vpack.c.b16 %v3203, %v3195
      %v4212 = vpack.c.b16 %v3204, %v3196
      %v4213 = vpack.c.b16 %v3213, %v3205
      %v4214 = vpack.c.b16 %v3214, %v3206
      %v4215 = vpack.c.b16 %v3215, %v3207
      %v4216 = vpack.c.b16 %v3216, %v3208
      %v4217 = vpack.c.b16 %v3217, %v3209
      %v4218 = vpack.c.b16 %v3218, %v3210
      %v4219 = vpack.c.b16 %v3219, %v3211
      %v4220 = vpack.c.b16 %v3220, %v3212
      %v4221 = vpack.c.b16 %v3229, %v3221
      %v4222 = vpack.c.b16 %v3230, %v3222
      %v4223 = vpack.c.b16 %v3231, %v3223
      %v4224 = vpack.c.b16 %v3232, %v3224
      %v4225 = vpack.c.b16 %v3233, %v3225
      %v4226 = vpack.c.b16 %v3234, %v3226
      %v4227 = vpack.c.b16 %v3235, %v3227
      %v4228 = vpack.c.b16 %v3236, %v3228
      %v4229 = vpack.c.b16 %v3245, %v3237
      %v4230 = vpack.c.b16 %v3246, %v3238
      %v4231 = vpack.c.b16 %v3247, %v3239
      %v4232 = vpack.c.b16 %v3248, %v3240
      %v4233 = vpack.c.b16 %v3249, %v3241
      %v4234 = vpack.c.b16 %v3250, %v3242
      %v4235 = vpack.c.b16 %v3251, %v3243
      %v4236 = vpack.c.b16 %v3252, %v3244
      %v4237 = vpack.c.b16 %v3261, %v3253
      %v4238 = vpack.c.b16 %v3262, %v3254
      %v4239 = vpack.c.b16 %v3263, %v3255
      %v4240 = vpack.c.b16 %v3264, %v3256
      %v4241 = vpack.c.b16 %v3265, %v3257
      %v4242 = vpack.c.b16 %v3266, %v3258
      %v4243 = vpack.c.b16 %v3267, %v3259
      %v4244 = vpack.c.b16 %v3268, %v3260
      %v4245 = vpack.c.b16 %v3277, %v3269
      %v4246 = vpack.c.b16 %v3278, %v3270
      %v4247 = vpack.c.b16 %v3279, %v3271
      %v4248 = vpack.c.b16 %v3280, %v3272
      %v4249 = vpack.c.b16 %v3281, %v3273
      %v4250 = vpack.c.b16 %v3282, %v3274
      %v4251 = vpack.c.b16 %v3283, %v3275
      %v4252 = vpack.c.b16 %v3284, %v3276
      %v4253 = vpack.c.b16 %v3293, %v3285
      %v4254 = vpack.c.b16 %v3294, %v3286
      %v4255 = vpack.c.b16 %v3295, %v3287
      %v4256 = vpack.c.b16 %v3296, %v3288
      %v4257 = vpack.c.b16 %v3297, %v3289
      %v4258 = vpack.c.b16 %v3298, %v3290
      %v4259 = vpack.c.b16 %v3299, %v3291
      %v4260 = vpack.c.b16 %v3300, %v3292
      %v4261 = vpack.c.b16 %v3309, %v3301
      %v4262 = vpack.c.b16 %v3310, %v3302
      %v4263 = vpack.c.b16 %v3311, %v3303
      %v4264 = vpack.c.b16 %v3312, %v3304
      %v4265 = vpack.c.b16 %v3313, %v3305
      %v4266 = vpack.c.b16 %v3314, %v3306
      %v4267 = vpack.c.b16 %v3315, %v3307
      %v4268 = vpack.c.b16 %v3316, %v3308
      %v4269 = vpack.c.b16 %v3325, %v3317
      %v4270 = vpack.c.b16 %v3326, %v3318
      %v4271 = vpack.c.b16 %v3327, %v3319
      %v4272 = vpack.c.b16 %v3328, %v3320
      %v4273 = vpack.c.b16 %v3329, %v3321
      %v4274 = vpack.c.b16 %v3330, %v3322
      %v4275 = vpack.c.b16 %v3331, %v3323
      %v4276 = vpack.c.b16 %v3332, %v3324
      %v4277 = vpack.c.b16 %v3341, %v3333
      %v4278 = vpack.c.b16 %v3342, %v3334
      %v4279 = vpack.c.b16 %v3343, %v3335
      %v4280 = vpack.c.b16 %v3344, %v3336
      %v4281 = vpack.c.b16 %v3345, %v3337
      %v4282 = vpack.c.b16 %v3346, %v3338
      %v4283 = vpack.c.b16 %v3347, %v3339
      %v4284 = vpack.c.b16 %v3348, %v3340
      %v4285 = vpack.c.b16 %v3357, %v3349
      %v4286 = vpack.c.b16 %v3358, %v3350
      %v4287 = vpack.c.b16 %v3359, %v3351
      %v4288 = vpack.c.b16 %v3360, %v3352
      %v4289 = vpack.c.b16 %v3361, %v3353
      %v4290 = vpack.c.b16 %v3362, %v3354
      %v4291 = vpack.c.b16 %v3363, %v3355
      %v4292 = vpack.c.b16 %v3364, %v3356
      %v4293 = vpack.c.b16 %v3373, %v3365
      %v4294 = vpack.c.b16 %v3374, %v3366
      %v4295 = vpack.c.b16 %v3375, %v3367
      %v4296 = vpack.c.b16 %v3376, %v3368
      %v4297 = vpack.c.b16 %v3377, %v3369
      %v4298 = vpack.c.b16 %v3378, %v3370
      %v4299 = vpack.c.b16 %v3379, %v3371
      %v4300 = vpack.c.b16 %v3380, %v3372
      %v4301 = vpack.c.b16 %v3389, %v3381
      %v4302 = vpack.c.b16 %v3390, %v3382
      %v4303 = vpack.c.b16 %v3391, %v3383
      %v4304 = vpack.c.b16 %v3392, %v3384
      %v4305 = vpack.c.b16 %v3393, %v3385
      %v4306 = vpack.c.b16 %v3394, %v3386
      %v4307 = vpack.c.b16 %v3395, %v3387
      %v4308 = vpack.c.b16 %v3396, %v3388
      %v4309 = vpack.c.b16 %v3405, %v3397
      %v4310 = vpack.c.b16 %v3406, %v3398
      %v4311 = vpack.c.b16 %v3407, %v3399
      %v4312 = vpack.c.b16 %v3408, %v3400
      %v4313 = vpack.c.b16 %v3409, %v3401
      %v4314 = vpack.c.b16 %v3410, %v3402
      %v4315 = vpack.c.b16 %v3411, %v3403
      %v4316 = vpack.c.b16 %v3412, %v3404
      %v4317 = vpack.c.b16 %v3421, %v3413
      %v4318 = vpack.c.b16 %v3422, %v3414
      %v4319 = vpack.c.b16 %v3423, %v3415
      %v4320 = vpack.c.b16 %v3424, %v3416
      %v4321 = vpack.c.b16 %v3425, %v3417
      %v4322 = vpack.c.b16 %v3426, %v3418
      %v4323 = vpack.c.b16 %v3427, %v3419
      %v4324 = vpack.c.b16 %v3428, %v3420
      %v4325 = vpack.c.b16 %v3437, %v3429
      %v4326 = vpack.c.b16 %v3438, %v3430
      %v4327 = vpack.c.b16 %v3439, %v3431
      %v4328 = vpack.c.b16 %v3440, %v3432
      %v4329 = vpack.c.b16 %v3441, %v3433
      %v4330 = vpack.c.b16 %v3442, %v3434
      %v4331 = vpack.c.b16 %v3443, %v3435
      %v4332 = vpack.c.b16 %v3444, %v3436
      %v4333 = vpack.c.b16 %v3453, %v3445
      %v4334 = vpack.c.b16 %v3454, %v3446
      %v4335 = vpack.c.b16 %v3455, %v3447
      %v4336 = vpack.c.b16 %v3456, %v3448
      %v4337 = vpack.c.b16 %v3457, %v3449
      %v4338 = vpack.c.b16 %v3458, %v3450
      %v4339 = vpack.c.b16 %v3459, %v3451
      %v4340 = vpack.c.b16 %v3460, %v3452
      %v4341 = vpack.c.b16 %v3469, %v3461
      %v4342 = vpack.c.b16 %v3470, %v3462
      %v4343 = vpack.c.b16 %v3471, %v3463
      %v4344 = vpack.c.b16 %v3472, %v3464
      %v4345 = vpack.c.b16 %v3473, %v3465
      %v4346 = vpack.c.b16 %v3474, %v3466
      %v4347 = vpack.c.b16 %v3475, %v3467
      %v4348 = vpack.c.b16 %v3476, %v3468
      %v4349 = vpack.c.b16 %v3485, %v3477
      %v4350 = vpack.c.b16 %v3486, %v3478
      %v4351 = vpack.c.b16 %v3487, %v3479
      %v4352 = vpack.c.b16 %v3488, %v3480
      %v4353 = vpack.c.b16 %v3489, %v3481
      %v4354 = vpack.c.b16 %v3490, %v3482
      %v4355 = vpack.c.b16 %v3491, %v3483
      %v4356 = vpack.c.b16 %v3492, %v3484
      %v4357 = vpack.c.b16 %v3501, %v3493
      %v4358 = vpack.c.b16 %v3502, %v3494
      %v4359 = vpack.c.b16 %v3503, %v3495
      %v4360 = vpack.c.b16 %v3504, %v3496
      %v4361 = vpack.c.b16 %v3505, %v3497
      %v4362 = vpack.c.b16 %v3506, %v3498
      %v4363 = vpack.c.b16 %v3507, %v3499
      %v4364 = vpack.c.b16 %v3508, %v3500
      %v4365 = vpack.c.b16 %v3517, %v3509
      %v4366 = vpack.c.b16 %v3518, %v3510
      %v4367 = vpack.c.b16 %v3519, %v3511
      %v4368 = vpack.c.b16 %v3520, %v3512
      %v4369 = vpack.c.b16 %v3521, %v3513
      %v4370 = vpack.c.b16 %v3522, %v3514
      %v4371 = vpack.c.b16 %v3523, %v3515
      %v4372 = vpack.c.b16 %v3524, %v3516
      %v4373 = vpack.c.b16 %v3533, %v3525
      %v4374 = vpack.c.b16 %v3534, %v3526
      %v4375 = vpack.c.b16 %v3535, %v3527
      %v4376 = vpack.c.b16 %v3536, %v3528
      %v4377 = vpack.c.b16 %v3537, %v3529
      %v4378 = vpack.c.b16 %v3538, %v3530
      %v4379 = vpack.c.b16 %v3539, %v3531
      %v4380 = vpack.c.b16 %v3540, %v3532
      %v4381 = vpack.c.b16 %v3549, %v3541
      %v4382 = vpack.c.b16 %v3550, %v3542
      %v4383 = vpack.c.b16 %v3551, %v3543
      %v4384 = vpack.c.b16 %v3552, %v3544
      %v4385 = vpack.c.b16 %v3553, %v3545
      %v4386 = vpack.c.b16 %v3554, %v3546
      %v4387 = vpack.c.b16 %v3555, %v3547
      %v4388 = vpack.c.b16 %v3556, %v3548
      %v4389 = vpack.c.b16 %v3565, %v3557
      %v4390 = vpack.c.b16 %v3566, %v3558
      %v4391 = vpack.c.b16 %v3567, %v3559
      %v4392 = vpack.c.b16 %v3568, %v3560
      %v4393 = vpack.c.b16 %v3569, %v3561
      %v4394 = vpack.c.b16 %v3570, %v3562
      %v4395 = vpack.c.b16 %v3571, %v3563
      %v4396 = vpack.c.b16 %v3572, %v3564
      %v4397 = vpack.c.b16 %v3581, %v3573
      %v4398 = vpack.c.b16 %v3582, %v3574
      %v4399 = vpack.c.b16 %v3583, %v3575
      %v4400 = vpack.c.b16 %v3584, %v3576
      %v4401 = vpack.c.b16 %v3585, %v3577
      %v4402 = vpack.c.b16 %v3586, %v3578
      %v4403 = vpack.c.b16 %v3587, %v3579
      %v4404 = vpack.c.b16 %v3588, %v3580
      %v4405 = vpack.c.b16 %v3597, %v3589
      %v4406 = vpack.c.b16 %v3598, %v3590
      %v4407 = vpack.c.b16 %v3599, %v3591
      %v4408 = vpack.c.b16 %v3600, %v3592
      %v4409 = vpack.c.b16 %v3601, %v3593
      %v4410 = vpack.c.b16 %v3602, %v3594
      %v4411 = vpack.c.b16 %v3603, %v3595
      %v4412 = vpack.c.b16 %v3604, %v3596
      %v4413 = vpack.c.b16 %v3613, %v3605
      %v4414 = vpack.c.b16 %v3614, %v3606
      %v4415 = vpack.c.b16 %v3615, %v3607
      %v4416 = vpack.c.b16 %v3616, %v3608
      %v4417 = vpack.c.b16 %v3617, %v3609
      %v4418 = vpack.c.b16 %v3618, %v3610
      %v4419 = vpack.c.b16 %v3619, %v3611
      %v4420 = vpack.c.b16 %v3620, %v3612
      %v4421 = vpack.c.b16 %v3629, %v3621
      %v4422 = vpack.c.b16 %v3630, %v3622
      %v4423 = vpack.c.b16 %v3631, %v3623
      %v4424 = vpack.c.b16 %v3632, %v3624
      %v4425 = vpack.c.b16 %v3633, %v3625
      %v4426 = vpack.c.b16 %v3634, %v3626
      %v4427 = vpack.c.b16 %v3635, %v3627
      %v4428 = vpack.c.b16 %v3636, %v3628
      %v4429 = vpack.c.b16 %v3645, %v3637
      %v4430 = vpack.c.b16 %v3646, %v3638
      %v4431 = vpack.c.b16 %v3647, %v3639
      %v4432 = vpack.c.b16 %v3648, %v3640
      %v4433 = vpack.c.b16 %v3649, %v3641
      %v4434 = vpack.c.b16 %v3650, %v3642
      %v4435 = vpack.c.b16 %v3651, %v3643
      %v4436 = vpack.c.b16 %v3652, %v3644
      %v4437 = vpack.c.b16 %v3661, %v3653
      %v4438 = vpack.c.b16 %v3662, %v3654
      %v4439 = vpack.c.b16 %v3663, %v3655
      %v4440 = vpack.c.b16 %v3664, %v3656
      %v4441 = vpack.c.b16 %v3665, %v3657
      %v4442 = vpack.c.b16 %v3666, %v3658
      %v4443 = vpack.c.b16 %v3667, %v3659
      %v4444 = vpack.c.b16 %v3668, %v3660
      %v4445 = vpack.c.b16 %v3677, %v3669
      %v4446 = vpack.c.b16 %v3678, %v3670
      %v4447 = vpack.c.b16 %v3679, %v3671
      %v4448 = vpack.c.b16 %v3680, %v3672
      %v4449 = vpack.c.b16 %v3681, %v3673
      %v4450 = vpack.c.b16 %v3682, %v3674
      %v4451 = vpack.c.b16 %v3683, %v3675
      %v4452 = vpack.c.b16 %v3684, %v3676
      %v4453 = vpack.c.b16 %v3693, %v3685
      %v4454 = vpack.c.b16 %v3694, %v3686
      %v4455 = vpack.c.b16 %v3695, %v3687
      %v4456 = vpack.c.b16 %v3696, %v3688
      %v4457 = vpack.c.b16 %v3697, %v3689
      %v4458 = vpack.c.b16 %v3698, %v3690
      %v4459 = vpack.c.b16 %v3699, %v3691
      %v4460 = vpack.c.b16 %v3700, %v3692
      %v4461 = vpack.c.b16 %v3709, %v3701
      %v4462 = vpack.c.b16 %v3710, %v3702
      %v4463 = vpack.c.b16 %v3711, %v3703
      %v4464 = vpack.c.b16 %v3712, %v3704
      %v4465 = vpack.c.b16 %v3713, %v3705
      %v4466 = vpack.c.b16 %v3714, %v3706
      %v4467 = vpack.c.b16 %v3715, %v3707
      %v4468 = vpack.c.b16 %v3716, %v3708
      %v4469 = vpack.c.b16 %v3725, %v3717
      %v4470 = vpack.c.b16 %v3726, %v3718
      %v4471 = vpack.c.b16 %v3727, %v3719
      %v4472 = vpack.c.b16 %v3728, %v3720
      %v4473 = vpack.c.b16 %v3729, %v3721
      %v4474 = vpack.c.b16 %v3730, %v3722
      %v4475 = vpack.c.b16 %v3731, %v3723
      %v4476 = vpack.c.b16 %v3732, %v3724
      %v4477 = vpack.c.b16 %v3741, %v3733
      %v4478 = vpack.c.b16 %v3742, %v3734
      %v4479 = vpack.c.b16 %v3743, %v3735
      %v4480 = vpack.c.b16 %v3744, %v3736
      %v4481 = vpack.c.b16 %v3745, %v3737
      %v4482 = vpack.c.b16 %v3746, %v3738
      %v4483 = vpack.c.b16 %v3747, %v3739
      %v4484 = vpack.c.b16 %v3748, %v3740
      %v4485 = vpack.c.b16 %v3757, %v3749
      %v4486 = vpack.c.b16 %v3758, %v3750
      %v4487 = vpack.c.b16 %v3759, %v3751
      %v4488 = vpack.c.b16 %v3760, %v3752
      %v4489 = vpack.c.b16 %v3761, %v3753
      %v4490 = vpack.c.b16 %v3762, %v3754
      %v4491 = vpack.c.b16 %v3763, %v3755
      %v4492 = vpack.c.b16 %v3764, %v3756
      %v4493 = vpack.c.b16 %v3773, %v3765
      %v4494 = vpack.c.b16 %v3774, %v3766
      %v4495 = vpack.c.b16 %v3775, %v3767
      %v4496 = vpack.c.b16 %v3776, %v3768
      %v4497 = vpack.c.b16 %v3777, %v3769
      %v4498 = vpack.c.b16 %v3778, %v3770
      %v4499 = vpack.c.b16 %v3779, %v3771
      %v4500 = vpack.c.b16 %v3780, %v3772
      %v4501 = vpack.c.b16 %v3789, %v3781
      %v4502 = vpack.c.b16 %v3790, %v3782
      %v4503 = vpack.c.b16 %v3791, %v3783
      %v4504 = vpack.c.b16 %v3792, %v3784
      %v4505 = vpack.c.b16 %v3793, %v3785
      %v4506 = vpack.c.b16 %v3794, %v3786
      %v4507 = vpack.c.b16 %v3795, %v3787
      %v4508 = vpack.c.b16 %v3796, %v3788
      %v4509 = vpack.c.b16 %v3805, %v3797
      %v4510 = vpack.c.b16 %v3806, %v3798
      %v4511 = vpack.c.b16 %v3807, %v3799
      %v4512 = vpack.c.b16 %v3808, %v3800
      %v4513 = vpack.c.b16 %v3809, %v3801
      %v4514 = vpack.c.b16 %v3810, %v3802
      %v4515 = vpack.c.b16 %v3811, %v3803
      %v4516 = vpack.c.b16 %v3812, %v3804
      %v4517 = vpack.c.b16 %v3821, %v3813
      %v4518 = vpack.c.b16 %v3822, %v3814
      %v4519 = vpack.c.b16 %v3823, %v3815
      %v4520 = vpack.c.b16 %v3824, %v3816
      %v4521 = vpack.c.b16 %v3825, %v3817
      %v4522 = vpack.c.b16 %v3826, %v3818
      %v4523 = vpack.c.b16 %v3827, %v3819
      %v4524 = vpack.c.b16 %v3828, %v3820
      %v4525 = vpack.c.b16 %v3837, %v3829
      %v4526 = vpack.c.b16 %v3838, %v3830
      %v4527 = vpack.c.b16 %v3839, %v3831
      %v4528 = vpack.c.b16 %v3840, %v3832
      %v4529 = vpack.c.b16 %v3841, %v3833
      %v4530 = vpack.c.b16 %v3842, %v3834
      %v4531 = vpack.c.b16 %v3843, %v3835
      %v4532 = vpack.c.b16 %v3844, %v3836
      %v4533 = vpack.c.b16 %v3853, %v3845
      %v4534 = vpack.c.b16 %v3854, %v3846
      %v4535 = vpack.c.b16 %v3855, %v3847
      %v4536 = vpack.c.b16 %v3856, %v3848
      %v4537 = vpack.c.b16 %v3857, %v3849
      %v4538 = vpack.c.b16 %v3858, %v3850
      %v4539 = vpack.c.b16 %v3859, %v3851
      %v4540 = vpack.c.b16 %v3860, %v3852
      %v4541 = vpack.c.b16 %v3869, %v3861
      %v4542 = vpack.c.b16 %v3870, %v3862
      %v4543 = vpack.c.b16 %v3871, %v3863
      %v4544 = vpack.c.b16 %v3872, %v3864
      %v4545 = vpack.c.b16 %v3873, %v3865
      %v4546 = vpack.c.b16 %v3874, %v3866
      %v4547 = vpack.c.b16 %v3875, %v3867
      %v4548 = vpack.c.b16 %v3876, %v3868
      %v4549 = vpack.c.b16 %v3885, %v3877
      %v4550 = vpack.c.b16 %v3886, %v3878
      %v4551 = vpack.c.b16 %v3887, %v3879
      %v4552 = vpack.c.b16 %v3888, %v3880
      %v4553 = vpack.c.b16 %v3889, %v3881
      %v4554 = vpack.c.b16 %v3890, %v3882
      %v4555 = vpack.c.b16 %v3891, %v3883
      %v4556 = vpack.c.b16 %v3892, %v3884
      %v4557 = vpack.c.b16 %v3901, %v3893
      %v4558 = vpack.c.b16 %v3902, %v3894
      %v4559 = vpack.c.b16 %v3903, %v3895
      %v4560 = vpack.c.b16 %v3904, %v3896
      %v4561 = vpack.c.b16 %v3905, %v3897
      %v4562 = vpack.c.b16 %v3906, %v3898
      %v4563 = vpack.c.b16 %v3907, %v3899
      %v4564 = vpack.c.b16 %v3908, %v3900
      %v4565 = vpack.c.b16 %v3917, %v3909
      %v4566 = vpack.c.b16 %v3918, %v3910
      %v4567 = vpack.c.b16 %v3919, %v3911
      %v4568 = vpack.c.b16 %v3920, %v3912
      %v4569 = vpack.c.b16 %v3921, %v3913
      %v4570 = vpack.c.b16 %v3922, %v3914
      %v4571 = vpack.c.b16 %v3923, %v3915
      %v4572 = vpack.c.b16 %v3924, %v3916
      %v4573 = vpack.c.b16 %v3933, %v3925
      %v4574 = vpack.c.b16 %v3934, %v3926
      %v4575 = vpack.c.b16 %v3935, %v3927
      %v4576 = vpack.c.b16 %v3936, %v3928
      %v4577 = vpack.c.b16 %v3937, %v3929
      %v4578 = vpack.c.b16 %v3938, %v3930
      %v4579 = vpack.c.b16 %v3939, %v3931
      %v4580 = vpack.c.b16 %v3940, %v3932
      %v4581 = vpack.c.b16 %v3949, %v3941
      %v4582 = vpack.c.b16 %v3950, %v3942
      %v4583 = vpack.c.b16 %v3951, %v3943
      %v4584 = vpack.c.b16 %v3952, %v3944
      %v4585 = vpack.c.b16 %v3953, %v3945
      %v4586 = vpack.c.b16 %v3954, %v3946
      %v4587 = vpack.c.b16 %v3955, %v3947
      %v4588 = vpack.c.b16 %v3956, %v3948
      %v4589 = vpack.c.b16 %v3965, %v3957
      %v4590 = vpack.c.b16 %v3966, %v3958
      %v4591 = vpack.c.b16 %v3967, %v3959
      %v4592 = vpack.c.b16 %v3968, %v3960
      %v4593 = vpack.c.b16 %v3969, %v3961
      %v4594 = vpack.c.b16 %v3970, %v3962
      %v4595 = vpack.c.b16 %v3971, %v3963
      %v4596 = vpack.c.b16 %v3972, %v3964
      %v4597 = vpack.c.b16 %v3981, %v3973
      %v4598 = vpack.c.b16 %v3982, %v3974
      %v4599 = vpack.c.b16 %v3983, %v3975
      %v4600 = vpack.c.b16 %v3984, %v3976
      %v4601 = vpack.c.b16 %v3985, %v3977
      %v4602 = vpack.c.b16 %v3986, %v3978
      %v4603 = vpack.c.b16 %v3987, %v3979
      %v4604 = vpack.c.b16 %v3988, %v3980
      %v4605 = vpack.c.b16 %v3997, %v3989
      %v4606 = vpack.c.b16 %v3998, %v3990
      %v4607 = vpack.c.b16 %v3999, %v3991
      %v4608 = vpack.c.b16 %v4000, %v3992
      %v4609 = vpack.c.b16 %v4001, %v3993
      %v4610 = vpack.c.b16 %v4002, %v3994
      %v4611 = vpack.c.b16 %v4003, %v3995
      %v4612 = vpack.c.b16 %v4004, %v3996
      %v4613 = vpack.c.b16 %v4013, %v4005
      %v4614 = vpack.c.b16 %v4014, %v4006
      %v4615 = vpack.c.b16 %v4015, %v4007
      %v4616 = vpack.c.b16 %v4016, %v4008
      %v4617 = vpack.c.b16 %v4017, %v4009
      %v4618 = vpack.c.b16 %v4018, %v4010
      %v4619 = vpack.c.b16 %v4019, %v4011
      %v4620 = vpack.c.b16 %v4020, %v4012
      %v4621 = vpack.c.b16 %v4029, %v4021
      %v4622 = vpack.c.b16 %v4030, %v4022
      %v4623 = vpack.c.b16 %v4031, %v4023
      %v4624 = vpack.c.b16 %v4032, %v4024
      %v4625 = vpack.c.b16 %v4033, %v4025
      %v4626 = vpack.c.b16 %v4034, %v4026
      %v4627 = vpack.c.b16 %v4035, %v4027
      %v4628 = vpack.c.b16 %v4036, %v4028
      %v4629 = vpack.c.b16 %v4045, %v4037
      %v4630 = vpack.c.b16 %v4046, %v4038
      %v4631 = vpack.c.b16 %v4047, %v4039
      %v4632 = vpack.c.b16 %v4048, %v4040
      %v4633 = vpack.c.b16 %v4049, %v4041
      %v4634 = vpack.c.b16 %v4050, %v4042
      %v4635 = vpack.c.b16 %v4051, %v4043
      %v4636 = vpack.c.b16 %v4052, %v4044
      %v4637 = vpack.c.b16 %v4061, %v4053
      %v4638 = vpack.c.b16 %v4062, %v4054
      %v4639 = vpack.c.b16 %v4063, %v4055
      %v4640 = vpack.c.b16 %v4064, %v4056
      %v4641 = vpack.c.b16 %v4065, %v4057
      %v4642 = vpack.c.b16 %v4066, %v4058
      %v4643 = vpack.c.b16 %v4067, %v4059
      %v4644 = vpack.c.b16 %v4068, %v4060
      %v4645 = vpack.c.b16 %v4077, %v4069
      %v4646 = vpack.c.b16 %v4078, %v4070
      %v4647 = vpack.c.b16 %v4079, %v4071
      %v4648 = vpack.c.b16 %v4080, %v4072
      %v4649 = vpack.c.b16 %v4081, %v4073
      %v4650 = vpack.c.b16 %v4082, %v4074
      %v4651 = vpack.c.b16 %v4083, %v4075
      %v4652 = vpack.c.b16 %v4084, %v4076
      %v4653 = vpack.c.b16 %v4093, %v4085
      %v4654 = vpack.c.b16 %v4094, %v4086
      %v4655 = vpack.c.b16 %v4095, %v4087
      %v4656 = vpack.c.b16 %v4096, %v4088
      %v4657 = vpack.c.b16 %v4097, %v4089
      %v4658 = vpack.c.b16 %v4098, %v4090
      %v4659 = vpack.c.b16 %v4099, %v4091
      %v4660 = vpack.c.b16 %v4100, %v4092
      %v4661 = vpack.c.b16 %v4109, %v4101
      %v4662 = vpack.c.b16 %v4110, %v4102
      %v4663 = vpack.c.b16 %v4111, %v4103
      %v4664 = vpack.c.b16 %v4112, %v4104
      %v4665 = vpack.c.b16 %v4113, %v4105
      %v4666 = vpack.c.b16 %v4114, %v4106
      %v4667 = vpack.c.b16 %v4115, %v4107
      %v4668 = vpack.c.b16 %v4116, %v4108
      %v4669 = vpack.c.b16 %v4125, %v4117
      %v4670 = vpack.c.b16 %v4126, %v4118
      %v4671 = vpack.c.b16 %v4127, %v4119
      %v4672 = vpack.c.b16 %v4128, %v4120
      %v4673 = vpack.c.b16 %v4129, %v4121
      %v4674 = vpack.c.b16 %v4130, %v4122
      %v4675 = vpack.c.b16 %v4131, %v4123
      %v4676 = vpack.c.b16 %v4132, %v4124
      %v4677 = vpack.c.b16 %v4141, %v4133
      %v4678 = vpack.c.b16 %v4142, %v4134
      %v4679 = vpack.c.b16 %v4143, %v4135
      %v4680 = vpack.c.b16 %v4144, %v4136
      %v4681 = vpack.c.b16 %v4145, %v4137
      %v4682 = vpack.c.b16 %v4146, %v4138
      %v4683 = vpack.c.b16 %v4147, %v4139
      %v4684 = vpack.c.b16 %v4148, %v4140
      %v4685 = vpack.c.b16 %v4157, %v4149
      %v4686 = vpack.c.b16 %v4158, %v4150
      %v4687 = vpack.c.b16 %v4159, %v4151
      %v4688 = vpack.c.b16 %v4160, %v4152
      %v4689 = vpack.c.b16 %v4161, %v4153
      %v4690 = vpack.c.b16 %v4162, %v4154
      %v4691 = vpack.c.b16 %v4163, %v4155
      %v4692 = vpack.c.b16 %v4164, %v4156
      %v4693 = vpack.c.b16 %v4173, %v4165
      %v4694 = vpack.c.b16 %v4174, %v4166
      %v4695 = vpack.c.b16 %v4175, %v4167
      %v4696 = vpack.c.b16 %v4176, %v4168
      %v4697 = vpack.c.b16 %v4177, %v4169
      %v4698 = vpack.c.b16 %v4178, %v4170
      %v4699 = vpack.c.b16 %v4179, %v4171
      %v4700 = vpack.c.b16 %v4180, %v4172
      %v4701 = vpack.c.b16 %v4189, %v4181
      %v4702 = vpack.c.b16 %v4190, %v4182
      %v4703 = vpack.c.b16 %v4191, %v4183
      %v4704 = vpack.c.b16 %v4192, %v4184
      %v4705 = vpack.c.b16 %v4193, %v4185
      %v4706 = vpack.c.b16 %v4194, %v4186
      %v4707 = vpack.c.b16 %v4195, %v4187
      %v4708 = vpack.c.b16 %v4196, %v4188
      %5221 = vmatprep.subr.bf16.mxu0 %v4198
      %5222 = vmatpush1.bf16.xpose.msra.mxu0 %v4197
      %5223 = vmatprep.subr.bf16.mxu0 %v4206
      %5224 = vmatpush1.bf16.xpose.msra.mxu0 %v4205
      %5225 = vmatprep.subr.bf16.mxu0 %v4214
      %5226 = vmatpush1.bf16.xpose.msra.mxu0 %v4213
      %5227 = vmatprep.subr.bf16.mxu0 %v4222
      %5228 = vmatpush1.bf16.xpose.msra.mxu0 %v4221
      %5229 = vmatprep.subr.bf16.mxu0 %v4230
      %5230 = vmatpush1.bf16.xpose.msra.mxu0 %v4229
      %5231 = vmatprep.subr.bf16.mxu0 %v4238
      %5232 = vmatpush1.bf16.xpose.msra.mxu0 %v4237
      %5233 = vmatprep.subr.bf16.mxu0 %v4246
      %5234 = vmatpush1.bf16.xpose.msra.mxu0 %v4245
      %5235 = vmatprep.subr.bf16.mxu0 %v4254
      %5236 = vmatpush1.bf16.xpose.msra.mxu0 %v4253
      %5237 = vmatprep.subr.bf16.mxu0 %v4262
      %5238 = vmatpush1.bf16.xpose.msra.mxu0 %v4261
      %5239 = vmatprep.subr.bf16.mxu0 %v4270
      %5240 = vmatpush1.bf16.xpose.msra.mxu0 %v4269
      %5241 = vmatprep.subr.bf16.mxu0 %v4278
      %5242 = vmatpush1.bf16.xpose.msra.mxu0 %v4277
      %5243 = vmatprep.subr.bf16.mxu0 %v4286
      %5244 = vmatpush1.bf16.xpose.msra.mxu0 %v4285
      %5245 = vmatprep.subr.bf16.mxu0 %v4294
      %5246 = vmatpush1.bf16.xpose.msra.mxu0 %v4293
      %5247 = vmatprep.subr.bf16.mxu0 %v4302
      %5248 = vmatpush1.bf16.xpose.msra.mxu0 %v4301
      %5249 = vmatprep.subr.bf16.mxu0 %v4310
      %5250 = vmatpush1.bf16.xpose.msra.mxu0 %v4309
      %5251 = vmatprep.subr.bf16.mxu0 %v4318
      %5252 = vmatpush1.bf16.xpose.msra.mxu0 %v4317
      %5253 = vmatprep.mubr.bf16.mxu0 %v2100
      %5254 = vmatmul.mubr.bf16.gmra.mrb[0].mxu0 %v2099
      %v5255 = vpop.f32.mrb[0].mxu0
      %v5256 = vadd.f32 %v2624, %v5255
      %v5257 = vpop.f32.mrb[0].mxu0
      %v5258 = vadd.f32 %v2628, %v5257
      %v5259 = vpop.f32.mrb[0].mxu0
      %v5260 = vpop.f32.mrb[0].mxu0
      %5261 = vdwg.mxu0
      %5262 = vmatprep.subr.bf16.mxu0 %v4200
      %5263 = vmatpush1.bf16.xpose.msra.mxu0 %v4199
      %5264 = vmatprep.subr.bf16.mxu0 %v4208
      %5265 = vmatpush1.bf16.xpose.msra.mxu0 %v4207
      %5266 = vmatprep.subr.bf16.mxu0 %v4216
      %5267 = vmatpush1.bf16.xpose.msra.mxu0 %v4215
      %5268 = vmatprep.subr.bf16.mxu0 %v4224
      %5269 = vmatpush1.bf16.xpose.msra.mxu0 %v4223
      %5270 = vmatprep.subr.bf16.mxu0 %v4232
      %5271 = vmatpush1.bf16.xpose.msra.mxu0 %v4231
      %5272 = vmatprep.subr.bf16.mxu0 %v4240
      %5273 = vmatpush1.bf16.xpose.msra.mxu0 %v4239
      %5274 = vmatprep.subr.bf16.mxu0 %v4248
      %5275 = vmatpush1.bf16.xpose.msra.mxu0 %v4247
      %5276 = vmatprep.subr.bf16.mxu0 %v4256
      %5277 = vmatpush1.bf16.xpose.msra.mxu0 %v4255
      %5278 = vmatprep.subr.bf16.mxu0 %v4264
      %5279 = vmatpush1.bf16.xpose.msra.mxu0 %v4263
      %5280 = vmatprep.subr.bf16.mxu0 %v4272
      %5281 = vmatpush1.bf16.xpose.msra.mxu0 %v4271
      %5282 = vmatprep.subr.bf16.mxu0 %v4280
      %5283 = vmatpush1.bf16.xpose.msra.mxu0 %v4279
      %5284 = vmatprep.subr.bf16.mxu0 %v4288
      %5285 = vmatpush1.bf16.xpose.msra.mxu0 %v4287
      %5286 = vmatprep.subr.bf16.mxu0 %v4296
      %5287 = vmatpush1.bf16.xpose.msra.mxu0 %v4295
      %5288 = vmatprep.subr.bf16.mxu0 %v4304
      %5289 = vmatpush1.bf16.xpose.msra.mxu0 %v4303
      %5290 = vmatprep.subr.bf16.mxu0 %v4312
      %5291 = vmatpush1.bf16.xpose.msra.mxu0 %v4311
      %5292 = vmatprep.subr.bf16.mxu0 %v4320
      %5293 = vmatpush1.bf16.xpose.msra.mxu0 %v4319
      %5294 = vmatprep.mubr.bf16.mxu0 %v2102
      %5295 = vmatmul.mubr.bf16.gmra.mrb[0].mxu0 %v2101
      %v5296 = vpop.f32.mrb[0].mxu0
      %v5297 = vadd.f32 %v5256, %v5296
      %v5298 = vpop.f32.mrb[0].mxu0
      %v5299 = vadd.f32 %v5258, %v5298
      %v5300 = vpop.f32.mrb[0].mxu0
      %v5301 = vpop.f32.mrb[0].mxu0
      %5302 = vdwg.mxu0
      %5303 = vmatprep.subr.bf16.mxu0 %v4202
      %5304 = vmatpush1.bf16.xpose.msra.mxu0 %v4201
      %5305 = vmatprep.subr.bf16.mxu0 %v4210
      %5306 = vmatpush1.bf16.xpose.msra.mxu0 %v4209
      %5307 = vmatprep.subr.bf16.mxu0 %v4218
      %5308 = vmatpush1.bf16.xpose.msra.mxu0 %v4217
      %5309 = vmatprep.subr.bf16.mxu0 %v4226
      %5310 = vmatpush1.bf16.xpose.msra.mxu0 %v4225
      %5311 = vmatprep.subr.bf16.mxu0 %v4234
      %5312 = vmatpush1.bf16.xpose.msra.mxu0 %v4233
      %5313 = vmatprep.subr.bf16.mxu0 %v4242
      %5314 = vmatpush1.bf16.xpose.msra.mxu0 %v4241
      %5315 = vmatprep.subr.bf16.mxu0 %v4250
      %5316 = vmatpush1.bf16.xpose.msra.mxu0 %v4249
      %5317 = vmatprep.subr.bf16.mxu0 %v4258
      %5318 = vmatpush1.bf16.xpose.msra.mxu0 %v4257
      %5319 = vmatprep.subr.bf16.mxu0 %v4266
      %5320 = vmatpush1.bf16.xpose.msra.mxu0 %v4265
      %5321 = vmatprep.subr.bf16.mxu0 %v4274
      %5322 = vmatpush1.bf16.xpose.msra.mxu0 %v4273
      %5323 = vmatprep.subr.bf16.mxu0 %v4282
      %5324 = vmatpush1.bf16.xpose.msra.mxu0 %v4281
      %5325 = vmatprep.subr.bf16.mxu0 %v4290
      %5326 = vmatpush1.bf16.xpose.msra.mxu0 %v4289
      %5327 = vmatprep.subr.bf16.mxu0 %v4298
      %5328 = vmatpush1.bf16.xpose.msra.mxu0 %v4297
      %5329 = vmatprep.subr.bf16.mxu0 %v4306
      %5330 = vmatpush1.bf16.xpose.msra.mxu0 %v4305
      %5331 = vmatprep.subr.bf16.mxu0 %v4314
      %5332 = vmatpush1.bf16.xpose.msra.mxu0 %v4313
      %5333 = vmatprep.subr.bf16.mxu0 %v4322
      %5334 = vmatpush1.bf16.xpose.msra.mxu0 %v4321
      %5335 = vmatprep.mubr.bf16.mxu0 %v2104
      %5336 = vmatmul.mubr.bf16.gmra.mrb[0].mxu0 %v2103
      %v5337 = vpop.f32.mrb[0].mxu0
      %v5338 = vadd.f32 %v5297, %v5337
      %v5339 = vpop.f32.mrb[0].mxu0
      %v5340 = vadd.f32 %v5299, %v5339
      %v5341 = vpop.f32.mrb[0].mxu0
      %v5342 = vpop.f32.mrb[0].mxu0
      %5343 = vdwg.mxu0
      %5344 = vmatprep.subr.bf16.mxu0 %v4204
      %5345 = vmatpush1.bf16.xpose.msra.mxu0 %v4203
      %5346 = vmatprep.subr.bf16.mxu0 %v4212
      %5347 = vmatpush1.bf16.xpose.msra.mxu0 %v4211
      %5348 = vmatprep.subr.bf16.mxu0 %v4220
      %5349 = vmatpush1.bf16.xpose.msra.mxu0 %v4219
      %5350 = vmatprep.subr.bf16.mxu0 %v4228
      %5351 = vmatpush1.bf16.xpose.msra.mxu0 %v4227
      %5352 = vmatprep.subr.bf16.mxu0 %v4236
      %5353 = vmatpush1.bf16.xpose.msra.mxu0 %v4235
      %5354 = vmatprep.subr.bf16.mxu0 %v4244
      %5355 = vmatpush1.bf16.xpose.msra.mxu0 %v4243
      %5356 = vmatprep.subr.bf16.mxu0 %v4252
      %5357 = vmatpush1.bf16.xpose.msra.mxu0 %v4251
      %5358 = vmatprep.subr.bf16.mxu0 %v4260
      %5359 = vmatpush1.bf16.xpose.msra.mxu0 %v4259
      %5360 = vmatprep.subr.bf16.mxu0 %v4268
      %5361 = vmatpush1.bf16.xpose.msra.mxu0 %v4267
      %5362 = vmatprep.subr.bf16.mxu0 %v4276
      %5363 = vmatpush1.bf16.xpose.msra.mxu0 %v4275
      %5364 = vmatprep.subr.bf16.mxu0 %v4284
      %5365 = vmatpush1.bf16.xpose.msra.mxu0 %v4283
      %5366 = vmatprep.subr.bf16.mxu0 %v4292
      %5367 = vmatpush1.bf16.xpose.msra.mxu0 %v4291
      %5368 = vmatprep.subr.bf16.mxu0 %v4300
      %5369 = vmatpush1.bf16.xpose.msra.mxu0 %v4299
      %5370 = vmatprep.subr.bf16.mxu0 %v4308
      %5371 = vmatpush1.bf16.xpose.msra.mxu0 %v4307
      %5372 = vmatprep.subr.bf16.mxu0 %v4316
      %5373 = vmatpush1.bf16.xpose.msra.mxu0 %v4315
      %5374 = vmatprep.subr.bf16.mxu0 %v4324
      %5375 = vmatpush1.bf16.xpose.msra.mxu0 %v4323
      %5376 = vmatprep.mubr.bf16.mxu0 %v2106
      %5377 = vmatmul.mubr.bf16.gmra.mrb[0].mxu0 %v2105
      %v5378 = vpop.f32.mrb[0].mxu0
      %v5379 = vadd.f32 %v5338, %v5378
      %v5380 = vpop.f32.mrb[0].mxu0
      %v5381 = vadd.f32 %v5340, %v5380
      %v5382 = vpop.f32.mrb[0].mxu0
      %v5383 = vpop.f32.mrb[0].mxu0
      %5384 = vdwg.mxu0
      %5385 = vmatprep.subr.bf16.mxu0 %v4326
      %5386 = vmatpush1.bf16.xpose.msra.mxu0 %v4325
      %5387 = vmatprep.subr.bf16.mxu0 %v4334
      %5388 = vmatpush1.bf16.xpose.msra.mxu0 %v4333
      %5389 = vmatprep.subr.bf16.mxu0 %v4342
      %5390 = vmatpush1.bf16.xpose.msra.mxu0 %v4341
      %5391 = vmatprep.subr.bf16.mxu0 %v4350
      %5392 = vmatpush1.bf16.xpose.msra.mxu0 %v4349
      %5393 = vmatprep.subr.bf16.mxu0 %v4358
      %5394 = vmatpush1.bf16.xpose.msra.mxu0 %v4357
      %5395 = vmatprep.subr.bf16.mxu0 %v4366
      %5396 = vmatpush1.bf16.xpose.msra.mxu0 %v4365
      %5397 = vmatprep.subr.bf16.mxu0 %v4374
      %5398 = vmatpush1.bf16.xpose.msra.mxu0 %v4373
      %5399 = vmatprep.subr.bf16.mxu0 %v4382
      %5400 = vmatpush1.bf16.xpose.msra.mxu0 %v4381
      %5401 = vmatprep.subr.bf16.mxu0 %v4390
      %5402 = vmatpush1.bf16.xpose.msra.mxu0 %v4389
      %5403 = vmatprep.subr.bf16.mxu0 %v4398
      %5404 = vmatpush1.bf16.xpose.msra.mxu0 %v4397
      %5405 = vmatprep.subr.bf16.mxu0 %v4406
      %5406 = vmatpush1.bf16.xpose.msra.mxu0 %v4405
      %5407 = vmatprep.subr.bf16.mxu0 %v4414
      %5408 = vmatpush1.bf16.xpose.msra.mxu0 %v4413
      %5409 = vmatprep.subr.bf16.mxu0 %v4422
      %5410 = vmatpush1.bf16.xpose.msra.mxu0 %v4421
      %5411 = vmatprep.subr.bf16.mxu0 %v4430
      %5412 = vmatpush1.bf16.xpose.msra.mxu0 %v4429
      %5413 = vmatprep.subr.bf16.mxu0 %v4438
      %5414 = vmatpush1.bf16.xpose.msra.mxu0 %v4437
      %5415 = vmatprep.subr.bf16.mxu0 %v4446
      %5416 = vmatpush1.bf16.xpose.msra.mxu0 %v4445
      %5417 = vmatprep.mubr.bf16.mxu0 %v2100
      %5418 = vmatmul.mubr.bf16.gmra.mrb[0].mxu0 %v2099
      %v5419 = vpop.f32.mrb[0].mxu0
      %v5420 = vadd.f32 %v2632, %v5419
      %v5421 = vpop.f32.mrb[0].mxu0
      %v5422 = vadd.f32 %v2636, %v5421
      %v5423 = vpop.f32.mrb[0].mxu0
      %v5424 = vpop.f32.mrb[0].mxu0
      %5425 = vdwg.mxu0
      %5426 = vmatprep.subr.bf16.mxu0 %v4328
      %5427 = vmatpush1.bf16.xpose.msra.mxu0 %v4327
      %5428 = vmatprep.subr.bf16.mxu0 %v4336
      %5429 = vmatpush1.bf16.xpose.msra.mxu0 %v4335
      %5430 = vmatprep.subr.bf16.mxu0 %v4344
      %5431 = vmatpush1.bf16.xpose.msra.mxu0 %v4343
      %5432 = vmatprep.subr.bf16.mxu0 %v4352
      %5433 = vmatpush1.bf16.xpose.msra.mxu0 %v4351
      %5434 = vmatprep.subr.bf16.mxu0 %v4360
      %5435 = vmatpush1.bf16.xpose.msra.mxu0 %v4359
      %5436 = vmatprep.subr.bf16.mxu0 %v4368
      %5437 = vmatpush1.bf16.xpose.msra.mxu0 %v4367
      %5438 = vmatprep.subr.bf16.mxu0 %v4376
      %5439 = vmatpush1.bf16.xpose.msra.mxu0 %v4375
      %5440 = vmatprep.subr.bf16.mxu0 %v4384
      %5441 = vmatpush1.bf16.xpose.msra.mxu0 %v4383
      %5442 = vmatprep.subr.bf16.mxu0 %v4392
      %5443 = vmatpush1.bf16.xpose.msra.mxu0 %v4391
      %5444 = vmatprep.subr.bf16.mxu0 %v4400
      %5445 = vmatpush1.bf16.xpose.msra.mxu0 %v4399
      %5446 = vmatprep.subr.bf16.mxu0 %v4408
      %5447 = vmatpush1.bf16.xpose.msra.mxu0 %v4407
      %5448 = vmatprep.subr.bf16.mxu0 %v4416
      %5449 = vmatpush1.bf16.xpose.msra.mxu0 %v4415
      %5450 = vmatprep.subr.bf16.mxu0 %v4424
      %5451 = vmatpush1.bf16.xpose.msra.mxu0 %v4423
      %5452 = vmatprep.subr.bf16.mxu0 %v4432
      %5453 = vmatpush1.bf16.xpose.msra.mxu0 %v4431
      %5454 = vmatprep.subr.bf16.mxu0 %v4440
      %5455 = vmatpush1.bf16.xpose.msra.mxu0 %v4439
      %5456 = vmatprep.subr.bf16.mxu0 %v4448
      %5457 = vmatpush1.bf16.xpose.msra.mxu0 %v4447
      %5458 = vmatprep.mubr.bf16.mxu0 %v2102
      %5459 = vmatmul.mubr.bf16.gmra.mrb[0].mxu0 %v2101
      %v5460 = vpop.f32.mrb[0].mxu0
      %v5461 = vadd.f32 %v5420, %v5460
      %v5462 = vpop.f32.mrb[0].mxu0
      %v5463 = vadd.f32 %v5422, %v5462
      %v5464 = vpop.f32.mrb[0].mxu0
      %v5465 = vpop.f32.mrb[0].mxu0
      %5466 = vdwg.mxu0
      %5467 = vmatprep.subr.bf16.mxu0 %v4330
      %5468 = vmatpush1.bf16.xpose.msra.mxu0 %v4329
      %5469 = vmatprep.subr.bf16.mxu0 %v4338
      %5470 = vmatpush1.bf16.xpose.msra.mxu0 %v4337
      %5471 = vmatprep.subr.bf16.mxu0 %v4346
      %5472 = vmatpush1.bf16.xpose.msra.mxu0 %v4345
      %5473 = vmatprep.subr.bf16.mxu0 %v4354
      %5474 = vmatpush1.bf16.xpose.msra.mxu0 %v4353
      %5475 = vmatprep.subr.bf16.mxu0 %v4362
      %5476 = vmatpush1.bf16.xpose.msra.mxu0 %v4361
      %5477 = vmatprep.subr.bf16.mxu0 %v4370
      %5478 = vmatpush1.bf16.xpose.msra.mxu0 %v4369
      %5479 = vmatprep.subr.bf16.mxu0 %v4378
      %5480 = vmatpush1.bf16.xpose.msra.mxu0 %v4377
      %5481 = vmatprep.subr.bf16.mxu0 %v4386
      %5482 = vmatpush1.bf16.xpose.msra.mxu0 %v4385
      %5483 = vmatprep.subr.bf16.mxu0 %v4394
      %5484 = vmatpush1.bf16.xpose.msra.mxu0 %v4393
      %5485 = vmatprep.subr.bf16.mxu0 %v4402
      %5486 = vmatpush1.bf16.xpose.msra.mxu0 %v4401
      %5487 = vmatprep.subr.bf16.mxu0 %v4410
      %5488 = vmatpush1.bf16.xpose.msra.mxu0 %v4409
      %5489 = vmatprep.subr.bf16.mxu0 %v4418
      %5490 = vmatpush1.bf16.xpose.msra.mxu0 %v4417
      %5491 = vmatprep.subr.bf16.mxu0 %v4426
      %5492 = vmatpush1.bf16.xpose.msra.mxu0 %v4425
      %5493 = vmatprep.subr.bf16.mxu0 %v4434
      %5494 = vmatpush1.bf16.xpose.msra.mxu0 %v4433
      %5495 = vmatprep.subr.bf16.mxu0 %v4442
      %5496 = vmatpush1.bf16.xpose.msra.mxu0 %v4441
      %5497 = vmatprep.subr.bf16.mxu0 %v4450
      %5498 = vmatpush1.bf16.xpose.msra.mxu0 %v4449
      %5499 = vmatprep.mubr.bf16.mxu0 %v2104
      %5500 = vmatmul.mubr.bf16.gmra.mrb[0].mxu0 %v2103
      %v5501 = vpop.f32.mrb[0].mxu0
      %v5502 = vadd.f32 %v5461, %v5501
      %v5503 = vpop.f32.mrb[0].mxu0
      %v5504 = vadd.f32 %v5463, %v5503
      %v5505 = vpop.f32.mrb[0].mxu0
      %v5506 = vpop.f32.mrb[0].mxu0
      %5507 = vdwg.mxu0
      %5508 = vmatprep.subr.bf16.mxu0 %v4332
      %5509 = vmatpush1.bf16.xpose.msra.mxu0 %v4331
      %5510 = vmatprep.subr.bf16.mxu0 %v4340
      %5511 = vmatpush1.bf16.xpose.msra.mxu0 %v4339
      %5512 = vmatprep.subr.bf16.mxu0 %v4348
      %5513 = vmatpush1.bf16.xpose.msra.mxu0 %v4347
      %5514 = vmatprep.subr.bf16.mxu0 %v4356
      %5515 = vmatpush1.bf16.xpose.msra.mxu0 %v4355
      %5516 = vmatprep.subr.bf16.mxu0 %v4364
      %5517 = vmatpush1.bf16.xpose.msra.mxu0 %v4363
      %5518 = vmatprep.subr.bf16.mxu0 %v4372
      %5519 = vmatpush1.bf16.xpose.msra.mxu0 %v4371
      %5520 = vmatprep.subr.bf16.mxu0 %v4380
      %5521 = vmatpush1.bf16.xpose.msra.mxu0 %v4379
      %5522 = vmatprep.subr.bf16.mxu0 %v4388
      %5523 = vmatpush1.bf16.xpose.msra.mxu0 %v4387
      %5524 = vmatprep.subr.bf16.mxu0 %v4396
      %5525 = vmatpush1.bf16.xpose.msra.mxu0 %v4395
      %5526 = vmatprep.subr.bf16.mxu0 %v4404
      %5527 = vmatpush1.bf16.xpose.msra.mxu0 %v4403
      %5528 = vmatprep.subr.bf16.mxu0 %v4412
      %5529 = vmatpush1.bf16.xpose.msra.mxu0 %v4411
      %5530 = vmatprep.subr.bf16.mxu0 %v4420
      %5531 = vmatpush1.bf16.xpose.msra.mxu0 %v4419
      %5532 = vmatprep.subr.bf16.mxu0 %v4428
      %5533 = vmatpush1.bf16.xpose.msra.mxu0 %v4427
      %5534 = vmatprep.subr.bf16.mxu0 %v4436
      %5535 = vmatpush1.bf16.xpose.msra.mxu0 %v4435
      %5536 = vmatprep.subr.bf16.mxu0 %v4444
      %5537 = vmatpush1.bf16.xpose.msra.mxu0 %v4443
      %5538 = vmatprep.subr.bf16.mxu0 %v4452
      %5539 = vmatpush1.bf16.xpose.msra.mxu0 %v4451
      %5540 = vmatprep.mubr.bf16.mxu0 %v2106
      %5541 = vmatmul.mubr.bf16.gmra.mrb[0].mxu0 %v2105
      %v5542 = vpop.f32.mrb[0].mxu0
      %v5543 = vadd.f32 %v5502, %v5542
      %v5544 = vpop.f32.mrb[0].mxu0
      %v5545 = vadd.f32 %v5504, %v5544
      %v5546 = vpop.f32.mrb[0].mxu0
      %v5547 = vpop.f32.mrb[0].mxu0
      %5548 = vdwg.mxu0
      %5549 = vmatprep.subr.bf16.mxu0 %v4454
      %5550 = vmatpush1.bf16.xpose.msra.mxu0 %v4453
      %5551 = vmatprep.subr.bf16.mxu0 %v4462
      %5552 = vmatpush1.bf16.xpose.msra.mxu0 %v4461
      %5553 = vmatprep.subr.bf16.mxu0 %v4470
      %5554 = vmatpush1.bf16.xpose.msra.mxu0 %v4469
      %5555 = vmatprep.subr.bf16.mxu0 %v4478
      %5556 = vmatpush1.bf16.xpose.msra.mxu0 %v4477
      %5557 = vmatprep.subr.bf16.mxu0 %v4486
      %5558 = vmatpush1.bf16.xpose.msra.mxu0 %v4485
      %5559 = vmatprep.subr.bf16.mxu0 %v4494
      %5560 = vmatpush1.bf16.xpose.msra.mxu0 %v4493
      %5561 = vmatprep.subr.bf16.mxu0 %v4502
      %5562 = vmatpush1.bf16.xpose.msra.mxu0 %v4501
      %5563 = vmatprep.subr.bf16.mxu0 %v4510
      %5564 = vmatpush1.bf16.xpose.msra.mxu0 %v4509
      %5565 = vmatprep.subr.bf16.mxu0 %v4518
      %5566 = vmatpush1.bf16.xpose.msra.mxu0 %v4517
      %5567 = vmatprep.subr.bf16.mxu0 %v4526
      %5568 = vmatpush1.bf16.xpose.msra.mxu0 %v4525
      %5569 = vmatprep.subr.bf16.mxu0 %v4534
      %5570 = vmatpush1.bf16.xpose.msra.mxu0 %v4533
      %5571 = vmatprep.subr.bf16.mxu0 %v4542
      %5572 = vmatpush1.bf16.xpose.msra.mxu0 %v4541
      %5573 = vmatprep.subr.bf16.mxu0 %v4550
      %5574 = vmatpush1.bf16.xpose.msra.mxu0 %v4549
      %5575 = vmatprep.subr.bf16.mxu0 %v4558
      %5576 = vmatpush1.bf16.xpose.msra.mxu0 %v4557
      %5577 = vmatprep.subr.bf16.mxu0 %v4566
      %5578 = vmatpush1.bf16.xpose.msra.mxu0 %v4565
      %5579 = vmatprep.subr.bf16.mxu0 %v4574
      %5580 = vmatpush1.bf16.xpose.msra.mxu0 %v4573
      %5581 = vmatprep.mubr.bf16.mxu0 %v2100
      %5582 = vmatmul.mubr.bf16.gmra.mrb[0].mxu0 %v2099
      %v5583 = vpop.f32.mrb[0].mxu0
      %v5584 = vadd.f32 %v2640, %v5583
      %v5585 = vpop.f32.mrb[0].mxu0
      %v5586 = vadd.f32 %v2644, %v5585
      %v5587 = vpop.f32.mrb[0].mxu0
      %v5588 = vpop.f32.mrb[0].mxu0
      %5589 = vdwg.mxu0
      %5590 = vmatprep.subr.bf16.mxu0 %v4456
      %5591 = vmatpush1.bf16.xpose.msra.mxu0 %v4455
      %5592 = vmatprep.subr.bf16.mxu0 %v4464
      %5593 = vmatpush1.bf16.xpose.msra.mxu0 %v4463
      %5594 = vmatprep.subr.bf16.mxu0 %v4472
      %5595 = vmatpush1.bf16.xpose.msra.mxu0 %v4471
      %5596 = vmatprep.subr.bf16.mxu0 %v4480
      %5597 = vmatpush1.bf16.xpose.msra.mxu0 %v4479
      %5598 = vmatprep.subr.bf16.mxu0 %v4488
      %5599 = vmatpush1.bf16.xpose.msra.mxu0 %v4487
      %5600 = vmatprep.subr.bf16.mxu0 %v4496
      %5601 = vmatpush1.bf16.xpose.msra.mxu0 %v4495
      %5602 = vmatprep.subr.bf16.mxu0 %v4504
      %5603 = vmatpush1.bf16.xpose.msra.mxu0 %v4503
      %5604 = vmatprep.subr.bf16.mxu0 %v4512
      %5605 = vmatpush1.bf16.xpose.msra.mxu0 %v4511
      %5606 = vmatprep.subr.bf16.mxu0 %v4520
      %5607 = vmatpush1.bf16.xpose.msra.mxu0 %v4519
      %5608 = vmatprep.subr.bf16.mxu0 %v4528
      %5609 = vmatpush1.bf16.xpose.msra.mxu0 %v4527
      %5610 = vmatprep.subr.bf16.mxu0 %v4536
      %5611 = vmatpush1.bf16.xpose.msra.mxu0 %v4535
      %5612 = vmatprep.subr.bf16.mxu0 %v4544
      %5613 = vmatpush1.bf16.xpose.msra.mxu0 %v4543
      %5614 = vmatprep.subr.bf16.mxu0 %v4552
      %5615 = vmatpush1.bf16.xpose.msra.mxu0 %v4551
      %5616 = vmatprep.subr.bf16.mxu0 %v4560
      %5617 = vmatpush1.bf16.xpose.msra.mxu0 %v4559
      %5618 = vmatprep.subr.bf16.mxu0 %v4568
      %5619 = vmatpush1.bf16.xpose.msra.mxu0 %v4567
      %5620 = vmatprep.subr.bf16.mxu0 %v4576
      %5621 = vmatpush1.bf16.xpose.msra.mxu0 %v4575
      %5622 = vmatprep.mubr.bf16.mxu0 %v2102
      %5623 = vmatmul.mubr.bf16.gmra.mrb[0].mxu0 %v2101
      %v5624 = vpop.f32.mrb[0].mxu0
      %v5625 = vadd.f32 %v5584, %v5624
      %v5626 = vpop.f32.mrb[0].mxu0
      %v5627 = vadd.f32 %v5586, %v5626
      %v5628 = vpop.f32.mrb[0].mxu0
      %v5629 = vpop.f32.mrb[0].mxu0
      %5630 = vdwg.mxu0
      %5631 = vmatprep.subr.bf16.mxu0 %v4458
      %5632 = vmatpush1.bf16.xpose.msra.mxu0 %v4457
      %5633 = vmatprep.subr.bf16.mxu0 %v4466
      %5634 = vmatpush1.bf16.xpose.msra.mxu0 %v4465
      %5635 = vmatprep.subr.bf16.mxu0 %v4474
      %5636 = vmatpush1.bf16.xpose.msra.mxu0 %v4473
      %5637 = vmatprep.subr.bf16.mxu0 %v4482
      %5638 = vmatpush1.bf16.xpose.msra.mxu0 %v4481
      %5639 = vmatprep.subr.bf16.mxu0 %v4490
      %5640 = vmatpush1.bf16.xpose.msra.mxu0 %v4489
      %5641 = vmatprep.subr.bf16.mxu0 %v4498
      %5642 = vmatpush1.bf16.xpose.msra.mxu0 %v4497
      %5643 = vmatprep.subr.bf16.mxu0 %v4506
      %5644 = vmatpush1.bf16.xpose.msra.mxu0 %v4505
      %5645 = vmatprep.subr.bf16.mxu0 %v4514
      %5646 = vmatpush1.bf16.xpose.msra.mxu0 %v4513
      %5647 = vmatprep.subr.bf16.mxu0 %v4522
      %5648 = vmatpush1.bf16.xpose.msra.mxu0 %v4521
      %5649 = vmatprep.subr.bf16.mxu0 %v4530
      %5650 = vmatpush1.bf16.xpose.msra.mxu0 %v4529
      %5651 = vmatprep.subr.bf16.mxu0 %v4538
      %5652 = vmatpush1.bf16.xpose.msra.mxu0 %v4537
      %5653 = vmatprep.subr.bf16.mxu0 %v4546
      %5654 = vmatpush1.bf16.xpose.msra.mxu0 %v4545
      %5655 = vmatprep.subr.bf16.mxu0 %v4554
      %5656 = vmatpush1.bf16.xpose.msra.mxu0 %v4553
      %5657 = vmatprep.subr.bf16.mxu0 %v4562
      %5658 = vmatpush1.bf16.xpose.msra.mxu0 %v4561
      %5659 = vmatprep.subr.bf16.mxu0 %v4570
      %5660 = vmatpush1.bf16.xpose.msra.mxu0 %v4569
      %5661 = vmatprep.subr.bf16.mxu0 %v4578
      %5662 = vmatpush1.bf16.xpose.msra.mxu0 %v4577
      %5663 = vmatprep.mubr.bf16.mxu0 %v2104
      %5664 = vmatmul.mubr.bf16.gmra.mrb[0].mxu0 %v2103
      %v5665 = vpop.f32.mrb[0].mxu0
      %v5666 = vadd.f32 %v5625, %v5665
      %v5667 = vpop.f32.mrb[0].mxu0
      %v5668 = vadd.f32 %v5627, %v5667
      %v5669 = vpop.f32.mrb[0].mxu0
      %v5670 = vpop.f32.mrb[0].mxu0
      %5671 = vdwg.mxu0
      %5672 = vmatprep.subr.bf16.mxu0 %v4460
      %5673 = vmatpush1.bf16.xpose.msra.mxu0 %v4459
      %5674 = vmatprep.subr.bf16.mxu0 %v4468
      %5675 = vmatpush1.bf16.xpose.msra.mxu0 %v4467
      %5676 = vmatprep.subr.bf16.mxu0 %v4476
      %5677 = vmatpush1.bf16.xpose.msra.mxu0 %v4475
      %5678 = vmatprep.subr.bf16.mxu0 %v4484
      %5679 = vmatpush1.bf16.xpose.msra.mxu0 %v4483
      %5680 = vmatprep.subr.bf16.mxu0 %v4492
      %5681 = vmatpush1.bf16.xpose.msra.mxu0 %v4491
      %5682 = vmatprep.subr.bf16.mxu0 %v4500
      %5683 = vmatpush1.bf16.xpose.msra.mxu0 %v4499
      %5684 = vmatprep.subr.bf16.mxu0 %v4508
      %5685 = vmatpush1.bf16.xpose.msra.mxu0 %v4507
      %5686 = vmatprep.subr.bf16.mxu0 %v4516
      %5687 = vmatpush1.bf16.xpose.msra.mxu0 %v4515
      %5688 = vmatprep.subr.bf16.mxu0 %v4524
      %5689 = vmatpush1.bf16.xpose.msra.mxu0 %v4523
      %5690 = vmatprep.subr.bf16.mxu0 %v4532
      %5691 = vmatpush1.bf16.xpose.msra.mxu0 %v4531
      %5692 = vmatprep.subr.bf16.mxu0 %v4540
      %5693 = vmatpush1.bf16.xpose.msra.mxu0 %v4539
      %5694 = vmatprep.subr.bf16.mxu0 %v4548
      %5695 = vmatpush1.bf16.xpose.msra.mxu0 %v4547
      %5696 = vmatprep.subr.bf16.mxu0 %v4556
      %5697 = vmatpush1.bf16.xpose.msra.mxu0 %v4555
      %5698 = vmatprep.subr.bf16.mxu0 %v4564
      %5699 = vmatpush1.bf16.xpose.msra.mxu0 %v4563
      %5700 = vmatprep.subr.bf16.mxu0 %v4572
      %5701 = vmatpush1.bf16.xpose.msra.mxu0 %v4571
      %5702 = vmatprep.subr.bf16.mxu0 %v4580
      %5703 = vmatpush1.bf16.xpose.msra.mxu0 %v4579
      %5704 = vmatprep.mubr.bf16.mxu0 %v2106
      %5705 = vmatmul.mubr.bf16.gmra.mrb[0].mxu0 %v2105
      %v5706 = vpop.f32.mrb[0].mxu0
      %v5707 = vadd.f32 %v5666, %v5706
      %v5708 = vpop.f32.mrb[0].mxu0
      %v5709 = vadd.f32 %v5668, %v5708
      %v5710 = vpop.f32.mrb[0].mxu0
      %v5711 = vpop.f32.mrb[0].mxu0
      %5712 = vdwg.mxu0
      %5713 = vmatprep.subr.bf16.mxu0 %v4582
      %5714 = vmatpush1.bf16.xpose.msra.mxu0 %v4581
      %5715 = vmatprep.subr.bf16.mxu0 %v4590
      %5716 = vmatpush1.bf16.xpose.msra.mxu0 %v4589
      %5717 = vmatprep.subr.bf16.mxu0 %v4598
      %5718 = vmatpush1.bf16.xpose.msra.mxu0 %v4597
      %5719 = vmatprep.subr.bf16.mxu0 %v4606
      %5720 = vmatpush1.bf16.xpose.msra.mxu0 %v4605
      %5721 = vmatprep.subr.bf16.mxu0 %v4614
      %5722 = vmatpush1.bf16.xpose.msra.mxu0 %v4613
      %5723 = vmatprep.subr.bf16.mxu0 %v4622
      %5724 = vmatpush1.bf16.xpose.msra.mxu0 %v4621
      %5725 = vmatprep.subr.bf16.mxu0 %v4630
      %5726 = vmatpush1.bf16.xpose.msra.mxu0 %v4629
      %5727 = vmatprep.subr.bf16.mxu0 %v4638
      %5728 = vmatpush1.bf16.xpose.msra.mxu0 %v4637
      %5729 = vmatprep.subr.bf16.mxu0 %v4646
      %5730 = vmatpush1.bf16.xpose.msra.mxu0 %v4645
      %5731 = vmatprep.subr.bf16.mxu0 %v4654
      %5732 = vmatpush1.bf16.xpose.msra.mxu0 %v4653
      %5733 = vmatprep.subr.bf16.mxu0 %v4662
      %5734 = vmatpush1.bf16.xpose.msra.mxu0 %v4661
      %5735 = vmatprep.subr.bf16.mxu0 %v4670
      %5736 = vmatpush1.bf16.xpose.msra.mxu0 %v4669
      %5737 = vmatprep.subr.bf16.mxu0 %v4678
      %5738 = vmatpush1.bf16.xpose.msra.mxu0 %v4677
      %5739 = vmatprep.subr.bf16.mxu0 %v4686
      %5740 = vmatpush1.bf16.xpose.msra.mxu0 %v4685
      %5741 = vmatprep.subr.bf16.mxu0 %v4694
      %5742 = vmatpush1.bf16.xpose.msra.mxu0 %v4693
      %5743 = vmatprep.subr.bf16.mxu0 %v4702
      %5744 = vmatpush1.bf16.xpose.msra.mxu0 %v4701
      %5745 = vmatprep.mubr.bf16.mxu0 %v2100
      %5746 = vmatmul.mubr.bf16.gmra.mrb[0].mxu0 %v2099
      %v5747 = vpop.f32.mrb[0].mxu0
      %v5748 = vadd.f32 %v2648, %v5747
      %v5749 = vpop.f32.mrb[0].mxu0
      %v5750 = vadd.f32 %v2652, %v5749
      %v5751 = vpop.f32.mrb[0].mxu0
      %v5752 = vpop.f32.mrb[0].mxu0
      %5753 = vdwg.mxu0
      %5754 = vmatprep.subr.bf16.mxu0 %v4584
      %5755 = vmatpush1.bf16.xpose.msra.mxu0 %v4583
      %5756 = vmatprep.subr.bf16.mxu0 %v4592
      %5757 = vmatpush1.bf16.xpose.msra.mxu0 %v4591
      %5758 = vmatprep.subr.bf16.mxu0 %v4600
      %5759 = vmatpush1.bf16.xpose.msra.mxu0 %v4599
      %5760 = vmatprep.subr.bf16.mxu0 %v4608
      %5761 = vmatpush1.bf16.xpose.msra.mxu0 %v4607
      %5762 = vmatprep.subr.bf16.mxu0 %v4616
      %5763 = vmatpush1.bf16.xpose.msra.mxu0 %v4615
      %5764 = vmatprep.subr.bf16.mxu0 %v4624
      %5765 = vmatpush1.bf16.xpose.msra.mxu0 %v4623
      %5766 = vmatprep.subr.bf16.mxu0 %v4632
      %5767 = vmatpush1.bf16.xpose.msra.mxu0 %v4631
      %5768 = vmatprep.subr.bf16.mxu0 %v4640
      %5769 = vmatpush1.bf16.xpose.msra.mxu0 %v4639
      %5770 = vmatprep.subr.bf16.mxu0 %v4648
      %5771 = vmatpush1.bf16.xpose.msra.mxu0 %v4647
      %5772 = vmatprep.subr.bf16.mxu0 %v4656
      %5773 = vmatpush1.bf16.xpose.msra.mxu0 %v4655
      %5774 = vmatprep.subr.bf16.mxu0 %v4664
      %5775 = vmatpush1.bf16.xpose.msra.mxu0 %v4663
      %5776 = vmatprep.subr.bf16.mxu0 %v4672
      %5777 = vmatpush1.bf16.xpose.msra.mxu0 %v4671
      %5778 = vmatprep.subr.bf16.mxu0 %v4680
      %5779 = vmatpush1.bf16.xpose.msra.mxu0 %v4679
      %5780 = vmatprep.subr.bf16.mxu0 %v4688
      %5781 = vmatpush1.bf16.xpose.msra.mxu0 %v4687
      %5782 = vmatprep.subr.bf16.mxu0 %v4696
      %5783 = vmatpush1.bf16.xpose.msra.mxu0 %v4695
      %5784 = vmatprep.subr.bf16.mxu0 %v4704
      %5785 = vmatpush1.bf16.xpose.msra.mxu0 %v4703
      %5786 = vmatprep.mubr.bf16.mxu0 %v2102
      %5787 = vmatmul.mubr.bf16.gmra.mrb[0].mxu0 %v2101
      %v5788 = vpop.f32.mrb[0].mxu0
      %v5789 = vadd.f32 %v5748, %v5788
      %v5790 = vpop.f32.mrb[0].mxu0
      %v5791 = vadd.f32 %v5750, %v5790
      %v5792 = vpop.f32.mrb[0].mxu0
      %v5793 = vpop.f32.mrb[0].mxu0
      %5794 = vdwg.mxu0
      %5795 = vmatprep.subr.bf16.mxu0 %v4586
      %5796 = vmatpush1.bf16.xpose.msra.mxu0 %v4585
      %5797 = vmatprep.subr.bf16.mxu0 %v4594
      %5798 = vmatpush1.bf16.xpose.msra.mxu0 %v4593
      %5799 = vmatprep.subr.bf16.mxu0 %v4602
      %5800 = vmatpush1.bf16.xpose.msra.mxu0 %v4601
      %5801 = vmatprep.subr.bf16.mxu0 %v4610
      %5802 = vmatpush1.bf16.xpose.msra.mxu0 %v4609
      %5803 = vmatprep.subr.bf16.mxu0 %v4618
      %5804 = vmatpush1.bf16.xpose.msra.mxu0 %v4617
      %5805 = vmatprep.subr.bf16.mxu0 %v4626
      %5806 = vmatpush1.bf16.xpose.msra.mxu0 %v4625
      %5807 = vmatprep.subr.bf16.mxu0 %v4634
      %5808 = vmatpush1.bf16.xpose.msra.mxu0 %v4633
      %5809 = vmatprep.subr.bf16.mxu0 %v4642
      %5810 = vmatpush1.bf16.xpose.msra.mxu0 %v4641
      %5811 = vmatprep.subr.bf16.mxu0 %v4650
      %5812 = vmatpush1.bf16.xpose.msra.mxu0 %v4649
      %5813 = vmatprep.subr.bf16.mxu0 %v4658
      %5814 = vmatpush1.bf16.xpose.msra.mxu0 %v4657
      %5815 = vmatprep.subr.bf16.mxu0 %v4666
      %5816 = vmatpush1.bf16.xpose.msra.mxu0 %v4665
      %5817 = vmatprep.subr.bf16.mxu0 %v4674
      %5818 = vmatpush1.bf16.xpose.msra.mxu0 %v4673
      %5819 = vmatprep.subr.bf16.mxu0 %v4682
      %5820 = vmatpush1.bf16.xpose.msra.mxu0 %v4681
      %5821 = vmatprep.subr.bf16.mxu0 %v4690
      %5822 = vmatpush1.bf16.xpose.msra.mxu0 %v4689
      %5823 = vmatprep.subr.bf16.mxu0 %v4698
      %5824 = vmatpush1.bf16.xpose.msra.mxu0 %v4697
      %5825 = vmatprep.subr.bf16.mxu0 %v4706
      %5826 = vmatpush1.bf16.xpose.msra.mxu0 %v4705
      %5827 = vmatprep.mubr.bf16.mxu0 %v2104
      %5828 = vmatmul.mubr.bf16.gmra.mrb[0].mxu0 %v2103
      %v5829 = vpop.f32.mrb[0].mxu0
      %v5830 = vadd.f32 %v5789, %v5829
      %v5831 = vpop.f32.mrb[0].mxu0
      %v5832 = vadd.f32 %v5791, %v5831
      %v5833 = vpop.f32.mrb[0].mxu0
      %v5834 = vpop.f32.mrb[0].mxu0
      %5835 = vdwg.mxu0
      %5836 = vmatprep.subr.bf16.mxu0 %v4588
      %5837 = vmatpush1.bf16.xpose.msra.mxu0 %v4587
      %5838 = vmatprep.subr.bf16.mxu0 %v4596
      %5839 = vmatpush1.bf16.xpose.msra.mxu0 %v4595
      %5840 = vmatprep.subr.bf16.mxu0 %v4604
      %5841 = vmatpush1.bf16.xpose.msra.mxu0 %v4603
      %5842 = vmatprep.subr.bf16.mxu0 %v4612
      %5843 = vmatpush1.bf16.xpose.msra.mxu0 %v4611
      %5844 = vmatprep.subr.bf16.mxu0 %v4620
      %5845 = vmatpush1.bf16.xpose.msra.mxu0 %v4619
      %5846 = vmatprep.subr.bf16.mxu0 %v4628
      %5847 = vmatpush1.bf16.xpose.msra.mxu0 %v4627
      %5848 = vmatprep.subr.bf16.mxu0 %v4636
      %5849 = vmatpush1.bf16.xpose.msra.mxu0 %v4635
      %5850 = vmatprep.subr.bf16.mxu0 %v4644
      %5851 = vmatpush1.bf16.xpose.msra.mxu0 %v4643
      %5852 = vmatprep.subr.bf16.mxu0 %v4652
      %5853 = vmatpush1.bf16.xpose.msra.mxu0 %v4651
      %5854 = vmatprep.subr.bf16.mxu0 %v4660
      %5855 = vmatpush1.bf16.xpose.msra.mxu0 %v4659
      %5856 = vmatprep.subr.bf16.mxu0 %v4668
      %5857 = vmatpush1.bf16.xpose.msra.mxu0 %v4667
      %5858 = vmatprep.subr.bf16.mxu0 %v4676
      %5859 = vmatpush1.bf16.xpose.msra.mxu0 %v4675
      %5860 = vmatprep.subr.bf16.mxu0 %v4684
      %5861 = vmatpush1.bf16.xpose.msra.mxu0 %v4683
      %5862 = vmatprep.subr.bf16.mxu0 %v4692
      %5863 = vmatpush1.bf16.xpose.msra.mxu0 %v4691
      %5864 = vmatprep.subr.bf16.mxu0 %v4700
      %5865 = vmatpush1.bf16.xpose.msra.mxu0 %v4699
      %5866 = vmatprep.subr.bf16.mxu0 %v4708
      %5867 = vmatpush1.bf16.xpose.msra.mxu0 %v4707
      %5868 = vmatprep.mubr.bf16.mxu0 %v2106
      %5869 = vmatmul.mubr.bf16.gmra.mrb[0].mxu0 %v2105
      %v5870 = vpop.f32.mrb[0].mxu0
      %v5871 = vadd.f32 %v5830, %v5870
      %v5872 = vpop.f32.mrb[0].mxu0
      %v5873 = vadd.f32 %v5832, %v5872
      %v5874 = vpop.f32.mrb[0].mxu0
      %v5875 = vpop.f32.mrb[0].mxu0
      %5876 = vdwg.mxu0
      %v5877 = vld [vmem:[%s2] sm:$0xff]
      %v5878 = vld [vmem:[%s2 + $0x8] sm:$0xff]
      %v5879 = vld [vmem:[%s2 + $0x10] sm:$0xff]
      %v5880 = vld [vmem:[%s2 + $0x18] sm:$0xff]
      %v5881 = vld [vmem:[%s2 + $0x20] sm:$0xff]
      %v5882 = vld [vmem:[%s2 + $0x28] sm:$0xff]
      %v5883 = vld [vmem:[%s2 + $0x30] sm:$0xff]
      %v5884 = vld [vmem:[%s2 + $0x38] sm:$0xff]
      %v5885 = vld [vmem:[%s2 + $0x40] sm:$0xff]
      %v5886 = vld [vmem:[%s2 + $0x48] sm:$0xff]
      %v5887 = vld [vmem:[%s2 + $0x50] sm:$0xff]
      %v5888 = vld [vmem:[%s2 + $0x58] sm:$0xff]
      %v5889 = vld [vmem:[%s2 + $0x60] sm:$0xff]
      %v5890 = vld [vmem:[%s2 + $0x68] sm:$0xff]
      %v5891 = vld [vmem:[%s2 + $0x70] sm:$0xff]
      %v5892 = vld [vmem:[%s2 + $0x78] sm:$0xff]
      %v5893 = vld [vmem:[%s2 + $0x80] sm:$0xff]
      %v5894 = vld [vmem:[%s2 + $0x88] sm:$0xff]
      %v5895 = vld [vmem:[%s2 + $0x90] sm:$0xff]
      %v5896 = vld [vmem:[%s2 + $0x98] sm:$0xff]
      %v5897 = vld [vmem:[%s2 + $0xa0] sm:$0xff]
      %v5898 = vld [vmem:[%s2 + $0xa8] sm:$0xff]
      %v5899 = vld [vmem:[%s2 + $0xb0] sm:$0xff]
      %v5900 = vld [vmem:[%s2 + $0xb8] sm:$0xff]
      %v5901 = vld [vmem:[%s2 + $0xc0] sm:$0xff]
      %v5902 = vld [vmem:[%s2 + $0xc8] sm:$0xff]
      %v5903 = vld [vmem:[%s2 + $0xd0] sm:$0xff]
      %v5904 = vld [vmem:[%s2 + $0xd8] sm:$0xff]
      %v5905 = vld [vmem:[%s2 + $0xe0] sm:$0xff]
      %v5906 = vld [vmem:[%s2 + $0xe8] sm:$0xff]
      %v5907 = vld [vmem:[%s2 + $0xf0] sm:$0xff]
      %v5908 = vld [vmem:[%s2 + $0xf8] sm:$0xff]
      %v5909 = vld [vmem:[%s2 + $0x100] sm:$0xff]
      %v5910 = vld [vmem:[%s2 + $0x108] sm:$0xff]
      %v5911 = vld [vmem:[%s2 + $0x110] sm:$0xff]
      %v5912 = vld [vmem:[%s2 + $0x118] sm:$0xff]
      %v5913 = vld [vmem:[%s2 + $0x120] sm:$0xff]
      %v5914 = vld [vmem:[%s2 + $0x128] sm:$0xff]
      %v5915 = vld [vmem:[%s2 + $0x130] sm:$0xff]
      %v5916 = vld [vmem:[%s2 + $0x138] sm:$0xff]
      %v5917 = vld [vmem:[%s2 + $0x140] sm:$0xff]
      %v5918 = vld [vmem:[%s2 + $0x148] sm:$0xff]
      %v5919 = vld [vmem:[%s2 + $0x150] sm:$0xff]
      %v5920 = vld [vmem:[%s2 + $0x158] sm:$0xff]
      %v5921 = vld [vmem:[%s2 + $0x160] sm:$0xff]
      %v5922 = vld [vmem:[%s2 + $0x168] sm:$0xff]
      %v5923 = vld [vmem:[%s2 + $0x170] sm:$0xff]
      %v5924 = vld [vmem:[%s2 + $0x178] sm:$0xff]
      %v5925 = vld [vmem:[%s2 + $0x180] sm:$0xff]
      %v5926 = vld [vmem:[%s2 + $0x188] sm:$0xff]
      %v5927 = vld [vmem:[%s2 + $0x190] sm:$0xff]
      %v5928 = vld [vmem:[%s2 + $0x198] sm:$0xff]
      %v5929 = vld [vmem:[%s2 + $0x1a0] sm:$0xff]
      %v5930 = vld [vmem:[%s2 + $0x1a8] sm:$0xff]
      %v5931 = vld [vmem:[%s2 + $0x1b0] sm:$0xff]
      %v5932 = vld [vmem:[%s2 + $0x1b8] sm:$0xff]
      %v5933 = vld [vmem:[%s2 + $0x1c0] sm:$0xff]
      %v5934 = vld [vmem:[%s2 + $0x1c8] sm:$0xff]
      %v5935 = vld [vmem:[%s2 + $0x1d0] sm:$0xff]
      %v5936 = vld [vmem:[%s2 + $0x1d8] sm:$0xff]
      %v5937 = vld [vmem:[%s2 + $0x1e0] sm:$0xff]
      %v5938 = vld [vmem:[%s2 + $0x1e8] sm:$0xff]
      %v5939 = vld [vmem:[%s2 + $0x1f0] sm:$0xff]
      %v5940 = vld [vmem:[%s2 + $0x1f8] sm:$0xff]
      %v5941 = vld [vmem:[%s2 + $0x200] sm:$0xff]
      %v5942 = vld [vmem:[%s2 + $0x208] sm:$0xff]
      %v5943 = vld [vmem:[%s2 + $0x210] sm:$0xff]
      %v5944 = vld [vmem:[%s2 + $0x218] sm:$0xff]
      %v5945 = vld [vmem:[%s2 + $0x220] sm:$0xff]
      %v5946 = vld [vmem:[%s2 + $0x228] sm:$0xff]
      %v5947 = vld [vmem:[%s2 + $0x230] sm:$0xff]
      %v5948 = vld [vmem:[%s2 + $0x238] sm:$0xff]
      %v5949 = vld [vmem:[%s2 + $0x240] sm:$0xff]
      %v5950 = vld [vmem:[%s2 + $0x248] sm:$0xff]
      %v5951 = vld [vmem:[%s2 + $0x250] sm:$0xff]
      %v5952 = vld [vmem:[%s2 + $0x258] sm:$0xff]
      %v5953 = vld [vmem:[%s2 + $0x260] sm:$0xff]
      %v5954 = vld [vmem:[%s2 + $0x268] sm:$0xff]
      %v5955 = vld [vmem:[%s2 + $0x270] sm:$0xff]
      %v5956 = vld [vmem:[%s2 + $0x278] sm:$0xff]
      %v5957 = vld [vmem:[%s2 + $0x280] sm:$0xff]
      %v5958 = vld [vmem:[%s2 + $0x288] sm:$0xff]
      %v5959 = vld [vmem:[%s2 + $0x290] sm:$0xff]
      %v5960 = vld [vmem:[%s2 + $0x298] sm:$0xff]
      %v5961 = vld [vmem:[%s2 + $0x2a0] sm:$0xff]
      %v5962 = vld [vmem:[%s2 + $0x2a8] sm:$0xff]
      %v5963 = vld [vmem:[%s2 + $0x2b0] sm:$0xff]
      %v5964 = vld [vmem:[%s2 + $0x2b8] sm:$0xff]
      %v5965 = vld [vmem:[%s2 + $0x2c0] sm:$0xff]
      %v5966 = vld [vmem:[%s2 + $0x2c8] sm:$0xff]
      %v5967 = vld [vmem:[%s2 + $0x2d0] sm:$0xff]
      %v5968 = vld [vmem:[%s2 + $0x2d8] sm:$0xff]
      %v5969 = vld [vmem:[%s2 + $0x2e0] sm:$0xff]
      %v5970 = vld [vmem:[%s2 + $0x2e8] sm:$0xff]
      %v5971 = vld [vmem:[%s2 + $0x2f0] sm:$0xff]
      %v5972 = vld [vmem:[%s2 + $0x2f8] sm:$0xff]
      %v5973 = vld [vmem:[%s2 + $0x300] sm:$0xff]
      %v5974 = vld [vmem:[%s2 + $0x308] sm:$0xff]
      %v5975 = vld [vmem:[%s2 + $0x310] sm:$0xff]
      %v5976 = vld [vmem:[%s2 + $0x318] sm:$0xff]
      %v5977 = vld [vmem:[%s2 + $0x320] sm:$0xff]
      %v5978 = vld [vmem:[%s2 + $0x328] sm:$0xff]
      %v5979 = vld [vmem:[%s2 + $0x330] sm:$0xff]
      %v5980 = vld [vmem:[%s2 + $0x338] sm:$0xff]
      %v5981 = vld [vmem:[%s2 + $0x340] sm:$0xff]
      %v5982 = vld [vmem:[%s2 + $0x348] sm:$0xff]
      %v5983 = vld [vmem:[%s2 + $0x350] sm:$0xff]
      %v5984 = vld [vmem:[%s2 + $0x358] sm:$0xff]
      %v5985 = vld [vmem:[%s2 + $0x360] sm:$0xff]
      %v5986 = vld [vmem:[%s2 + $0x368] sm:$0xff]
      %v5987 = vld [vmem:[%s2 + $0x370] sm:$0xff]
      %v5988 = vld [vmem:[%s2 + $0x378] sm:$0xff]
      %v5989 = vld [vmem:[%s2 + $0x380] sm:$0xff]
      %v5990 = vld [vmem:[%s2 + $0x388] sm:$0xff]
      %v5991 = vld [vmem:[%s2 + $0x390] sm:$0xff]
      %v5992 = vld [vmem:[%s2 + $0x398] sm:$0xff]
      %v5993 = vld [vmem:[%s2 + $0x3a0] sm:$0xff]
      %v5994 = vld [vmem:[%s2 + $0x3a8] sm:$0xff]
      %v5995 = vld [vmem:[%s2 + $0x3b0] sm:$0xff]
      %v5996 = vld [vmem:[%s2 + $0x3b8] sm:$0xff]
      %v5997 = vld [vmem:[%s2 + $0x3c0] sm:$0xff]
      %v5998 = vld [vmem:[%s2 + $0x3c8] sm:$0xff]
      %v5999 = vld [vmem:[%s2 + $0x3d0] sm:$0xff]
      %v6000 = vld [vmem:[%s2 + $0x3d8] sm:$0xff]
      %v6001 = vld [vmem:[%s2 + $0x3e0] sm:$0xff]
      %v6002 = vld [vmem:[%s2 + $0x3e8] sm:$0xff]
      %v6003 = vld [vmem:[%s2 + $0x3f0] sm:$0xff]
      %v6004 = vld [vmem:[%s2 + $0x3f8] sm:$0xff]
      %v6005 = vld [vmem:[%s2 + $0x400] sm:$0xff]
      %v6006 = vld [vmem:[%s2 + $0x408] sm:$0xff]
      %v6007 = vld [vmem:[%s2 + $0x410] sm:$0xff]
      %v6008 = vld [vmem:[%s2 + $0x418] sm:$0xff]
      %v6009 = vld [vmem:[%s2 + $0x420] sm:$0xff]
      %v6010 = vld [vmem:[%s2 + $0x428] sm:$0xff]
      %v6011 = vld [vmem:[%s2 + $0x430] sm:$0xff]
      %v6012 = vld [vmem:[%s2 + $0x438] sm:$0xff]
      %v6013 = vld [vmem:[%s2 + $0x440] sm:$0xff]
      %v6014 = vld [vmem:[%s2 + $0x448] sm:$0xff]
      %v6015 = vld [vmem:[%s2 + $0x450] sm:$0xff]
      %v6016 = vld [vmem:[%s2 + $0x458] sm:$0xff]
      %v6017 = vld [vmem:[%s2 + $0x460] sm:$0xff]
      %v6018 = vld [vmem:[%s2 + $0x468] sm:$0xff]
      %v6019 = vld [vmem:[%s2 + $0x470] sm:$0xff]
      %v6020 = vld [vmem:[%s2 + $0x478] sm:$0xff]
      %v6021 = vld [vmem:[%s2 + $0x480] sm:$0xff]
      %v6022 = vld [vmem:[%s2 + $0x488] sm:$0xff]
      %v6023 = vld [vmem:[%s2 + $0x490] sm:$0xff]
      %v6024 = vld [vmem:[%s2 + $0x498] sm:$0xff]
      %v6025 = vld [vmem:[%s2 + $0x4a0] sm:$0xff]
      %v6026 = vld [vmem:[%s2 + $0x4a8] sm:$0xff]
      %v6027 = vld [vmem:[%s2 + $0x4b0] sm:$0xff]
      %v6028 = vld [vmem:[%s2 + $0x4b8] sm:$0xff]
      %v6029 = vld [vmem:[%s2 + $0x4c0] sm:$0xff]
      %v6030 = vld [vmem:[%s2 + $0x4c8] sm:$0xff]
      %v6031 = vld [vmem:[%s2 + $0x4d0] sm:$0xff]
      %v6032 = vld [vmem:[%s2 + $0x4d8] sm:$0xff]
      %v6033 = vld [vmem:[%s2 + $0x4e0] sm:$0xff]
      %v6034 = vld [vmem:[%s2 + $0x4e8] sm:$0xff]
      %v6035 = vld [vmem:[%s2 + $0x4f0] sm:$0xff]
      %v6036 = vld [vmem:[%s2 + $0x4f8] sm:$0xff]
      %v6037 = vld [vmem:[%s2 + $0x500] sm:$0xff]
      %v6038 = vld [vmem:[%s2 + $0x508] sm:$0xff]
      %v6039 = vld [vmem:[%s2 + $0x510] sm:$0xff]
      %v6040 = vld [vmem:[%s2 + $0x518] sm:$0xff]
      %v6041 = vld [vmem:[%s2 + $0x520] sm:$0xff]
      %v6042 = vld [vmem:[%s2 + $0x528] sm:$0xff]
      %v6043 = vld [vmem:[%s2 + $0x530] sm:$0xff]
      %v6044 = vld [vmem:[%s2 + $0x538] sm:$0xff]
      %v6045 = vld [vmem:[%s2 + $0x540] sm:$0xff]
      %v6046 = vld [vmem:[%s2 + $0x548] sm:$0xff]
      %v6047 = vld [vmem:[%s2 + $0x550] sm:$0xff]
      %v6048 = vld [vmem:[%s2 + $0x558] sm:$0xff]
      %v6049 = vld [vmem:[%s2 + $0x560] sm:$0xff]
      %v6050 = vld [vmem:[%s2 + $0x568] sm:$0xff]
      %v6051 = vld [vmem:[%s2 + $0x570] sm:$0xff]
      %v6052 = vld [vmem:[%s2 + $0x578] sm:$0xff]
      %v6053 = vld [vmem:[%s2 + $0x580] sm:$0xff]
      %v6054 = vld [vmem:[%s2 + $0x588] sm:$0xff]
      %v6055 = vld [vmem:[%s2 + $0x590] sm:$0xff]
      %v6056 = vld [vmem:[%s2 + $0x598] sm:$0xff]
      %v6057 = vld [vmem:[%s2 + $0x5a0] sm:$0xff]
      %v6058 = vld [vmem:[%s2 + $0x5a8] sm:$0xff]
      %v6059 = vld [vmem:[%s2 + $0x5b0] sm:$0xff]
      %v6060 = vld [vmem:[%s2 + $0x5b8] sm:$0xff]
      %v6061 = vld [vmem:[%s2 + $0x5c0] sm:$0xff]
      %v6062 = vld [vmem:[%s2 + $0x5c8] sm:$0xff]
      %v6063 = vld [vmem:[%s2 + $0x5d0] sm:$0xff]
      %v6064 = vld [vmem:[%s2 + $0x5d8] sm:$0xff]
      %v6065 = vld [vmem:[%s2 + $0x5e0] sm:$0xff]
      %v6066 = vld [vmem:[%s2 + $0x5e8] sm:$0xff]
      %v6067 = vld [vmem:[%s2 + $0x5f0] sm:$0xff]
      %v6068 = vld [vmem:[%s2 + $0x5f8] sm:$0xff]
      %v6069 = vld [vmem:[%s2 + $0x600] sm:$0xff]
      %v6070 = vld [vmem:[%s2 + $0x608] sm:$0xff]
      %v6071 = vld [vmem:[%s2 + $0x610] sm:$0xff]
      %v6072 = vld [vmem:[%s2 + $0x618] sm:$0xff]
      %v6073 = vld [vmem:[%s2 + $0x620] sm:$0xff]
      %v6074 = vld [vmem:[%s2 + $0x628] sm:$0xff]
      %v6075 = vld [vmem:[%s2 + $0x630] sm:$0xff]
      %v6076 = vld [vmem:[%s2 + $0x638] sm:$0xff]
      %v6077 = vld [vmem:[%s2 + $0x640] sm:$0xff]
      %v6078 = vld [vmem:[%s2 + $0x648] sm:$0xff]
      %v6079 = vld [vmem:[%s2 + $0x650] sm:$0xff]
      %v6080 = vld [vmem:[%s2 + $0x658] sm:$0xff]
      %v6081 = vld [vmem:[%s2 + $0x660] sm:$0xff]
      %v6082 = vld [vmem:[%s2 + $0x668] sm:$0xff]
      %v6083 = vld [vmem:[%s2 + $0x670] sm:$0xff]
      %v6084 = vld [vmem:[%s2 + $0x678] sm:$0xff]
      %v6085 = vld [vmem:[%s2 + $0x680] sm:$0xff]
      %v6086 = vld [vmem:[%s2 + $0x688] sm:$0xff]
      %v6087 = vld [vmem:[%s2 + $0x690] sm:$0xff]
      %v6088 = vld [vmem:[%s2 + $0x698] sm:$0xff]
      %v6089 = vld [vmem:[%s2 + $0x6a0] sm:$0xff]
      %v6090 = vld [vmem:[%s2 + $0x6a8] sm:$0xff]
      %v6091 = vld [vmem:[%s2 + $0x6b0] sm:$0xff]
      %v6092 = vld [vmem:[%s2 + $0x6b8] sm:$0xff]
      %v6093 = vld [vmem:[%s2 + $0x6c0] sm:$0xff]
      %v6094 = vld [vmem:[%s2 + $0x6c8] sm:$0xff]
      %v6095 = vld [vmem:[%s2 + $0x6d0] sm:$0xff]
      %v6096 = vld [vmem:[%s2 + $0x6d8] sm:$0xff]
      %v6097 = vld [vmem:[%s2 + $0x6e0] sm:$0xff]
      %v6098 = vld [vmem:[%s2 + $0x6e8] sm:$0xff]
      %v6099 = vld [vmem:[%s2 + $0x6f0] sm:$0xff]
      %v6100 = vld [vmem:[%s2 + $0x6f8] sm:$0xff]
      %v6101 = vld [vmem:[%s2 + $0x700] sm:$0xff]
      %v6102 = vld [vmem:[%s2 + $0x708] sm:$0xff]
      %v6103 = vld [vmem:[%s2 + $0x710] sm:$0xff]
      %v6104 = vld [vmem:[%s2 + $0x718] sm:$0xff]
      %v6105 = vld [vmem:[%s2 + $0x720] sm:$0xff]
      %v6106 = vld [vmem:[%s2 + $0x728] sm:$0xff]
      %v6107 = vld [vmem:[%s2 + $0x730] sm:$0xff]
      %v6108 = vld [vmem:[%s2 + $0x738] sm:$0xff]
      %v6109 = vld [vmem:[%s2 + $0x740] sm:$0xff]
      %v6110 = vld [vmem:[%s2 + $0x748] sm:$0xff]
      %v6111 = vld [vmem:[%s2 + $0x750] sm:$0xff]
      %v6112 = vld [vmem:[%s2 + $0x758] sm:$0xff]
      %v6113 = vld [vmem:[%s2 + $0x760] sm:$0xff]
      %v6114 = vld [vmem:[%s2 + $0x768] sm:$0xff]
      %v6115 = vld [vmem:[%s2 + $0x770] sm:$0xff]
      %v6116 = vld [vmem:[%s2 + $0x778] sm:$0xff]
      %v6117 = vld [vmem:[%s2 + $0x780] sm:$0xff]
      %v6118 = vld [vmem:[%s2 + $0x788] sm:$0xff]
      %v6119 = vld [vmem:[%s2 + $0x790] sm:$0xff]
      %v6120 = vld [vmem:[%s2 + $0x798] sm:$0xff]
      %v6121 = vld [vmem:[%s2 + $0x7a0] sm:$0xff]
      %v6122 = vld [vmem:[%s2 + $0x7a8] sm:$0xff]
      %v6123 = vld [vmem:[%s2 + $0x7b0] sm:$0xff]
      %v6124 = vld [vmem:[%s2 + $0x7b8] sm:$0xff]
      %v6125 = vld [vmem:[%s2 + $0x7c0] sm:$0xff]
      %v6126 = vld [vmem:[%s2 + $0x7c8] sm:$0xff]
      %v6127 = vld [vmem:[%s2 + $0x7d0] sm:$0xff]
      %v6128 = vld [vmem:[%s2 + $0x7d8] sm:$0xff]
      %v6129 = vld [vmem:[%s2 + $0x7e0] sm:$0xff]
      %v6130 = vld [vmem:[%s2 + $0x7e8] sm:$0xff]
      %v6131 = vld [vmem:[%s2 + $0x7f0] sm:$0xff]
      %v6132 = vld [vmem:[%s2 + $0x7f8] sm:$0xff]
      %v6389 = vunpack.c.l.b16 %v5877
      %v6390 = vunpack.c.h.b16 %v5877
      %v6391 = vunpack.c.l.b16 %v5878
      %v6392 = vunpack.c.h.b16 %v5878
      %v6393 = vunpack.c.l.b16 %v5879
      %v6394 = vunpack.c.h.b16 %v5879
      %v6395 = vunpack.c.l.b16 %v5880
      %v6396 = vunpack.c.h.b16 %v5880
      %v6397 = vunpack.c.l.b16 %v5881
      %v6398 = vunpack.c.h.b16 %v5881
      %v6399 = vunpack.c.l.b16 %v5882
      %v6400 = vunpack.c.h.b16 %v5882
      %v6401 = vunpack.c.l.b16 %v5883
      %v6402 = vunpack.c.h.b16 %v5883
      %v6403 = vunpack.c.l.b16 %v5884
      %v6404 = vunpack.c.h.b16 %v5884
      %v6405 = vunpack.c.l.b16 %v5885
      %v6406 = vunpack.c.h.b16 %v5885
      %v6407 = vunpack.c.l.b16 %v5886
      %v6408 = vunpack.c.h.b16 %v5886
      %v6409 = vunpack.c.l.b16 %v5887
      %v6410 = vunpack.c.h.b16 %v5887
      %v6411 = vunpack.c.l.b16 %v5888
      %v6412 = vunpack.c.h.b16 %v5888
      %v6413 = vunpack.c.l.b16 %v5889
      %v6414 = vunpack.c.h.b16 %v5889
      %v6415 = vunpack.c.l.b16 %v5890
      %v6416 = vunpack.c.h.b16 %v5890
      %v6417 = vunpack.c.l.b16 %v5891
      %v6418 = vunpack.c.h.b16 %v5891
      %v6419 = vunpack.c.l.b16 %v5892
      %v6420 = vunpack.c.h.b16 %v5892
      %v6421 = vunpack.c.l.b16 %v5893
      %v6422 = vunpack.c.h.b16 %v5893
      %v6423 = vunpack.c.l.b16 %v5894
      %v6424 = vunpack.c.h.b16 %v5894
      %v6425 = vunpack.c.l.b16 %v5895
      %v6426 = vunpack.c.h.b16 %v5895
      %v6427 = vunpack.c.l.b16 %v5896
      %v6428 = vunpack.c.h.b16 %v5896
      %v6429 = vunpack.c.l.b16 %v5897
      %v6430 = vunpack.c.h.b16 %v5897
      %v6431 = vunpack.c.l.b16 %v5898
      %v6432 = vunpack.c.h.b16 %v5898
      %v6433 = vunpack.c.l.b16 %v5899
      %v6434 = vunpack.c.h.b16 %v5899
      %v6435 = vunpack.c.l.b16 %v5900
      %v6436 = vunpack.c.h.b16 %v5900
      %v6437 = vunpack.c.l.b16 %v5901
      %v6438 = vunpack.c.h.b16 %v5901
      %v6439 = vunpack.c.l.b16 %v5902
      %v6440 = vunpack.c.h.b16 %v5902
      %v6441 = vunpack.c.l.b16 %v5903
      %v6442 = vunpack.c.h.b16 %v5903
      %v6443 = vunpack.c.l.b16 %v5904
      %v6444 = vunpack.c.h.b16 %v5904
      %v6445 = vunpack.c.l.b16 %v5905
      %v6446 = vunpack.c.h.b16 %v5905
      %v6447 = vunpack.c.l.b16 %v5906
      %v6448 = vunpack.c.h.b16 %v5906
      %v6449 = vunpack.c.l.b16 %v5907
      %v6450 = vunpack.c.h.b16 %v5907
      %v6451 = vunpack.c.l.b16 %v5908
      %v6452 = vunpack.c.h.b16 %v5908
      %v6453 = vunpack.c.l.b16 %v5909
      %v6454 = vunpack.c.h.b16 %v5909
      %v6455 = vunpack.c.l.b16 %v5910
      %v6456 = vunpack.c.h.b16 %v5910
      %v6457 = vunpack.c.l.b16 %v5911
      %v6458 = vunpack.c.h.b16 %v5911
      %v6459 = vunpack.c.l.b16 %v5912
      %v6460 = vunpack.c.h.b16 %v5912
      %v6461 = vunpack.c.l.b16 %v5913
      %v6462 = vunpack.c.h.b16 %v5913
      %v6463 = vunpack.c.l.b16 %v5914
      %v6464 = vunpack.c.h.b16 %v5914
      %v6465 = vunpack.c.l.b16 %v5915
      %v6466 = vunpack.c.h.b16 %v5915
      %v6467 = vunpack.c.l.b16 %v5916
      %v6468 = vunpack.c.h.b16 %v5916
      %v6469 = vunpack.c.l.b16 %v5917
      %v6470 = vunpack.c.h.b16 %v5917
      %v6471 = vunpack.c.l.b16 %v5918
      %v6472 = vunpack.c.h.b16 %v5918
      %v6473 = vunpack.c.l.b16 %v5919
      %v6474 = vunpack.c.h.b16 %v5919
      %v6475 = vunpack.c.l.b16 %v5920
      %v6476 = vunpack.c.h.b16 %v5920
      %v6477 = vunpack.c.l.b16 %v5921
      %v6478 = vunpack.c.h.b16 %v5921
      %v6479 = vunpack.c.l.b16 %v5922
      %v6480 = vunpack.c.h.b16 %v5922
      %v6481 = vunpack.c.l.b16 %v5923
      %v6482 = vunpack.c.h.b16 %v5923
      %v6483 = vunpack.c.l.b16 %v5924
      %v6484 = vunpack.c.h.b16 %v5924
      %v6485 = vunpack.c.l.b16 %v5925
      %v6486 = vunpack.c.h.b16 %v5925
      %v6487 = vunpack.c.l.b16 %v5926
      %v6488 = vunpack.c.h.b16 %v5926
      %v6489 = vunpack.c.l.b16 %v5927
      %v6490 = vunpack.c.h.b16 %v5927
      %v6491 = vunpack.c.l.b16 %v5928
      %v6492 = vunpack.c.h.b16 %v5928
      %v6493 = vunpack.c.l.b16 %v5929
      %v6494 = vunpack.c.h.b16 %v5929
      %v6495 = vunpack.c.l.b16 %v5930
      %v6496 = vunpack.c.h.b16 %v5930
      %v6497 = vunpack.c.l.b16 %v5931
      %v6498 = vunpack.c.h.b16 %v5931
      %v6499 = vunpack.c.l.b16 %v5932
      %v6500 = vunpack.c.h.b16 %v5932
      %v6501 = vunpack.c.l.b16 %v5933
      %v6502 = vunpack.c.h.b16 %v5933
      %v6503 = vunpack.c.l.b16 %v5934
      %v6504 = vunpack.c.h.b16 %v5934
      %v6505 = vunpack.c.l.b16 %v5935
      %v6506 = vunpack.c.h.b16 %v5935
      %v6507 = vunpack.c.l.b16 %v5936
      %v6508 = vunpack.c.h.b16 %v5936
      %v6509 = vunpack.c.l.b16 %v5937
      %v6510 = vunpack.c.h.b16 %v5937
      %v6511 = vunpack.c.l.b16 %v5938
      %v6512 = vunpack.c.h.b16 %v5938
      %v6513 = vunpack.c.l.b16 %v5939
      %v6514 = vunpack.c.h.b16 %v5939
      %v6515 = vunpack.c.l.b16 %v5940
      %v6516 = vunpack.c.h.b16 %v5940
      %v6517 = vunpack.c.l.b16 %v5941
      %v6518 = vunpack.c.h.b16 %v5941
      %v6519 = vunpack.c.l.b16 %v5942
      %v6520 = vunpack.c.h.b16 %v5942
      %v6521 = vunpack.c.l.b16 %v5943
      %v6522 = vunpack.c.h.b16 %v5943
      %v6523 = vunpack.c.l.b16 %v5944
      %v6524 = vunpack.c.h.b16 %v5944
      %v6525 = vunpack.c.l.b16 %v5945
      %v6526 = vunpack.c.h.b16 %v5945
      %v6527 = vunpack.c.l.b16 %v5946
      %v6528 = vunpack.c.h.b16 %v5946
      %v6529 = vunpack.c.l.b16 %v5947
      %v6530 = vunpack.c.h.b16 %v5947
      %v6531 = vunpack.c.l.b16 %v5948
      %v6532 = vunpack.c.h.b16 %v5948
      %v6533 = vunpack.c.l.b16 %v5949
      %v6534 = vunpack.c.h.b16 %v5949
      %v6535 = vunpack.c.l.b16 %v5950
      %v6536 = vunpack.c.h.b16 %v5950
      %v6537 = vunpack.c.l.b16 %v5951
      %v6538 = vunpack.c.h.b16 %v5951
      %v6539 = vunpack.c.l.b16 %v5952
      %v6540 = vunpack.c.h.b16 %v5952
      %v6541 = vunpack.c.l.b16 %v5953
      %v6542 = vunpack.c.h.b16 %v5953
      %v6543 = vunpack.c.l.b16 %v5954
      %v6544 = vunpack.c.h.b16 %v5954
      %v6545 = vunpack.c.l.b16 %v5955
      %v6546 = vunpack.c.h.b16 %v5955
      %v6547 = vunpack.c.l.b16 %v5956
      %v6548 = vunpack.c.h.b16 %v5956
      %v6549 = vunpack.c.l.b16 %v5957
      %v6550 = vunpack.c.h.b16 %v5957
      %v6551 = vunpack.c.l.b16 %v5958
      %v6552 = vunpack.c.h.b16 %v5958
      %v6553 = vunpack.c.l.b16 %v5959
      %v6554 = vunpack.c.h.b16 %v5959
      %v6555 = vunpack.c.l.b16 %v5960
      %v6556 = vunpack.c.h.b16 %v5960
      %v6557 = vunpack.c.l.b16 %v5961
      %v6558 = vunpack.c.h.b16 %v5961
      %v6559 = vunpack.c.l.b16 %v5962
      %v6560 = vunpack.c.h.b16 %v5962
      %v6561 = vunpack.c.l.b16 %v5963
      %v6562 = vunpack.c.h.b16 %v5963
      %v6563 = vunpack.c.l.b16 %v5964
      %v6564 = vunpack.c.h.b16 %v5964
      %v6565 = vunpack.c.l.b16 %v5965
      %v6566 = vunpack.c.h.b16 %v5965
      %v6567 = vunpack.c.l.b16 %v5966
      %v6568 = vunpack.c.h.b16 %v5966
      %v6569 = vunpack.c.l.b16 %v5967
      %v6570 = vunpack.c.h.b16 %v5967
      %v6571 = vunpack.c.l.b16 %v5968
      %v6572 = vunpack.c.h.b16 %v5968
      %v6573 = vunpack.c.l.b16 %v5969
      %v6574 = vunpack.c.h.b16 %v5969
      %v6575 = vunpack.c.l.b16 %v5970
      %v6576 = vunpack.c.h.b16 %v5970
      %v6577 = vunpack.c.l.b16 %v5971
      %v6578 = vunpack.c.h.b16 %v5971
      %v6579 = vunpack.c.l.b16 %v5972
      %v6580 = vunpack.c.h.b16 %v5972
      %v6581 = vunpack.c.l.b16 %v5973
      %v6582 = vunpack.c.h.b16 %v5973
      %v6583 = vunpack.c.l.b16 %v5974
      %v6584 = vunpack.c.h.b16 %v5974
      %v6585 = vunpack.c.l.b16 %v5975
      %v6586 = vunpack.c.h.b16 %v5975
      %v6587 = vunpack.c.l.b16 %v5976
      %v6588 = vunpack.c.h.b16 %v5976
      %v6589 = vunpack.c.l.b16 %v5977
      %v6590 = vunpack.c.h.b16 %v5977
      %v6591 = vunpack.c.l.b16 %v5978
      %v6592 = vunpack.c.h.b16 %v5978
      %v6593 = vunpack.c.l.b16 %v5979
      %v6594 = vunpack.c.h.b16 %v5979
      %v6595 = vunpack.c.l.b16 %v5980
      %v6596 = vunpack.c.h.b16 %v5980
      %v6597 = vunpack.c.l.b16 %v5981
      %v6598 = vunpack.c.h.b16 %v5981
      %v6599 = vunpack.c.l.b16 %v5982
      %v6600 = vunpack.c.h.b16 %v5982
      %v6601 = vunpack.c.l.b16 %v5983
      %v6602 = vunpack.c.h.b16 %v5983
      %v6603 = vunpack.c.l.b16 %v5984
      %v6604 = vunpack.c.h.b16 %v5984
      %v6605 = vunpack.c.l.b16 %v5985
      %v6606 = vunpack.c.h.b16 %v5985
      %v6607 = vunpack.c.l.b16 %v5986
      %v6608 = vunpack.c.h.b16 %v5986
      %v6609 = vunpack.c.l.b16 %v5987
      %v6610 = vunpack.c.h.b16 %v5987
      %v6611 = vunpack.c.l.b16 %v5988
      %v6612 = vunpack.c.h.b16 %v5988
      %v6613 = vunpack.c.l.b16 %v5989
      %v6614 = vunpack.c.h.b16 %v5989
      %v6615 = vunpack.c.l.b16 %v5990
      %v6616 = vunpack.c.h.b16 %v5990
      %v6617 = vunpack.c.l.b16 %v5991
      %v6618 = vunpack.c.h.b16 %v5991
      %v6619 = vunpack.c.l.b16 %v5992
      %v6620 = vunpack.c.h.b16 %v5992
      %v6621 = vunpack.c.l.b16 %v5993
      %v6622 = vunpack.c.h.b16 %v5993
      %v6623 = vunpack.c.l.b16 %v5994
      %v6624 = vunpack.c.h.b16 %v5994
      %v6625 = vunpack.c.l.b16 %v5995
      %v6626 = vunpack.c.h.b16 %v5995
      %v6627 = vunpack.c.l.b16 %v5996
      %v6628 = vunpack.c.h.b16 %v5996
      %v6629 = vunpack.c.l.b16 %v5997
      %v6630 = vunpack.c.h.b16 %v5997
      %v6631 = vunpack.c.l.b16 %v5998
      %v6632 = vunpack.c.h.b16 %v5998
      %v6633 = vunpack.c.l.b16 %v5999
      %v6634 = vunpack.c.h.b16 %v5999
      %v6635 = vunpack.c.l.b16 %v6000
      %v6636 = vunpack.c.h.b16 %v6000
      %v6637 = vunpack.c.l.b16 %v6001
      %v6638 = vunpack.c.h.b16 %v6001
      %v6639 = vunpack.c.l.b16 %v6002
      %v6640 = vunpack.c.h.b16 %v6002
      %v6641 = vunpack.c.l.b16 %v6003
      %v6642 = vunpack.c.h.b16 %v6003
      %v6643 = vunpack.c.l.b16 %v6004
      %v6644 = vunpack.c.h.b16 %v6004
      %v6645 = vunpack.c.l.b16 %v6005
      %v6646 = vunpack.c.h.b16 %v6005
      %v6647 = vunpack.c.l.b16 %v6006
      %v6648 = vunpack.c.h.b16 %v6006
      %v6649 = vunpack.c.l.b16 %v6007
      %v6650 = vunpack.c.h.b16 %v6007
      %v6651 = vunpack.c.l.b16 %v6008
      %v6652 = vunpack.c.h.b16 %v6008
      %v6653 = vunpack.c.l.b16 %v6009
      %v6654 = vunpack.c.h.b16 %v6009
      %v6655 = vunpack.c.l.b16 %v6010
      %v6656 = vunpack.c.h.b16 %v6010
      %v6657 = vunpack.c.l.b16 %v6011
      %v6658 = vunpack.c.h.b16 %v6011
      %v6659 = vunpack.c.l.b16 %v6012
      %v6660 = vunpack.c.h.b16 %v6012
      %v6661 = vunpack.c.l.b16 %v6013
      %v6662 = vunpack.c.h.b16 %v6013
      %v6663 = vunpack.c.l.b16 %v6014
      %v6664 = vunpack.c.h.b16 %v6014
      %v6665 = vunpack.c.l.b16 %v6015
      %v6666 = vunpack.c.h.b16 %v6015
      %v6667 = vunpack.c.l.b16 %v6016
      %v6668 = vunpack.c.h.b16 %v6016
      %v6669 = vunpack.c.l.b16 %v6017
      %v6670 = vunpack.c.h.b16 %v6017
      %v6671 = vunpack.c.l.b16 %v6018
      %v6672 = vunpack.c.h.b16 %v6018
      %v6673 = vunpack.c.l.b16 %v6019
      %v6674 = vunpack.c.h.b16 %v6019
      %v6675 = vunpack.c.l.b16 %v6020
      %v6676 = vunpack.c.h.b16 %v6020
      %v6677 = vunpack.c.l.b16 %v6021
      %v6678 = vunpack.c.h.b16 %v6021
      %v6679 = vunpack.c.l.b16 %v6022
      %v6680 = vunpack.c.h.b16 %v6022
      %v6681 = vunpack.c.l.b16 %v6023
      %v6682 = vunpack.c.h.b16 %v6023
      %v6683 = vunpack.c.l.b16 %v6024
      %v6684 = vunpack.c.h.b16 %v6024
      %v6685 = vunpack.c.l.b16 %v6025
      %v6686 = vunpack.c.h.b16 %v6025
      %v6687 = vunpack.c.l.b16 %v6026
      %v6688 = vunpack.c.h.b16 %v6026
      %v6689 = vunpack.c.l.b16 %v6027
      %v6690 = vunpack.c.h.b16 %v6027
      %v6691 = vunpack.c.l.b16 %v6028
      %v6692 = vunpack.c.h.b16 %v6028
      %v6693 = vunpack.c.l.b16 %v6029
      %v6694 = vunpack.c.h.b16 %v6029
      %v6695 = vunpack.c.l.b16 %v6030
      %v6696 = vunpack.c.h.b16 %v6030
      %v6697 = vunpack.c.l.b16 %v6031
      %v6698 = vunpack.c.h.b16 %v6031
      %v6699 = vunpack.c.l.b16 %v6032
      %v6700 = vunpack.c.h.b16 %v6032
      %v6701 = vunpack.c.l.b16 %v6033
      %v6702 = vunpack.c.h.b16 %v6033
      %v6703 = vunpack.c.l.b16 %v6034
      %v6704 = vunpack.c.h.b16 %v6034
      %v6705 = vunpack.c.l.b16 %v6035
      %v6706 = vunpack.c.h.b16 %v6035
      %v6707 = vunpack.c.l.b16 %v6036
      %v6708 = vunpack.c.h.b16 %v6036
      %v6709 = vunpack.c.l.b16 %v6037
      %v6710 = vunpack.c.h.b16 %v6037
      %v6711 = vunpack.c.l.b16 %v6038
      %v6712 = vunpack.c.h.b16 %v6038
      %v6713 = vunpack.c.l.b16 %v6039
      %v6714 = vunpack.c.h.b16 %v6039
      %v6715 = vunpack.c.l.b16 %v6040
      %v6716 = vunpack.c.h.b16 %v6040
      %v6717 = vunpack.c.l.b16 %v6041
      %v6718 = vunpack.c.h.b16 %v6041
      %v6719 = vunpack.c.l.b16 %v6042
      %v6720 = vunpack.c.h.b16 %v6042
      %v6721 = vunpack.c.l.b16 %v6043
      %v6722 = vunpack.c.h.b16 %v6043
      %v6723 = vunpack.c.l.b16 %v6044
      %v6724 = vunpack.c.h.b16 %v6044
      %v6725 = vunpack.c.l.b16 %v6045
      %v6726 = vunpack.c.h.b16 %v6045
      %v6727 = vunpack.c.l.b16 %v6046
      %v6728 = vunpack.c.h.b16 %v6046
      %v6729 = vunpack.c.l.b16 %v6047
      %v6730 = vunpack.c.h.b16 %v6047
      %v6731 = vunpack.c.l.b16 %v6048
      %v6732 = vunpack.c.h.b16 %v6048
      %v6733 = vunpack.c.l.b16 %v6049
      %v6734 = vunpack.c.h.b16 %v6049
      %v6735 = vunpack.c.l.b16 %v6050
      %v6736 = vunpack.c.h.b16 %v6050
      %v6737 = vunpack.c.l.b16 %v6051
      %v6738 = vunpack.c.h.b16 %v6051
      %v6739 = vunpack.c.l.b16 %v6052
      %v6740 = vunpack.c.h.b16 %v6052
      %v6741 = vunpack.c.l.b16 %v6053
      %v6742 = vunpack.c.h.b16 %v6053
      %v6743 = vunpack.c.l.b16 %v6054
      %v6744 = vunpack.c.h.b16 %v6054
      %v6745 = vunpack.c.l.b16 %v6055
      %v6746 = vunpack.c.h.b16 %v6055
      %v6747 = vunpack.c.l.b16 %v6056
      %v6748 = vunpack.c.h.b16 %v6056
      %v6749 = vunpack.c.l.b16 %v6057
      %v6750 = vunpack.c.h.b16 %v6057
      %v6751 = vunpack.c.l.b16 %v6058
      %v6752 = vunpack.c.h.b16 %v6058
      %v6753 = vunpack.c.l.b16 %v6059
      %v6754 = vunpack.c.h.b16 %v6059
      %v6755 = vunpack.c.l.b16 %v6060
      %v6756 = vunpack.c.h.b16 %v6060
      %v6757 = vunpack.c.l.b16 %v6061
      %v6758 = vunpack.c.h.b16 %v6061
      %v6759 = vunpack.c.l.b16 %v6062
      %v6760 = vunpack.c.h.b16 %v6062
      %v6761 = vunpack.c.l.b16 %v6063
      %v6762 = vunpack.c.h.b16 %v6063
      %v6763 = vunpack.c.l.b16 %v6064
      %v6764 = vunpack.c.h.b16 %v6064
      %v6765 = vunpack.c.l.b16 %v6065
      %v6766 = vunpack.c.h.b16 %v6065
      %v6767 = vunpack.c.l.b16 %v6066
      %v6768 = vunpack.c.h.b16 %v6066
      %v6769 = vunpack.c.l.b16 %v6067
      %v6770 = vunpack.c.h.b16 %v6067
      %v6771 = vunpack.c.l.b16 %v6068
      %v6772 = vunpack.c.h.b16 %v6068
      %v6773 = vunpack.c.l.b16 %v6069
      %v6774 = vunpack.c.h.b16 %v6069
      %v6775 = vunpack.c.l.b16 %v6070
      %v6776 = vunpack.c.h.b16 %v6070
      %v6777 = vunpack.c.l.b16 %v6071
      %v6778 = vunpack.c.h.b16 %v6071
      %v6779 = vunpack.c.l.b16 %v6072
      %v6780 = vunpack.c.h.b16 %v6072
      %v6781 = vunpack.c.l.b16 %v6073
      %v6782 = vunpack.c.h.b16 %v6073
      %v6783 = vunpack.c.l.b16 %v6074
      %v6784 = vunpack.c.h.b16 %v6074
      %v6785 = vunpack.c.l.b16 %v6075
      %v6786 = vunpack.c.h.b16 %v6075
      %v6787 = vunpack.c.l.b16 %v6076
      %v6788 = vunpack.c.h.b16 %v6076
      %v6789 = vunpack.c.l.b16 %v6077
      %v6790 = vunpack.c.h.b16 %v6077
      %v6791 = vunpack.c.l.b16 %v6078
      %v6792 = vunpack.c.h.b16 %v6078
      %v6793 = vunpack.c.l.b16 %v6079
      %v6794 = vunpack.c.h.b16 %v6079
      %v6795 = vunpack.c.l.b16 %v6080
      %v6796 = vunpack.c.h.b16 %v6080
      %v6797 = vunpack.c.l.b16 %v6081
      %v6798 = vunpack.c.h.b16 %v6081
      %v6799 = vunpack.c.l.b16 %v6082
      %v6800 = vunpack.c.h.b16 %v6082
      %v6801 = vunpack.c.l.b16 %v6083
      %v6802 = vunpack.c.h.b16 %v6083
      %v6803 = vunpack.c.l.b16 %v6084
      %v6804 = vunpack.c.h.b16 %v6084
      %v6805 = vunpack.c.l.b16 %v6085
      %v6806 = vunpack.c.h.b16 %v6085
      %v6807 = vunpack.c.l.b16 %v6086
      %v6808 = vunpack.c.h.b16 %v6086
      %v6809 = vunpack.c.l.b16 %v6087
      %v6810 = vunpack.c.h.b16 %v6087
      %v6811 = vunpack.c.l.b16 %v6088
      %v6812 = vunpack.c.h.b16 %v6088
      %v6813 = vunpack.c.l.b16 %v6089
      %v6814 = vunpack.c.h.b16 %v6089
      %v6815 = vunpack.c.l.b16 %v6090
      %v6816 = vunpack.c.h.b16 %v6090
      %v6817 = vunpack.c.l.b16 %v6091
      %v6818 = vunpack.c.h.b16 %v6091
      %v6819 = vunpack.c.l.b16 %v6092
      %v6820 = vunpack.c.h.b16 %v6092
      %v6821 = vunpack.c.l.b16 %v6093
      %v6822 = vunpack.c.h.b16 %v6093
      %v6823 = vunpack.c.l.b16 %v6094
      %v6824 = vunpack.c.h.b16 %v6094
      %v6825 = vunpack.c.l.b16 %v6095
      %v6826 = vunpack.c.h.b16 %v6095
      %v6827 = vunpack.c.l.b16 %v6096
      %v6828 = vunpack.c.h.b16 %v6096
      %v6829 = vunpack.c.l.b16 %v6097
      %v6830 = vunpack.c.h.b16 %v6097
      %v6831 = vunpack.c.l.b16 %v6098
      %v6832 = vunpack.c.h.b16 %v6098
      %v6833 = vunpack.c.l.b16 %v6099
      %v6834 = vunpack.c.h.b16 %v6099
      %v6835 = vunpack.c.l.b16 %v6100
      %v6836 = vunpack.c.h.b16 %v6100
      %v6837 = vunpack.c.l.b16 %v6101
      %v6838 = vunpack.c.h.b16 %v6101
      %v6839 = vunpack.c.l.b16 %v6102
      %v6840 = vunpack.c.h.b16 %v6102
      %v6841 = vunpack.c.l.b16 %v6103
      %v6842 = vunpack.c.h.b16 %v6103
      %v6843 = vunpack.c.l.b16 %v6104
      %v6844 = vunpack.c.h.b16 %v6104
      %v6845 = vunpack.c.l.b16 %v6105
      %v6846 = vunpack.c.h.b16 %v6105
      %v6847 = vunpack.c.l.b16 %v6106
      %v6848 = vunpack.c.h.b16 %v6106
      %v6849 = vunpack.c.l.b16 %v6107
      %v6850 = vunpack.c.h.b16 %v6107
      %v6851 = vunpack.c.l.b16 %v6108
      %v6852 = vunpack.c.h.b16 %v6108
      %v6853 = vunpack.c.l.b16 %v6109
      %v6854 = vunpack.c.h.b16 %v6109
      %v6855 = vunpack.c.l.b16 %v6110
      %v6856 = vunpack.c.h.b16 %v6110
      %v6857 = vunpack.c.l.b16 %v6111
      %v6858 = vunpack.c.h.b16 %v6111
      %v6859 = vunpack.c.l.b16 %v6112
      %v6860 = vunpack.c.h.b16 %v6112
      %v6861 = vunpack.c.l.b16 %v6113
      %v6862 = vunpack.c.h.b16 %v6113
      %v6863 = vunpack.c.l.b16 %v6114
      %v6864 = vunpack.c.h.b16 %v6114
      %v6865 = vunpack.c.l.b16 %v6115
      %v6866 = vunpack.c.h.b16 %v6115
      %v6867 = vunpack.c.l.b16 %v6116
      %v6868 = vunpack.c.h.b16 %v6116
      %v6869 = vunpack.c.l.b16 %v6117
      %v6870 = vunpack.c.h.b16 %v6117
      %v6871 = vunpack.c.l.b16 %v6118
      %v6872 = vunpack.c.h.b16 %v6118
      %v6873 = vunpack.c.l.b16 %v6119
      %v6874 = vunpack.c.h.b16 %v6119
      %v6875 = vunpack.c.l.b16 %v6120
      %v6876 = vunpack.c.h.b16 %v6120
      %v6877 = vunpack.c.l.b16 %v6121
      %v6878 = vunpack.c.h.b16 %v6121
      %v6879 = vunpack.c.l.b16 %v6122
      %v6880 = vunpack.c.h.b16 %v6122
      %v6881 = vunpack.c.l.b16 %v6123
      %v6882 = vunpack.c.h.b16 %v6123
      %v6883 = vunpack.c.l.b16 %v6124
      %v6884 = vunpack.c.h.b16 %v6124
      %v6885 = vunpack.c.l.b16 %v6125
      %v6886 = vunpack.c.h.b16 %v6125
      %v6887 = vunpack.c.l.b16 %v6126
      %v6888 = vunpack.c.h.b16 %v6126
      %v6889 = vunpack.c.l.b16 %v6127
      %v6890 = vunpack.c.h.b16 %v6127
      %v6891 = vunpack.c.l.b16 %v6128
      %v6892 = vunpack.c.h.b16 %v6128
      %v6893 = vunpack.c.l.b16 %v6129
      %v6894 = vunpack.c.h.b16 %v6129
      %v6895 = vunpack.c.l.b16 %v6130
      %v6896 = vunpack.c.h.b16 %v6130
      %v6897 = vunpack.c.l.b16 %v6131
      %v6898 = vunpack.c.h.b16 %v6131
      %v6899 = vunpack.c.l.b16 %v6132
      %v6900 = vunpack.c.h.b16 %v6132
      %v6901 = vpack.c.b16 %v6397, %v6389
      %v6902 = vpack.c.b16 %v6398, %v6390
      %v6903 = vpack.c.b16 %v6399, %v6391
      %v6904 = vpack.c.b16 %v6400, %v6392
      %v6905 = vpack.c.b16 %v6401, %v6393
      %v6906 = vpack.c.b16 %v6402, %v6394
      %v6907 = vpack.c.b16 %v6403, %v6395
      %v6908 = vpack.c.b16 %v6404, %v6396
      %v6909 = vpack.c.b16 %v6413, %v6405
      %v6910 = vpack.c.b16 %v6414, %v6406
      %v6911 = vpack.c.b16 %v6415, %v6407
      %v6912 = vpack.c.b16 %v6416, %v6408
      %v6913 = vpack.c.b16 %v6417, %v6409
      %v6914 = vpack.c.b16 %v6418, %v6410
      %v6915 = vpack.c.b16 %v6419, %v6411
      %v6916 = vpack.c.b16 %v6420, %v6412
      %v6917 = vpack.c.b16 %v6429, %v6421
      %v6918 = vpack.c.b16 %v6430, %v6422
      %v6919 = vpack.c.b16 %v6431, %v6423
      %v6920 = vpack.c.b16 %v6432, %v6424
      %v6921 = vpack.c.b16 %v6433, %v6425
      %v6922 = vpack.c.b16 %v6434, %v6426
      %v6923 = vpack.c.b16 %v6435, %v6427
      %v6924 = vpack.c.b16 %v6436, %v6428
      %v6925 = vpack.c.b16 %v6445, %v6437
      %v6926 = vpack.c.b16 %v6446, %v6438
      %v6927 = vpack.c.b16 %v6447, %v6439
      %v6928 = vpack.c.b16 %v6448, %v6440
      %v6929 = vpack.c.b16 %v6449, %v6441
      %v6930 = vpack.c.b16 %v6450, %v6442
      %v6931 = vpack.c.b16 %v6451, %v6443
      %v6932 = vpack.c.b16 %v6452, %v6444
      %v6933 = vpack.c.b16 %v6461, %v6453
      %v6934 = vpack.c.b16 %v6462, %v6454
      %v6935 = vpack.c.b16 %v6463, %v6455
      %v6936 = vpack.c.b16 %v6464, %v6456
      %v6937 = vpack.c.b16 %v6465, %v6457
      %v6938 = vpack.c.b16 %v6466, %v6458
      %v6939 = vpack.c.b16 %v6467, %v6459
      %v6940 = vpack.c.b16 %v6468, %v6460
      %v6941 = vpack.c.b16 %v6477, %v6469
      %v6942 = vpack.c.b16 %v6478, %v6470
      %v6943 = vpack.c.b16 %v6479, %v6471
      %v6944 = vpack.c.b16 %v6480, %v6472
      %v6945 = vpack.c.b16 %v6481, %v6473
      %v6946 = vpack.c.b16 %v6482, %v6474
      %v6947 = vpack.c.b16 %v6483, %v6475
      %v6948 = vpack.c.b16 %v6484, %v6476
      %v6949 = vpack.c.b16 %v6493, %v6485
      %v6950 = vpack.c.b16 %v6494, %v6486
      %v6951 = vpack.c.b16 %v6495, %v6487
      %v6952 = vpack.c.b16 %v6496, %v6488
      %v6953 = vpack.c.b16 %v6497, %v6489
      %v6954 = vpack.c.b16 %v6498, %v6490
      %v6955 = vpack.c.b16 %v6499, %v6491
      %v6956 = vpack.c.b16 %v6500, %v6492
      %v6957 = vpack.c.b16 %v6509, %v6501
      %v6958 = vpack.c.b16 %v6510, %v6502
      %v6959 = vpack.c.b16 %v6511, %v6503
      %v6960 = vpack.c.b16 %v6512, %v6504
      %v6961 = vpack.c.b16 %v6513, %v6505
      %v6962 = vpack.c.b16 %v6514, %v6506
      %v6963 = vpack.c.b16 %v6515, %v6507
      %v6964 = vpack.c.b16 %v6516, %v6508
      %v6965 = vpack.c.b16 %v6525, %v6517
      %v6966 = vpack.c.b16 %v6526, %v6518
      %v6967 = vpack.c.b16 %v6527, %v6519
      %v6968 = vpack.c.b16 %v6528, %v6520
      %v6969 = vpack.c.b16 %v6529, %v6521
      %v6970 = vpack.c.b16 %v6530, %v6522
      %v6971 = vpack.c.b16 %v6531, %v6523
      %v6972 = vpack.c.b16 %v6532, %v6524
      %v6973 = vpack.c.b16 %v6541, %v6533
      %v6974 = vpack.c.b16 %v6542, %v6534
      %v6975 = vpack.c.b16 %v6543, %v6535
      %v6976 = vpack.c.b16 %v6544, %v6536
      %v6977 = vpack.c.b16 %v6545, %v6537
      %v6978 = vpack.c.b16 %v6546, %v6538
      %v6979 = vpack.c.b16 %v6547, %v6539
      %v6980 = vpack.c.b16 %v6548, %v6540
      %v6981 = vpack.c.b16 %v6557, %v6549
      %v6982 = vpack.c.b16 %v6558, %v6550
      %v6983 = vpack.c.b16 %v6559, %v6551
      %v6984 = vpack.c.b16 %v6560, %v6552
      %v6985 = vpack.c.b16 %v6561, %v6553
      %v6986 = vpack.c.b16 %v6562, %v6554
      %v6987 = vpack.c.b16 %v6563, %v6555
      %v6988 = vpack.c.b16 %v6564, %v6556
      %v6989 = vpack.c.b16 %v6573, %v6565
      %v6990 = vpack.c.b16 %v6574, %v6566
      %v6991 = vpack.c.b16 %v6575, %v6567
      %v6992 = vpack.c.b16 %v6576, %v6568
      %v6993 = vpack.c.b16 %v6577, %v6569
      %v6994 = vpack.c.b16 %v6578, %v6570
      %v6995 = vpack.c.b16 %v6579, %v6571
      %v6996 = vpack.c.b16 %v6580, %v6572
      %v6997 = vpack.c.b16 %v6589, %v6581
      %v6998 = vpack.c.b16 %v6590, %v6582
      %v6999 = vpack.c.b16 %v6591, %v6583
      %v7000 = vpack.c.b16 %v6592, %v6584
      %v7001 = vpack.c.b16 %v6593, %v6585
      %v7002 = vpack.c.b16 %v6594, %v6586
      %v7003 = vpack.c.b16 %v6595, %v6587
      %v7004 = vpack.c.b16 %v6596, %v6588
      %v7005 = vpack.c.b16 %v6605, %v6597
      %v7006 = vpack.c.b16 %v6606, %v6598
      %v7007 = vpack.c.b16 %v6607, %v6599
      %v7008 = vpack.c.b16 %v6608, %v6600
      %v7009 = vpack.c.b16 %v6609, %v6601
      %v7010 = vpack.c.b16 %v6610, %v6602
      %v7011 = vpack.c.b16 %v6611, %v6603
      %v7012 = vpack.c.b16 %v6612, %v6604
      %v7013 = vpack.c.b16 %v6621, %v6613
      %v7014 = vpack.c.b16 %v6622, %v6614
      %v7015 = vpack.c.b16 %v6623, %v6615
      %v7016 = vpack.c.b16 %v6624, %v6616
      %v7017 = vpack.c.b16 %v6625, %v6617
      %v7018 = vpack.c.b16 %v6626, %v6618
      %v7019 = vpack.c.b16 %v6627, %v6619
      %v7020 = vpack.c.b16 %v6628, %v6620
      %v7021 = vpack.c.b16 %v6637, %v6629
      %v7022 = vpack.c.b16 %v6638, %v6630
      %v7023 = vpack.c.b16 %v6639, %v6631
      %v7024 = vpack.c.b16 %v6640, %v6632
      %v7025 = vpack.c.b16 %v6641, %v6633
      %v7026 = vpack.c.b16 %v6642, %v6634
      %v7027 = vpack.c.b16 %v6643, %v6635
      %v7028 = vpack.c.b16 %v6644, %v6636
      %v7029 = vpack.c.b16 %v6653, %v6645
      %v7030 = vpack.c.b16 %v6654, %v6646
      %v7031 = vpack.c.b16 %v6655, %v6647
      %v7032 = vpack.c.b16 %v6656, %v6648
      %v7033 = vpack.c.b16 %v6657, %v6649
      %v7034 = vpack.c.b16 %v6658, %v6650
      %v7035 = vpack.c.b16 %v6659, %v6651
      %v7036 = vpack.c.b16 %v6660, %v6652
      %v7037 = vpack.c.b16 %v6669, %v6661
      %v7038 = vpack.c.b16 %v6670, %v6662
      %v7039 = vpack.c.b16 %v6671, %v6663
      %v7040 = vpack.c.b16 %v6672, %v6664
      %v7041 = vpack.c.b16 %v6673, %v6665
      %v7042 = vpack.c.b16 %v6674, %v6666
      %v7043 = vpack.c.b16 %v6675, %v6667
      %v7044 = vpack.c.b16 %v6676, %v6668
      %v7045 = vpack.c.b16 %v6685, %v6677
      %v7046 = vpack.c.b16 %v6686, %v6678
      %v7047 = vpack.c.b16 %v6687, %v6679
      %v7048 = vpack.c.b16 %v6688, %v6680
      %v7049 = vpack.c.b16 %v6689, %v6681
      %v7050 = vpack.c.b16 %v6690, %v6682
      %v7051 = vpack.c.b16 %v6691, %v6683
      %v7052 = vpack.c.b16 %v6692, %v6684
      %v7053 = vpack.c.b16 %v6701, %v6693
      %v7054 = vpack.c.b16 %v6702, %v6694
      %v7055 = vpack.c.b16 %v6703, %v6695
      %v7056 = vpack.c.b16 %v6704, %v6696
      %v7057 = vpack.c.b16 %v6705, %v6697
      %v7058 = vpack.c.b16 %v6706, %v6698
      %v7059 = vpack.c.b16 %v6707, %v6699
      %v7060 = vpack.c.b16 %v6708, %v6700
      %v7061 = vpack.c.b16 %v6717, %v6709
      %v7062 = vpack.c.b16 %v6718, %v6710
      %v7063 = vpack.c.b16 %v6719, %v6711
      %v7064 = vpack.c.b16 %v6720, %v6712
      %v7065 = vpack.c.b16 %v6721, %v6713
      %v7066 = vpack.c.b16 %v6722, %v6714
      %v7067 = vpack.c.b16 %v6723, %v6715
      %v7068 = vpack.c.b16 %v6724, %v6716
      %v7069 = vpack.c.b16 %v6733, %v6725
      %v7070 = vpack.c.b16 %v6734, %v6726
      %v7071 = vpack.c.b16 %v6735, %v6727
      %v7072 = vpack.c.b16 %v6736, %v6728
      %v7073 = vpack.c.b16 %v6737, %v6729
      %v7074 = vpack.c.b16 %v6738, %v6730
      %v7075 = vpack.c.b16 %v6739, %v6731
      %v7076 = vpack.c.b16 %v6740, %v6732
      %v7077 = vpack.c.b16 %v6749, %v6741
      %v7078 = vpack.c.b16 %v6750, %v6742
      %v7079 = vpack.c.b16 %v6751, %v6743
      %v7080 = vpack.c.b16 %v6752, %v6744
      %v7081 = vpack.c.b16 %v6753, %v6745
      %v7082 = vpack.c.b16 %v6754, %v6746
      %v7083 = vpack.c.b16 %v6755, %v6747
      %v7084 = vpack.c.b16 %v6756, %v6748
      %v7085 = vpack.c.b16 %v6765, %v6757
      %v7086 = vpack.c.b16 %v6766, %v6758
      %v7087 = vpack.c.b16 %v6767, %v6759
      %v7088 = vpack.c.b16 %v6768, %v6760
      %v7089 = vpack.c.b16 %v6769, %v6761
      %v7090 = vpack.c.b16 %v6770, %v6762
      %v7091 = vpack.c.b16 %v6771, %v6763
      %v7092 = vpack.c.b16 %v6772, %v6764
      %v7093 = vpack.c.b16 %v6781, %v6773
      %v7094 = vpack.c.b16 %v6782, %v6774
      %v7095 = vpack.c.b16 %v6783, %v6775
      %v7096 = vpack.c.b16 %v6784, %v6776
      %v7097 = vpack.c.b16 %v6785, %v6777
      %v7098 = vpack.c.b16 %v6786, %v6778
      %v7099 = vpack.c.b16 %v6787, %v6779
      %v7100 = vpack.c.b16 %v6788, %v6780
      %v7101 = vpack.c.b16 %v6797, %v6789
      %v7102 = vpack.c.b16 %v6798, %v6790
      %v7103 = vpack.c.b16 %v6799, %v6791
      %v7104 = vpack.c.b16 %v6800, %v6792
      %v7105 = vpack.c.b16 %v6801, %v6793
      %v7106 = vpack.c.b16 %v6802, %v6794
      %v7107 = vpack.c.b16 %v6803, %v6795
      %v7108 = vpack.c.b16 %v6804, %v6796
      %v7109 = vpack.c.b16 %v6813, %v6805
      %v7110 = vpack.c.b16 %v6814, %v6806
      %v7111 = vpack.c.b16 %v6815, %v6807
      %v7112 = vpack.c.b16 %v6816, %v6808
      %v7113 = vpack.c.b16 %v6817, %v6809
      %v7114 = vpack.c.b16 %v6818, %v6810
      %v7115 = vpack.c.b16 %v6819, %v6811
      %v7116 = vpack.c.b16 %v6820, %v6812
      %v7117 = vpack.c.b16 %v6829, %v6821
      %v7118 = vpack.c.b16 %v6830, %v6822
      %v7119 = vpack.c.b16 %v6831, %v6823
      %v7120 = vpack.c.b16 %v6832, %v6824
      %v7121 = vpack.c.b16 %v6833, %v6825
      %v7122 = vpack.c.b16 %v6834, %v6826
      %v7123 = vpack.c.b16 %v6835, %v6827
      %v7124 = vpack.c.b16 %v6836, %v6828
      %v7125 = vpack.c.b16 %v6845, %v6837
      %v7126 = vpack.c.b16 %v6846, %v6838
      %v7127 = vpack.c.b16 %v6847, %v6839
      %v7128 = vpack.c.b16 %v6848, %v6840
      %v7129 = vpack.c.b16 %v6849, %v6841
      %v7130 = vpack.c.b16 %v6850, %v6842
      %v7131 = vpack.c.b16 %v6851, %v6843
      %v7132 = vpack.c.b16 %v6852, %v6844
      %v7133 = vpack.c.b16 %v6861, %v6853
      %v7134 = vpack.c.b16 %v6862, %v6854
      %v7135 = vpack.c.b16 %v6863, %v6855
      %v7136 = vpack.c.b16 %v6864, %v6856
      %v7137 = vpack.c.b16 %v6865, %v6857
      %v7138 = vpack.c.b16 %v6866, %v6858
      %v7139 = vpack.c.b16 %v6867, %v6859
      %v7140 = vpack.c.b16 %v6868, %v6860
      %v7141 = vpack.c.b16 %v6877, %v6869
      %v7142 = vpack.c.b16 %v6878, %v6870
      %v7143 = vpack.c.b16 %v6879, %v6871
      %v7144 = vpack.c.b16 %v6880, %v6872
      %v7145 = vpack.c.b16 %v6881, %v6873
      %v7146 = vpack.c.b16 %v6882, %v6874
      %v7147 = vpack.c.b16 %v6883, %v6875
      %v7148 = vpack.c.b16 %v6884, %v6876
      %v7149 = vpack.c.b16 %v6893, %v6885
      %v7150 = vpack.c.b16 %v6894, %v6886
      %v7151 = vpack.c.b16 %v6895, %v6887
      %v7152 = vpack.c.b16 %v6896, %v6888
      %v7153 = vpack.c.b16 %v6897, %v6889
      %v7154 = vpack.c.b16 %v6898, %v6890
      %v7155 = vpack.c.b16 %v6899, %v6891
      %v7156 = vpack.c.b16 %v6900, %v6892
      %7413 = vmatprep.subr.bf16.mxu0 %v6902
      %7414 = vmatpush1.bf16.xpose.msra.mxu0 %v6901
      %7415 = vmatprep.subr.bf16.mxu0 %v6910
      %7416 = vmatpush1.bf16.xpose.msra.mxu0 %v6909
      %7417 = vmatprep.subr.bf16.mxu0 %v6918
      %7418 = vmatpush1.bf16.xpose.msra.mxu0 %v6917
      %7419 = vmatprep.subr.bf16.mxu0 %v6926
      %7420 = vmatpush1.bf16.xpose.msra.mxu0 %v6925
      %7421 = vmatprep.subr.bf16.mxu0 %v6934
      %7422 = vmatpush1.bf16.xpose.msra.mxu0 %v6933
      %7423 = vmatprep.subr.bf16.mxu0 %v6942
      %7424 = vmatpush1.bf16.xpose.msra.mxu0 %v6941
      %7425 = vmatprep.subr.bf16.mxu0 %v6950
      %7426 = vmatpush1.bf16.xpose.msra.mxu0 %v6949
      %7427 = vmatprep.subr.bf16.mxu0 %v6958
      %7428 = vmatpush1.bf16.xpose.msra.mxu0 %v6957
      %7429 = vmatprep.subr.bf16.mxu0 %v6966
      %7430 = vmatpush1.bf16.xpose.msra.mxu0 %v6965
      %7431 = vmatprep.subr.bf16.mxu0 %v6974
      %7432 = vmatpush1.bf16.xpose.msra.mxu0 %v6973
      %7433 = vmatprep.subr.bf16.mxu0 %v6982
      %7434 = vmatpush1.bf16.xpose.msra.mxu0 %v6981
      %7435 = vmatprep.subr.bf16.mxu0 %v6990
      %7436 = vmatpush1.bf16.xpose.msra.mxu0 %v6989
      %7437 = vmatprep.subr.bf16.mxu0 %v6998
      %7438 = vmatpush1.bf16.xpose.msra.mxu0 %v6997
      %7439 = vmatprep.subr.bf16.mxu0 %v7006
      %7440 = vmatpush1.bf16.xpose.msra.mxu0 %v7005
      %7441 = vmatprep.subr.bf16.mxu0 %v7014
      %7442 = vmatpush1.bf16.xpose.msra.mxu0 %v7013
      %7443 = vmatprep.subr.bf16.mxu0 %v7022
      %7444 = vmatpush1.bf16.xpose.msra.mxu0 %v7021
      %7445 = vmatprep.mubr.bf16.mxu0 %v2100
      %7446 = vmatmul.mubr.bf16.gmra.mrb[0].mxu0 %v2099
      %v7447 = vpop.f32.mrb[0].mxu0
      %v7448 = vadd.f32 0.0, %v7447
      %v7449 = vpop.f32.mrb[0].mxu0
      %v7450 = vadd.f32 0.0, %v7449
      %v7451 = vpop.f32.mrb[0].mxu0
      %v7452 = vpop.f32.mrb[0].mxu0
      %7453 = vdwg.mxu0
      %7454 = vmatprep.subr.bf16.mxu0 %v6904
      %7455 = vmatpush1.bf16.xpose.msra.mxu0 %v6903
      %7456 = vmatprep.subr.bf16.mxu0 %v6912
      %7457 = vmatpush1.bf16.xpose.msra.mxu0 %v6911
      %7458 = vmatprep.subr.bf16.mxu0 %v6920
      %7459 = vmatpush1.bf16.xpose.msra.mxu0 %v6919
      %7460 = vmatprep.subr.bf16.mxu0 %v6928
      %7461 = vmatpush1.bf16.xpose.msra.mxu0 %v6927
      %7462 = vmatprep.subr.bf16.mxu0 %v6936
      %7463 = vmatpush1.bf16.xpose.msra.mxu0 %v6935
      %7464 = vmatprep.subr.bf16.mxu0 %v6944
      %7465 = vmatpush1.bf16.xpose.msra.mxu0 %v6943
      %7466 = vmatprep.subr.bf16.mxu0 %v6952
      %7467 = vmatpush1.bf16.xpose.msra.mxu0 %v6951
      %7468 = vmatprep.subr.bf16.mxu0 %v6960
      %7469 = vmatpush1.bf16.xpose.msra.mxu0 %v6959
      %7470 = vmatprep.subr.bf16.mxu0 %v6968
      %7471 = vmatpush1.bf16.xpose.msra.mxu0 %v6967
      %7472 = vmatprep.subr.bf16.mxu0 %v6976
      %7473 = vmatpush1.bf16.xpose.msra.mxu0 %v6975
      %7474 = vmatprep.subr.bf16.mxu0 %v6984
      %7475 = vmatpush1.bf16.xpose.msra.mxu0 %v6983
      %7476 = vmatprep.subr.bf16.mxu0 %v6992
      %7477 = vmatpush1.bf16.xpose.msra.mxu0 %v6991
      %7478 = vmatprep.subr.bf16.mxu0 %v7000
      %7479 = vmatpush1.bf16.xpose.msra.mxu0 %v6999
      %7480 = vmatprep.subr.bf16.mxu0 %v7008
      %7481 = vmatpush1.bf16.xpose.msra.mxu0 %v7007
      %7482 = vmatprep.subr.bf16.mxu0 %v7016
      %7483 = vmatpush1.bf16.xpose.msra.mxu0 %v7015
      %7484 = vmatprep.subr.bf16.mxu0 %v7024
      %7485 = vmatpush1.bf16.xpose.msra.mxu0 %v7023
      %7486 = vmatprep.mubr.bf16.mxu0 %v2102
      %7487 = vmatmul.mubr.bf16.gmra.mrb[0].mxu0 %v2101
      %v7488 = vpop.f32.mrb[0].mxu0
      %v7489 = vadd.f32 %v7448, %v7488
      %v7490 = vpop.f32.mrb[0].mxu0
      %v7491 = vadd.f32 %v7450, %v7490
      %v7492 = vpop.f32.mrb[0].mxu0
      %v7493 = vpop.f32.mrb[0].mxu0
      %7494 = vdwg.mxu0
      %7495 = vmatprep.subr.bf16.mxu0 %v6906
      %7496 = vmatpush1.bf16.xpose.msra.mxu0 %v6905
      %7497 = vmatprep.subr.bf16.mxu0 %v6914
      %7498 = vmatpush1.bf16.xpose.msra.mxu0 %v6913
      %7499 = vmatprep.subr.bf16.mxu0 %v6922
      %7500 = vmatpush1.bf16.xpose.msra.mxu0 %v6921
      %7501 = vmatprep.subr.bf16.mxu0 %v6930
      %7502 = vmatpush1.bf16.xpose.msra.mxu0 %v6929
      %7503 = vmatprep.subr.bf16.mxu0 %v6938
      %7504 = vmatpush1.bf16.xpose.msra.mxu0 %v6937
      %7505 = vmatprep.subr.bf16.mxu0 %v6946
      %7506 = vmatpush1.bf16.xpose.msra.mxu0 %v6945
      %7507 = vmatprep.subr.bf16.mxu0 %v6954
      %7508 = vmatpush1.bf16.xpose.msra.mxu0 %v6953
      %7509 = vmatprep.subr.bf16.mxu0 %v6962
      %7510 = vmatpush1.bf16.xpose.msra.mxu0 %v6961
      %7511 = vmatprep.subr.bf16.mxu0 %v6970
      %7512 = vmatpush1.bf16.xpose.msra.mxu0 %v6969
      %7513 = vmatprep.subr.bf16.mxu0 %v6978
      %7514 = vmatpush1.bf16.xpose.msra.mxu0 %v6977
      %7515 = vmatprep.subr.bf16.mxu0 %v6986
      %7516 = vmatpush1.bf16.xpose.msra.mxu0 %v6985
      %7517 = vmatprep.subr.bf16.mxu0 %v6994
      %7518 = vmatpush1.bf16.xpose.msra.mxu0 %v6993
      %7519 = vmatprep.subr.bf16.mxu0 %v7002
      %7520 = vmatpush1.bf16.xpose.msra.mxu0 %v7001
      %7521 = vmatprep.subr.bf16.mxu0 %v7010
      %7522 = vmatpush1.bf16.xpose.msra.mxu0 %v7009
      %7523 = vmatprep.subr.bf16.mxu0 %v7018
      %7524 = vmatpush1.bf16.xpose.msra.mxu0 %v7017
      %7525 = vmatprep.subr.bf16.mxu0 %v7026
      %7526 = vmatpush1.bf16.xpose.msra.mxu0 %v7025
      %7527 = vmatprep.mubr.bf16.mxu0 %v2104
      %7528 = vmatmul.mubr.bf16.gmra.mrb[0].mxu0 %v2103
      %v7529 = vpop.f32.mrb[0].mxu0
      %v7530 = vadd.f32 %v7489, %v7529
      %v7531 = vpop.f32.mrb[0].mxu0
      %v7532 = vadd.f32 %v7491, %v7531
      %v7533 = vpop.f32.mrb[0].mxu0
      %v7534 = vpop.f32.mrb[0].mxu0
      %7535 = vdwg.mxu0
      %7536 = vmatprep.subr.bf16.mxu0 %v6908
      %7537 = vmatpush1.bf16.xpose.msra.mxu0 %v6907
      %7538 = vmatprep.subr.bf16.mxu0 %v6916
      %7539 = vmatpush1.bf16.xpose.msra.mxu0 %v6915
      %7540 = vmatprep.subr.bf16.mxu0 %v6924
      %7541 = vmatpush1.bf16.xpose.msra.mxu0 %v6923
      %7542 = vmatprep.subr.bf16.mxu0 %v6932
      %7543 = vmatpush1.bf16.xpose.msra.mxu0 %v6931
      %7544 = vmatprep.subr.bf16.mxu0 %v6940
      %7545 = vmatpush1.bf16.xpose.msra.mxu0 %v6939
      %7546 = vmatprep.subr.bf16.mxu0 %v6948
      %7547 = vmatpush1.bf16.xpose.msra.mxu0 %v6947
      %7548 = vmatprep.subr.bf16.mxu0 %v6956
      %7549 = vmatpush1.bf16.xpose.msra.mxu0 %v6955
      %7550 = vmatprep.subr.bf16.mxu0 %v6964
      %7551 = vmatpush1.bf16.xpose.msra.mxu0 %v6963
      %7552 = vmatprep.subr.bf16.mxu0 %v6972
      %7553 = vmatpush1.bf16.xpose.msra.mxu0 %v6971
      %7554 = vmatprep.subr.bf16.mxu0 %v6980
      %7555 = vmatpush1.bf16.xpose.msra.mxu0 %v6979
      %7556 = vmatprep.subr.bf16.mxu0 %v6988
      %7557 = vmatpush1.bf16.xpose.msra.mxu0 %v6987
      %7558 = vmatprep.subr.bf16.mxu0 %v6996
      %7559 = vmatpush1.bf16.xpose.msra.mxu0 %v6995
      %7560 = vmatprep.subr.bf16.mxu0 %v7004
      %7561 = vmatpush1.bf16.xpose.msra.mxu0 %v7003
      %7562 = vmatprep.subr.bf16.mxu0 %v7012
      %7563 = vmatpush1.bf16.xpose.msra.mxu0 %v7011
      %7564 = vmatprep.subr.bf16.mxu0 %v7020
      %7565 = vmatpush1.bf16.xpose.msra.mxu0 %v7019
      %7566 = vmatprep.subr.bf16.mxu0 %v7028
      %7567 = vmatpush1.bf16.xpose.msra.mxu0 %v7027
      %7568 = vmatprep.mubr.bf16.mxu0 %v2106
      %7569 = vmatmul.mubr.bf16.gmra.mrb[0].mxu0 %v2105
      %v7570 = vpop.f32.mrb[0].mxu0
      %v7571 = vadd.f32 %v7530, %v7570
      %v7572 = vpop.f32.mrb[0].mxu0
      %v7573 = vadd.f32 %v7532, %v7572
      %v7574 = vpop.f32.mrb[0].mxu0
      %v7575 = vpop.f32.mrb[0].mxu0
      %7576 = vdwg.mxu0
      %7577 = vmatprep.subr.bf16.mxu0 %v7030
      %7578 = vmatpush1.bf16.xpose.msra.mxu0 %v7029
      %7579 = vmatprep.subr.bf16.mxu0 %v7038
      %7580 = vmatpush1.bf16.xpose.msra.mxu0 %v7037
      %7581 = vmatprep.subr.bf16.mxu0 %v7046
      %7582 = vmatpush1.bf16.xpose.msra.mxu0 %v7045
      %7583 = vmatprep.subr.bf16.mxu0 %v7054
      %7584 = vmatpush1.bf16.xpose.msra.mxu0 %v7053
      %7585 = vmatprep.subr.bf16.mxu0 %v7062
      %7586 = vmatpush1.bf16.xpose.msra.mxu0 %v7061
      %7587 = vmatprep.subr.bf16.mxu0 %v7070
      %7588 = vmatpush1.bf16.xpose.msra.mxu0 %v7069
      %7589 = vmatprep.subr.bf16.mxu0 %v7078
      %7590 = vmatpush1.bf16.xpose.msra.mxu0 %v7077
      %7591 = vmatprep.subr.bf16.mxu0 %v7086
      %7592 = vmatpush1.bf16.xpose.msra.mxu0 %v7085
      %7593 = vmatprep.subr.bf16.mxu0 %v7094
      %7594 = vmatpush1.bf16.xpose.msra.mxu0 %v7093
      %7595 = vmatprep.subr.bf16.mxu0 %v7102
      %7596 = vmatpush1.bf16.xpose.msra.mxu0 %v7101
      %7597 = vmatprep.subr.bf16.mxu0 %v7110
      %7598 = vmatpush1.bf16.xpose.msra.mxu0 %v7109
      %7599 = vmatprep.subr.bf16.mxu0 %v7118
      %7600 = vmatpush1.bf16.xpose.msra.mxu0 %v7117
      %7601 = vmatprep.subr.bf16.mxu0 %v7126
      %7602 = vmatpush1.bf16.xpose.msra.mxu0 %v7125
      %7603 = vmatprep.subr.bf16.mxu0 %v7134
      %7604 = vmatpush1.bf16.xpose.msra.mxu0 %v7133
      %7605 = vmatprep.subr.bf16.mxu0 %v7142
      %7606 = vmatpush1.bf16.xpose.msra.mxu0 %v7141
      %7607 = vmatprep.subr.bf16.mxu0 %v7150
      %7608 = vmatpush1.bf16.xpose.msra.mxu0 %v7149
      %7609 = vmatprep.mubr.bf16.mxu0 %v2100
      %7610 = vmatmul.mubr.bf16.gmra.mrb[0].mxu0 %v2099
      %v7611 = vpop.f32.mrb[0].mxu0
      %v7612 = vadd.f32 0.0, %v7611
      %v7613 = vpop.f32.mrb[0].mxu0
      %v7614 = vadd.f32 0.0, %v7613
      %v7615 = vpop.f32.mrb[0].mxu0
      %v7616 = vpop.f32.mrb[0].mxu0
      %7617 = vdwg.mxu0
      %7618 = vmatprep.subr.bf16.mxu0 %v7032
      %7619 = vmatpush1.bf16.xpose.msra.mxu0 %v7031
      %7620 = vmatprep.subr.bf16.mxu0 %v7040
      %7621 = vmatpush1.bf16.xpose.msra.mxu0 %v7039
      %7622 = vmatprep.subr.bf16.mxu0 %v7048
      %7623 = vmatpush1.bf16.xpose.msra.mxu0 %v7047
      %7624 = vmatprep.subr.bf16.mxu0 %v7056
      %7625 = vmatpush1.bf16.xpose.msra.mxu0 %v7055
      %7626 = vmatprep.subr.bf16.mxu0 %v7064
      %7627 = vmatpush1.bf16.xpose.msra.mxu0 %v7063
      %7628 = vmatprep.subr.bf16.mxu0 %v7072
      %7629 = vmatpush1.bf16.xpose.msra.mxu0 %v7071
      %7630 = vmatprep.subr.bf16.mxu0 %v7080
      %7631 = vmatpush1.bf16.xpose.msra.mxu0 %v7079
      %7632 = vmatprep.subr.bf16.mxu0 %v7088
      %7633 = vmatpush1.bf16.xpose.msra.mxu0 %v7087
      %7634 = vmatprep.subr.bf16.mxu0 %v7096
      %7635 = vmatpush1.bf16.xpose.msra.mxu0 %v7095
      %7636 = vmatprep.subr.bf16.mxu0 %v7104
      %7637 = vmatpush1.bf16.xpose.msra.mxu0 %v7103
      %7638 = vmatprep.subr.bf16.mxu0 %v7112
      %7639 = vmatpush1.bf16.xpose.msra.mxu0 %v7111
      %7640 = vmatprep.subr.bf16.mxu0 %v7120
      %7641 = vmatpush1.bf16.xpose.msra.mxu0 %v7119
      %7642 = vmatprep.subr.bf16.mxu0 %v7128
      %7643 = vmatpush1.bf16.xpose.msra.mxu0 %v7127
      %7644 = vmatprep.subr.bf16.mxu0 %v7136
      %7645 = vmatpush1.bf16.xpose.msra.mxu0 %v7135
      %7646 = vmatprep.subr.bf16.mxu0 %v7144
      %7647 = vmatpush1.bf16.xpose.msra.mxu0 %v7143
      %7648 = vmatprep.subr.bf16.mxu0 %v7152
      %7649 = vmatpush1.bf16.xpose.msra.mxu0 %v7151
      %7650 = vmatprep.mubr.bf16.mxu0 %v2102
      %7651 = vmatmul.mubr.bf16.gmra.mrb[0].mxu0 %v2101
      %v7652 = vpop.f32.mrb[0].mxu0
      %v7653 = vadd.f32 %v7612, %v7652
      %v7654 = vpop.f32.mrb[0].mxu0
      %v7655 = vadd.f32 %v7614, %v7654
      %v7656 = vpop.f32.mrb[0].mxu0
      %v7657 = vpop.f32.mrb[0].mxu0
      %7658 = vdwg.mxu0
      %7659 = vmatprep.subr.bf16.mxu0 %v7034
      %7660 = vmatpush1.bf16.xpose.msra.mxu0 %v7033
      %7661 = vmatprep.subr.bf16.mxu0 %v7042
      %7662 = vmatpush1.bf16.xpose.msra.mxu0 %v7041
      %7663 = vmatprep.subr.bf16.mxu0 %v7050
      %7664 = vmatpush1.bf16.xpose.msra.mxu0 %v7049
      %7665 = vmatprep.subr.bf16.mxu0 %v7058
      %7666 = vmatpush1.bf16.xpose.msra.mxu0 %v7057
      %7667 = vmatprep.subr.bf16.mxu0 %v7066
      %7668 = vmatpush1.bf16.xpose.msra.mxu0 %v7065
      %7669 = vmatprep.subr.bf16.mxu0 %v7074
      %7670 = vmatpush1.bf16.xpose.msra.mxu0 %v7073
      %7671 = vmatprep.subr.bf16.mxu0 %v7082
      %7672 = vmatpush1.bf16.xpose.msra.mxu0 %v7081
      %7673 = vmatprep.subr.bf16.mxu0 %v7090
      %7674 = vmatpush1.bf16.xpose.msra.mxu0 %v7089
      %7675 = vmatprep.subr.bf16.mxu0 %v7098
      %7676 = vmatpush1.bf16.xpose.msra.mxu0 %v7097
      %7677 = vmatprep.subr.bf16.mxu0 %v7106
      %7678 = vmatpush1.bf16.xpose.msra.mxu0 %v7105
      %7679 = vmatprep.subr.bf16.mxu0 %v7114
      %7680 = vmatpush1.bf16.xpose.msra.mxu0 %v7113
      %7681 = vmatprep.subr.bf16.mxu0 %v7122
      %7682 = vmatpush1.bf16.xpose.msra.mxu0 %v7121
      %7683 = vmatprep.subr.bf16.mxu0 %v7130
      %7684 = vmatpush1.bf16.xpose.msra.mxu0 %v7129
      %7685 = vmatprep.subr.bf16.mxu0 %v7138
      %7686 = vmatpush1.bf16.xpose.msra.mxu0 %v7137
      %7687 = vmatprep.subr.bf16.mxu0 %v7146
      %7688 = vmatpush1.bf16.xpose.msra.mxu0 %v7145
      %7689 = vmatprep.subr.bf16.mxu0 %v7154
      %7690 = vmatpush1.bf16.xpose.msra.mxu0 %v7153
      %7691 = vmatprep.mubr.bf16.mxu0 %v2104
      %7692 = vmatmul.mubr.bf16.gmra.mrb[0].mxu0 %v2103
      %v7693 = vpop.f32.mrb[0].mxu0
      %v7694 = vadd.f32 %v7653, %v7693
      %v7695 = vpop.f32.mrb[0].mxu0
      %v7696 = vadd.f32 %v7655, %v7695
      %v7697 = vpop.f32.mrb[0].mxu0
      %v7698 = vpop.f32.mrb[0].mxu0
      %7699 = vdwg.mxu0
      %7700 = vmatprep.subr.bf16.mxu0 %v7036
      %7701 = vmatpush1.bf16.xpose.msra.mxu0 %v7035
      %7702 = vmatprep.subr.bf16.mxu0 %v7044
      %7703 = vmatpush1.bf16.xpose.msra.mxu0 %v7043
      %7704 = vmatprep.subr.bf16.mxu0 %v7052
      %7705 = vmatpush1.bf16.xpose.msra.mxu0 %v7051
      %7706 = vmatprep.subr.bf16.mxu0 %v7060
      %7707 = vmatpush1.bf16.xpose.msra.mxu0 %v7059
      %7708 = vmatprep.subr.bf16.mxu0 %v7068
      %7709 = vmatpush1.bf16.xpose.msra.mxu0 %v7067
      %7710 = vmatprep.subr.bf16.mxu0 %v7076
      %7711 = vmatpush1.bf16.xpose.msra.mxu0 %v7075
      %7712 = vmatprep.subr.bf16.mxu0 %v7084
      %7713 = vmatpush1.bf16.xpose.msra.mxu0 %v7083
      %7714 = vmatprep.subr.bf16.mxu0 %v7092
      %7715 = vmatpush1.bf16.xpose.msra.mxu0 %v7091
      %7716 = vmatprep.subr.bf16.mxu0 %v7100
      %7717 = vmatpush1.bf16.xpose.msra.mxu0 %v7099
      %7718 = vmatprep.subr.bf16.mxu0 %v7108
      %7719 = vmatpush1.bf16.xpose.msra.mxu0 %v7107
      %7720 = vmatprep.subr.bf16.mxu0 %v7116
      %7721 = vmatpush1.bf16.xpose.msra.mxu0 %v7115
      %7722 = vmatprep.subr.bf16.mxu0 %v7124
      %7723 = vmatpush1.bf16.xpose.msra.mxu0 %v7123
      %7724 = vmatprep.subr.bf16.mxu0 %v7132
      %7725 = vmatpush1.bf16.xpose.msra.mxu0 %v7131
      %7726 = vmatprep.subr.bf16.mxu0 %v7140
      %7727 = vmatpush1.bf16.xpose.msra.mxu0 %v7139
      %7728 = vmatprep.subr.bf16.mxu0 %v7148
      %7729 = vmatpush1.bf16.xpose.msra.mxu0 %v7147
      %7730 = vmatprep.subr.bf16.mxu0 %v7156
      %7731 = vmatpush1.bf16.xpose.msra.mxu0 %v7155
      %7732 = vmatprep.mubr.bf16.mxu0 %v2106
      %7733 = vmatmul.mubr.bf16.gmra.mrb[0].mxu0 %v2105
      %v7734 = vpop.f32.mrb[0].mxu0
      %v7735 = vadd.f32 %v7694, %v7734
      %v7736 = vpop.f32.mrb[0].mxu0
      %v7737 = vadd.f32 %v7696, %v7736
      %v7738 = vpop.f32.mrb[0].mxu0
      %v7739 = vpop.f32.mrb[0].mxu0
      %7740 = vdwg.mxu0
      %v7741 = vld [vmem:[%s1] sm:$0xff]
      %v7742 = vld [vmem:[%s1 + $0x8] sm:$0xff]
      %v7743 = vld [vmem:[%s1 + $0x10] sm:$0xff]
      %v7744 = vld [vmem:[%s1 + $0x18] sm:$0xff]
      %v7745 = vsub.f32 %v7741, %v7571
      %v7746 = vsub.f32 %v7742, %v7573
      %v7747 = vsub.f32 %v7743, %v7735
      %v7748 = vsub.f32 %v7744, %v7737
      %v7749 = vpack.c.bf16 %v7745, %v7745
      %v7750 = vpack.c.bf16 %v7746, %v7746
      %v7751 = vpack.c.bf16 %v7747, %v7747
      %v7752 = vpack.c.bf16 %v7748, %v7748
      %7753 = vmatprep.subr.bf16.mxu0 %v6902
      %7754 = vmatpush1.bf16.msra.mxu0 %v6901
      %7755 = vmatprep.subr.bf16.mxu0 %v6910
      %7756 = vmatpush1.bf16.msra.mxu0 %v6909
      %7757 = vmatprep.subr.bf16.mxu0 %v6918
      %7758 = vmatpush1.bf16.msra.mxu0 %v6917
      %7759 = vmatprep.subr.bf16.mxu0 %v6926
      %7760 = vmatpush1.bf16.msra.mxu0 %v6925
      %7761 = vmatprep.subr.bf16.mxu0 %v6934
      %7762 = vmatpush1.bf16.msra.mxu0 %v6933
      %7763 = vmatprep.subr.bf16.mxu0 %v6942
      %7764 = vmatpush1.bf16.msra.mxu0 %v6941
      %7765 = vmatprep.subr.bf16.mxu0 %v6950
      %7766 = vmatpush1.bf16.msra.mxu0 %v6949
      %7767 = vmatprep.subr.bf16.mxu0 %v6958
      %7768 = vmatpush1.bf16.msra.mxu0 %v6957
      %7769 = vmatprep.subr.bf16.mxu0 %v6966
      %7770 = vmatpush1.bf16.msra.mxu0 %v6965
      %7771 = vmatprep.subr.bf16.mxu0 %v6974
      %7772 = vmatpush1.bf16.msra.mxu0 %v6973
      %7773 = vmatprep.subr.bf16.mxu0 %v6982
      %7774 = vmatpush1.bf16.msra.mxu0 %v6981
      %7775 = vmatprep.subr.bf16.mxu0 %v6990
      %7776 = vmatpush1.bf16.msra.mxu0 %v6989
      %7777 = vmatprep.subr.bf16.mxu0 %v6998
      %7778 = vmatpush1.bf16.msra.mxu0 %v6997
      %7779 = vmatprep.subr.bf16.mxu0 %v7006
      %7780 = vmatpush1.bf16.msra.mxu0 %v7005
      %7781 = vmatprep.subr.bf16.mxu0 %v7014
      %7782 = vmatpush1.bf16.msra.mxu0 %v7013
      %7783 = vmatprep.subr.bf16.mxu0 %v7022
      %7784 = vmatpush1.bf16.msra.mxu0 %v7021
      %7785 = vmatprep.mubr.bf16.mxu0 %v7750
      %7786 = vmatmul.mubr.bf16.gmra.mrb[0].mxu0 %v7749
      %v7787 = vpop.f32.mrb[0].mxu0
      %v7788 = vadd.f32 0.0, %v7787
      %v7789 = vpop.f32.mrb[0].mxu0
      %v7790 = vadd.f32 0.0, %v7789
      %v7791 = vpop.f32.mrb[0].mxu0
      %v7792 = vpop.f32.mrb[0].mxu0
      %7793 = vdwg.mxu0
      %7794 = vmatprep.subr.bf16.mxu0 %v7030
      %7795 = vmatpush1.bf16.msra.mxu0 %v7029
      %7796 = vmatprep.subr.bf16.mxu0 %v7038
      %7797 = vmatpush1.bf16.msra.mxu0 %v7037
      %7798 = vmatprep.subr.bf16.mxu0 %v7046
      %7799 = vmatpush1.bf16.msra.mxu0 %v7045
      %7800 = vmatprep.subr.bf16.mxu0 %v7054
      %7801 = vmatpush1.bf16.msra.mxu0 %v7053
      %7802 = vmatprep.subr.bf16.mxu0 %v7062
      %7803 = vmatpush1.bf16.msra.mxu0 %v7061
      %7804 = vmatprep.subr.bf16.mxu0 %v7070
      %7805 = vmatpush1.bf16.msra.mxu0 %v7069
      %7806 = vmatprep.subr.bf16.mxu0 %v7078
      %7807 = vmatpush1.bf16.msra.mxu0 %v7077
      %7808 = vmatprep.subr.bf16.mxu0 %v7086
      %7809 = vmatpush1.bf16.msra.mxu0 %v7085
      %7810 = vmatprep.subr.bf16.mxu0 %v7094
      %7811 = vmatpush1.bf16.msra.mxu0 %v7093
      %7812 = vmatprep.subr.bf16.mxu0 %v7102
      %7813 = vmatpush1.bf16.msra.mxu0 %v7101
      %7814 = vmatprep.subr.bf16.mxu0 %v7110
      %7815 = vmatpush1.bf16.msra.mxu0 %v7109
      %7816 = vmatprep.subr.bf16.mxu0 %v7118
      %7817 = vmatpush1.bf16.msra.mxu0 %v7117
      %7818 = vmatprep.subr.bf16.mxu0 %v7126
      %7819 = vmatpush1.bf16.msra.mxu0 %v7125
      %7820 = vmatprep.subr.bf16.mxu0 %v7134
      %7821 = vmatpush1.bf16.msra.mxu0 %v7133
      %7822 = vmatprep.subr.bf16.mxu0 %v7142
      %7823 = vmatpush1.bf16.msra.mxu0 %v7141
      %7824 = vmatprep.subr.bf16.mxu0 %v7150
      %7825 = vmatpush1.bf16.msra.mxu0 %v7149
      %7826 = vmatprep.mubr.bf16.mxu0 %v7752
      %7827 = vmatmul.mubr.bf16.gmra.mrb[0].mxu0 %v7751
      %v7828 = vpop.f32.mrb[0].mxu0
      %v7829 = vadd.f32 %v7788, %v7828
      %v7830 = vpop.f32.mrb[0].mxu0
      %v7831 = vadd.f32 %v7790, %v7830
      %v7832 = vpop.f32.mrb[0].mxu0
      %v7833 = vpop.f32.mrb[0].mxu0
      %7834 = vdwg.mxu0
      %7835 = vmatprep.subr.bf16.mxu0 %v6904
      %7836 = vmatpush1.bf16.msra.mxu0 %v6903
      %7837 = vmatprep.subr.bf16.mxu0 %v6912
      %7838 = vmatpush1.bf16.msra.mxu0 %v6911
      %7839 = vmatprep.subr.bf16.mxu0 %v6920
      %7840 = vmatpush1.bf16.msra.mxu0 %v6919
      %7841 = vmatprep.subr.bf16.mxu0 %v6928
      %7842 = vmatpush1.bf16.msra.mxu0 %v6927
      %7843 = vmatprep.subr.bf16.mxu0 %v6936
      %7844 = vmatpush1.bf16.msra.mxu0 %v6935
      %7845 = vmatprep.subr.bf16.mxu0 %v6944
      %7846 = vmatpush1.bf16.msra.mxu0 %v6943
      %7847 = vmatprep.subr.bf16.mxu0 %v6952
      %7848 = vmatpush1.bf16.msra.mxu0 %v6951
      %7849 = vmatprep.subr.bf16.mxu0 %v6960
      %7850 = vmatpush1.bf16.msra.mxu0 %v6959
      %7851 = vmatprep.subr.bf16.mxu0 %v6968
      %7852 = vmatpush1.bf16.msra.mxu0 %v6967
      %7853 = vmatprep.subr.bf16.mxu0 %v6976
      %7854 = vmatpush1.bf16.msra.mxu0 %v6975
      %7855 = vmatprep.subr.bf16.mxu0 %v6984
      %7856 = vmatpush1.bf16.msra.mxu0 %v6983
      %7857 = vmatprep.subr.bf16.mxu0 %v6992
      %7858 = vmatpush1.bf16.msra.mxu0 %v6991
      %7859 = vmatprep.subr.bf16.mxu0 %v7000
      %7860 = vmatpush1.bf16.msra.mxu0 %v6999
      %7861 = vmatprep.subr.bf16.mxu0 %v7008
      %7862 = vmatpush1.bf16.msra.mxu0 %v7007
      %7863 = vmatprep.subr.bf16.mxu0 %v7016
      %7864 = vmatpush1.bf16.msra.mxu0 %v7015
      %7865 = vmatprep.subr.bf16.mxu0 %v7024
      %7866 = vmatpush1.bf16.msra.mxu0 %v7023
      %7867 = vmatprep.mubr.bf16.mxu0 %v7750
      %7868 = vmatmul.mubr.bf16.gmra.mrb[0].mxu0 %v7749
      %v7869 = vpop.f32.mrb[0].mxu0
      %v7870 = vadd.f32 0.0, %v7869
      %v7871 = vpop.f32.mrb[0].mxu0
      %v7872 = vadd.f32 0.0, %v7871
      %v7873 = vpop.f32.mrb[0].mxu0
      %v7874 = vpop.f32.mrb[0].mxu0
      %7875 = vdwg.mxu0
      %7876 = vmatprep.subr.bf16.mxu0 %v7032
      %7877 = vmatpush1.bf16.msra.mxu0 %v7031
      %7878 = vmatprep.subr.bf16.mxu0 %v7040
      %7879 = vmatpush1.bf16.msra.mxu0 %v7039
      %7880 = vmatprep.subr.bf16.mxu0 %v7048
      %7881 = vmatpush1.bf16.msra.mxu0 %v7047
      %7882 = vmatprep.subr.bf16.mxu0 %v7056
      %7883 = vmatpush1.bf16.msra.mxu0 %v7055
      %7884 = vmatprep.subr.bf16.mxu0 %v7064
      %7885 = vmatpush1.bf16.msra.mxu0 %v7063
      %7886 = vmatprep.subr.bf16.mxu0 %v7072
      %7887 = vmatpush1.bf16.msra.mxu0 %v7071
      %7888 = vmatprep.subr.bf16.mxu0 %v7080
      %7889 = vmatpush1.bf16.msra.mxu0 %v7079
      %7890 = vmatprep.subr.bf16.mxu0 %v7088
      %7891 = vmatpush1.bf16.msra.mxu0 %v7087
      %7892 = vmatprep.subr.bf16.mxu0 %v7096
      %7893 = vmatpush1.bf16.msra.mxu0 %v7095
      %7894 = vmatprep.subr.bf16.mxu0 %v7104
      %7895 = vmatpush1.bf16.msra.mxu0 %v7103
      %7896 = vmatprep.subr.bf16.mxu0 %v7112
      %7897 = vmatpush1.bf16.msra.mxu0 %v7111
      %7898 = vmatprep.subr.bf16.mxu0 %v7120
      %7899 = vmatpush1.bf16.msra.mxu0 %v7119
      %7900 = vmatprep.subr.bf16.mxu0 %v7128
      %7901 = vmatpush1.bf16.msra.mxu0 %v7127
      %7902 = vmatprep.subr.bf16.mxu0 %v7136
      %7903 = vmatpush1.bf16.msra.mxu0 %v7135
      %7904 = vmatprep.subr.bf16.mxu0 %v7144
      %7905 = vmatpush1.bf16.msra.mxu0 %v7143
      %7906 = vmatprep.subr.bf16.mxu0 %v7152
      %7907 = vmatpush1.bf16.msra.mxu0 %v7151
      %7908 = vmatprep.mubr.bf16.mxu0 %v7752
      %7909 = vmatmul.mubr.bf16.gmra.mrb[0].mxu0 %v7751
      %v7910 = vpop.f32.mrb[0].mxu0
      %v7911 = vadd.f32 %v7870, %v7910
      %v7912 = vpop.f32.mrb[0].mxu0
      %v7913 = vadd.f32 %v7872, %v7912
      %v7914 = vpop.f32.mrb[0].mxu0
      %v7915 = vpop.f32.mrb[0].mxu0
      %7916 = vdwg.mxu0
      %7917 = vmatprep.subr.bf16.mxu0 %v6906
      %7918 = vmatpush1.bf16.msra.mxu0 %v6905
      %7919 = vmatprep.subr.bf16.mxu0 %v6914
      %7920 = vmatpush1.bf16.msra.mxu0 %v6913
      %7921 = vmatprep.subr.bf16.mxu0 %v6922
      %7922 = vmatpush1.bf16.msra.mxu0 %v6921
      %7923 = vmatprep.subr.bf16.mxu0 %v6930
      %7924 = vmatpush1.bf16.msra.mxu0 %v6929
      %7925 = vmatprep.subr.bf16.mxu0 %v6938
      %7926 = vmatpush1.bf16.msra.mxu0 %v6937
      %7927 = vmatprep.subr.bf16.mxu0 %v6946
      %7928 = vmatpush1.bf16.msra.mxu0 %v6945
      %7929 = vmatprep.subr.bf16.mxu0 %v6954
      %7930 = vmatpush1.bf16.msra.mxu0 %v6953
      %7931 = vmatprep.subr.bf16.mxu0 %v6962
      %7932 = vmatpush1.bf16.msra.mxu0 %v6961
      %7933 = vmatprep.subr.bf16.mxu0 %v6970
      %7934 = vmatpush1.bf16.msra.mxu0 %v6969
      %7935 = vmatprep.subr.bf16.mxu0 %v6978
      %7936 = vmatpush1.bf16.msra.mxu0 %v6977
      %7937 = vmatprep.subr.bf16.mxu0 %v6986
      %7938 = vmatpush1.bf16.msra.mxu0 %v6985
      %7939 = vmatprep.subr.bf16.mxu0 %v6994
      %7940 = vmatpush1.bf16.msra.mxu0 %v6993
      %7941 = vmatprep.subr.bf16.mxu0 %v7002
      %7942 = vmatpush1.bf16.msra.mxu0 %v7001
      %7943 = vmatprep.subr.bf16.mxu0 %v7010
      %7944 = vmatpush1.bf16.msra.mxu0 %v7009
      %7945 = vmatprep.subr.bf16.mxu0 %v7018
      %7946 = vmatpush1.bf16.msra.mxu0 %v7017
      %7947 = vmatprep.subr.bf16.mxu0 %v7026
      %7948 = vmatpush1.bf16.msra.mxu0 %v7025
      %7949 = vmatprep.mubr.bf16.mxu0 %v7750
      %7950 = vmatmul.mubr.bf16.gmra.mrb[0].mxu0 %v7749
      %v7951 = vpop.f32.mrb[0].mxu0
      %v7952 = vadd.f32 0.0, %v7951
      %v7953 = vpop.f32.mrb[0].mxu0
      %v7954 = vadd.f32 0.0, %v7953
      %v7955 = vpop.f32.mrb[0].mxu0
      %v7956 = vpop.f32.mrb[0].mxu0
      %7957 = vdwg.mxu0
      %7958 = vmatprep.subr.bf16.mxu0 %v7034
      %7959 = vmatpush1.bf16.msra.mxu0 %v7033
      %7960 = vmatprep.subr.bf16.mxu0 %v7042
      %7961 = vmatpush1.bf16.msra.mxu0 %v7041
      %7962 = vmatprep.subr.bf16.mxu0 %v7050
      %7963 = vmatpush1.bf16.msra.mxu0 %v7049
      %7964 = vmatprep.subr.bf16.mxu0 %v7058
      %7965 = vmatpush1.bf16.msra.mxu0 %v7057
      %7966 = vmatprep.subr.bf16.mxu0 %v7066
      %7967 = vmatpush1.bf16.msra.mxu0 %v7065
      %7968 = vmatprep.subr.bf16.mxu0 %v7074
      %7969 = vmatpush1.bf16.msra.mxu0 %v7073
      %7970 = vmatprep.subr.bf16.mxu0 %v7082
      %7971 = vmatpush1.bf16.msra.mxu0 %v7081
      %7972 = vmatprep.subr.bf16.mxu0 %v7090
      %7973 = vmatpush1.bf16.msra.mxu0 %v7089
      %7974 = vmatprep.subr.bf16.mxu0 %v7098
      %7975 = vmatpush1.bf16.msra.mxu0 %v7097
      %7976 = vmatprep.subr.bf16.mxu0 %v7106
      %7977 = vmatpush1.bf16.msra.mxu0 %v7105
      %7978 = vmatprep.subr.bf16.mxu0 %v7114
      %7979 = vmatpush1.bf16.msra.mxu0 %v7113
      %7980 = vmatprep.subr.bf16.mxu0 %v7122
      %7981 = vmatpush1.bf16.msra.mxu0 %v7121
      %7982 = vmatprep.subr.bf16.mxu0 %v7130
      %7983 = vmatpush1.bf16.msra.mxu0 %v7129
      %7984 = vmatprep.subr.bf16.mxu0 %v7138
      %7985 = vmatpush1.bf16.msra.mxu0 %v7137
      %7986 = vmatprep.subr.bf16.mxu0 %v7146
      %7987 = vmatpush1.bf16.msra.mxu0 %v7145
      %7988 = vmatprep.subr.bf16.mxu0 %v7154
      %7989 = vmatpush1.bf16.msra.mxu0 %v7153
      %7990 = vmatprep.mubr.bf16.mxu0 %v7752
      %7991 = vmatmul.mubr.bf16.gmra.mrb[0].mxu0 %v7751
      %v7992 = vpop.f32.mrb[0].mxu0
      %v7993 = vadd.f32 %v7952, %v7992
      %v7994 = vpop.f32.mrb[0].mxu0
      %v7995 = vadd.f32 %v7954, %v7994
      %v7996 = vpop.f32.mrb[0].mxu0
      %v7997 = vpop.f32.mrb[0].mxu0
      %7998 = vdwg.mxu0
      %7999 = vmatprep.subr.bf16.mxu0 %v6908
      %8000 = vmatpush1.bf16.msra.mxu0 %v6907
      %8001 = vmatprep.subr.bf16.mxu0 %v6916
      %8002 = vmatpush1.bf16.msra.mxu0 %v6915
      %8003 = vmatprep.subr.bf16.mxu0 %v6924
      %8004 = vmatpush1.bf16.msra.mxu0 %v6923
      %8005 = vmatprep.subr.bf16.mxu0 %v6932
      %8006 = vmatpush1.bf16.msra.mxu0 %v6931
      %8007 = vmatprep.subr.bf16.mxu0 %v6940
      %8008 = vmatpush1.bf16.msra.mxu0 %v6939
      %8009 = vmatprep.subr.bf16.mxu0 %v6948
      %8010 = vmatpush1.bf16.msra.mxu0 %v6947
      %8011 = vmatprep.subr.bf16.mxu0 %v6956
      %8012 = vmatpush1.bf16.msra.mxu0 %v6955
      %8013 = vmatprep.subr.bf16.mxu0 %v6964
      %8014 = vmatpush1.bf16.msra.mxu0 %v6963
      %8015 = vmatprep.subr.bf16.mxu0 %v6972
      %8016 = vmatpush1.bf16.msra.mxu0 %v6971
      %8017 = vmatprep.subr.bf16.mxu0 %v6980
      %8018 = vmatpush1.bf16.msra.mxu0 %v6979
      %8019 = vmatprep.subr.bf16.mxu0 %v6988
      %8020 = vmatpush1.bf16.msra.mxu0 %v6987
      %8021 = vmatprep.subr.bf16.mxu0 %v6996
      %8022 = vmatpush1.bf16.msra.mxu0 %v6995
      %8023 = vmatprep.subr.bf16.mxu0 %v7004
      %8024 = vmatpush1.bf16.msra.mxu0 %v7003
      %8025 = vmatprep.subr.bf16.mxu0 %v7012
      %8026 = vmatpush1.bf16.msra.mxu0 %v7011
      %8027 = vmatprep.subr.bf16.mxu0 %v7020
      %8028 = vmatpush1.bf16.msra.mxu0 %v7019
      %8029 = vmatprep.subr.bf16.mxu0 %v7028
      %8030 = vmatpush1.bf16.msra.mxu0 %v7027
      %8031 = vmatprep.mubr.bf16.mxu0 %v7750
      %8032 = vmatmul.mubr.bf16.gmra.mrb[0].mxu0 %v7749
      %v8033 = vpop.f32.mrb[0].mxu0
      %v8034 = vadd.f32 0.0, %v8033
      %v8035 = vpop.f32.mrb[0].mxu0
      %v8036 = vadd.f32 0.0, %v8035
      %v8037 = vpop.f32.mrb[0].mxu0
      %v8038 = vpop.f32.mrb[0].mxu0
      %8039 = vdwg.mxu0
      %8040 = vmatprep.subr.bf16.mxu0 %v7036
      %8041 = vmatpush1.bf16.msra.mxu0 %v7035
      %8042 = vmatprep.subr.bf16.mxu0 %v7044
      %8043 = vmatpush1.bf16.msra.mxu0 %v7043
      %8044 = vmatprep.subr.bf16.mxu0 %v7052
      %8045 = vmatpush1.bf16.msra.mxu0 %v7051
      %8046 = vmatprep.subr.bf16.mxu0 %v7060
      %8047 = vmatpush1.bf16.msra.mxu0 %v7059
      %8048 = vmatprep.subr.bf16.mxu0 %v7068
      %8049 = vmatpush1.bf16.msra.mxu0 %v7067
      %8050 = vmatprep.subr.bf16.mxu0 %v7076
      %8051 = vmatpush1.bf16.msra.mxu0 %v7075
      %8052 = vmatprep.subr.bf16.mxu0 %v7084
      %8053 = vmatpush1.bf16.msra.mxu0 %v7083
      %8054 = vmatprep.subr.bf16.mxu0 %v7092
      %8055 = vmatpush1.bf16.msra.mxu0 %v7091
      %8056 = vmatprep.subr.bf16.mxu0 %v7100
      %8057 = vmatpush1.bf16.msra.mxu0 %v7099
      %8058 = vmatprep.subr.bf16.mxu0 %v7108
      %8059 = vmatpush1.bf16.msra.mxu0 %v7107
      %8060 = vmatprep.subr.bf16.mxu0 %v7116
      %8061 = vmatpush1.bf16.msra.mxu0 %v7115
      %8062 = vmatprep.subr.bf16.mxu0 %v7124
      %8063 = vmatpush1.bf16.msra.mxu0 %v7123
      %8064 = vmatprep.subr.bf16.mxu0 %v7132
      %8065 = vmatpush1.bf16.msra.mxu0 %v7131
      %8066 = vmatprep.subr.bf16.mxu0 %v7140
      %8067 = vmatpush1.bf16.msra.mxu0 %v7139
      %8068 = vmatprep.subr.bf16.mxu0 %v7148
      %8069 = vmatpush1.bf16.msra.mxu0 %v7147
      %8070 = vmatprep.subr.bf16.mxu0 %v7156
      %8071 = vmatpush1.bf16.msra.mxu0 %v7155
      %8072 = vmatprep.mubr.bf16.mxu0 %v7752
      %8073 = vmatmul.mubr.bf16.gmra.mrb[0].mxu0 %v7751
      %v8074 = vpop.f32.mrb[0].mxu0
      %v8075 = vadd.f32 %v8034, %v8074
      %v8076 = vpop.f32.mrb[0].mxu0
      %v8077 = vadd.f32 %v8036, %v8076
      %v8078 = vpop.f32.mrb[0].mxu0
      %v8079 = vpop.f32.mrb[0].mxu0
      %8080 = vdwg.mxu0
      %v8081 = vadd.f32 %v5379, %v2091
      %v8082 = vadd.f32 %v5381, %v2092
      %v8083 = vadd.f32 %v5543, %v2093
      %v8084 = vadd.f32 %v5545, %v2094
      %v8085 = vadd.f32 %v5707, %v2095
      %v8086 = vadd.f32 %v5709, %v2096
      %v8087 = vadd.f32 %v5871, %v2097
      %v8088 = vadd.f32 %v5873, %v2098
      %s8089 = sld [smem:[#allocation3 + %s22]]
      %v8090 = vstv %s8089
      %v8091 = vmul.f32 %v8090, %v7829
      %v8092 = vmul.f32 %v8090, %v7831
      %v8093 = vmul.f32 %v8090, %v7911
      %v8094 = vmul.f32 %v8090, %v7913
      %v8095 = vmul.f32 %v8090, %v7993
      %v8096 = vmul.f32 %v8090, %v7995
      %v8097 = vmul.f32 %v8090, %v8075
      %v8098 = vmul.f32 %v8090, %v8077
      %v8099 = vadd.f32 %v8081, %v8091
      %v8100 = vadd.f32 %v8082, %v8092
      %v8101 = vadd.f32 %v8083, %v8093
      %v8102 = vadd.f32 %v8084, %v8094
      %v8103 = vadd.f32 %v8085, %v8095
      %v8104 = vadd.f32 %v8086, %v8096
      %v8105 = vadd.f32 %v8087, %v8097
      %v8106 = vadd.f32 %v8088, %v8098
      %8107 = vst [vmem:[%s5] sm:$0xff] %v8099
      %8108 = vst [vmem:[%s5 + $0x8] sm:$0xff] %v8100
      %8109 = vst [vmem:[%s5 + $0x10] sm:$0xff] %v8101
      %8110 = vst [vmem:[%s5 + $0x18] sm:$0xff] %v8102
      %8111 = vst [vmem:[%s5 + $0x20] sm:$0xff] %v8103
      %8112 = vst [vmem:[%s5 + $0x28] sm:$0xff] %v8104
      %8113 = vst [vmem:[%s5 + $0x30] sm:$0xff] %v8105
      %8114 = vst [vmem:[%s5 + $0x38] sm:$0xff] %v8106
      // Predicated region
      $region41: #{_gradient_descent_impl.1} parent=35 // pred_check
        %p8115 = pneg %p129
      $region42: #{_gradient_descent_impl.1} parent=35 // pred_check_branch
        %8117 = sbr.rel (%p8115) target = $region44
      $region43: #{_gradient_descent_impl.1} parent=35 // pred_region
        _
      $region44: #{_gradient_descent_impl.1} parent=35 // pred_fallthru
        _
      // Predicated region
      $region45: #{_gradient_descent_impl.1} parent=35 // pred_check
        %p8118 = pneg %p129
      $region46: #{_gradient_descent_impl.1} parent=35 // pred_check_branch
        %8120 = sbr.rel (%p8118) target = $region48
      $region47: #{_gradient_descent_impl.1} parent=35 // pred_region
        _
      $region48: #{_gradient_descent_impl.1} parent=35 // pred_fallthru
        _
    $region36: #{_gradient_descent_impl.1} parent=5 // pred_fallthru
      _
    %p8121 = scmp.le.s32.totalorder 2, %s17
    // Predicated region
    $region49: #{_gradient_descent_impl.1} parent=5 // pred_check
      %p8122 = pneg %p8121
    $region50: #{_gradient_descent_impl.1} parent=5 // pred_check_branch
      %8124 = sbr.rel (%p8122) target = $region52
    $region51: #{_gradient_descent_impl.1} parent=5 // pred_region
      %s8125 = ssub.s32 %s17, 2
    $region52: #{_gradient_descent_impl.1} parent=5 // pred_fallthru
      _
  $region6: #{_gradient_descent_impl.1} parent=0 // loop_footer
    %s21 = sadd.s32 1, %s17
  $region7: #{_gradient_descent_impl.1} parent=0 // loop_footer_branch
    %16 = sbr.rel target = $region3
  $region8: #{_gradient_descent_impl.1} parent=0 // loop_exit
    _

</llo_original>
